<compile_context>
chip_gen: v5e
topology: v5e:2x2
jax: 0.10.0
libtpu: 0.0.40
codegen_flags: <defaults>
</compile_context>

<pallas_src>
import functools

import numpy as np
import jax
import jax.numpy as jnp
from jax.experimental import pallas as pl
from jax.experimental.pallas import tpu as pltpu


# ---------------------------------------------------------------------------
# Geometry of the flattened "wide" conv layout
# ---------------------------------------------------------------------------
def _wide_dims(H, W):
    Wp = W + 2                                    # padded width (2 junk cols)
    NR = H * Wp                                   # rows of one wide conv output
    soff = -(-(Wp + 1) // 8) * 8                  # 8-aligned store offset > Wp
    pad_rows = -(-(soff + NR + Wp) // 8) * 8      # covers reads [soff-Wp, soff+Wp+NR)
    return Wp, NR, soff, pad_rows


# ---------------------------------------------------------------------------
# Fused forward kernel (IMGS images per grid step)
# ---------------------------------------------------------------------------
def fused_forward_kernel(x_ref, s_ref, w1_ref, b1_ref, w2_ref, b2_ref,
                         wfc1_ref, bfc1_ref, wfc2_ref, bfc2_ref,
                         o_ref, awide_ref, pool_ref, *, H, W):
    Wp, NR, soff, pad_rows = _wide_dims(H, W)
    IMGS = x_ref.shape[0]
    C1 = w1_ref.shape[1]              # 32
    KW = 3 * C1                       # 96: conv2 contraction width
    C2 = w2_ref.shape[2]              # 64
    N1 = wfc1_ref.shape[1]            # 256

    # Zero only the halo rows of the conv2 operand scratch.  Rows
    # [soff+1, soff+NR-1) are fully overwritten (in every 32-channel block)
    # by the three a1 stores below, so they never need clearing.
    awide_ref[0:soff + 1, :] = jnp.zeros((soff + 1, KW), jnp.float32)
    awide_ref[soff + NR - 1:pad_rows, :] = jnp.zeros(
        (pad_rows - (soff + NR - 1), KW), jnp.float32)

    row = jax.lax.broadcasted_iota(jnp.int32, (NR, 1), 0)
    col_valid = (row % Wp) < W        # wide-layout wrap-around junk columns

    for img in range(IMGS):
        # ---- conv1 (3x3 'same') + bias + ReLU: one K=27 matmul -------------
        a1 = jnp.dot(x_ref[img], w1_ref[...], preferred_element_type=jnp.float32)
        a1 = jnp.maximum(a1 + b1_ref[...], 0.0)
        # junk columns (x >= W) must be exactly zero: they are conv2's
        # horizontal zero padding.
        a1 = jnp.where(col_valid, a1, 0.0)

        # ---- scatter a1 into the K=96 conv2 operand -------------------------
        # channel block kx holds a1 shifted by (kx-1) rows, so one read row of
        # awide concatenates the three horizontal taps.
        awide_ref[soff + 1:soff + 1 + NR, 0:C1] = a1            # kx = 0
        awide_ref[soff:soff + NR, C1:2 * C1] = a1               # kx = 1
        awide_ref[soff - 1:soff - 1 + NR, 2 * C1:KW] = a1       # kx = 2

        # ---- conv2 (3x3 'same') + bias + ReLU: 3 accumulated K=96 matmuls ---
        acc2 = jnp.zeros((NR, C2), jnp.float32)
        for ky in range(3):
            base = soff + (ky - 1) * Wp
            acc2 += jnp.dot(awide_ref[base:base + NR, :], w2_ref[ky],
                            preferred_element_type=jnp.float32)
        act2 = jnp.maximum(acc2 + b2_ref[...], 0.0)

        # ---- AdaptiveAvgPool2d(7) as one (49,NR)@(NR,C2) matmul -------------
        # (junk columns / junk rows of act2 carry zero weight in s_ref)
        pool_ref[img] = jnp.dot(s_ref[...], act2,
                                preferred_element_type=jnp.float32)

    # ---- fc1 + ReLU: 49 accumulated (IMGS, C2) @ (C2, N1) chunks -----------
    # fc1_w rows were pre-permuted to (pool_pos, channel) order, so pooled
    # position p pairs with weight rows [p*C2, (p+1)*C2) -- no in-kernel
    # flatten/relayout; the 1.6 MB bf16 weight streams once per IMGS images.
    n_pos = wfc1_ref.shape[0] // C2
    h = jnp.zeros((IMGS, N1), jnp.float32)
    for p in range(n_pos):
        if IMGS == 1:
            lhs = pool_ref[0, p:p + 1, :]
        else:
            lhs = jnp.concatenate(
                [pool_ref[i, p:p + 1, :] for i in range(IMGS)], axis=0)
        h += jnp.dot(lhs.astype(wfc1_ref.dtype),
                     wfc1_ref[p * C2:(p + 1) * C2, :],
                     preferred_element_type=jnp.float32)
    h = jnp.maximum(h + bfc1_ref[...], 0.0)

    # ---- fc2 (output zero-padded to 128 lanes -> dense vst) ----------------
    out = jnp.dot(h, wfc2_ref[...], preferred_element_type=jnp.float32)
    o_ref[0] = (out + bfc2_ref[...]).astype(o_ref.dtype)


# ---------------------------------------------------------------------------
# Wrapper
# ---------------------------------------------------------------------------
def simple_model2_forward(x_nchw, kp, imgs_per_step=None, n_out=3):
    """x_nchw: (B, 3, H, W) f32; kp: kernel-layout params from prepare_params."""
    B, Cin, H, W = x_nchw.shape
    Wp, NR, _, pad_rows = _wide_dims(H, W)
    assert kp["pool_s"].shape == (49, NR), "params prepared for a different H/W"

    if imgs_per_step is None:
        # keep >= 2 grid steps when possible so both v7x TensorCores get work
        imgs_per_step = max(1, min(8, B // 2))
    IMGS = imgs_per_step
    n_steps = -(-B // IMGS)
    B_pad = n_steps * IMGS

    # Wrapper-side layout glue: NCHW -> zero-padded NHWC -> im2col (K=27 rows)
    x = jnp.transpose(x_nchw, (0, 2, 3, 1)).astype(jnp.float32)       # NHWC
    xp = jnp.pad(x, ((0, 0), (1, 1), (1, 1), (0, 0)))                 # zero pad
    taps = [xp[:, ky:ky + H, kx:kx + W, :]
            for ky in range(3) for kx in range(3)]
    cols = jnp.stack(taps, axis=3).reshape(B, H, W, 9 * Cin)           # (B,H,W,27)
    cols = jnp.pad(cols, ((0, B_pad - B), (0, 0), (0, Wp - W), (0, 0)))  # junk cols -> 0
    cols = cols.reshape(B_pad, NR, 9 * Cin)

    C1 = kp["conv1_w"].shape[1]
    C2 = kp["conv2_w"].shape[2]
    N2p = kp["fc2_w"].shape[1]

    def fullspec(shape):
        n = len(shape)
        return pl.BlockSpec(shape, lambda b, n=n: (0,) * n)

    out = pl.pallas_call(
        functools.partial(fused_forward_kernel, H=H, W=W),
        out_shape=jax.ShapeDtypeStruct((n_steps, IMGS, N2p), jnp.float32),
        grid=(n_steps,),
        in_specs=[
            pl.BlockSpec((IMGS, NR, 9 * Cin), lambda b: (b, 0, 0)),
            fullspec(kp["pool_s"].shape),
            fullspec(kp["conv1_w"].shape), fullspec(kp["conv1_b"].shape),
            fullspec(kp["conv2_w"].shape), fullspec(kp["conv2_b"].shape),
            fullspec(kp["fc1_w"].shape),   fullspec(kp["fc1_b"].shape),
            fullspec(kp["fc2_w"].shape),   fullspec(kp["fc2_b"].shape),
        ],
        out_specs=pl.BlockSpec((1, IMGS, N2p), lambda b: (b, 0, 0)),
        scratch_shapes=[
            pltpu.VMEM((pad_rows, 3 * C1), jnp.float32),   # conv2 K=96 operand
            pltpu.VMEM((IMGS, 49, C2), jnp.float32),       # pooled activations
        ],
        compiler_params=pltpu.CompilerParams(
            dimension_semantics=("parallel",)),
    )(cols, kp["pool_s"],
      kp["conv1_w"], kp["conv1_b"],
      kp["conv2_w"], kp["conv2_b"],
      kp["fc1_w"], kp["fc1_b"],
      kp["fc2_w"], kp["fc2_b"])

    return out.reshape(B_pad, N2p)[:B, :n_out]


# ---------------------------------------------------------------------------
# Parameters: synthetic PyTorch-layout weights + one-time kernel-layout prep
# ---------------------------------------------------------------------------
def init_torch_layout_params(key):
    ks = jax.random.split(key, 8)

    def u(k, shape, fan_in):
        b = 1.0 / jnp.sqrt(fan_in)
        return jax.random.uniform(k, shape, jnp.float32, -b, b)

    return {
        "conv1_w": u(ks[0], (32, 3, 3, 3), 3 * 9),     # OIHW
        "conv1_b": u(ks[1], (32,), 3 * 9),
        "conv2_w": u(ks[2], (64, 32, 3, 3), 32 * 9),
        "conv2_b": u(ks[3], (64,), 32 * 9),
        "fc1_w":  u(ks[4], (256, 64 * 7 * 7), 64 * 7 * 7),   # (out, in)
        "fc1_b":  u(ks[5], (256,), 64 * 7 * 7),
        "fc2_w":  u(ks[6], (3, 256), 256),
        "fc2_b":  u(ks[7], (3,), 256),
    }


def prepare_params(tp, H, W):
    """One-time conversion of PyTorch-layout params into kernel layouts."""
    C1 = tp["conv1_w"].shape[0]       # 32
    Ci = tp["conv1_w"].shape[1]       # 3
    C2 = tp["conv2_w"].shape[0]       # 64
    Wp, NR, _, _ = _wide_dims(H, W)

    # conv1: OIHW -> (27, 32), row = (ky*3+kx)*Cin + cin (matches im2col order)
    w1 = jnp.transpose(tp["conv1_w"], (2, 3, 1, 0)).reshape(9 * Ci, C1)
    # conv2: OIHW -> (ky, 96, 64), middle index = kx*C1 + cin (matches awide blocks)
    w2 = jnp.transpose(tp["conv2_w"], (2, 3, 1, 0)).reshape(3, 3 * C1, C2)

    # fc1: PyTorch flattens NCHW (in-index = c*49 + p); the kernel consumes
    # pooled activations in (p, c) order -> permute the rows once, store bf16.
    wt = tp["fc1_w"]                                         # (N1, C2*49)
    n1 = wt.shape[0]
    wk = jnp.transpose(wt.T.reshape(C2, 49, n1), (1, 0, 2)).reshape(49 * C2, n1)

    # fc2: transpose and zero-pad the 3 outputs up to 128 lanes (dense store)
    n2 = tp["fc2_w"].shape[0]
    n2p = 128
    wfc2 = jnp.zeros((n1, n2p), jnp.float32).at[:, :n2].set(tp["fc2_w"].T)
    bfc2 = jnp.zeros((1, n2p), jnp.float32).at[0, :n2].set(tp["fc2_b"])

    # AdaptiveAvgPool2d(7) as a linear map from the wide conv2 layout
    # (general adaptive bins: start=floor(i*H/7), end=ceil((i+1)*H/7)).
    S = np.zeros((49, NR), np.float32)
    for ph in range(7):
        y0, y1 = (ph * H) // 7, -((-(ph + 1) * H) // 7)
        for pw in range(7):
            x0, x1 = (pw * W) // 7, -((-(pw + 1) * W) // 7)
            wgt = 1.0 / ((y1 - y0) * (x1 - x0))
            for yy in range(y0, y1):
                for xx in range(x0, x1):
                    S[ph * 7 + pw, yy * Wp + xx] = wgt

    return {
        "conv1_w": w1, "conv1_b": tp["conv1_b"].reshape(1, C1),
        "conv2_w": w2, "conv2_b": tp["conv2_b"].reshape(1, C2),
        "fc1_w": wk.astype(jnp.bfloat16), "fc1_b": tp["fc1_b"].reshape(1, n1),
        "fc2_w": wfc2, "fc2_b": bfc2,
        "pool_s": jnp.asarray(S),
    }


# ---------------------------------------------------------------------------
# Pure-JAX reference (PyTorch semantics) for a correctness check
# ---------------------------------------------------------------------------
def reference_forward(x_nchw, tp):
    dn = ("NCHW", "OIHW", "NCHW")
    y = jax.lax.conv_general_dilated(x_nchw, tp["conv1_w"], (1, 1),
                                     ((1, 1), (1, 1)), dimension_numbers=dn)
    y = jax.nn.relu(y + tp["conv1_b"][None, :, None, None])
    y = jax.lax.conv_general_dilated(y, tp["conv2_w"], (1, 1),
                                     ((1, 1), (1, 1)), dimension_numbers=dn)
    y = jax.nn.relu(y + tp["conv2_b"][None, :, None, None])
    B, C, H, W = y.shape
    y = y.reshape(B, C, 7, H // 7, 7, W // 7).mean(axis=(3, 5))  # exact for 14x14
    y = y.reshape(B, -1)
    # match the kernel's deliberate bf16 fc1 path so the check isolates bugs
    w1 = tp["fc1_w"].astype(jnp.bfloat16).astype(jnp.float32)
    y = y.astype(jnp.bfloat16).astype(jnp.float32)
    y = jax.nn.relu(y @ w1.T + tp["fc1_b"])
    return y @ tp["fc2_w"].T + tp["fc2_b"]


if __name__ == "__main__":
    B, H, W = 2, 14, 14   # small; 14 divisible by 7 -> pool is an exact 2x2 mean
    key = jax.random.PRNGKey(0)
    pkey, xkey = jax.random.split(key)
    torch_params = init_torch_layout_params(pkey)
    kparams = prepare_params(torch_params, H, W)
    x = jax.random.normal(xkey, (B, 3, H, W), dtype=jnp.float32)

    fwd = jax.jit(simple_model2_forward)
    out = jax.block_until_ready(fwd(x, kparams))
    assert out.shape == (B, 3) and out.dtype == jnp.float32

    ref = reference_forward(x, torch_params)
    max_err = float(jnp.max(jnp.abs(out - ref)))
    assert jnp.allclose(out, ref, rtol=1e-3, atol=1e-3), f"max_err={max_err}"
    print("KERNEL_OK")
</pallas_src>

<mosaic_0001>
module attributes {stable_mosaic.version = 11 : i64} {
  func.func @fused_forward_kernel(%arg0: i32, %arg1: memref<1x224x27xf32, #tpu.memory_space<vmem>>, %arg2: memref<49x224xf32, #tpu.memory_space<vmem>>, %arg3: memref<27x32xf32, #tpu.memory_space<vmem>>, %arg4: memref<1x32xf32, #tpu.memory_space<vmem>>, %arg5: memref<3x96x64xf32, #tpu.memory_space<vmem>>, %arg6: memref<1x64xf32, #tpu.memory_space<vmem>>, %arg7: memref<3136x256xbf16, #tpu.memory_space<vmem>>, %arg8: memref<1x256xf32, #tpu.memory_space<vmem>>, %arg9: memref<256x128xf32, #tpu.memory_space<vmem>>, %arg10: memref<1x128xf32, #tpu.memory_space<vmem>>, %arg11: memref<1x1x128xf32, #tpu.memory_space<vmem>>, %arg12: memref<264x96xf32, #tpu.memory_space<vmem>>, %arg13: memref<1x49x64xf32, #tpu.memory_space<vmem>>) attributes {dimension_semantics = [#tpu.dimension_semantics<parallel>], iteration_bounds = array<i64: 2>, scalar_prefetch = 0 : i64, scratch_operands = 2 : i64, tpu.core_type = #tpu.core_type<tc>, window_params = [{transform_indices = @transform_0, window_bounds = array<i64: 1, 224, 27>}, {pipeline_mode = #tpu.pipeline_mode<synchronous>, transform_indices = @transform_1, window_bounds = array<i64: 49, 224>}, {pipeline_mode = #tpu.pipeline_mode<synchronous>, transform_indices = @transform_2, window_bounds = array<i64: 27, 32>}, {pipeline_mode = #tpu.pipeline_mode<synchronous>, transform_indices = @transform_3, window_bounds = array<i64: 1, 32>}, {pipeline_mode = #tpu.pipeline_mode<synchronous>, transform_indices = @transform_4, window_bounds = array<i64: 3, 96, 64>}, {pipeline_mode = #tpu.pipeline_mode<synchronous>, transform_indices = @transform_5, window_bounds = array<i64: 1, 64>}, {pipeline_mode = #tpu.pipeline_mode<synchronous>, transform_indices = @transform_6, window_bounds = array<i64: 3136, 256>}, {pipeline_mode = #tpu.pipeline_mode<synchronous>, transform_indices = @transform_7, window_bounds = array<i64: 1, 256>}, {pipeline_mode = #tpu.pipeline_mode<synchronous>, transform_indices = @transform_8, window_bounds = array<i64: 256, 128>}, {pipeline_mode = #tpu.pipeline_mode<synchronous>, transform_indices = @transform_9, window_bounds = array<i64: 1, 128>}, {transform_indices = @transform_10, window_bounds = array<i64: 1, 1, 128>}]} {
    %cst = arith.constant 0.000000e+00 : f32
    %0 = vector.broadcast %cst : f32 to vector<25x96xf32>
    %c0 = arith.constant 0 : index
    %c0_0 = arith.constant 0 : index
    %1 = vector.load %arg12[%c0, %c0_0] : memref<264x96xf32, #tpu.memory_space<vmem>>, vector<25x96xf32>
    tpu.vector_store %arg12[%c0, %c0_0], %0 {strides = array<i32>} : memref<264x96xf32, #tpu.memory_space<vmem>>, vector<25x96xf32>,
    %cst_1 = arith.constant 0.000000e+00 : f32
    %2 = vector.broadcast %cst_1 : f32 to vector<17x96xf32>
    %c247 = arith.constant 247 : index
    %c0_2 = arith.constant 0 : index
    %3 = vector.load %arg12[%c247, %c0_2] : memref<264x96xf32, #tpu.memory_space<vmem>>, vector<17x96xf32>
    tpu.vector_store %arg12[%c247, %c0_2], %2 {strides = array<i32>} : memref<264x96xf32, #tpu.memory_space<vmem>>, vector<17x96xf32>,
    %4 = tpu.iota {dimensions = array<i32: 0>} : vector<224x1xi32>
    %c16_i32 = arith.constant 16 : i32
    %c0_i32 = arith.constant 0 : i32
    %5 = arith.cmpi eq, %c16_i32, %c0_i32 : i32
    %c1_i32 = arith.constant 1 : i32
    %6 = arith.select %5, %c1_i32, %c16_i32 : i32
    %7 = vector.broadcast %6 : i32 to vector<224x1xi32>
    %8 = arith.remsi %4, %7 : vector<224x1xi32>
    %c0_i32_3 = arith.constant 0 : i32
    %9 = vector.broadcast %c0_i32_3 : i32 to vector<224x1xi32>
    %10 = arith.cmpi ne, %8, %9 : vector<224x1xi32>
    %c0_i32_4 = arith.constant 0 : i32
    %11 = vector.broadcast %c0_i32_4 : i32 to vector<224x1xi32>
    %12 = arith.cmpi slt, %8, %11 : vector<224x1xi32>
    %c0_i32_5 = arith.constant 0 : i32
    %13 = arith.cmpi slt, %6, %c0_i32_5 : i32
    %14 = vector.broadcast %13 : i1 to vector<224x1xi1>
    %15 = vector.broadcast %14 : vector<224x1xi1> to vector<224x1xi1>
    %16 = arith.xori %12, %15 : vector<224x1xi1>
    %17 = arith.andi %16, %10 : vector<224x1xi1>
    %18 = vector.broadcast %6 : i32 to vector<224x1xi32>
    %19 = arith.addi %8, %18 : vector<224x1xi32>
    %20 = arith.select %17, %19, %8 : vector<224x1xi1>, vector<224x1xi32>
    %c14_i32 = arith.constant 14 : i32
    %21 = vector.broadcast %c14_i32 : i32 to vector<224x1xi32>
    %22 = arith.cmpi slt, %20, %21 : vector<224x1xi32>
    %c0_6 = arith.constant 0 : index
    %c0_7 = arith.constant 0 : index
    %c0_8 = arith.constant 0 : index
    %23 = vector.load %arg1[%c0_6, %c0_7, %c0_8] : memref<1x224x27xf32, #tpu.memory_space<vmem>>, vector<1x224x27xf32>
    %24 = vector.shape_cast %23 : vector<1x224x27xf32> to vector<224x27xf32>
    %c0_9 = arith.constant 0 : index
    %c0_10 = arith.constant 0 : index
    %25 = vector.load %arg3[%c0_9, %c0_10] : memref<27x32xf32, #tpu.memory_space<vmem>>, vector<27x32xf32>
    %cst_11 = arith.constant dense<0.000000e+00> : vector<224x32xf32>
    %26 = tpu.matmul %24, %25, %cst_11 {dimension_numbers = #tpu.dot_dimension_numbers<[1], [0], [0], [1], [0, 0, 1, 1], [], []>} : vector<224x27xf32>, vector<27x32xf32>, vector<224x32xf32> -> vector<224x32xf32>
    %c0_12 = arith.constant 0 : index
    %c0_13 = arith.constant 0 : index
    %27 = vector.load %arg4[%c0_12, %c0_13] : memref<1x32xf32, #tpu.memory_space<vmem>>, vector<1x32xf32>
    %28 = vector.broadcast %27 : vector<1x32xf32> to vector<224x32xf32>
    %29 = arith.addf %26, %28 : vector<224x32xf32>
    %cst_14 = arith.constant 0.000000e+00 : f32
    %30 = vector.broadcast %cst_14 : f32 to vector<224x32xf32>
    %31 = arith.maximumf %29, %30 : vector<224x32xf32>
    %cst_15 = arith.constant 0.000000e+00 : f32
    %32 = vector.shape_cast %22 : vector<224x1xi1> to vector<224x1xi1>
    %33 = vector.broadcast %32 : vector<224x1xi1> to vector<224x32xi1>
    %34 = vector.broadcast %cst_15 : f32 to vector<224x32xf32>
    %35 = arith.select %33, %31, %34 : vector<224x32xi1>, vector<224x32xf32>
    %c25 = arith.constant 25 : index
    %c0_16 = arith.constant 0 : index
    %36 = vector.load %arg12[%c25, %c0_16] : memref<264x96xf32, #tpu.memory_space<vmem>>, vector<224x32xf32>
    tpu.vector_store %arg12[%c25, %c0_16], %35 {strides = array<i32>} : memref<264x96xf32, #tpu.memory_space<vmem>>, vector<224x32xf32>,
    %c24 = arith.constant 24 : index
    %c32 = arith.constant 32 : index
    %37 = vector.load %arg12[%c24, %c32] : memref<264x96xf32, #tpu.memory_space<vmem>>, vector<224x32xf32>
    tpu.vector_store %arg12[%c24, %c32], %35 {strides = array<i32>} : memref<264x96xf32, #tpu.memory_space<vmem>>, vector<224x32xf32>,
    %c23 = arith.constant 23 : index
    %c64 = arith.constant 64 : index
    %38 = vector.load %arg12[%c23, %c64] : memref<264x96xf32, #tpu.memory_space<vmem>>, vector<224x32xf32>
    tpu.vector_store %arg12[%c23, %c64], %35 {strides = array<i32>} : memref<264x96xf32, #tpu.memory_space<vmem>>, vector<224x32xf32>,
    %cst_17 = arith.constant 0.000000e+00 : f32
    %39 = vector.broadcast %cst_17 : f32 to vector<224x64xf32>
    %c8 = arith.constant 8 : index
    %c0_18 = arith.constant 0 : index
    %40 = vector.load %arg12[%c8, %c0_18] : memref<264x96xf32, #tpu.memory_space<vmem>>, vector<224x96xf32>
    %c0_19 = arith.constant 0 : index
    %c0_20 = arith.constant 0 : index
    %c0_21 = arith.constant 0 : index
    %41 = vector.load %arg5[%c0_19, %c0_20, %c0_21] : memref<3x96x64xf32, #tpu.memory_space<vmem>>, vector<1x96x64xf32>
    %42 = vector.shape_cast %41 : vector<1x96x64xf32> to vector<96x64xf32>
    %cst_22 = arith.constant dense<0.000000e+00> : vector<224x64xf32>
    %43 = tpu.matmul %40, %42, %cst_22 {dimension_numbers = #tpu.dot_dimension_numbers<[1], [0], [0], [1], [0, 0, 1, 1], [], []>} : vector<224x96xf32>, vector<96x64xf32>, vector<224x64xf32> -> vector<224x64xf32>
    %44 = arith.addf %39, %43 : vector<224x64xf32>
    %c24_23 = arith.constant 24 : index
    %c0_24 = arith.constant 0 : index
    %45 = vector.load %arg12[%c24_23, %c0_24] : memref<264x96xf32, #tpu.memory_space<vmem>>, vector<224x96xf32>
    %c1 = arith.constant 1 : index
    %c0_25 = arith.constant 0 : index
    %c0_26 = arith.constant 0 : index
    %46 = vector.load %arg5[%c1, %c0_25, %c0_26] : memref<3x96x64xf32, #tpu.memory_space<vmem>>, vector<1x96x64xf32>
    %47 = vector.shape_cast %46 : vector<1x96x64xf32> to vector<96x64xf32>
    %cst_27 = arith.constant dense<0.000000e+00> : vector<224x64xf32>
    %48 = tpu.matmul %45, %47, %cst_27 {dimension_numbers = #tpu.dot_dimension_numbers<[1], [0], [0], [1], [0, 0, 1, 1], [], []>} : vector<224x96xf32>, vector<96x64xf32>, vector<224x64xf32> -> vector<224x64xf32>
    %49 = arith.addf %44, %48 : vector<224x64xf32>
    %c40 = arith.constant 40 : index
    %c0_28 = arith.constant 0 : index
    %50 = vector.load %arg12[%c40, %c0_28] : memref<264x96xf32, #tpu.memory_space<vmem>>, vector<224x96xf32>
    %c2 = arith.constant 2 : index
    %c0_29 = arith.constant 0 : index
    %c0_30 = arith.constant 0 : index
    %51 = vector.load %arg5[%c2, %c0_29, %c0_30] : memref<3x96x64xf32, #tpu.memory_space<vmem>>, vector<1x96x64xf32>
    %52 = vector.shape_cast %51 : vector<1x96x64xf32> to vector<96x64xf32>
    %cst_31 = arith.constant dense<0.000000e+00> : vector<224x64xf32>
    %53 = tpu.matmul %50, %52, %cst_31 {dimension_numbers = #tpu.dot_dimension_numbers<[1], [0], [0], [1], [0, 0, 1, 1], [], []>} : vector<224x96xf32>, vector<96x64xf32>, vector<224x64xf32> -> vector<224x64xf32>
    %54 = arith.addf %49, %53 : vector<224x64xf32>
    %c0_32 = arith.constant 0 : index
    %c0_33 = arith.constant 0 : index
    %55 = vector.load %arg6[%c0_32, %c0_33] : memref<1x64xf32, #tpu.memory_space<vmem>>, vector<1x64xf32>
    %56 = vector.broadcast %55 : vector<1x64xf32> to vector<224x64xf32>
    %57 = arith.addf %54, %56 : vector<224x64xf32>
    %cst_34 = arith.constant 0.000000e+00 : f32
    %58 = vector.broadcast %cst_34 : f32 to vector<224x64xf32>
    %59 = arith.maximumf %57, %58 : vector<224x64xf32>
    %c0_35 = arith.constant 0 : index
    %c0_36 = arith.constant 0 : index
    %60 = vector.load %arg2[%c0_35, %c0_36] : memref<49x224xf32, #tpu.memory_space<vmem>>, vector<49x224xf32>
    %cst_37 = arith.constant dense<0.000000e+00> : vector<49x64xf32>
    %61 = tpu.matmul %60, %59, %cst_37 {dimension_numbers = #tpu.dot_dimension_numbers<[1], [0], [0], [1], [0, 0, 1, 1], [], []>} : vector<49x224xf32>, vector<224x64xf32>, vector<49x64xf32> -> vector<49x64xf32>
    %c0_38 = arith.constant 0 : index
    %c0_39 = arith.constant 0 : index
    %c0_40 = arith.constant 0 : index
    %62 = vector.load %arg13[%c0_38, %c0_39, %c0_40] : memref<1x49x64xf32, #tpu.memory_space<vmem>>, vector<1x49x64xf32>
    %63 = vector.shape_cast %62 : vector<1x49x64xf32> to vector<49x64xf32>
    %64 = vector.shape_cast %61 : vector<49x64xf32> to vector<1x49x64xf32>
    tpu.vector_store %arg13[%c0_38, %c0_39, %c0_40], %64 {strides = array<i32>} : memref<1x49x64xf32, #tpu.memory_space<vmem>>, vector<1x49x64xf32>,
    %cst_41 = arith.constant 0.000000e+00 : f32
    %65 = vector.broadcast %cst_41 : f32 to vector<1x256xf32>
    %c0_42 = arith.constant 0 : index
    %c0_43 = arith.constant 0 : index
    %c0_44 = arith.constant 0 : index
    %66 = vector.load %arg13[%c0_42, %c0_43, %c0_44] : memref<1x49x64xf32, #tpu.memory_space<vmem>>, vector<1x1x64xf32>
    %67 = vector.shape_cast %66 : vector<1x1x64xf32> to vector<1x64xf32>
    %68 = arith.truncf %67 : vector<1x64xf32> to vector<1x64xbf16>
    %c0_45 = arith.constant 0 : index
    %c0_46 = arith.constant 0 : index
    %69 = vector.load %arg7[%c0_45, %c0_46] : memref<3136x256xbf16, #tpu.memory_space<vmem>>, vector<64x256xbf16>
    %cst_47 = arith.constant dense<0.000000e+00> : vector<1x256xf32>
    %70 = tpu.matmul %68, %69, %cst_47 {dimension_numbers = #tpu.dot_dimension_numbers<[1], [0], [0], [1], [0, 0, 1, 1], [], []>} : vector<1x64xbf16>, vector<64x256xbf16>, vector<1x256xf32> -> vector<1x256xf32>
    %71 = arith.addf %65, %70 : vector<1x256xf32>
    %c0_48 = arith.constant 0 : index
    %c1_49 = arith.constant 1 : index
    %c0_50 = arith.constant 0 : index
    %72 = vector.load %arg13[%c0_48, %c1_49, %c0_50] : memref<1x49x64xf32, #tpu.memory_space<vmem>>, vector<1x1x64xf32>
    %73 = vector.shape_cast %72 : vector<1x1x64xf32> to vector<1x64xf32>
    %74 = arith.truncf %73 : vector<1x64xf32> to vector<1x64xbf16>
    %c64_51 = arith.constant 64 : index
    %c0_52 = arith.constant 0 : index
    %75 = vector.load %arg7[%c64_51, %c0_52] : memref<3136x256xbf16, #tpu.memory_space<vmem>>, vector<64x256xbf16>
    %cst_53 = arith.constant dense<0.000000e+00> : vector<1x256xf32>
    %76 = tpu.matmul %74, %75, %cst_53 {dimension_numbers = #tpu.dot_dimension_numbers<[1], [0], [0], [1], [0, 0, 1, 1], [], []>} : vector<1x64xbf16>, vector<64x256xbf16>, vector<1x256xf32> -> vector<1x256xf32>
    %77 = arith.addf %71, %76 : vector<1x256xf32>
    %c0_54 = arith.constant 0 : index
    %c2_55 = arith.constant 2 : index
    %c0_56 = arith.constant 0 : index
    %78 = vector.load %arg13[%c0_54, %c2_55, %c0_56] : memref<1x49x64xf32, #tpu.memory_space<vmem>>, vector<1x1x64xf32>
    %79 = vector.shape_cast %78 : vector<1x1x64xf32> to vector<1x64xf32>
    %80 = arith.truncf %79 : vector<1x64xf32> to vector<1x64xbf16>
    %c128 = arith.constant 128 : index
    %c0_57 = arith.constant 0 : index
    %81 = vector.load %arg7[%c128, %c0_57] : memref<3136x256xbf16, #tpu.memory_space<vmem>>, vector<64x256xbf16>
    %cst_58 = arith.constant dense<0.000000e+00> : vector<1x256xf32>
    %82 = tpu.matmul %80, %81, %cst_58 {dimension_numbers = #tpu.dot_dimension_numbers<[1], [0], [0], [1], [0, 0, 1, 1], [], []>} : vector<1x64xbf16>, vector<64x256xbf16>, vector<1x256xf32> -> vector<1x256xf32>
    %83 = arith.addf %77, %82 : vector<1x256xf32>
    %c0_59 = arith.constant 0 : index
    %c3 = arith.constant 3 : index
    %c0_60 = arith.constant 0 : index
    %84 = vector.load %arg13[%c0_59, %c3, %c0_60] : memref<1x49x64xf32, #tpu.memory_space<vmem>>, vector<1x1x64xf32>
    %85 = vector.shape_cast %84 : vector<1x1x64xf32> to vector<1x64xf32>
    %86 = arith.truncf %85 : vector<1x64xf32> to vector<1x64xbf16>
    %c192 = arith.constant 192 : index
    %c0_61 = arith.constant 0 : index
    %87 = vector.load %arg7[%c192, %c0_61] : memref<3136x256xbf16, #tpu.memory_space<vmem>>, vector<64x256xbf16>
    %cst_62 = arith.constant dense<0.000000e+00> : vector<1x256xf32>
    %88 = tpu.matmul %86, %87, %cst_62 {dimension_numbers = #tpu.dot_dimension_numbers<[1], [0], [0], [1], [0, 0, 1, 1], [], []>} : vector<1x64xbf16>, vector<64x256xbf16>, vector<1x256xf32> -> vector<1x256xf32>
    %89 = arith.addf %83, %88 : vector<1x256xf32>
    %c0_63 = arith.constant 0 : index
    %c4 = arith.constant 4 : index
    %c0_64 = arith.constant 0 : index
    %90 = vector.load %arg13[%c0_63, %c4, %c0_64] : memref<1x49x64xf32, #tpu.memory_space<vmem>>, vector<1x1x64xf32>
    %91 = vector.shape_cast %90 : vector<1x1x64xf32> to vector<1x64xf32>
    %92 = arith.truncf %91 : vector<1x64xf32> to vector<1x64xbf16>
    %c256 = arith.constant 256 : index
    %c0_65 = arith.constant 0 : index
    %93 = vector.load %arg7[%c256, %c0_65] : memref<3136x256xbf16, #tpu.memory_space<vmem>>, vector<64x256xbf16>
    %cst_66 = arith.constant dense<0.000000e+00> : vector<1x256xf32>
    %94 = tpu.matmul %92, %93, %cst_66 {dimension_numbers = #tpu.dot_dimension_numbers<[1], [0], [0], [1], [0, 0, 1, 1], [], []>} : vector<1x64xbf16>, vector<64x256xbf16>, vector<1x256xf32> -> vector<1x256xf32>
    %95 = arith.addf %89, %94 : vector<1x256xf32>
    %c0_67 = arith.constant 0 : index
    %c5 = arith.constant 5 : index
    %c0_68 = arith.constant 0 : index
    %96 = vector.load %arg13[%c0_67, %c5, %c0_68] : memref<1x49x64xf32, #tpu.memory_space<vmem>>, vector<1x1x64xf32>
    %97 = vector.shape_cast %96 : vector<1x1x64xf32> to vector<1x64xf32>
    %98 = arith.truncf %97 : vector<1x64xf32> to vector<1x64xbf16>
    %c320 = arith.constant 320 : index
    %c0_69 = arith.constant 0 : index
    %99 = vector.load %arg7[%c320, %c0_69] : memref<3136x256xbf16, #tpu.memory_space<vmem>>, vector<64x256xbf16>
    %cst_70 = arith.constant dense<0.000000e+00> : vector<1x256xf32>
    %100 = tpu.matmul %98, %99, %cst_70 {dimension_numbers = #tpu.dot_dimension_numbers<[1], [0], [0], [1], [0, 0, 1, 1], [], []>} : vector<1x64xbf16>, vector<64x256xbf16>, vector<1x256xf32> -> vector<1x256xf32>
    %101 = arith.addf %95, %100 : vector<1x256xf32>
    %c0_71 = arith.constant 0 : index
    %c6 = arith.constant 6 : index
    %c0_72 = arith.constant 0 : index
    %102 = vector.load %arg13[%c0_71, %c6, %c0_72] : memref<1x49x64xf32, #tpu.memory_space<vmem>>, vector<1x1x64xf32>
    %103 = vector.shape_cast %102 : vector<1x1x64xf32> to vector<1x64xf32>
    %104 = arith.truncf %103 : vector<1x64xf32> to vector<1x64xbf16>
    %c384 = arith.constant 384 : index
    %c0_73 = arith.constant 0 : index
    %105 = vector.load %arg7[%c384, %c0_73] : memref<3136x256xbf16, #tpu.memory_space<vmem>>, vector<64x256xbf16>
    %cst_74 = arith.constant dense<0.000000e+00> : vector<1x256xf32>
    %106 = tpu.matmul %104, %105, %cst_74 {dimension_numbers = #tpu.dot_dimension_numbers<[1], [0], [0], [1], [0, 0, 1, 1], [], []>} : vector<1x64xbf16>, vector<64x256xbf16>, vector<1x256xf32> -> vector<1x256xf32>
    %107 = arith.addf %101, %106 : vector<1x256xf32>
    %c0_75 = arith.constant 0 : index
    %c7 = arith.constant 7 : index
    %c0_76 = arith.constant 0 : index
    %108 = vector.load %arg13[%c0_75, %c7, %c0_76] : memref<1x49x64xf32, #tpu.memory_space<vmem>>, vector<1x1x64xf32>
    %109 = vector.shape_cast %108 : vector<1x1x64xf32> to vector<1x64xf32>
    %110 = arith.truncf %109 : vector<1x64xf32> to vector<1x64xbf16>
    %c448 = arith.constant 448 : index
    %c0_77 = arith.constant 0 : index
    %111 = vector.load %arg7[%c448, %c0_77] : memref<3136x256xbf16, #tpu.memory_space<vmem>>, vector<64x256xbf16>
    %cst_78 = arith.constant dense<0.000000e+00> : vector<1x256xf32>
    %112 = tpu.matmul %110, %111, %cst_78 {dimension_numbers = #tpu.dot_dimension_numbers<[1], [0], [0], [1], [0, 0, 1, 1], [], []>} : vector<1x64xbf16>, vector<64x256xbf16>, vector<1x256xf32> -> vector<1x256xf32>
    %113 = arith.addf %107, %112 : vector<1x256xf32>
    %c0_79 = arith.constant 0 : index
    %c8_80 = arith.constant 8 : index
    %c0_81 = arith.constant 0 : index
    %114 = vector.load %arg13[%c0_79, %c8_80, %c0_81] : memref<1x49x64xf32, #tpu.memory_space<vmem>>, vector<1x1x64xf32>
    %115 = vector.shape_cast %114 : vector<1x1x64xf32> to vector<1x64xf32>
    %116 = arith.truncf %115 : vector<1x64xf32> to vector<1x64xbf16>
    %c512 = arith.constant 512 : index
    %c0_82 = arith.constant 0 : index
    %117 = vector.load %arg7[%c512, %c0_82] : memref<3136x256xbf16, #tpu.memory_space<vmem>>, vector<64x256xbf16>
    %cst_83 = arith.constant dense<0.000000e+00> : vector<1x256xf32>
    %118 = tpu.matmul %116, %117, %cst_83 {dimension_numbers = #tpu.dot_dimension_numbers<[1], [0], [0], [1], [0, 0, 1, 1], [], []>} : vector<1x64xbf16>, vector<64x256xbf16>, vector<1x256xf32> -> vector<1x256xf32>
    %119 = arith.addf %113, %118 : vector<1x256xf32>
    %c0_84 = arith.constant 0 : index
    %c9 = arith.constant 9 : index
    %c0_85 = arith.constant 0 : index
    %120 = vector.load %arg13[%c0_84, %c9, %c0_85] : memref<1x49x64xf32, #tpu.memory_space<vmem>>, vector<1x1x64xf32>
    %121 = vector.shape_cast %120 : vector<1x1x64xf32> to vector<1x64xf32>
    %122 = arith.truncf %121 : vector<1x64xf32> to vector<1x64xbf16>
    %c576 = arith.constant 576 : index
    %c0_86 = arith.constant 0 : index
    %123 = vector.load %arg7[%c576, %c0_86] : memref<3136x256xbf16, #tpu.memory_space<vmem>>, vector<64x256xbf16>
    %cst_87 = arith.constant dense<0.000000e+00> : vector<1x256xf32>
    %124 = tpu.matmul %122, %123, %cst_87 {dimension_numbers = #tpu.dot_dimension_numbers<[1], [0], [0], [1], [0, 0, 1, 1], [], []>} : vector<1x64xbf16>, vector<64x256xbf16>, vector<1x256xf32> -> vector<1x256xf32>
    %125 = arith.addf %119, %124 : vector<1x256xf32>
    %c0_88 = arith.constant 0 : index
    %c10 = arith.constant 10 : index
    %c0_89 = arith.constant 0 : index
    %126 = vector.load %arg13[%c0_88, %c10, %c0_89] : memref<1x49x64xf32, #tpu.memory_space<vmem>>, vector<1x1x64xf32>
    %127 = vector.shape_cast %126 : vector<1x1x64xf32> to vector<1x64xf32>
    %128 = arith.truncf %127 : vector<1x64xf32> to vector<1x64xbf16>
    %c640 = arith.constant 640 : index
    %c0_90 = arith.constant 0 : index
    %129 = vector.load %arg7[%c640, %c0_90] : memref<3136x256xbf16, #tpu.memory_space<vmem>>, vector<64x256xbf16>
    %cst_91 = arith.constant dense<0.000000e+00> : vector<1x256xf32>
    %130 = tpu.matmul %128, %129, %cst_91 {dimension_numbers = #tpu.dot_dimension_numbers<[1], [0], [0], [1], [0, 0, 1, 1], [], []>} : vector<1x64xbf16>, vector<64x256xbf16>, vector<1x256xf32> -> vector<1x256xf32>
    %131 = arith.addf %125, %130 : vector<1x256xf32>
    %c0_92 = arith.constant 0 : index
    %c11 = arith.constant 11 : index
    %c0_93 = arith.constant 0 : index
    %132 = vector.load %arg13[%c0_92, %c11, %c0_93] : memref<1x49x64xf32, #tpu.memory_space<vmem>>, vector<1x1x64xf32>
    %133 = vector.shape_cast %132 : vector<1x1x64xf32> to vector<1x64xf32>
    %134 = arith.truncf %133 : vector<1x64xf32> to vector<1x64xbf16>
    %c704 = arith.constant 704 : index
    %c0_94 = arith.constant 0 : index
    %135 = vector.load %arg7[%c704, %c0_94] : memref<3136x256xbf16, #tpu.memory_space<vmem>>, vector<64x256xbf16>
    %cst_95 = arith.constant dense<0.000000e+00> : vector<1x256xf32>
    %136 = tpu.matmul %134, %135, %cst_95 {dimension_numbers = #tpu.dot_dimension_numbers<[1], [0], [0], [1], [0, 0, 1, 1], [], []>} : vector<1x64xbf16>, vector<64x256xbf16>, vector<1x256xf32> -> vector<1x256xf32>
    %137 = arith.addf %131, %136 : vector<1x256xf32>
    %c0_96 = arith.constant 0 : index
    %c12 = arith.constant 12 : index
    %c0_97 = arith.constant 0 : index
    %138 = vector.load %arg13[%c0_96, %c12, %c0_97] : memref<1x49x64xf32, #tpu.memory_space<vmem>>, vector<1x1x64xf32>
    %139 = vector.shape_cast %138 : vector<1x1x64xf32> to vector<1x64xf32>
    %140 = arith.truncf %139 : vector<1x64xf32> to vector<1x64xbf16>
    %c768 = arith.constant 768 : index
    %c0_98 = arith.constant 0 : index
    %141 = vector.load %arg7[%c768, %c0_98] : memref<3136x256xbf16, #tpu.memory_space<vmem>>, vector<64x256xbf16>
    %cst_99 = arith.constant dense<0.000000e+00> : vector<1x256xf32>
    %142 = tpu.matmul %140, %141, %cst_99 {dimension_numbers = #tpu.dot_dimension_numbers<[1], [0], [0], [1], [0, 0, 1, 1], [], []>} : vector<1x64xbf16>, vector<64x256xbf16>, vector<1x256xf32> -> vector<1x256xf32>
    %143 = arith.addf %137, %142 : vector<1x256xf32>
    %c0_100 = arith.constant 0 : index
    %c13 = arith.constant 13 : index
    %c0_101 = arith.constant 0 : index
    %144 = vector.load %arg13[%c0_100, %c13, %c0_101] : memref<1x49x64xf32, #tpu.memory_space<vmem>>, vector<1x1x64xf32>
    %145 = vector.shape_cast %144 : vector<1x1x64xf32> to vector<1x64xf32>
    %146 = arith.truncf %145 : vector<1x64xf32> to vector<1x64xbf16>
    %c832 = arith.constant 832 : index
    %c0_102 = arith.constant 0 : index
    %147 = vector.load %arg7[%c832, %c0_102] : memref<3136x256xbf16, #tpu.memory_space<vmem>>, vector<64x256xbf16>
    %cst_103 = arith.constant dense<0.000000e+00> : vector<1x256xf32>
    %148 = tpu.matmul %146, %147, %cst_103 {dimension_numbers = #tpu.dot_dimension_numbers<[1], [0], [0], [1], [0, 0, 1, 1], [], []>} : vector<1x64xbf16>, vector<64x256xbf16>, vector<1x256xf32> -> vector<1x256xf32>
    %149 = arith.addf %143, %148 : vector<1x256xf32>
    %c0_104 = arith.constant 0 : index
    %c14 = arith.constant 14 : index
    %c0_105 = arith.constant 0 : index
    %150 = vector.load %arg13[%c0_104, %c14, %c0_105] : memref<1x49x64xf32, #tpu.memory_space<vmem>>, vector<1x1x64xf32>
    %151 = vector.shape_cast %150 : vector<1x1x64xf32> to vector<1x64xf32>
    %152 = arith.truncf %151 : vector<1x64xf32> to vector<1x64xbf16>
    %c896 = arith.constant 896 : index
    %c0_106 = arith.constant 0 : index
    %153 = vector.load %arg7[%c896, %c0_106] : memref<3136x256xbf16, #tpu.memory_space<vmem>>, vector<64x256xbf16>
    %cst_107 = arith.constant dense<0.000000e+00> : vector<1x256xf32>
    %154 = tpu.matmul %152, %153, %cst_107 {dimension_numbers = #tpu.dot_dimension_numbers<[1], [0], [0], [1], [0, 0, 1, 1], [], []>} : vector<1x64xbf16>, vector<64x256xbf16>, vector<1x256xf32> -> vector<1x256xf32>
    %155 = arith.addf %149, %154 : vector<1x256xf32>
    %c0_108 = arith.constant 0 : index
    %c15 = arith.constant 15 : index
    %c0_109 = arith.constant 0 : index
    %156 = vector.load %arg13[%c0_108, %c15, %c0_109] : memref<1x49x64xf32, #tpu.memory_space<vmem>>, vector<1x1x64xf32>
    %157 = vector.shape_cast %156 : vector<1x1x64xf32> to vector<1x64xf32>
    %158 = arith.truncf %157 : vector<1x64xf32> to vector<1x64xbf16>
    %c960 = arith.constant 960 : index
    %c0_110 = arith.constant 0 : index
    %159 = vector.load %arg7[%c960, %c0_110] : memref<3136x256xbf16, #tpu.memory_space<vmem>>, vector<64x256xbf16>
    %cst_111 = arith.constant dense<0.000000e+00> : vector<1x256xf32>
    %160 = tpu.matmul %158, %159, %cst_111 {dimension_numbers = #tpu.dot_dimension_numbers<[1], [0], [0], [1], [0, 0, 1, 1], [], []>} : vector<1x64xbf16>, vector<64x256xbf16>, vector<1x256xf32> -> vector<1x256xf32>
    %161 = arith.addf %155, %160 : vector<1x256xf32>
    %c0_112 = arith.constant 0 : index
    %c16 = arith.constant 16 : index
    %c0_113 = arith.constant 0 : index
    %162 = vector.load %arg13[%c0_112, %c16, %c0_113] : memref<1x49x64xf32, #tpu.memory_space<vmem>>, vector<1x1x64xf32>
    %163 = vector.shape_cast %162 : vector<1x1x64xf32> to vector<1x64xf32>
    %164 = arith.truncf %163 : vector<1x64xf32> to vector<1x64xbf16>
    %c1024 = arith.constant 1024 : index
    %c0_114 = arith.constant 0 : index
    %165 = vector.load %arg7[%c1024, %c0_114] : memref<3136x256xbf16, #tpu.memory_space<vmem>>, vector<64x256xbf16>
    %cst_115 = arith.constant dense<0.000000e+00> : vector<1x256xf32>
    %166 = tpu.matmul %164, %165, %cst_115 {dimension_numbers = #tpu.dot_dimension_numbers<[1], [0], [0], [1], [0, 0, 1, 1], [], []>} : vector<1x64xbf16>, vector<64x256xbf16>, vector<1x256xf32> -> vector<1x256xf32>
    %167 = arith.addf %161, %166 : vector<1x256xf32>
    %c0_116 = arith.constant 0 : index
    %c17 = arith.constant 17 : index
    %c0_117 = arith.constant 0 : index
    %168 = vector.load %arg13[%c0_116, %c17, %c0_117] : memref<1x49x64xf32, #tpu.memory_space<vmem>>, vector<1x1x64xf32>
    %169 = vector.shape_cast %168 : vector<1x1x64xf32> to vector<1x64xf32>
    %170 = arith.truncf %169 : vector<1x64xf32> to vector<1x64xbf16>
    %c1088 = arith.constant 1088 : index
    %c0_118 = arith.constant 0 : index
    %171 = vector.load %arg7[%c1088, %c0_118] : memref<3136x256xbf16, #tpu.memory_space<vmem>>, vector<64x256xbf16>
    %cst_119 = arith.constant dense<0.000000e+00> : vector<1x256xf32>
    %172 = tpu.matmul %170, %171, %cst_119 {dimension_numbers = #tpu.dot_dimension_numbers<[1], [0], [0], [1], [0, 0, 1, 1], [], []>} : vector<1x64xbf16>, vector<64x256xbf16>, vector<1x256xf32> -> vector<1x256xf32>
    %173 = arith.addf %167, %172 : vector<1x256xf32>
    %c0_120 = arith.constant 0 : index
    %c18 = arith.constant 18 : index
    %c0_121 = arith.constant 0 : index
    %174 = vector.load %arg13[%c0_120, %c18, %c0_121] : memref<1x49x64xf32, #tpu.memory_space<vmem>>, vector<1x1x64xf32>
    %175 = vector.shape_cast %174 : vector<1x1x64xf32> to vector<1x64xf32>
    %176 = arith.truncf %175 : vector<1x64xf32> to vector<1x64xbf16>
    %c1152 = arith.constant 1152 : index
    %c0_122 = arith.constant 0 : index
    %177 = vector.load %arg7[%c1152, %c0_122] : memref<3136x256xbf16, #tpu.memory_space<vmem>>, vector<64x256xbf16>
    %cst_123 = arith.constant dense<0.000000e+00> : vector<1x256xf32>
    %178 = tpu.matmul %176, %177, %cst_123 {dimension_numbers = #tpu.dot_dimension_numbers<[1], [0], [0], [1], [0, 0, 1, 1], [], []>} : vector<1x64xbf16>, vector<64x256xbf16>, vector<1x256xf32> -> vector<1x256xf32>
    %179 = arith.addf %173, %178 : vector<1x256xf32>
    %c0_124 = arith.constant 0 : index
    %c19 = arith.constant 19 : index
    %c0_125 = arith.constant 0 : index
    %180 = vector.load %arg13[%c0_124, %c19, %c0_125] : memref<1x49x64xf32, #tpu.memory_space<vmem>>, vector<1x1x64xf32>
    %181 = vector.shape_cast %180 : vector<1x1x64xf32> to vector<1x64xf32>
    %182 = arith.truncf %181 : vector<1x64xf32> to vector<1x64xbf16>
    %c1216 = arith.constant 1216 : index
    %c0_126 = arith.constant 0 : index
    %183 = vector.load %arg7[%c1216, %c0_126] : memref<3136x256xbf16, #tpu.memory_space<vmem>>, vector<64x256xbf16>
    %cst_127 = arith.constant dense<0.000000e+00> : vector<1x256xf32>
    %184 = tpu.matmul %182, %183, %cst_127 {dimension_numbers = #tpu.dot_dimension_numbers<[1], [0], [0], [1], [0, 0, 1, 1], [], []>} : vector<1x64xbf16>, vector<64x256xbf16>, vector<1x256xf32> -> vector<1x256xf32>
    %185 = arith.addf %179, %184 : vector<1x256xf32>
    %c0_128 = arith.constant 0 : index
    %c20 = arith.constant 20 : index
    %c0_129 = arith.constant 0 : index
    %186 = vector.load %arg13[%c0_128, %c20, %c0_129] : memref<1x49x64xf32, #tpu.memory_space<vmem>>, vector<1x1x64xf32>
    %187 = vector.shape_cast %186 : vector<1x1x64xf32> to vector<1x64xf32>
    %188 = arith.truncf %187 : vector<1x64xf32> to vector<1x64xbf16>
    %c1280 = arith.constant 1280 : index
    %c0_130 = arith.constant 0 : index
    %189 = vector.load %arg7[%c1280, %c0_130] : memref<3136x256xbf16, #tpu.memory_space<vmem>>, vector<64x256xbf16>
    %cst_131 = arith.constant dense<0.000000e+00> : vector<1x256xf32>
    %190 = tpu.matmul %188, %189, %cst_131 {dimension_numbers = #tpu.dot_dimension_numbers<[1], [0], [0], [1], [0, 0, 1, 1], [], []>} : vector<1x64xbf16>, vector<64x256xbf16>, vector<1x256xf32> -> vector<1x256xf32>
    %191 = arith.addf %185, %190 : vector<1x256xf32>
    %c0_132 = arith.constant 0 : index
    %c21 = arith.constant 21 : index
    %c0_133 = arith.constant 0 : index
    %192 = vector.load %arg13[%c0_132, %c21, %c0_133] : memref<1x49x64xf32, #tpu.memory_space<vmem>>, vector<1x1x64xf32>
    %193 = vector.shape_cast %192 : vector<1x1x64xf32> to vector<1x64xf32>
    %194 = arith.truncf %193 : vector<1x64xf32> to vector<1x64xbf16>
    %c1344 = arith.constant 1344 : index
    %c0_134 = arith.constant 0 : index
    %195 = vector.load %arg7[%c1344, %c0_134] : memref<3136x256xbf16, #tpu.memory_space<vmem>>, vector<64x256xbf16>
    %cst_135 = arith.constant dense<0.000000e+00> : vector<1x256xf32>
    %196 = tpu.matmul %194, %195, %cst_135 {dimension_numbers = #tpu.dot_dimension_numbers<[1], [0], [0], [1], [0, 0, 1, 1], [], []>} : vector<1x64xbf16>, vector<64x256xbf16>, vector<1x256xf32> -> vector<1x256xf32>
    %197 = arith.addf %191, %196 : vector<1x256xf32>
    %c0_136 = arith.constant 0 : index
    %c22 = arith.constant 22 : index
    %c0_137 = arith.constant 0 : index
    %198 = vector.load %arg13[%c0_136, %c22, %c0_137] : memref<1x49x64xf32, #tpu.memory_space<vmem>>, vector<1x1x64xf32>
    %199 = vector.shape_cast %198 : vector<1x1x64xf32> to vector<1x64xf32>
    %200 = arith.truncf %199 : vector<1x64xf32> to vector<1x64xbf16>
    %c1408 = arith.constant 1408 : index
    %c0_138 = arith.constant 0 : index
    %201 = vector.load %arg7[%c1408, %c0_138] : memref<3136x256xbf16, #tpu.memory_space<vmem>>, vector<64x256xbf16>
    %cst_139 = arith.constant dense<0.000000e+00> : vector<1x256xf32>
    %202 = tpu.matmul %200, %201, %cst_139 {dimension_numbers = #tpu.dot_dimension_numbers<[1], [0], [0], [1], [0, 0, 1, 1], [], []>} : vector<1x64xbf16>, vector<64x256xbf16>, vector<1x256xf32> -> vector<1x256xf32>
    %203 = arith.addf %197, %202 : vector<1x256xf32>
    %c0_140 = arith.constant 0 : index
    %c23_141 = arith.constant 23 : index
    %c0_142 = arith.constant 0 : index
    %204 = vector.load %arg13[%c0_140, %c23_141, %c0_142] : memref<1x49x64xf32, #tpu.memory_space<vmem>>, vector<1x1x64xf32>
    %205 = vector.shape_cast %204 : vector<1x1x64xf32> to vector<1x64xf32>
    %206 = arith.truncf %205 : vector<1x64xf32> to vector<1x64xbf16>
    %c1472 = arith.constant 1472 : index
    %c0_143 = arith.constant 0 : index
    %207 = vector.load %arg7[%c1472, %c0_143] : memref<3136x256xbf16, #tpu.memory_space<vmem>>, vector<64x256xbf16>
    %cst_144 = arith.constant dense<0.000000e+00> : vector<1x256xf32>
    %208 = tpu.matmul %206, %207, %cst_144 {dimension_numbers = #tpu.dot_dimension_numbers<[1], [0], [0], [1], [0, 0, 1, 1], [], []>} : vector<1x64xbf16>, vector<64x256xbf16>, vector<1x256xf32> -> vector<1x256xf32>
    %209 = arith.addf %203, %208 : vector<1x256xf32>
    %c0_145 = arith.constant 0 : index
    %c24_146 = arith.constant 24 : index
    %c0_147 = arith.constant 0 : index
    %210 = vector.load %arg13[%c0_145, %c24_146, %c0_147] : memref<1x49x64xf32, #tpu.memory_space<vmem>>, vector<1x1x64xf32>
    %211 = vector.shape_cast %210 : vector<1x1x64xf32> to vector<1x64xf32>
    %212 = arith.truncf %211 : vector<1x64xf32> to vector<1x64xbf16>
    %c1536 = arith.constant 1536 : index
    %c0_148 = arith.constant 0 : index
    %213 = vector.load %arg7[%c1536, %c0_148] : memref<3136x256xbf16, #tpu.memory_space<vmem>>, vector<64x256xbf16>
    %cst_149 = arith.constant dense<0.000000e+00> : vector<1x256xf32>
    %214 = tpu.matmul %212, %213, %cst_149 {dimension_numbers = #tpu.dot_dimension_numbers<[1], [0], [0], [1], [0, 0, 1, 1], [], []>} : vector<1x64xbf16>, vector<64x256xbf16>, vector<1x256xf32> -> vector<1x256xf32>
    %215 = arith.addf %209, %214 : vector<1x256xf32>
    %c0_150 = arith.constant 0 : index
    %c25_151 = arith.constant 25 : index
    %c0_152 = arith.constant 0 : index
    %216 = vector.load %arg13[%c0_150, %c25_151, %c0_152] : memref<1x49x64xf32, #tpu.memory_space<vmem>>, vector<1x1x64xf32>
    %217 = vector.shape_cast %216 : vector<1x1x64xf32> to vector<1x64xf32>
    %218 = arith.truncf %217 : vector<1x64xf32> to vector<1x64xbf16>
    %c1600 = arith.constant 1600 : index
    %c0_153 = arith.constant 0 : index
    %219 = vector.load %arg7[%c1600, %c0_153] : memref<3136x256xbf16, #tpu.memory_space<vmem>>, vector<64x256xbf16>
    %cst_154 = arith.constant dense<0.000000e+00> : vector<1x256xf32>
    %220 = tpu.matmul %218, %219, %cst_154 {dimension_numbers = #tpu.dot_dimension_numbers<[1], [0], [0], [1], [0, 0, 1, 1], [], []>} : vector<1x64xbf16>, vector<64x256xbf16>, vector<1x256xf32> -> vector<1x256xf32>
    %221 = arith.addf %215, %220 : vector<1x256xf32>
    %c0_155 = arith.constant 0 : index
    %c26 = arith.constant 26 : index
    %c0_156 = arith.constant 0 : index
    %222 = vector.load %arg13[%c0_155, %c26, %c0_156] : memref<1x49x64xf32, #tpu.memory_space<vmem>>, vector<1x1x64xf32>
    %223 = vector.shape_cast %222 : vector<1x1x64xf32> to vector<1x64xf32>
    %224 = arith.truncf %223 : vector<1x64xf32> to vector<1x64xbf16>
    %c1664 = arith.constant 1664 : index
    %c0_157 = arith.constant 0 : index
    %225 = vector.load %arg7[%c1664, %c0_157] : memref<3136x256xbf16, #tpu.memory_space<vmem>>, vector<64x256xbf16>
    %cst_158 = arith.constant dense<0.000000e+00> : vector<1x256xf32>
    %226 = tpu.matmul %224, %225, %cst_158 {dimension_numbers = #tpu.dot_dimension_numbers<[1], [0], [0], [1], [0, 0, 1, 1], [], []>} : vector<1x64xbf16>, vector<64x256xbf16>, vector<1x256xf32> -> vector<1x256xf32>
    %227 = arith.addf %221, %226 : vector<1x256xf32>
    %c0_159 = arith.constant 0 : index
    %c27 = arith.constant 27 : index
    %c0_160 = arith.constant 0 : index
    %228 = vector.load %arg13[%c0_159, %c27, %c0_160] : memref<1x49x64xf32, #tpu.memory_space<vmem>>, vector<1x1x64xf32>
    %229 = vector.shape_cast %228 : vector<1x1x64xf32> to vector<1x64xf32>
    %230 = arith.truncf %229 : vector<1x64xf32> to vector<1x64xbf16>
    %c1728 = arith.constant 1728 : index
    %c0_161 = arith.constant 0 : index
    %231 = vector.load %arg7[%c1728, %c0_161] : memref<3136x256xbf16, #tpu.memory_space<vmem>>, vector<64x256xbf16>
    %cst_162 = arith.constant dense<0.000000e+00> : vector<1x256xf32>
    %232 = tpu.matmul %230, %231, %cst_162 {dimension_numbers = #tpu.dot_dimension_numbers<[1], [0], [0], [1], [0, 0, 1, 1], [], []>} : vector<1x64xbf16>, vector<64x256xbf16>, vector<1x256xf32> -> vector<1x256xf32>
    %233 = arith.addf %227, %232 : vector<1x256xf32>
    %c0_163 = arith.constant 0 : index
    %c28 = arith.constant 28 : index
    %c0_164 = arith.constant 0 : index
    %234 = vector.load %arg13[%c0_163, %c28, %c0_164] : memref<1x49x64xf32, #tpu.memory_space<vmem>>, vector<1x1x64xf32>
    %235 = vector.shape_cast %234 : vector<1x1x64xf32> to vector<1x64xf32>
    %236 = arith.truncf %235 : vector<1x64xf32> to vector<1x64xbf16>
    %c1792 = arith.constant 1792 : index
    %c0_165 = arith.constant 0 : index
    %237 = vector.load %arg7[%c1792, %c0_165] : memref<3136x256xbf16, #tpu.memory_space<vmem>>, vector<64x256xbf16>
    %cst_166 = arith.constant dense<0.000000e+00> : vector<1x256xf32>
    %238 = tpu.matmul %236, %237, %cst_166 {dimension_numbers = #tpu.dot_dimension_numbers<[1], [0], [0], [1], [0, 0, 1, 1], [], []>} : vector<1x64xbf16>, vector<64x256xbf16>, vector<1x256xf32> -> vector<1x256xf32>
    %239 = arith.addf %233, %238 : vector<1x256xf32>
    %c0_167 = arith.constant 0 : index
    %c29 = arith.constant 29 : index
    %c0_168 = arith.constant 0 : index
    %240 = vector.load %arg13[%c0_167, %c29, %c0_168] : memref<1x49x64xf32, #tpu.memory_space<vmem>>, vector<1x1x64xf32>
    %241 = vector.shape_cast %240 : vector<1x1x64xf32> to vector<1x64xf32>
    %242 = arith.truncf %241 : vector<1x64xf32> to vector<1x64xbf16>
    %c1856 = arith.constant 1856 : index
    %c0_169 = arith.constant 0 : index
    %243 = vector.load %arg7[%c1856, %c0_169] : memref<3136x256xbf16, #tpu.memory_space<vmem>>, vector<64x256xbf16>
    %cst_170 = arith.constant dense<0.000000e+00> : vector<1x256xf32>
    %244 = tpu.matmul %242, %243, %cst_170 {dimension_numbers = #tpu.dot_dimension_numbers<[1], [0], [0], [1], [0, 0, 1, 1], [], []>} : vector<1x64xbf16>, vector<64x256xbf16>, vector<1x256xf32> -> vector<1x256xf32>
    %245 = arith.addf %239, %244 : vector<1x256xf32>
    %c0_171 = arith.constant 0 : index
    %c30 = arith.constant 30 : index
    %c0_172 = arith.constant 0 : index
    %246 = vector.load %arg13[%c0_171, %c30, %c0_172] : memref<1x49x64xf32, #tpu.memory_space<vmem>>, vector<1x1x64xf32>
    %247 = vector.shape_cast %246 : vector<1x1x64xf32> to vector<1x64xf32>
    %248 = arith.truncf %247 : vector<1x64xf32> to vector<1x64xbf16>
    %c1920 = arith.constant 1920 : index
    %c0_173 = arith.constant 0 : index
    %249 = vector.load %arg7[%c1920, %c0_173] : memref<3136x256xbf16, #tpu.memory_space<vmem>>, vector<64x256xbf16>
    %cst_174 = arith.constant dense<0.000000e+00> : vector<1x256xf32>
    %250 = tpu.matmul %248, %249, %cst_174 {dimension_numbers = #tpu.dot_dimension_numbers<[1], [0], [0], [1], [0, 0, 1, 1], [], []>} : vector<1x64xbf16>, vector<64x256xbf16>, vector<1x256xf32> -> vector<1x256xf32>
    %251 = arith.addf %245, %250 : vector<1x256xf32>
    %c0_175 = arith.constant 0 : index
    %c31 = arith.constant 31 : index
    %c0_176 = arith.constant 0 : index
    %252 = vector.load %arg13[%c0_175, %c31, %c0_176] : memref<1x49x64xf32, #tpu.memory_space<vmem>>, vector<1x1x64xf32>
    %253 = vector.shape_cast %252 : vector<1x1x64xf32> to vector<1x64xf32>
    %254 = arith.truncf %253 : vector<1x64xf32> to vector<1x64xbf16>
    %c1984 = arith.constant 1984 : index
    %c0_177 = arith.constant 0 : index
    %255 = vector.load %arg7[%c1984, %c0_177] : memref<3136x256xbf16, #tpu.memory_space<vmem>>, vector<64x256xbf16>
    %cst_178 = arith.constant dense<0.000000e+00> : vector<1x256xf32>
    %256 = tpu.matmul %254, %255, %cst_178 {dimension_numbers = #tpu.dot_dimension_numbers<[1], [0], [0], [1], [0, 0, 1, 1], [], []>} : vector<1x64xbf16>, vector<64x256xbf16>, vector<1x256xf32> -> vector<1x256xf32>
    %257 = arith.addf %251, %256 : vector<1x256xf32>
    %c0_179 = arith.constant 0 : index
    %c32_180 = arith.constant 32 : index
    %c0_181 = arith.constant 0 : index
    %258 = vector.load %arg13[%c0_179, %c32_180, %c0_181] : memref<1x49x64xf32, #tpu.memory_space<vmem>>, vector<1x1x64xf32>
    %259 = vector.shape_cast %258 : vector<1x1x64xf32> to vector<1x64xf32>
    %260 = arith.truncf %259 : vector<1x64xf32> to vector<1x64xbf16>
    %c2048 = arith.constant 2048 : index
    %c0_182 = arith.constant 0 : index
    %261 = vector.load %arg7[%c2048, %c0_182] : memref<3136x256xbf16, #tpu.memory_space<vmem>>, vector<64x256xbf16>
    %cst_183 = arith.constant dense<0.000000e+00> : vector<1x256xf32>
    %262 = tpu.matmul %260, %261, %cst_183 {dimension_numbers = #tpu.dot_dimension_numbers<[1], [0], [0], [1], [0, 0, 1, 1], [], []>} : vector<1x64xbf16>, vector<64x256xbf16>, vector<1x256xf32> -> vector<1x256xf32>
    %263 = arith.addf %257, %262 : vector<1x256xf32>
    %c0_184 = arith.constant 0 : index
    %c33 = arith.constant 33 : index
    %c0_185 = arith.constant 0 : index
    %264 = vector.load %arg13[%c0_184, %c33, %c0_185] : memref<1x49x64xf32, #tpu.memory_space<vmem>>, vector<1x1x64xf32>
    %265 = vector.shape_cast %264 : vector<1x1x64xf32> to vector<1x64xf32>
    %266 = arith.truncf %265 : vector<1x64xf32> to vector<1x64xbf16>
    %c2112 = arith.constant 2112 : index
    %c0_186 = arith.constant 0 : index
    %267 = vector.load %arg7[%c2112, %c0_186] : memref<3136x256xbf16, #tpu.memory_space<vmem>>, vector<64x256xbf16>
    %cst_187 = arith.constant dense<0.000000e+00> : vector<1x256xf32>
    %268 = tpu.matmul %266, %267, %cst_187 {dimension_numbers = #tpu.dot_dimension_numbers<[1], [0], [0], [1], [0, 0, 1, 1], [], []>} : vector<1x64xbf16>, vector<64x256xbf16>, vector<1x256xf32> -> vector<1x256xf32>
    %269 = arith.addf %263, %268 : vector<1x256xf32>
    %c0_188 = arith.constant 0 : index
    %c34 = arith.constant 34 : index
    %c0_189 = arith.constant 0 : index
    %270 = vector.load %arg13[%c0_188, %c34, %c0_189] : memref<1x49x64xf32, #tpu.memory_space<vmem>>, vector<1x1x64xf32>
    %271 = vector.shape_cast %270 : vector<1x1x64xf32> to vector<1x64xf32>
    %272 = arith.truncf %271 : vector<1x64xf32> to vector<1x64xbf16>
    %c2176 = arith.constant 2176 : index
    %c0_190 = arith.constant 0 : index
    %273 = vector.load %arg7[%c2176, %c0_190] : memref<3136x256xbf16, #tpu.memory_space<vmem>>, vector<64x256xbf16>
    %cst_191 = arith.constant dense<0.000000e+00> : vector<1x256xf32>
    %274 = tpu.matmul %272, %273, %cst_191 {dimension_numbers = #tpu.dot_dimension_numbers<[1], [0], [0], [1], [0, 0, 1, 1], [], []>} : vector<1x64xbf16>, vector<64x256xbf16>, vector<1x256xf32> -> vector<1x256xf32>
    %275 = arith.addf %269, %274 : vector<1x256xf32>
    %c0_192 = arith.constant 0 : index
    %c35 = arith.constant 35 : index
    %c0_193 = arith.constant 0 : index
    %276 = vector.load %arg13[%c0_192, %c35, %c0_193] : memref<1x49x64xf32, #tpu.memory_space<vmem>>, vector<1x1x64xf32>
    %277 = vector.shape_cast %276 : vector<1x1x64xf32> to vector<1x64xf32>
    %278 = arith.truncf %277 : vector<1x64xf32> to vector<1x64xbf16>
    %c2240 = arith.constant 2240 : index
    %c0_194 = arith.constant 0 : index
    %279 = vector.load %arg7[%c2240, %c0_194] : memref<3136x256xbf16, #tpu.memory_space<vmem>>, vector<64x256xbf16>
    %cst_195 = arith.constant dense<0.000000e+00> : vector<1x256xf32>
    %280 = tpu.matmul %278, %279, %cst_195 {dimension_numbers = #tpu.dot_dimension_numbers<[1], [0], [0], [1], [0, 0, 1, 1], [], []>} : vector<1x64xbf16>, vector<64x256xbf16>, vector<1x256xf32> -> vector<1x256xf32>
    %281 = arith.addf %275, %280 : vector<1x256xf32>
    %c0_196 = arith.constant 0 : index
    %c36 = arith.constant 36 : index
    %c0_197 = arith.constant 0 : index
    %282 = vector.load %arg13[%c0_196, %c36, %c0_197] : memref<1x49x64xf32, #tpu.memory_space<vmem>>, vector<1x1x64xf32>
    %283 = vector.shape_cast %282 : vector<1x1x64xf32> to vector<1x64xf32>
    %284 = arith.truncf %283 : vector<1x64xf32> to vector<1x64xbf16>
    %c2304 = arith.constant 2304 : index
    %c0_198 = arith.constant 0 : index
    %285 = vector.load %arg7[%c2304, %c0_198] : memref<3136x256xbf16, #tpu.memory_space<vmem>>, vector<64x256xbf16>
    %cst_199 = arith.constant dense<0.000000e+00> : vector<1x256xf32>
    %286 = tpu.matmul %284, %285, %cst_199 {dimension_numbers = #tpu.dot_dimension_numbers<[1], [0], [0], [1], [0, 0, 1, 1], [], []>} : vector<1x64xbf16>, vector<64x256xbf16>, vector<1x256xf32> -> vector<1x256xf32>
    %287 = arith.addf %281, %286 : vector<1x256xf32>
    %c0_200 = arith.constant 0 : index
    %c37 = arith.constant 37 : index
    %c0_201 = arith.constant 0 : index
    %288 = vector.load %arg13[%c0_200, %c37, %c0_201] : memref<1x49x64xf32, #tpu.memory_space<vmem>>, vector<1x1x64xf32>
    %289 = vector.shape_cast %288 : vector<1x1x64xf32> to vector<1x64xf32>
    %290 = arith.truncf %289 : vector<1x64xf32> to vector<1x64xbf16>
    %c2368 = arith.constant 2368 : index
    %c0_202 = arith.constant 0 : index
    %291 = vector.load %arg7[%c2368, %c0_202] : memref<3136x256xbf16, #tpu.memory_space<vmem>>, vector<64x256xbf16>
    %cst_203 = arith.constant dense<0.000000e+00> : vector<1x256xf32>
    %292 = tpu.matmul %290, %291, %cst_203 {dimension_numbers = #tpu.dot_dimension_numbers<[1], [0], [0], [1], [0, 0, 1, 1], [], []>} : vector<1x64xbf16>, vector<64x256xbf16>, vector<1x256xf32> -> vector<1x256xf32>
    %293 = arith.addf %287, %292 : vector<1x256xf32>
    %c0_204 = arith.constant 0 : index
    %c38 = arith.constant 38 : index
    %c0_205 = arith.constant 0 : index
    %294 = vector.load %arg13[%c0_204, %c38, %c0_205] : memref<1x49x64xf32, #tpu.memory_space<vmem>>, vector<1x1x64xf32>
    %295 = vector.shape_cast %294 : vector<1x1x64xf32> to vector<1x64xf32>
    %296 = arith.truncf %295 : vector<1x64xf32> to vector<1x64xbf16>
    %c2432 = arith.constant 2432 : index
    %c0_206 = arith.constant 0 : index
    %297 = vector.load %arg7[%c2432, %c0_206] : memref<3136x256xbf16, #tpu.memory_space<vmem>>, vector<64x256xbf16>
    %cst_207 = arith.constant dense<0.000000e+00> : vector<1x256xf32>
    %298 = tpu.matmul %296, %297, %cst_207 {dimension_numbers = #tpu.dot_dimension_numbers<[1], [0], [0], [1], [0, 0, 1, 1], [], []>} : vector<1x64xbf16>, vector<64x256xbf16>, vector<1x256xf32> -> vector<1x256xf32>
    %299 = arith.addf %293, %298 : vector<1x256xf32>
    %c0_208 = arith.constant 0 : index
    %c39 = arith.constant 39 : index
    %c0_209 = arith.constant 0 : index
    %300 = vector.load %arg13[%c0_208, %c39, %c0_209] : memref<1x49x64xf32, #tpu.memory_space<vmem>>, vector<1x1x64xf32>
    %301 = vector.shape_cast %300 : vector<1x1x64xf32> to vector<1x64xf32>
    %302 = arith.truncf %301 : vector<1x64xf32> to vector<1x64xbf16>
    %c2496 = arith.constant 2496 : index
    %c0_210 = arith.constant 0 : index
    %303 = vector.load %arg7[%c2496, %c0_210] : memref<3136x256xbf16, #tpu.memory_space<vmem>>, vector<64x256xbf16>
    %cst_211 = arith.constant dense<0.000000e+00> : vector<1x256xf32>
    %304 = tpu.matmul %302, %303, %cst_211 {dimension_numbers = #tpu.dot_dimension_numbers<[1], [0], [0], [1], [0, 0, 1, 1], [], []>} : vector<1x64xbf16>, vector<64x256xbf16>, vector<1x256xf32> -> vector<1x256xf32>
    %305 = arith.addf %299, %304 : vector<1x256xf32>
    %c0_212 = arith.constant 0 : index
    %c40_213 = arith.constant 40 : index
    %c0_214 = arith.constant 0 : index
    %306 = vector.load %arg13[%c0_212, %c40_213, %c0_214] : memref<1x49x64xf32, #tpu.memory_space<vmem>>, vector<1x1x64xf32>
    %307 = vector.shape_cast %306 : vector<1x1x64xf32> to vector<1x64xf32>
    %308 = arith.truncf %307 : vector<1x64xf32> to vector<1x64xbf16>
    %c2560 = arith.constant 2560 : index
    %c0_215 = arith.constant 0 : index
    %309 = vector.load %arg7[%c2560, %c0_215] : memref<3136x256xbf16, #tpu.memory_space<vmem>>, vector<64x256xbf16>
    %cst_216 = arith.constant dense<0.000000e+00> : vector<1x256xf32>
    %310 = tpu.matmul %308, %309, %cst_216 {dimension_numbers = #tpu.dot_dimension_numbers<[1], [0], [0], [1], [0, 0, 1, 1], [], []>} : vector<1x64xbf16>, vector<64x256xbf16>, vector<1x256xf32> -> vector<1x256xf32>
    %311 = arith.addf %305, %310 : vector<1x256xf32>
    %c0_217 = arith.constant 0 : index
    %c41 = arith.constant 41 : index
    %c0_218 = arith.constant 0 : index
    %312 = vector.load %arg13[%c0_217, %c41, %c0_218] : memref<1x49x64xf32, #tpu.memory_space<vmem>>, vector<1x1x64xf32>
    %313 = vector.shape_cast %312 : vector<1x1x64xf32> to vector<1x64xf32>
    %314 = arith.truncf %313 : vector<1x64xf32> to vector<1x64xbf16>
    %c2624 = arith.constant 2624 : index
    %c0_219 = arith.constant 0 : index
    %315 = vector.load %arg7[%c2624, %c0_219] : memref<3136x256xbf16, #tpu.memory_space<vmem>>, vector<64x256xbf16>
    %cst_220 = arith.constant dense<0.000000e+00> : vector<1x256xf32>
    %316 = tpu.matmul %314, %315, %cst_220 {dimension_numbers = #tpu.dot_dimension_numbers<[1], [0], [0], [1], [0, 0, 1, 1], [], []>} : vector<1x64xbf16>, vector<64x256xbf16>, vector<1x256xf32> -> vector<1x256xf32>
    %317 = arith.addf %311, %316 : vector<1x256xf32>
    %c0_221 = arith.constant 0 : index
    %c42 = arith.constant 42 : index
    %c0_222 = arith.constant 0 : index
    %318 = vector.load %arg13[%c0_221, %c42, %c0_222] : memref<1x49x64xf32, #tpu.memory_space<vmem>>, vector<1x1x64xf32>
    %319 = vector.shape_cast %318 : vector<1x1x64xf32> to vector<1x64xf32>
    %320 = arith.truncf %319 : vector<1x64xf32> to vector<1x64xbf16>
    %c2688 = arith.constant 2688 : index
    %c0_223 = arith.constant 0 : index
    %321 = vector.load %arg7[%c2688, %c0_223] : memref<3136x256xbf16, #tpu.memory_space<vmem>>, vector<64x256xbf16>
    %cst_224 = arith.constant dense<0.000000e+00> : vector<1x256xf32>
    %322 = tpu.matmul %320, %321, %cst_224 {dimension_numbers = #tpu.dot_dimension_numbers<[1], [0], [0], [1], [0, 0, 1, 1], [], []>} : vector<1x64xbf16>, vector<64x256xbf16>, vector<1x256xf32> -> vector<1x256xf32>
    %323 = arith.addf %317, %322 : vector<1x256xf32>
    %c0_225 = arith.constant 0 : index
    %c43 = arith.constant 43 : index
    %c0_226 = arith.constant 0 : index
    %324 = vector.load %arg13[%c0_225, %c43, %c0_226] : memref<1x49x64xf32, #tpu.memory_space<vmem>>, vector<1x1x64xf32>
    %325 = vector.shape_cast %324 : vector<1x1x64xf32> to vector<1x64xf32>
    %326 = arith.truncf %325 : vector<1x64xf32> to vector<1x64xbf16>
    %c2752 = arith.constant 2752 : index
    %c0_227 = arith.constant 0 : index
    %327 = vector.load %arg7[%c2752, %c0_227] : memref<3136x256xbf16, #tpu.memory_space<vmem>>, vector<64x256xbf16>
    %cst_228 = arith.constant dense<0.000000e+00> : vector<1x256xf32>
    %328 = tpu.matmul %326, %327, %cst_228 {dimension_numbers = #tpu.dot_dimension_numbers<[1], [0], [0], [1], [0, 0, 1, 1], [], []>} : vector<1x64xbf16>, vector<64x256xbf16>, vector<1x256xf32> -> vector<1x256xf32>
    %329 = arith.addf %323, %328 : vector<1x256xf32>
    %c0_229 = arith.constant 0 : index
    %c44 = arith.constant 44 : index
    %c0_230 = arith.constant 0 : index
    %330 = vector.load %arg13[%c0_229, %c44, %c0_230] : memref<1x49x64xf32, #tpu.memory_space<vmem>>, vector<1x1x64xf32>
    %331 = vector.shape_cast %330 : vector<1x1x64xf32> to vector<1x64xf32>
    %332 = arith.truncf %331 : vector<1x64xf32> to vector<1x64xbf16>
    %c2816 = arith.constant 2816 : index
    %c0_231 = arith.constant 0 : index
    %333 = vector.load %arg7[%c2816, %c0_231] : memref<3136x256xbf16, #tpu.memory_space<vmem>>, vector<64x256xbf16>
    %cst_232 = arith.constant dense<0.000000e+00> : vector<1x256xf32>
    %334 = tpu.matmul %332, %333, %cst_232 {dimension_numbers = #tpu.dot_dimension_numbers<[1], [0], [0], [1], [0, 0, 1, 1], [], []>} : vector<1x64xbf16>, vector<64x256xbf16>, vector<1x256xf32> -> vector<1x256xf32>
    %335 = arith.addf %329, %334 : vector<1x256xf32>
    %c0_233 = arith.constant 0 : index
    %c45 = arith.constant 45 : index
    %c0_234 = arith.constant 0 : index
    %336 = vector.load %arg13[%c0_233, %c45, %c0_234] : memref<1x49x64xf32, #tpu.memory_space<vmem>>, vector<1x1x64xf32>
    %337 = vector.shape_cast %336 : vector<1x1x64xf32> to vector<1x64xf32>
    %338 = arith.truncf %337 : vector<1x64xf32> to vector<1x64xbf16>
    %c2880 = arith.constant 2880 : index
    %c0_235 = arith.constant 0 : index
    %339 = vector.load %arg7[%c2880, %c0_235] : memref<3136x256xbf16, #tpu.memory_space<vmem>>, vector<64x256xbf16>
    %cst_236 = arith.constant dense<0.000000e+00> : vector<1x256xf32>
    %340 = tpu.matmul %338, %339, %cst_236 {dimension_numbers = #tpu.dot_dimension_numbers<[1], [0], [0], [1], [0, 0, 1, 1], [], []>} : vector<1x64xbf16>, vector<64x256xbf16>, vector<1x256xf32> -> vector<1x256xf32>
    %341 = arith.addf %335, %340 : vector<1x256xf32>
    %c0_237 = arith.constant 0 : index
    %c46 = arith.constant 46 : index
    %c0_238 = arith.constant 0 : index
    %342 = vector.load %arg13[%c0_237, %c46, %c0_238] : memref<1x49x64xf32, #tpu.memory_space<vmem>>, vector<1x1x64xf32>
    %343 = vector.shape_cast %342 : vector<1x1x64xf32> to vector<1x64xf32>
    %344 = arith.truncf %343 : vector<1x64xf32> to vector<1x64xbf16>
    %c2944 = arith.constant 2944 : index
    %c0_239 = arith.constant 0 : index
    %345 = vector.load %arg7[%c2944, %c0_239] : memref<3136x256xbf16, #tpu.memory_space<vmem>>, vector<64x256xbf16>
    %cst_240 = arith.constant dense<0.000000e+00> : vector<1x256xf32>
    %346 = tpu.matmul %344, %345, %cst_240 {dimension_numbers = #tpu.dot_dimension_numbers<[1], [0], [0], [1], [0, 0, 1, 1], [], []>} : vector<1x64xbf16>, vector<64x256xbf16>, vector<1x256xf32> -> vector<1x256xf32>
    %347 = arith.addf %341, %346 : vector<1x256xf32>
    %c0_241 = arith.constant 0 : index
    %c47 = arith.constant 47 : index
    %c0_242 = arith.constant 0 : index
    %348 = vector.load %arg13[%c0_241, %c47, %c0_242] : memref<1x49x64xf32, #tpu.memory_space<vmem>>, vector<1x1x64xf32>
    %349 = vector.shape_cast %348 : vector<1x1x64xf32> to vector<1x64xf32>
    %350 = arith.truncf %349 : vector<1x64xf32> to vector<1x64xbf16>
    %c3008 = arith.constant 3008 : index
    %c0_243 = arith.constant 0 : index
    %351 = vector.load %arg7[%c3008, %c0_243] : memref<3136x256xbf16, #tpu.memory_space<vmem>>, vector<64x256xbf16>
    %cst_244 = arith.constant dense<0.000000e+00> : vector<1x256xf32>
    %352 = tpu.matmul %350, %351, %cst_244 {dimension_numbers = #tpu.dot_dimension_numbers<[1], [0], [0], [1], [0, 0, 1, 1], [], []>} : vector<1x64xbf16>, vector<64x256xbf16>, vector<1x256xf32> -> vector<1x256xf32>
    %353 = arith.addf %347, %352 : vector<1x256xf32>
    %c0_245 = arith.constant 0 : index
    %c48 = arith.constant 48 : index
    %c0_246 = arith.constant 0 : index
    %354 = vector.load %arg13[%c0_245, %c48, %c0_246] : memref<1x49x64xf32, #tpu.memory_space<vmem>>, vector<1x1x64xf32>
    %355 = vector.shape_cast %354 : vector<1x1x64xf32> to vector<1x64xf32>
    %356 = arith.truncf %355 : vector<1x64xf32> to vector<1x64xbf16>
    %c3072 = arith.constant 3072 : index
    %c0_247 = arith.constant 0 : index
    %357 = vector.load %arg7[%c3072, %c0_247] : memref<3136x256xbf16, #tpu.memory_space<vmem>>, vector<64x256xbf16>
    %cst_248 = arith.constant dense<0.000000e+00> : vector<1x256xf32>
    %358 = tpu.matmul %356, %357, %cst_248 {dimension_numbers = #tpu.dot_dimension_numbers<[1], [0], [0], [1], [0, 0, 1, 1], [], []>} : vector<1x64xbf16>, vector<64x256xbf16>, vector<1x256xf32> -> vector<1x256xf32>
    %359 = arith.addf %353, %358 : vector<1x256xf32>
    %c0_249 = arith.constant 0 : index
    %c0_250 = arith.constant 0 : index
    %360 = vector.load %arg8[%c0_249, %c0_250] : memref<1x256xf32, #tpu.memory_space<vmem>>, vector<1x256xf32>
    %361 = arith.addf %359, %360 : vector<1x256xf32>
    %cst_251 = arith.constant 0.000000e+00 : f32
    %362 = vector.broadcast %cst_251 : f32 to vector<1x256xf32>
    %363 = arith.maximumf %361, %362 : vector<1x256xf32>
    %c0_252 = arith.constant 0 : index
    %c0_253 = arith.constant 0 : index
    %364 = vector.load %arg9[%c0_252, %c0_253] : memref<256x128xf32, #tpu.memory_space<vmem>>, vector<256x128xf32>
    %cst_254 = arith.constant dense<0.000000e+00> : vector<1x128xf32>
    %365 = tpu.matmul %363, %364, %cst_254 {dimension_numbers = #tpu.dot_dimension_numbers<[1], [0], [0], [1], [0, 0, 1, 1], [], []>} : vector<1x256xf32>, vector<256x128xf32>, vector<1x128xf32> -> vector<1x128xf32>
    %c0_255 = arith.constant 0 : index
    %c0_256 = arith.constant 0 : index
    %366 = vector.load %arg10[%c0_255, %c0_256] : memref<1x128xf32, #tpu.memory_space<vmem>>, vector<1x128xf32>
    %367 = arith.addf %365, %366 : vector<1x128xf32>
    %c0_257 = arith.constant 0 : index
    %c0_258 = arith.constant 0 : index
    %c0_259 = arith.constant 0 : index
    %368 = vector.load %arg11[%c0_257, %c0_258, %c0_259] : memref<1x1x128xf32, #tpu.memory_space<vmem>>, vector<1x1x128xf32>
    %369 = vector.shape_cast %368 : vector<1x1x128xf32> to vector<1x128xf32>
    %370 = vector.shape_cast %367 : vector<1x128xf32> to vector<1x1x128xf32>
    tpu.vector_store %arg11[%c0_257, %c0_258, %c0_259], %370 {strides = array<i32>} : memref<1x1x128xf32, #tpu.memory_space<vmem>>, vector<1x1x128xf32>,
    return
  }
  func.func @transform_0(%arg0: i32) -> (i32, i32, i32) {
    %c0_i32 = arith.constant 0 : i32
    %c0_i32_0 = arith.constant 0 : i32
    %c0_i32_1 = arith.constant 0 : i32
    return %arg0, %c0_i32, %c0_i32_0 : i32, i32, i32
  }
  func.func @transform_1(%arg0: i32) -> (i32, i32) {
    %c0_i32 = arith.constant 0 : i32
    %c0_i32_0 = arith.constant 0 : i32
    %c0_i32_1 = arith.constant 0 : i32
    return %c0_i32, %c0_i32_0 : i32, i32
  }
  func.func @transform_2(%arg0: i32) -> (i32, i32) {
    %c0_i32 = arith.constant 0 : i32
    %c0_i32_0 = arith.constant 0 : i32
    %c0_i32_1 = arith.constant 0 : i32
    return %c0_i32, %c0_i32_0 : i32, i32
  }
  func.func @transform_3(%arg0: i32) -> (i32, i32) {
    %c0_i32 = arith.constant 0 : i32
    %c0_i32_0 = arith.constant 0 : i32
    %c0_i32_1 = arith.constant 0 : i32
    return %c0_i32, %c0_i32_0 : i32, i32
  }
  func.func @transform_4(%arg0: i32) -> (i32, i32, i32) {
    %c0_i32 = arith.constant 0 : i32
    %c0_i32_0 = arith.constant 0 : i32
    %c0_i32_1 = arith.constant 0 : i32
    %c0_i32_2 = arith.constant 0 : i32
    return %c0_i32, %c0_i32_0, %c0_i32_1 : i32, i32, i32
  }
  func.func @transform_5(%arg0: i32) -> (i32, i32) {
    %c0_i32 = arith.constant 0 : i32
    %c0_i32_0 = arith.constant 0 : i32
    %c0_i32_1 = arith.constant 0 : i32
    return %c0_i32, %c0_i32_0 : i32, i32
  }
  func.func @transform_6(%arg0: i32) -> (i32, i32) {
    %c0_i32 = arith.constant 0 : i32
    %c0_i32_0 = arith.constant 0 : i32
    %c0_i32_1 = arith.constant 0 : i32
    return %c0_i32, %c0_i32_0 : i32, i32
  }
  func.func @transform_7(%arg0: i32) -> (i32, i32) {
    %c0_i32 = arith.constant 0 : i32
    %c0_i32_0 = arith.constant 0 : i32
    %c0_i32_1 = arith.constant 0 : i32
    return %c0_i32, %c0_i32_0 : i32, i32
  }
  func.func @transform_8(%arg0: i32) -> (i32, i32) {
    %c0_i32 = arith.constant 0 : i32
    %c0_i32_0 = arith.constant 0 : i32
    %c0_i32_1 = arith.constant 0 : i32
    return %c0_i32, %c0_i32_0 : i32, i32
  }
  func.func @transform_9(%arg0: i32) -> (i32, i32) {
    %c0_i32 = arith.constant 0 : i32
    %c0_i32_0 = arith.constant 0 : i32
    %c0_i32_1 = arith.constant 0 : i32
    return %c0_i32, %c0_i32_0 : i32, i32
  }
  func.func @transform_10(%arg0: i32) -> (i32, i32, i32) {
    %c0_i32 = arith.constant 0 : i32
    %c0_i32_0 = arith.constant 0 : i32
    %c0_i32_1 = arith.constant 0 : i32
    return %arg0, %c0_i32, %c0_i32_0 : i32, i32, i32
  }
}

</mosaic_0001>

<llo_original>
// kernel: simple_model2_forward.1
$region0: #{simple_model2_forward.1}
  #allocation0 [shape = 'u32[]', space=smem, size = 0x4, offset = 0x4, fixed_abs, tag = 'smem constant byte address 0x4 - core index']
  #allocation1 [shape = 'u32[72,128]{1,0:T(1,128)}', space=vmem, size = 0x9000, scoped, tag = 'internal scratch']
  #allocation2 [shape = 'f32[264,96]{1,0:T(8,128)}', space=vmem, size = 0x21000, scoped, tag = 'scratch operand']
  #allocation3 [shape = 'f32[1,49,64]{2,1,0:T(8,128)}', space=vmem, size = 0x7000, scoped, tag = 'scratch operand']
  %s0 = inlined_call_operand.vmem [shape: f32[2,224,27], index: 0, kind: input, shape index: {}]
  %s1 = inlined_call_operand.vmem [shape: f32[49,224], index: 1, kind: input, shape index: {}]
  %s2 = inlined_call_operand.vmem [shape: f32[27,32], index: 2, kind: input, shape index: {}]
  %s3 = inlined_call_operand.vmem [shape: f32[1,32], index: 3, kind: input, shape index: {}]
  %s4 = inlined_call_operand.vmem [shape: f32[3,96,64], index: 4, kind: input, shape index: {}]
  %s5 = inlined_call_operand.vmem [shape: f32[1,64], index: 5, kind: input, shape index: {}]
  %s6 = inlined_call_operand.vmem [shape: bf16[3136,256], index: 6, kind: input, shape index: {}]
  %s7 = inlined_call_operand.vmem [shape: f32[1,256], index: 7, kind: input, shape index: {}]
  %s8 = inlined_call_operand.vmem [shape: f32[256,128], index: 8, kind: input, shape index: {}]
  %s9 = inlined_call_operand.vmem [shape: f32[1,128], index: 9, kind: input, shape index: {}]
  %s10 = inlined_call_operand.hbm [shape: f32[2,1,128], index: 10, kind: output, shape index: {}]
  %s11 = sld [smem:[#allocation0]]
  $region73: #{simple_model2_forward.1} parent=0
    _
  %s13 = ssub.s32 1, %s11
  %s14 = scalar_select 0, %s13, %s11
  $region1: #{simple_model2_forward.1} parent=0
    #allocation4 [shape = 'u8[1024]{0}', space=vmem, size = 0x400, scoped, tag = 'output window, operand 0']
    #allocation5 [shape = 's32[2]{0}', space=sflag, size = 0x8, scoped, tag = 'scoped memory for simple_model2_forward.1']
    %15 = vsyncpa [#allocation5], 0
    %s16 = scalar_lea.sflag [#allocation5], 1
    %17 = vsyncpa %s16, 0
    loop: start=0, step=1, limit=4
    $region2: #{simple_model2_forward.1} parent=1 // loop_pre_header
      _
    $region3: #{simple_model2_forward.1} parent=1 // loop_header
      %s19 = sphi 0, %s23
      %p20 = scmp.ge.s32.totalorder %s19, 4
      %s29 = sphi 0, %s31
      %s32 = sphi 0, %s29
      %s33 = sphi 0, %s32
      %s49 = sphi 0, %s33
      %s53 = sphi 0, %s53
      %s55 = sphi 0, %s53
      %s56 = sphi 0, %s55
      %s70 = sphi 0, %s56
      %s74 = sphi 0, %s74
      %s76 = sphi 0, %s74
      %s77 = sphi 0, %s76
      %s91 = sphi 0, %s77
      %s95 = sphi 0, %s95
      %s97 = sphi 0, %s95
      %s98 = sphi 0, %s97
      %s112 = sphi 0, %s98
      %s116 = sphi 0, %s116
      %s118 = sphi 0, %s116
      %s119 = sphi 0, %s118
      %s133 = sphi 0, %s119
      %s137 = sphi 0, %s137
      %s139 = sphi 0, %s137
      %s140 = sphi 0, %s139
      %s154 = sphi 0, %s140
      %s158 = sphi 0, %s158
      %s160 = sphi 0, %s158
      %s161 = sphi 0, %s160
      %s175 = sphi 0, %s161
      %s179 = sphi 0, %s179
      %s181 = sphi 0, %s179
      %s182 = sphi 0, %s181
      %s196 = sphi 0, %s182
      %s200 = sphi 0, %s200
      %s202 = sphi 0, %s200
      %s203 = sphi 0, %s202
      %s217 = sphi 0, %s203
      %s221 = sphi 0, %s221
      %s223 = sphi 0, %s221
      %s224 = sphi 0, %s223
      %s238 = sphi 0, %s224
      %s244 = sphi 0, %s246
      %s247 = sphi 0, %s244
      %s248 = sphi 0, %s247
      %s264 = sphi 0, %s248
    $region4: #{simple_model2_forward.1} parent=1 // loop_header_branch
      %22 = sbr.rel (%p20) target = $region8
    $region5: #{simple_model2_forward.1} parent=1 // loop_body
      %s24 = ssub.s32 %s19, 1
      %s25 = ssub.s32 %s19, 2
      %s26 = sadd.s32 %s19, 1
      %s27 = ssub.s32 %s19, %s26
      %p28 = scmp.eq.s32.totalorder %s27, 0
      %s30 = sadd.s32 %s29, 1
      %s31 = scalar_select %p28, %s29, %s30
      %p34 = pneg %p28
      %p35 = scmp.eq.s32.totalorder %s19, 1
      %p36 = por %p34, %p35
      %p37 = scmp.ne.s32.totalorder %s29, %s32
      %p38 = scmp.eq.s32.totalorder %s19, 0
      %p39 = por %p37, %p38
      %p40 = scmp.ne.s32.totalorder %s29, %s32
      %p41 = scmp.eq.s32.totalorder %s24, 1
      %p42 = por %p40, %p41
      %p43 = scmp.ne.s32.totalorder %s32, %s33
      %p44 = scmp.eq.s32.totalorder %s24, 0
      %p45 = por %p43, %p44
      %p46 = scmp.ne.s32.totalorder %s32, %s33
      %p47 = scmp.eq.s32.totalorder %s25, 1
      %p48 = por %p46, %p47
      %p50 = scmp.ne.s32.totalorder %s33, %s49
      %p51 = scmp.eq.s32.totalorder %s25, 0
      %p52 = por %p50, %p51
      %s54 = sadd.s32 %s53, 1
      %p57 = scmp.eq.s32.totalorder %s19, 1
      %p58 = scmp.ne.s32.totalorder %s53, %s55
      %p59 = scmp.eq.s32.totalorder %s19, 0
      %p60 = por %p58, %p59
      %p61 = scmp.ne.s32.totalorder %s53, %s55
      %p62 = scmp.eq.s32.totalorder %s24, 1
      %p63 = por %p61, %p62
      %p64 = scmp.ne.s32.totalorder %s55, %s56
      %p65 = scmp.eq.s32.totalorder %s24, 0
      %p66 = por %p64, %p65
      %p67 = scmp.ne.s32.totalorder %s55, %s56
      %p68 = scmp.eq.s32.totalorder %s25, 1
      %p69 = por %p67, %p68
      %p71 = scmp.ne.s32.totalorder %s56, %s70
      %p72 = scmp.eq.s32.totalorder %s25, 0
      %p73 = por %p71, %p72
      %s75 = sadd.s32 %s74, 1
      %p78 = scmp.eq.s32.totalorder %s19, 1
      %p79 = scmp.ne.s32.totalorder %s74, %s76
      %p80 = scmp.eq.s32.totalorder %s19, 0
      %p81 = por %p79, %p80
      %p82 = scmp.ne.s32.totalorder %s74, %s76
      %p83 = scmp.eq.s32.totalorder %s24, 1
      %p84 = por %p82, %p83
      %p85 = scmp.ne.s32.totalorder %s76, %s77
      %p86 = scmp.eq.s32.totalorder %s24, 0
      %p87 = por %p85, %p86
      %p88 = scmp.ne.s32.totalorder %s76, %s77
      %p89 = scmp.eq.s32.totalorder %s25, 1
      %p90 = por %p88, %p89
      %p92 = scmp.ne.s32.totalorder %s77, %s91
      %p93 = scmp.eq.s32.totalorder %s25, 0
      %p94 = por %p92, %p93
      %s96 = sadd.s32 %s95, 1
      %p99 = scmp.eq.s32.totalorder %s19, 1
      %p100 = scmp.ne.s32.totalorder %s95, %s97
      %p101 = scmp.eq.s32.totalorder %s19, 0
      %p102 = por %p100, %p101
      %p103 = scmp.ne.s32.totalorder %s95, %s97
      %p104 = scmp.eq.s32.totalorder %s24, 1
      %p105 = por %p103, %p104
      %p106 = scmp.ne.s32.totalorder %s97, %s98
      %p107 = scmp.eq.s32.totalorder %s24, 0
      %p108 = por %p106, %p107
      %p109 = scmp.ne.s32.totalorder %s97, %s98
      %p110 = scmp.eq.s32.totalorder %s25, 1
      %p111 = por %p109, %p110
      %p113 = scmp.ne.s32.totalorder %s98, %s112
      %p114 = scmp.eq.s32.totalorder %s25, 0
      %p115 = por %p113, %p114
      %s117 = sadd.s32 %s116, 1
      %p120 = scmp.eq.s32.totalorder %s19, 1
      %p121 = scmp.ne.s32.totalorder %s116, %s118
      %p122 = scmp.eq.s32.totalorder %s19, 0
      %p123 = por %p121, %p122
      %p124 = scmp.ne.s32.totalorder %s116, %s118
      %p125 = scmp.eq.s32.totalorder %s24, 1
      %p126 = por %p124, %p125
      %p127 = scmp.ne.s32.totalorder %s118, %s119
      %p128 = scmp.eq.s32.totalorder %s24, 0
      %p129 = por %p127, %p128
      %p130 = scmp.ne.s32.totalorder %s118, %s119
      %p131 = scmp.eq.s32.totalorder %s25, 1
      %p132 = por %p130, %p131
      %p134 = scmp.ne.s32.totalorder %s119, %s133
      %p135 = scmp.eq.s32.totalorder %s25, 0
      %p136 = por %p134, %p135
      %s138 = sadd.s32 %s137, 1
      %p141 = scmp.eq.s32.totalorder %s19, 1
      %p142 = scmp.ne.s32.totalorder %s137, %s139
      %p143 = scmp.eq.s32.totalorder %s19, 0
      %p144 = por %p142, %p143
      %p145 = scmp.ne.s32.totalorder %s137, %s139
      %p146 = scmp.eq.s32.totalorder %s24, 1
      %p147 = por %p145, %p146
      %p148 = scmp.ne.s32.totalorder %s139, %s140
      %p149 = scmp.eq.s32.totalorder %s24, 0
      %p150 = por %p148, %p149
      %p151 = scmp.ne.s32.totalorder %s139, %s140
      %p152 = scmp.eq.s32.totalorder %s25, 1
      %p153 = por %p151, %p152
      %p155 = scmp.ne.s32.totalorder %s140, %s154
      %p156 = scmp.eq.s32.totalorder %s25, 0
      %p157 = por %p155, %p156
      %s159 = sadd.s32 %s158, 1
      %p162 = scmp.eq.s32.totalorder %s19, 1
      %p163 = scmp.ne.s32.totalorder %s158, %s160
      %p164 = scmp.eq.s32.totalorder %s19, 0
      %p165 = por %p163, %p164
      %p166 = scmp.ne.s32.totalorder %s158, %s160
      %p167 = scmp.eq.s32.totalorder %s24, 1
      %p168 = por %p166, %p167
      %p169 = scmp.ne.s32.totalorder %s160, %s161
      %p170 = scmp.eq.s32.totalorder %s24, 0
      %p171 = por %p169, %p170
      %p172 = scmp.ne.s32.totalorder %s160, %s161
      %p173 = scmp.eq.s32.totalorder %s25, 1
      %p174 = por %p172, %p173
      %p176 = scmp.ne.s32.totalorder %s161, %s175
      %p177 = scmp.eq.s32.totalorder %s25, 0
      %p178 = por %p176, %p177
      %s180 = sadd.s32 %s179, 1
      %p183 = scmp.eq.s32.totalorder %s19, 1
      %p184 = scmp.ne.s32.totalorder %s179, %s181
      %p185 = scmp.eq.s32.totalorder %s19, 0
      %p186 = por %p184, %p185
      %p187 = scmp.ne.s32.totalorder %s179, %s181
      %p188 = scmp.eq.s32.totalorder %s24, 1
      %p189 = por %p187, %p188
      %p190 = scmp.ne.s32.totalorder %s181, %s182
      %p191 = scmp.eq.s32.totalorder %s24, 0
      %p192 = por %p190, %p191
      %p193 = scmp.ne.s32.totalorder %s181, %s182
      %p194 = scmp.eq.s32.totalorder %s25, 1
      %p195 = por %p193, %p194
      %p197 = scmp.ne.s32.totalorder %s182, %s196
      %p198 = scmp.eq.s32.totalorder %s25, 0
      %p199 = por %p197, %p198
      %s201 = sadd.s32 %s200, 1
      %p204 = scmp.eq.s32.totalorder %s19, 1
      %p205 = scmp.ne.s32.totalorder %s200, %s202
      %p206 = scmp.eq.s32.totalorder %s19, 0
      %p207 = por %p205, %p206
      %p208 = scmp.ne.s32.totalorder %s200, %s202
      %p209 = scmp.eq.s32.totalorder %s24, 1
      %p210 = por %p208, %p209
      %p211 = scmp.ne.s32.totalorder %s202, %s203
      %p212 = scmp.eq.s32.totalorder %s24, 0
      %p213 = por %p211, %p212
      %p214 = scmp.ne.s32.totalorder %s202, %s203
      %p215 = scmp.eq.s32.totalorder %s25, 1
      %p216 = por %p214, %p215
      %p218 = scmp.ne.s32.totalorder %s203, %s217
      %p219 = scmp.eq.s32.totalorder %s25, 0
      %p220 = por %p218, %p219
      %s222 = sadd.s32 %s221, 1
      %p225 = scmp.eq.s32.totalorder %s19, 1
      %p226 = scmp.ne.s32.totalorder %s221, %s223
      %p227 = scmp.eq.s32.totalorder %s19, 0
      %p228 = por %p226, %p227
      %p229 = scmp.ne.s32.totalorder %s221, %s223
      %p230 = scmp.eq.s32.totalorder %s24, 1
      %p231 = por %p229, %p230
      %p232 = scmp.ne.s32.totalorder %s223, %s224
      %p233 = scmp.eq.s32.totalorder %s24, 0
      %p234 = por %p232, %p233
      %p235 = scmp.ne.s32.totalorder %s223, %s224
      %p236 = scmp.eq.s32.totalorder %s25, 1
      %p237 = por %p235, %p236
      %p239 = scmp.ne.s32.totalorder %s224, %s238
      %p240 = scmp.eq.s32.totalorder %s25, 0
      %p241 = por %p239, %p240
      %s242 = ssub.s32 %s19, %s26
      %p243 = scmp.eq.s32.totalorder %s242, 0
      %s245 = sadd.s32 %s244, 1
      %s246 = scalar_select %p243, %s244, %s245
      %p249 = pneg %p243
      %p250 = scmp.eq.s32.totalorder %s19, 1
      %p251 = por %p249, %p250
      %p252 = scmp.ne.s32.totalorder %s244, %s247
      %p253 = scmp.eq.s32.totalorder %s19, 0
      %p254 = por %p252, %p253
      %p255 = scmp.ne.s32.totalorder %s244, %s247
      %p256 = scmp.eq.s32.totalorder %s24, 1
      %p257 = por %p255, %p256
      %p258 = scmp.ne.s32.totalorder %s247, %s248
      %p259 = scmp.eq.s32.totalorder %s24, 0
      %p260 = por %p258, %p259
      %p261 = scmp.ne.s32.totalorder %s247, %s248
      %p262 = scmp.eq.s32.totalorder %s25, 1
      %p263 = por %p261, %p262
      %p265 = scmp.ne.s32.totalorder %s248, %s264
      %p266 = scmp.eq.s32.totalorder %s25, 0
      %p267 = por %p265, %p266
      %p268 = scmp.le.s32.totalorder 1, %s19
      %p269 = scmp.lt.s32.totalorder %s19, 3
      %p270 = pnand %p268, %p269
      %p271 = pneg %p270
      // Predicated region
      $region9: #{simple_model2_forward.1} parent=5 // pred_check
        _
      $region10: #{simple_model2_forward.1} parent=5 // pred_check_branch
        %273 = sbr.rel (%p270) target = $region12
      $region11: #{simple_model2_forward.1} parent=5 // pred_region
        %s274 = ssub.s32 %s19, 1
        // Predicated region
        $region13: #{simple_model2_forward.1} parent=11 // pred_check
          %p275 = pneg %p66
        $region14: #{simple_model2_forward.1} parent=11 // pred_check_branch
          %277 = sbr.rel (%p275) target = $region16
        $region15: #{simple_model2_forward.1} parent=11 // pred_region
          _
        $region16: #{simple_model2_forward.1} parent=11 // pred_fallthru
          _
        // Predicated region
        $region17: #{simple_model2_forward.1} parent=11 // pred_check
          %p278 = pneg %p87
        $region18: #{simple_model2_forward.1} parent=11 // pred_check_branch
          %280 = sbr.rel (%p278) target = $region20
        $region19: #{simple_model2_forward.1} parent=11 // pred_region
          _
        $region20: #{simple_model2_forward.1} parent=11 // pred_fallthru
          _
        // Predicated region
        $region21: #{simple_model2_forward.1} parent=11 // pred_check
          %p281 = pneg %p108
        $region22: #{simple_model2_forward.1} parent=11 // pred_check_branch
          %283 = sbr.rel (%p281) target = $region24
        $region23: #{simple_model2_forward.1} parent=11 // pred_region
          _
        $region24: #{simple_model2_forward.1} parent=11 // pred_fallthru
          _
        // Predicated region
        $region25: #{simple_model2_forward.1} parent=11 // pred_check
          %p284 = pneg %p129
        $region26: #{simple_model2_forward.1} parent=11 // pred_check_branch
          %286 = sbr.rel (%p284) target = $region28
        $region27: #{simple_model2_forward.1} parent=11 // pred_region
          _
        $region28: #{simple_model2_forward.1} parent=11 // pred_fallthru
          _
        // Predicated region
        $region29: #{simple_model2_forward.1} parent=11 // pred_check
          %p287 = pneg %p150
        $region30: #{simple_model2_forward.1} parent=11 // pred_check_branch
          %289 = sbr.rel (%p287) target = $region32
        $region31: #{simple_model2_forward.1} parent=11 // pred_region
          _
        $region32: #{simple_model2_forward.1} parent=11 // pred_fallthru
          _
        // Predicated region
        $region33: #{simple_model2_forward.1} parent=11 // pred_check
          %p290 = pneg %p171
        $region34: #{simple_model2_forward.1} parent=11 // pred_check_branch
          %292 = sbr.rel (%p290) target = $region36
        $region35: #{simple_model2_forward.1} parent=11 // pred_region
          _
        $region36: #{simple_model2_forward.1} parent=11 // pred_fallthru
          _
        // Predicated region
        $region37: #{simple_model2_forward.1} parent=11 // pred_check
          %p293 = pneg %p192
        $region38: #{simple_model2_forward.1} parent=11 // pred_check_branch
          %295 = sbr.rel (%p293) target = $region40
        $region39: #{simple_model2_forward.1} parent=11 // pred_region
          _
        $region40: #{simple_model2_forward.1} parent=11 // pred_fallthru
          _
        // Predicated region
        $region41: #{simple_model2_forward.1} parent=11 // pred_check
          %p296 = pneg %p213
        $region42: #{simple_model2_forward.1} parent=11 // pred_check_branch
          %298 = sbr.rel (%p296) target = $region44
        $region43: #{simple_model2_forward.1} parent=11 // pred_region
          _
        $region44: #{simple_model2_forward.1} parent=11 // pred_fallthru
          _
        // Predicated region
        $region45: #{simple_model2_forward.1} parent=11 // pred_check
          %p299 = pneg %p234
        $region46: #{simple_model2_forward.1} parent=11 // pred_check_branch
          %301 = sbr.rel (%p299) target = $region48
        $region47: #{simple_model2_forward.1} parent=11 // pred_region
          _
        $region48: #{simple_model2_forward.1} parent=11 // pred_fallthru
          _
      $region12: #{simple_model2_forward.1} parent=5 // pred_fallthru
        _
      %p302 = scmp.lt.s32.totalorder %s19, 2
      // Predicated region
      $region49: #{simple_model2_forward.1} parent=5 // pred_check
        %p303 = pneg %p302
      $region50: #{simple_model2_forward.1} parent=5 // pred_check_branch
        %305 = sbr.rel (%p303) target = $region52
      $region51: #{simple_model2_forward.1} parent=5 // pred_region
        // Predicated region
        $region53: #{simple_model2_forward.1} parent=51 // pred_check
          %p306 = pneg %p39
        $region54: #{simple_model2_forward.1} parent=51 // pred_check_branch
          %308 = sbr.rel (%p306) target = $region56
        $region55: #{simple_model2_forward.1} parent=51 // pred_region
          %p309 = scmp.lt.s32.totalorder %s19, 1
          %s310 = scalar_select %p309, %s19, 1
          %s311 = smul.addr %s310, 28
          %s312 = smul.addr %s311, 8
          %s313 = scalar_lea.vmem %s0, %s312
        $region56: #{simple_model2_forward.1} parent=51 // pred_fallthru
          _
      $region52: #{simple_model2_forward.1} parent=5 // pred_fallthru
        _
      %p314 = scmp.le.s32.totalorder 1, %s19
      %p315 = scmp.lt.s32.totalorder %s19, 3
      %p316 = pnand %p314, %p315
      %p317 = pneg %p316
      // Predicated region
      $region57: #{simple_model2_forward.1} parent=5 // pred_check
        _
      $region58: #{simple_model2_forward.1} parent=5 // pred_check_branch
        %319 = sbr.rel (%p316) target = $region60
      $region59: #{simple_model2_forward.1} parent=5 // pred_region
        %s320 = ssub.s32 %s19, 1
        %p321 = scmp.lt.s32.totalorder %s24, 1
        %s322 = scalar_select %p321, %s24, 1
        %s323 = smul.addr %s322, 28
        %s324 = smul.addr %s323, 8
        %s325 = scalar_lea.vmem %s0, %s324
        %p326 = pneg %p45
        %p327 = pneg %p42
        %p328 = pneg %p66
        %p329 = pneg %p63
        %p330 = pneg %p87
        %p331 = pneg %p84
        %p332 = pneg %p108
        %p333 = pneg %p105
        %p334 = pneg %p129
        %p335 = pneg %p126
        %p336 = pneg %p150
        %p337 = pneg %p147
        %p338 = pneg %p171
        %p339 = pneg %p168
        %p340 = pneg %p192
        %p341 = pneg %p189
        %p342 = pneg %p213
        %p343 = pneg %p210
        %p344 = pneg %p234
        %p345 = pneg %p231
        %p346 = pneg %p260
        %p347 = pneg %p257
        %s348 = sand.u32 %s247, 1
        %s349 = scalar_lea.sflag [#allocation5], %s348
        %s350 = sand.u32 %s247, 1
        %s351 = scalar_lea.vmem [#allocation4], %s350
        %p352 = scmp.lt.s32.totalorder %s24, 1
        %s353 = scalar_select %p352, %s24, 1
        %s354 = smul.addr %s353, 28
        %s355 = smul.addr %s354, 8
        %s356 = scalar_lea.vmem %s0, %s355
        %vm358 = vcmask 785408
        %359 = vst.msk [vmem:[#allocation2] sm:$0xff] %vm358, 0.0
        %360 = vst.msk [vmem:[#allocation2 + $0x8] sm:$0xff] %vm358, 0.0
        %361 = vst.msk [vmem:[#allocation2 + $0x10] sm:$0xff] %vm358, 0.0
        %vm362 = vcmask 778240
        %363 = vst.msk [vmem:[#allocation2 + $0x18] sm:$0x1] %vm362, 0.0
        %364 = vst.msk [vmem:[#allocation2 + $0xf7] sm:$0xff] %vm358, 0.0
        %365 = vst.msk [vmem:[#allocation2 + $0xff] sm:$0xff] %vm358, 0.0
        %366 = vst.msk [vmem:[#allocation2 + $0x107] sm:$0x1] %vm362, 0.0
        %v367 = vlaneseq
        %v368 = vshrl.u32 %v367, 7
        %v369 = vadd.s32 %v368, 8
        %v370 = vadd.s32 %v368, 16
        %v371 = vadd.s32 %v368, 24
        %v372 = vadd.s32 %v368, 32
        %v373 = vadd.s32 %v368, 40
        %v374 = vadd.s32 %v368, 48
        %v375 = vadd.s32 %v368, 56
        %v376 = vadd.s32 %v368, 64
        %v377 = vadd.s32 %v368, 72
        %v378 = vadd.s32 %v368, 80
        %v379 = vadd.s32 %v368, 88
        %v380 = vadd.s32 %v368, 96
        %v381 = vadd.s32 %v368, 104
        %v382 = vadd.s32 %v368, 112
        %v383 = vadd.s32 %v368, 120
        %v384 = vadd.s32 %v368, 128
        %v385 = vadd.s32 %v368, 136
        %v386 = vadd.s32 %v368, 144
        %v387 = vadd.s32 %v368, 152
        %v388 = vadd.s32 %v368, 160
        %v389 = vadd.s32 %v368, 168
        %v390 = vadd.s32 %v368, 176
        %v391 = vadd.s32 %v368, 184
        %v392 = vadd.s32 %v368, 192
        %v393 = vadd.s32 %v368, 200
        %v394 = vadd.s32 %v368, 208
        %v395 = vadd.s32 %v368, 216
        %vm396 = vcmp.lt.s32.totalorder %v368, 0
        %v397 = vsub.s32 0, %v368
        %v398 = vsel %vm396, %v397, %v368
        %v399 = vshrl.u32 %v398, 4
        %v400 = vand.u32 %v398, 15
        %v401 = vsub.s32 0, %v400
        %v402 = vsel %vm396, %v401, %v400
        %vm403 = vcmp.lt.s32.totalorder %v369, 0
        %v404 = vsub.s32 0, %v369
        %v405 = vsel %vm403, %v404, %v369
        %v406 = vshrl.u32 %v405, 4
        %v407 = vand.u32 %v405, 15
        %v408 = vsub.s32 0, %v407
        %v409 = vsel %vm403, %v408, %v407
        %vm410 = vcmp.lt.s32.totalorder %v370, 0
        %v411 = vsub.s32 0, %v370
        %v412 = vsel %vm410, %v411, %v370
        %v413 = vshrl.u32 %v412, 4
        %v414 = vand.u32 %v412, 15
        %v415 = vsub.s32 0, %v414
        %v416 = vsel %vm410, %v415, %v414
        %vm417 = vcmp.lt.s32.totalorder %v371, 0
        %v418 = vsub.s32 0, %v371
        %v419 = vsel %vm417, %v418, %v371
        %v420 = vshrl.u32 %v419, 4
        %v421 = vand.u32 %v419, 15
        %v422 = vsub.s32 0, %v421
        %v423 = vsel %vm417, %v422, %v421
        %vm424 = vcmp.lt.s32.totalorder %v372, 0
        %v425 = vsub.s32 0, %v372
        %v426 = vsel %vm424, %v425, %v372
        %v427 = vshrl.u32 %v426, 4
        %v428 = vand.u32 %v426, 15
        %v429 = vsub.s32 0, %v428
        %v430 = vsel %vm424, %v429, %v428
        %vm431 = vcmp.lt.s32.totalorder %v373, 0
        %v432 = vsub.s32 0, %v373
        %v433 = vsel %vm431, %v432, %v373
        %v434 = vshrl.u32 %v433, 4
        %v435 = vand.u32 %v433, 15
        %v436 = vsub.s32 0, %v435
        %v437 = vsel %vm431, %v436, %v435
        %vm438 = vcmp.lt.s32.totalorder %v374, 0
        %v439 = vsub.s32 0, %v374
        %v440 = vsel %vm438, %v439, %v374
        %v441 = vshrl.u32 %v440, 4
        %v442 = vand.u32 %v440, 15
        %v443 = vsub.s32 0, %v442
        %v444 = vsel %vm438, %v443, %v442
        %vm445 = vcmp.lt.s32.totalorder %v375, 0
        %v446 = vsub.s32 0, %v375
        %v447 = vsel %vm445, %v446, %v375
        %v448 = vshrl.u32 %v447, 4
        %v449 = vand.u32 %v447, 15
        %v450 = vsub.s32 0, %v449
        %v451 = vsel %vm445, %v450, %v449
        %vm452 = vcmp.lt.s32.totalorder %v376, 0
        %v453 = vsub.s32 0, %v376
        %v454 = vsel %vm452, %v453, %v376
        %v455 = vshrl.u32 %v454, 4
        %v456 = vand.u32 %v454, 15
        %v457 = vsub.s32 0, %v456
        %v458 = vsel %vm452, %v457, %v456
        %vm459 = vcmp.lt.s32.totalorder %v377, 0
        %v460 = vsub.s32 0, %v377
        %v461 = vsel %vm459, %v460, %v377
        %v462 = vshrl.u32 %v461, 4
        %v463 = vand.u32 %v461, 15
        %v464 = vsub.s32 0, %v463
        %v465 = vsel %vm459, %v464, %v463
        %vm466 = vcmp.lt.s32.totalorder %v378, 0
        %v467 = vsub.s32 0, %v378
        %v468 = vsel %vm466, %v467, %v378
        %v469 = vshrl.u32 %v468, 4
        %v470 = vand.u32 %v468, 15
        %v471 = vsub.s32 0, %v470
        %v472 = vsel %vm466, %v471, %v470
        %vm473 = vcmp.lt.s32.totalorder %v379, 0
        %v474 = vsub.s32 0, %v379
        %v475 = vsel %vm473, %v474, %v379
        %v476 = vshrl.u32 %v475, 4
        %v477 = vand.u32 %v475, 15
        %v478 = vsub.s32 0, %v477
        %v479 = vsel %vm473, %v478, %v477
        %vm480 = vcmp.lt.s32.totalorder %v380, 0
        %v481 = vsub.s32 0, %v380
        %v482 = vsel %vm480, %v481, %v380
        %v483 = vshrl.u32 %v482, 4
        %v484 = vand.u32 %v482, 15
        %v485 = vsub.s32 0, %v484
        %v486 = vsel %vm480, %v485, %v484
        %vm487 = vcmp.lt.s32.totalorder %v381, 0
        %v488 = vsub.s32 0, %v381
        %v489 = vsel %vm487, %v488, %v381
        %v490 = vshrl.u32 %v489, 4
        %v491 = vand.u32 %v489, 15
        %v492 = vsub.s32 0, %v491
        %v493 = vsel %vm487, %v492, %v491
        %vm494 = vcmp.lt.s32.totalorder %v382, 0
        %v495 = vsub.s32 0, %v382
        %v496 = vsel %vm494, %v495, %v382
        %v497 = vshrl.u32 %v496, 4
        %v498 = vand.u32 %v496, 15
        %v499 = vsub.s32 0, %v498
        %v500 = vsel %vm494, %v499, %v498
        %vm501 = vcmp.lt.s32.totalorder %v383, 0
        %v502 = vsub.s32 0, %v383
        %v503 = vsel %vm501, %v502, %v383
        %v504 = vshrl.u32 %v503, 4
        %v505 = vand.u32 %v503, 15
        %v506 = vsub.s32 0, %v505
        %v507 = vsel %vm501, %v506, %v505
        %vm508 = vcmp.lt.s32.totalorder %v384, 0
        %v509 = vsub.s32 0, %v384
        %v510 = vsel %vm508, %v509, %v384
        %v511 = vshrl.u32 %v510, 4
        %v512 = vand.u32 %v510, 15
        %v513 = vsub.s32 0, %v512
        %v514 = vsel %vm508, %v513, %v512
        %vm515 = vcmp.lt.s32.totalorder %v385, 0
        %v516 = vsub.s32 0, %v385
        %v517 = vsel %vm515, %v516, %v385
        %v518 = vshrl.u32 %v517, 4
        %v519 = vand.u32 %v517, 15
        %v520 = vsub.s32 0, %v519
        %v521 = vsel %vm515, %v520, %v519
        %vm522 = vcmp.lt.s32.totalorder %v386, 0
        %v523 = vsub.s32 0, %v386
        %v524 = vsel %vm522, %v523, %v386
        %v525 = vshrl.u32 %v524, 4
        %v526 = vand.u32 %v524, 15
        %v527 = vsub.s32 0, %v526
        %v528 = vsel %vm522, %v527, %v526
        %vm529 = vcmp.lt.s32.totalorder %v387, 0
        %v530 = vsub.s32 0, %v387
        %v531 = vsel %vm529, %v530, %v387
        %v532 = vshrl.u32 %v531, 4
        %v533 = vand.u32 %v531, 15
        %v534 = vsub.s32 0, %v533
        %v535 = vsel %vm529, %v534, %v533
        %vm536 = vcmp.lt.s32.totalorder %v388, 0
        %v537 = vsub.s32 0, %v388
        %v538 = vsel %vm536, %v537, %v388
        %v539 = vshrl.u32 %v538, 4
        %v540 = vand.u32 %v538, 15
        %v541 = vsub.s32 0, %v540
        %v542 = vsel %vm536, %v541, %v540
        %vm543 = vcmp.lt.s32.totalorder %v389, 0
        %v544 = vsub.s32 0, %v389
        %v545 = vsel %vm543, %v544, %v389
        %v546 = vshrl.u32 %v545, 4
        %v547 = vand.u32 %v545, 15
        %v548 = vsub.s32 0, %v547
        %v549 = vsel %vm543, %v548, %v547
        %vm550 = vcmp.lt.s32.totalorder %v390, 0
        %v551 = vsub.s32 0, %v390
        %v552 = vsel %vm550, %v551, %v390
        %v553 = vshrl.u32 %v552, 4
        %v554 = vand.u32 %v552, 15
        %v555 = vsub.s32 0, %v554
        %v556 = vsel %vm550, %v555, %v554
        %vm557 = vcmp.lt.s32.totalorder %v391, 0
        %v558 = vsub.s32 0, %v391
        %v559 = vsel %vm557, %v558, %v391
        %v560 = vshrl.u32 %v559, 4
        %v561 = vand.u32 %v559, 15
        %v562 = vsub.s32 0, %v561
        %v563 = vsel %vm557, %v562, %v561
        %vm564 = vcmp.lt.s32.totalorder %v392, 0
        %v565 = vsub.s32 0, %v392
        %v566 = vsel %vm564, %v565, %v392
        %v567 = vshrl.u32 %v566, 4
        %v568 = vand.u32 %v566, 15
        %v569 = vsub.s32 0, %v568
        %v570 = vsel %vm564, %v569, %v568
        %vm571 = vcmp.lt.s32.totalorder %v393, 0
        %v572 = vsub.s32 0, %v393
        %v573 = vsel %vm571, %v572, %v393
        %v574 = vshrl.u32 %v573, 4
        %v575 = vand.u32 %v573, 15
        %v576 = vsub.s32 0, %v575
        %v577 = vsel %vm571, %v576, %v575
        %vm578 = vcmp.lt.s32.totalorder %v394, 0
        %v579 = vsub.s32 0, %v394
        %v580 = vsel %vm578, %v579, %v394
        %v581 = vshrl.u32 %v580, 4
        %v582 = vand.u32 %v580, 15
        %v583 = vsub.s32 0, %v582
        %v584 = vsel %vm578, %v583, %v582
        %vm585 = vcmp.lt.s32.totalorder %v395, 0
        %v586 = vsub.s32 0, %v395
        %v587 = vsel %vm585, %v586, %v395
        %v588 = vshrl.u32 %v587, 4
        %v589 = vand.u32 %v587, 15
        %v590 = vsub.s32 0, %v589
        %v591 = vsel %vm585, %v590, %v589
        %vm592 = vcmp.ne.s32.totalorder %v402, 0
        %vm593 = vcmp.ne.s32.totalorder %v409, 0
        %vm594 = vcmp.ne.s32.totalorder %v416, 0
        %vm595 = vcmp.ne.s32.totalorder %v423, 0
        %vm596 = vcmp.ne.s32.totalorder %v430, 0
        %vm597 = vcmp.ne.s32.totalorder %v437, 0
        %vm598 = vcmp.ne.s32.totalorder %v444, 0
        %vm599 = vcmp.ne.s32.totalorder %v451, 0
        %vm600 = vcmp.ne.s32.totalorder %v458, 0
        %vm601 = vcmp.ne.s32.totalorder %v465, 0
        %vm602 = vcmp.ne.s32.totalorder %v472, 0
        %vm603 = vcmp.ne.s32.totalorder %v479, 0
        %vm604 = vcmp.ne.s32.totalorder %v486, 0
        %vm605 = vcmp.ne.s32.totalorder %v493, 0
        %vm606 = vcmp.ne.s32.totalorder %v500, 0
        %vm607 = vcmp.ne.s32.totalorder %v507, 0
        %vm608 = vcmp.ne.s32.totalorder %v514, 0
        %vm609 = vcmp.ne.s32.totalorder %v521, 0
        %vm610 = vcmp.ne.s32.totalorder %v528, 0
        %vm611 = vcmp.ne.s32.totalorder %v535, 0
        %vm612 = vcmp.ne.s32.totalorder %v542, 0
        %vm613 = vcmp.ne.s32.totalorder %v549, 0
        %vm614 = vcmp.ne.s32.totalorder %v556, 0
        %vm615 = vcmp.ne.s32.totalorder %v563, 0
        %vm616 = vcmp.ne.s32.totalorder %v570, 0
        %vm617 = vcmp.ne.s32.totalorder %v577, 0
        %vm618 = vcmp.ne.s32.totalorder %v584, 0
        %vm619 = vcmp.ne.s32.totalorder %v591, 0
        %vm620 = vcmp.lt.s32.totalorder %v402, 0
        %vm621 = vcmp.lt.s32.totalorder %v409, 0
        %vm622 = vcmp.lt.s32.totalorder %v416, 0
        %vm623 = vcmp.lt.s32.totalorder %v423, 0
        %vm624 = vcmp.lt.s32.totalorder %v430, 0
        %vm625 = vcmp.lt.s32.totalorder %v437, 0
        %vm626 = vcmp.lt.s32.totalorder %v444, 0
        %vm627 = vcmp.lt.s32.totalorder %v451, 0
        %vm628 = vcmp.lt.s32.totalorder %v458, 0
        %vm629 = vcmp.lt.s32.totalorder %v465, 0
        %vm630 = vcmp.lt.s32.totalorder %v472, 0
        %vm631 = vcmp.lt.s32.totalorder %v479, 0
        %vm632 = vcmp.lt.s32.totalorder %v486, 0
        %vm633 = vcmp.lt.s32.totalorder %v493, 0
        %vm634 = vcmp.lt.s32.totalorder %v500, 0
        %vm635 = vcmp.lt.s32.totalorder %v507, 0
        %vm636 = vcmp.lt.s32.totalorder %v514, 0
        %vm637 = vcmp.lt.s32.totalorder %v521, 0
        %vm638 = vcmp.lt.s32.totalorder %v528, 0
        %vm639 = vcmp.lt.s32.totalorder %v535, 0
        %vm640 = vcmp.lt.s32.totalorder %v542, 0
        %vm641 = vcmp.lt.s32.totalorder %v549, 0
        %vm642 = vcmp.lt.s32.totalorder %v556, 0
        %vm643 = vcmp.lt.s32.totalorder %v563, 0
        %vm644 = vcmp.lt.s32.totalorder %v570, 0
        %vm645 = vcmp.lt.s32.totalorder %v577, 0
        %vm646 = vcmp.lt.s32.totalorder %v584, 0
        %vm647 = vcmp.lt.s32.totalorder %v591, 0
        %vm648 = vmand %vm620, %vm592
        %vm649 = vmand %vm621, %vm593
        %vm650 = vmand %vm622, %vm594
        %vm651 = vmand %vm623, %vm595
        %vm652 = vmand %vm624, %vm596
        %vm653 = vmand %vm625, %vm597
        %vm654 = vmand %vm626, %vm598
        %vm655 = vmand %vm627, %vm599
        %vm656 = vmand %vm628, %vm600
        %vm657 = vmand %vm629, %vm601
        %vm658 = vmand %vm630, %vm602
        %vm659 = vmand %vm631, %vm603
        %vm660 = vmand %vm632, %vm604
        %vm661 = vmand %vm633, %vm605
        %vm662 = vmand %vm634, %vm606
        %vm663 = vmand %vm635, %vm607
        %vm664 = vmand %vm636, %vm608
        %vm665 = vmand %vm637, %vm609
        %vm666 = vmand %vm638, %vm610
        %vm667 = vmand %vm639, %vm611
        %vm668 = vmand %vm640, %vm612
        %vm669 = vmand %vm641, %vm613
        %vm670 = vmand %vm642, %vm614
        %vm671 = vmand %vm643, %vm615
        %vm672 = vmand %vm644, %vm616
        %vm673 = vmand %vm645, %vm617
        %vm674 = vmand %vm646, %vm618
        %vm675 = vmand %vm647, %vm619
        %v676 = vadd.s32 %v402, 16
        %v677 = vadd.s32 %v409, 16
        %v678 = vadd.s32 %v416, 16
        %v679 = vadd.s32 %v423, 16
        %v680 = vadd.s32 %v430, 16
        %v681 = vadd.s32 %v437, 16
        %v682 = vadd.s32 %v444, 16
        %v683 = vadd.s32 %v451, 16
        %v684 = vadd.s32 %v458, 16
        %v685 = vadd.s32 %v465, 16
        %v686 = vadd.s32 %v472, 16
        %v687 = vadd.s32 %v479, 16
        %v688 = vadd.s32 %v486, 16
        %v689 = vadd.s32 %v493, 16
        %v690 = vadd.s32 %v500, 16
        %v691 = vadd.s32 %v507, 16
        %v692 = vadd.s32 %v514, 16
        %v693 = vadd.s32 %v521, 16
        %v694 = vadd.s32 %v528, 16
        %v695 = vadd.s32 %v535, 16
        %v696 = vadd.s32 %v542, 16
        %v697 = vadd.s32 %v549, 16
        %v698 = vadd.s32 %v556, 16
        %v699 = vadd.s32 %v563, 16
        %v700 = vadd.s32 %v570, 16
        %v701 = vadd.s32 %v577, 16
        %v702 = vadd.s32 %v584, 16
        %v703 = vadd.s32 %v591, 16
        %v704 = vsel %vm648, %v676, %v402
        %v705 = vsel %vm649, %v677, %v409
        %v706 = vsel %vm650, %v678, %v416
        %v707 = vsel %vm651, %v679, %v423
        %v708 = vsel %vm652, %v680, %v430
        %v709 = vsel %vm653, %v681, %v437
        %v710 = vsel %vm654, %v682, %v444
        %v711 = vsel %vm655, %v683, %v451
        %v712 = vsel %vm656, %v684, %v458
        %v713 = vsel %vm657, %v685, %v465
        %v714 = vsel %vm658, %v686, %v472
        %v715 = vsel %vm659, %v687, %v479
        %v716 = vsel %vm660, %v688, %v486
        %v717 = vsel %vm661, %v689, %v493
        %v718 = vsel %vm662, %v690, %v500
        %v719 = vsel %vm663, %v691, %v507
        %v720 = vsel %vm664, %v692, %v514
        %v721 = vsel %vm665, %v693, %v521
        %v722 = vsel %vm666, %v694, %v528
        %v723 = vsel %vm667, %v695, %v535
        %v724 = vsel %vm668, %v696, %v542
        %v725 = vsel %vm669, %v697, %v549
        %v726 = vsel %vm670, %v698, %v556
        %v727 = vsel %vm671, %v699, %v563
        %v728 = vsel %vm672, %v700, %v570
        %v729 = vsel %vm673, %v701, %v577
        %v730 = vsel %vm674, %v702, %v584
        %v731 = vsel %vm675, %v703, %v591
        %vm732 = vcmp.lt.s32.totalorder %v704, 14
        %vm733 = vcmp.lt.s32.totalorder %v705, 14
        %vm734 = vcmp.lt.s32.totalorder %v706, 14
        %vm735 = vcmp.lt.s32.totalorder %v707, 14
        %vm736 = vcmp.lt.s32.totalorder %v708, 14
        %vm737 = vcmp.lt.s32.totalorder %v709, 14
        %vm738 = vcmp.lt.s32.totalorder %v710, 14
        %vm739 = vcmp.lt.s32.totalorder %v711, 14
        %vm740 = vcmp.lt.s32.totalorder %v712, 14
        %vm741 = vcmp.lt.s32.totalorder %v713, 14
        %vm742 = vcmp.lt.s32.totalorder %v714, 14
        %vm743 = vcmp.lt.s32.totalorder %v715, 14
        %vm744 = vcmp.lt.s32.totalorder %v716, 14
        %vm745 = vcmp.lt.s32.totalorder %v717, 14
        %vm746 = vcmp.lt.s32.totalorder %v718, 14
        %vm747 = vcmp.lt.s32.totalorder %v719, 14
        %vm748 = vcmp.lt.s32.totalorder %v720, 14
        %vm749 = vcmp.lt.s32.totalorder %v721, 14
        %vm750 = vcmp.lt.s32.totalorder %v722, 14
        %vm751 = vcmp.lt.s32.totalorder %v723, 14
        %vm752 = vcmp.lt.s32.totalorder %v724, 14
        %vm753 = vcmp.lt.s32.totalorder %v725, 14
        %vm754 = vcmp.lt.s32.totalorder %v726, 14
        %vm755 = vcmp.lt.s32.totalorder %v727, 14
        %vm756 = vcmp.lt.s32.totalorder %v728, 14
        %vm757 = vcmp.lt.s32.totalorder %v729, 14
        %vm758 = vcmp.lt.s32.totalorder %v730, 14
        %vm759 = vcmp.lt.s32.totalorder %v731, 14
        %v760 = vld [vmem:[%s356] sm:$0xff]
        %v761 = vld [vmem:[%s356 + $0x8] sm:$0xff]
        %v762 = vld [vmem:[%s356 + $0x10] sm:$0xff]
        %v763 = vld [vmem:[%s356 + $0x18] sm:$0xff]
        %v764 = vld [vmem:[%s356 + $0x20] sm:$0xff]
        %v765 = vld [vmem:[%s356 + $0x28] sm:$0xff]
        %v766 = vld [vmem:[%s356 + $0x30] sm:$0xff]
        %v767 = vld [vmem:[%s356 + $0x38] sm:$0xff]
        %v768 = vld [vmem:[%s356 + $0x40] sm:$0xff]
        %v769 = vld [vmem:[%s356 + $0x48] sm:$0xff]
        %v770 = vld [vmem:[%s356 + $0x50] sm:$0xff]
        %v771 = vld [vmem:[%s356 + $0x58] sm:$0xff]
        %v772 = vld [vmem:[%s356 + $0x60] sm:$0xff]
        %v773 = vld [vmem:[%s356 + $0x68] sm:$0xff]
        %v774 = vld [vmem:[%s356 + $0x70] sm:$0xff]
        %v775 = vld [vmem:[%s356 + $0x78] sm:$0xff]
        %v776 = vld [vmem:[%s356 + $0x80] sm:$0xff]
        %v777 = vld [vmem:[%s356 + $0x88] sm:$0xff]
        %v778 = vld [vmem:[%s356 + $0x90] sm:$0xff]
        %v779 = vld [vmem:[%s356 + $0x98] sm:$0xff]
        %v780 = vld [vmem:[%s356 + $0xa0] sm:$0xff]
        %v781 = vld [vmem:[%s356 + $0xa8] sm:$0xff]
        %v782 = vld [vmem:[%s356 + $0xb0] sm:$0xff]
        %v783 = vld [vmem:[%s356 + $0xb8] sm:$0xff]
        %v784 = vld [vmem:[%s356 + $0xc0] sm:$0xff]
        %v785 = vld [vmem:[%s356 + $0xc8] sm:$0xff]
        %v786 = vld [vmem:[%s356 + $0xd0] sm:$0xff]
        %v787 = vld [vmem:[%s356 + $0xd8] sm:$0xff]
        %v788 = vld [vmem:[%s2] sm:$0xff]
        %v789 = vld [vmem:[%s2 + $0x8] sm:$0xff]
        %v790 = vld [vmem:[%s2 + $0x10] sm:$0xff]
        %v791 = vld [vmem:[%s2 + $0x18] sm:$0x7]
        %v792 = vld [vmem:[%s3] sm:$0x1]
        %v794 = vperm.slane %v792, 0
        %vm796 = vcmask 220160
        %v798 = vsel %vm796, %v760, 0
        %v801 = vsel %vm796, %v761, 0
        %v804 = vsel %vm796, %v762, 0
        %v807 = vsel %vm796, %v763, 0
        %v810 = vsel %vm796, %v764, 0
        %v813 = vsel %vm796, %v765, 0
        %v816 = vsel %vm796, %v766, 0
        %v819 = vsel %vm796, %v767, 0
        %v822 = vsel %vm796, %v768, 0
        %v825 = vsel %vm796, %v769, 0
        %v828 = vsel %vm796, %v770, 0
        %v831 = vsel %vm796, %v771, 0
        %v834 = vsel %vm796, %v772, 0
        %v837 = vsel %vm796, %v773, 0
        %v840 = vsel %vm796, %v774, 0
        %v843 = vsel %vm796, %v775, 0
        %v846 = vsel %vm796, %v776, 0
        %v849 = vsel %vm796, %v777, 0
        %v852 = vsel %vm796, %v778, 0
        %v855 = vsel %vm796, %v779, 0
        %v858 = vsel %vm796, %v780, 0
        %v861 = vsel %vm796, %v781, 0
        %v864 = vsel %vm796, %v782, 0
        %v867 = vsel %vm796, %v783, 0
        %v870 = vsel %vm796, %v784, 0
        %v873 = vsel %vm796, %v785, 0
        %v876 = vsel %vm796, %v786, 0
        %v879 = vsel %vm796, %v787, 0
        %vm881 = vcmask 1042432
        %v883 = vsel %vm881, %v791, 0
        %885 = vmatpush.msra.mxu0 0.0
        %886 = vmatpush.msra.mxu0 0.0
        %887 = vmatpush.msra.mxu0 0.0
        %888 = vmatpush.msra.mxu0 0.0
        %889 = vmatpush.msra.mxu0 0.0
        %890 = vmatpush.msra.mxu0 0.0
        %891 = vmatpush.msra.mxu0 0.0
        %892 = vmatpush.msra.mxu0 0.0
        %893 = vmatpush.msra.mxu0 0.0
        %894 = vmatpush.msra.mxu0 0.0
        %895 = vmatpush.msra.mxu0 0.0
        %896 = vmatpush.msra.mxu0 0.0
        %897 = vmatpush.msra.mxu0 %v883
        %898 = vmatpush.msra.mxu0 %v790
        %899 = vmatpush.msra.mxu0 %v789
        %900 = vmatpush.msra.mxu0 %v788
        %901 = vmatmul.f32.gmra.mxu0 %v798
        %v902 = vpop.f32.mrf.mxu0
        %v903 = vadd.f32 %v794, %v902
        %904 = vmatmul.f32.gmra.mxu0 %v801
        %v905 = vpop.f32.mrf.mxu0
        %v906 = vadd.f32 %v794, %v905
        %907 = vmatmul.f32.gmra.mxu0 %v804
        %v908 = vpop.f32.mrf.mxu0
        %v909 = vadd.f32 %v794, %v908
        %910 = vmatmul.f32.gmra.mxu0 %v807
        %v911 = vpop.f32.mrf.mxu0
        %v912 = vadd.f32 %v794, %v911
        %913 = vmatmul.f32.gmra.mxu0 %v810
        %v914 = vpop.f32.mrf.mxu0
        %v915 = vadd.f32 %v794, %v914
        %916 = vmatmul.f32.gmra.mxu0 %v813
        %v917 = vpop.f32.mrf.mxu0
        %v918 = vadd.f32 %v794, %v917
        %919 = vmatmul.f32.gmra.mxu0 %v816
        %v920 = vpop.f32.mrf.mxu0
        %v921 = vadd.f32 %v794, %v920
        %922 = vmatmul.f32.gmra.mxu0 %v819
        %v923 = vpop.f32.mrf.mxu0
        %v924 = vadd.f32 %v794, %v923
        %925 = vmatmul.f32.gmra.mxu0 %v822
        %v926 = vpop.f32.mrf.mxu0
        %v927 = vadd.f32 %v794, %v926
        %928 = vmatmul.f32.gmra.mxu0 %v825
        %v929 = vpop.f32.mrf.mxu0
        %v930 = vadd.f32 %v794, %v929
        %931 = vmatmul.f32.gmra.mxu0 %v828
        %v932 = vpop.f32.mrf.mxu0
        %v933 = vadd.f32 %v794, %v932
        %934 = vmatmul.f32.gmra.mxu0 %v831
        %v935 = vpop.f32.mrf.mxu0
        %v936 = vadd.f32 %v794, %v935
        %937 = vmatmul.f32.gmra.mxu0 %v834
        %v938 = vpop.f32.mrf.mxu0
        %v939 = vadd.f32 %v794, %v938
        %940 = vmatmul.f32.gmra.mxu0 %v837
        %v941 = vpop.f32.mrf.mxu0
        %v942 = vadd.f32 %v794, %v941
        %943 = vmatmul.f32.gmra.mxu0 %v840
        %v944 = vpop.f32.mrf.mxu0
        %v945 = vadd.f32 %v794, %v944
        %946 = vmatmul.f32.gmra.mxu0 %v843
        %v947 = vpop.f32.mrf.mxu0
        %v948 = vadd.f32 %v794, %v947
        %949 = vmatmul.f32.gmra.mxu0 %v846
        %v950 = vpop.f32.mrf.mxu0
        %v951 = vadd.f32 %v794, %v950
        %952 = vmatmul.f32.gmra.mxu0 %v849
        %v953 = vpop.f32.mrf.mxu0
        %v954 = vadd.f32 %v794, %v953
        %955 = vmatmul.f32.gmra.mxu0 %v852
        %v956 = vpop.f32.mrf.mxu0
        %v957 = vadd.f32 %v794, %v956
        %958 = vmatmul.f32.gmra.mxu0 %v855
        %v959 = vpop.f32.mrf.mxu0
        %v960 = vadd.f32 %v794, %v959
        %961 = vmatmul.f32.gmra.mxu0 %v858
        %v962 = vpop.f32.mrf.mxu0
        %v963 = vadd.f32 %v794, %v962
        %964 = vmatmul.f32.gmra.mxu0 %v861
        %v965 = vpop.f32.mrf.mxu0
        %v966 = vadd.f32 %v794, %v965
        %967 = vmatmul.f32.gmra.mxu0 %v864
        %v968 = vpop.f32.mrf.mxu0
        %v969 = vadd.f32 %v794, %v968
        %970 = vmatmul.f32.gmra.mxu0 %v867
        %v971 = vpop.f32.mrf.mxu0
        %v972 = vadd.f32 %v794, %v971
        %973 = vmatmul.f32.gmra.mxu0 %v870
        %v974 = vpop.f32.mrf.mxu0
        %v975 = vadd.f32 %v794, %v974
        %976 = vmatmul.f32.gmra.mxu0 %v873
        %v977 = vpop.f32.mrf.mxu0
        %v978 = vadd.f32 %v794, %v977
        %979 = vmatmul.f32.gmra.mxu0 %v876
        %v980 = vpop.f32.mrf.mxu0
        %v981 = vadd.f32 %v794, %v980
        %982 = vmatmul.f32.gmra.mxu0 %v879
        %v983 = vpop.f32.mrf.mxu0
        %v984 = vadd.f32 %v794, %v983
        %985 = vdwg.mxu0
        %v986 = vmax.f32 %v903, 0.0
        %v987 = vmax.f32 %v906, 0.0
        %v988 = vmax.f32 %v909, 0.0
        %v989 = vmax.f32 %v912, 0.0
        %v990 = vmax.f32 %v915, 0.0
        %v991 = vmax.f32 %v918, 0.0
        %v992 = vmax.f32 %v921, 0.0
        %v993 = vmax.f32 %v924, 0.0
        %v994 = vmax.f32 %v927, 0.0
        %v995 = vmax.f32 %v930, 0.0
        %v996 = vmax.f32 %v933, 0.0
        %v997 = vmax.f32 %v936, 0.0
        %v998 = vmax.f32 %v939, 0.0
        %v999 = vmax.f32 %v942, 0.0
        %v1000 = vmax.f32 %v945, 0.0
        %v1001 = vmax.f32 %v948, 0.0
        %v1002 = vmax.f32 %v951, 0.0
        %v1003 = vmax.f32 %v954, 0.0
        %v1004 = vmax.f32 %v957, 0.0
        %v1005 = vmax.f32 %v960, 0.0
        %v1006 = vmax.f32 %v963, 0.0
        %v1007 = vmax.f32 %v966, 0.0
        %v1008 = vmax.f32 %v969, 0.0
        %v1009 = vmax.f32 %v972, 0.0
        %v1010 = vmax.f32 %v975, 0.0
        %v1011 = vmax.f32 %v978, 0.0
        %v1012 = vmax.f32 %v981, 0.0
        %v1013 = vmax.f32 %v984, 0.0
        %v1014 = vsel %vm732, 1, 0
        %v1015 = vsel %vm733, 1, 0
        %v1016 = vsel %vm734, 1, 0
        %v1017 = vsel %vm735, 1, 0
        %v1018 = vsel %vm736, 1, 0
        %v1019 = vsel %vm737, 1, 0
        %v1020 = vsel %vm738, 1, 0
        %v1021 = vsel %vm739, 1, 0
        %v1022 = vsel %vm740, 1, 0
        %v1023 = vsel %vm741, 1, 0
        %v1024 = vsel %vm742, 1, 0
        %v1025 = vsel %vm743, 1, 0
        %v1026 = vsel %vm744, 1, 0
        %v1027 = vsel %vm745, 1, 0
        %v1028 = vsel %vm746, 1, 0
        %v1029 = vsel %vm747, 1, 0
        %v1030 = vsel %vm748, 1, 0
        %v1031 = vsel %vm749, 1, 0
        %v1032 = vsel %vm750, 1, 0
        %v1033 = vsel %vm751, 1, 0
        %v1034 = vsel %vm752, 1, 0
        %v1035 = vsel %vm753, 1, 0
        %v1036 = vsel %vm754, 1, 0
        %v1037 = vsel %vm755, 1, 0
        %v1038 = vsel %vm756, 1, 0
        %v1039 = vsel %vm757, 1, 0
        %v1040 = vsel %vm758, 1, 0
        %v1041 = vsel %vm759, 1, 0
        %vm1042 = vcmp.eq.s32.totalorder %v1014, 1
        %vm1043 = vcmp.eq.s32.totalorder %v1015, 1
        %vm1044 = vcmp.eq.s32.totalorder %v1016, 1
        %vm1045 = vcmp.eq.s32.totalorder %v1017, 1
        %vm1046 = vcmp.eq.s32.totalorder %v1018, 1
        %vm1047 = vcmp.eq.s32.totalorder %v1019, 1
        %vm1048 = vcmp.eq.s32.totalorder %v1020, 1
        %vm1049 = vcmp.eq.s32.totalorder %v1021, 1
        %vm1050 = vcmp.eq.s32.totalorder %v1022, 1
        %vm1051 = vcmp.eq.s32.totalorder %v1023, 1
        %vm1052 = vcmp.eq.s32.totalorder %v1024, 1
        %vm1053 = vcmp.eq.s32.totalorder %v1025, 1
        %vm1054 = vcmp.eq.s32.totalorder %v1026, 1
        %vm1055 = vcmp.eq.s32.totalorder %v1027, 1
        %vm1056 = vcmp.eq.s32.totalorder %v1028, 1
        %vm1057 = vcmp.eq.s32.totalorder %v1029, 1
        %vm1058 = vcmp.eq.s32.totalorder %v1030, 1
        %vm1059 = vcmp.eq.s32.totalorder %v1031, 1
        %vm1060 = vcmp.eq.s32.totalorder %v1032, 1
        %vm1061 = vcmp.eq.s32.totalorder %v1033, 1
        %vm1062 = vcmp.eq.s32.totalorder %v1034, 1
        %vm1063 = vcmp.eq.s32.totalorder %v1035, 1
        %vm1064 = vcmp.eq.s32.totalorder %v1036, 1
        %vm1065 = vcmp.eq.s32.totalorder %v1037, 1
        %vm1066 = vcmp.eq.s32.totalorder %v1038, 1
        %vm1067 = vcmp.eq.s32.totalorder %v1039, 1
        %vm1068 = vcmp.eq.s32.totalorder %v1040, 1
        %vm1069 = vcmp.eq.s32.totalorder %v1041, 1
        %v1070 = vsel %vm1042, %v986, 0.0
        %v1071 = vsel %vm1043, %v987, 0.0
        %v1072 = vsel %vm1044, %v988, 0.0
        %v1073 = vsel %vm1045, %v989, 0.0
        %v1074 = vsel %vm1046, %v990, 0.0
        %v1075 = vsel %vm1047, %v991, 0.0
        %v1076 = vsel %vm1048, %v992, 0.0
        %v1077 = vsel %vm1049, %v993, 0.0
        %v1078 = vsel %vm1050, %v994, 0.0
        %v1079 = vsel %vm1051, %v995, 0.0
        %v1080 = vsel %vm1052, %v996, 0.0
        %v1081 = vsel %vm1053, %v997, 0.0
        %v1082 = vsel %vm1054, %v998, 0.0
        %v1083 = vsel %vm1055, %v999, 0.0
        %v1084 = vsel %vm1056, %v1000, 0.0
        %v1085 = vsel %vm1057, %v1001, 0.0
        %v1086 = vsel %vm1058, %v1002, 0.0
        %v1087 = vsel %vm1059, %v1003, 0.0
        %v1088 = vsel %vm1060, %v1004, 0.0
        %v1089 = vsel %vm1061, %v1005, 0.0
        %v1090 = vsel %vm1062, %v1006, 0.0
        %v1091 = vsel %vm1063, %v1007, 0.0
        %v1092 = vsel %vm1064, %v1008, 0.0
        %v1093 = vsel %vm1065, %v1009, 0.0
        %v1094 = vsel %vm1066, %v1010, 0.0
        %v1095 = vsel %vm1067, %v1011, 0.0
        %v1096 = vsel %vm1068, %v1012, 0.0
        %v1097 = vsel %vm1069, %v1013, 0.0
        %vm1098 = vcmask 261120
        %1099 = vst.msk [vmem:[#allocation2 + $0x19] sm:$0xff] %vm1098, %v1070
        %1100 = vst.msk [vmem:[#allocation2 + $0x21] sm:$0xff] %vm1098, %v1071
        %1101 = vst.msk [vmem:[#allocation2 + $0x29] sm:$0xff] %vm1098, %v1072
        %1102 = vst.msk [vmem:[#allocation2 + $0x31] sm:$0xff] %vm1098, %v1073
        %1103 = vst.msk [vmem:[#allocation2 + $0x39] sm:$0xff] %vm1098, %v1074
        %1104 = vst.msk [vmem:[#allocation2 + $0x41] sm:$0xff] %vm1098, %v1075
        %1105 = vst.msk [vmem:[#allocation2 + $0x49] sm:$0xff] %vm1098, %v1076
        %1106 = vst.msk [vmem:[#allocation2 + $0x51] sm:$0xff] %vm1098, %v1077
        %1107 = vst.msk [vmem:[#allocation2 + $0x59] sm:$0xff] %vm1098, %v1078
        %1108 = vst.msk [vmem:[#allocation2 + $0x61] sm:$0xff] %vm1098, %v1079
        %1109 = vst.msk [vmem:[#allocation2 + $0x69] sm:$0xff] %vm1098, %v1080
        %1110 = vst.msk [vmem:[#allocation2 + $0x71] sm:$0xff] %vm1098, %v1081
        %1111 = vst.msk [vmem:[#allocation2 + $0x79] sm:$0xff] %vm1098, %v1082
        %1112 = vst.msk [vmem:[#allocation2 + $0x81] sm:$0xff] %vm1098, %v1083
        %1113 = vst.msk [vmem:[#allocation2 + $0x89] sm:$0xff] %vm1098, %v1084
        %1114 = vst.msk [vmem:[#allocation2 + $0x91] sm:$0xff] %vm1098, %v1085
        %1115 = vst.msk [vmem:[#allocation2 + $0x99] sm:$0xff] %vm1098, %v1086
        %1116 = vst.msk [vmem:[#allocation2 + $0xa1] sm:$0xff] %vm1098, %v1087
        %1117 = vst.msk [vmem:[#allocation2 + $0xa9] sm:$0xff] %vm1098, %v1088
        %1118 = vst.msk [vmem:[#allocation2 + $0xb1] sm:$0xff] %vm1098, %v1089
        %1119 = vst.msk [vmem:[#allocation2 + $0xb9] sm:$0xff] %vm1098, %v1090
        %1120 = vst.msk [vmem:[#allocation2 + $0xc1] sm:$0xff] %vm1098, %v1091
        %1121 = vst.msk [vmem:[#allocation2 + $0xc9] sm:$0xff] %vm1098, %v1092
        %1122 = vst.msk [vmem:[#allocation2 + $0xd1] sm:$0xff] %vm1098, %v1093
        %1123 = vst.msk [vmem:[#allocation2 + $0xd9] sm:$0xff] %vm1098, %v1094
        %1124 = vst.msk [vmem:[#allocation2 + $0xe1] sm:$0xff] %vm1098, %v1095
        %1125 = vst.msk [vmem:[#allocation2 + $0xe9] sm:$0xff] %vm1098, %v1096
        %1126 = vst.msk [vmem:[#allocation2 + $0xf1] sm:$0xff] %vm1098, %v1097
        %1155 = vrot.lane.b32.xlu0 %v1070, 32
        %v1156 = vpop.permute.xlu0 %1155
        %1157 = vrot.lane.b32.xlu0 %v1071, 32
        %v1158 = vpop.permute.xlu0 %1157
        %1159 = vrot.lane.b32.xlu0 %v1072, 32
        %v1160 = vpop.permute.xlu0 %1159
        %1161 = vrot.lane.b32.xlu0 %v1073, 32
        %v1162 = vpop.permute.xlu0 %1161
        %1163 = vrot.lane.b32.xlu0 %v1074, 32
        %v1164 = vpop.permute.xlu0 %1163
        %1165 = vrot.lane.b32.xlu0 %v1075, 32
        %v1166 = vpop.permute.xlu0 %1165
        %1167 = vrot.lane.b32.xlu0 %v1076, 32
        %v1168 = vpop.permute.xlu0 %1167
        %1169 = vrot.lane.b32.xlu0 %v1077, 32
        %v1170 = vpop.permute.xlu0 %1169
        %1171 = vrot.lane.b32.xlu0 %v1078, 32
        %v1172 = vpop.permute.xlu0 %1171
        %1173 = vrot.lane.b32.xlu0 %v1079, 32
        %v1174 = vpop.permute.xlu0 %1173
        %1175 = vrot.lane.b32.xlu0 %v1080, 32
        %v1176 = vpop.permute.xlu0 %1175
        %1177 = vrot.lane.b32.xlu0 %v1081, 32
        %v1178 = vpop.permute.xlu0 %1177
        %1179 = vrot.lane.b32.xlu0 %v1082, 32
        %v1180 = vpop.permute.xlu0 %1179
        %1181 = vrot.lane.b32.xlu0 %v1083, 32
        %v1182 = vpop.permute.xlu0 %1181
        %1183 = vrot.lane.b32.xlu0 %v1084, 32
        %v1184 = vpop.permute.xlu0 %1183
        %1185 = vrot.lane.b32.xlu0 %v1085, 32
        %v1186 = vpop.permute.xlu0 %1185
        %1187 = vrot.lane.b32.xlu0 %v1086, 32
        %v1188 = vpop.permute.xlu0 %1187
        %1189 = vrot.lane.b32.xlu0 %v1087, 32
        %v1190 = vpop.permute.xlu0 %1189
        %1191 = vrot.lane.b32.xlu0 %v1088, 32
        %v1192 = vpop.permute.xlu0 %1191
        %1193 = vrot.lane.b32.xlu0 %v1089, 32
        %v1194 = vpop.permute.xlu0 %1193
        %1195 = vrot.lane.b32.xlu0 %v1090, 32
        %v1196 = vpop.permute.xlu0 %1195
        %1197 = vrot.lane.b32.xlu0 %v1091, 32
        %v1198 = vpop.permute.xlu0 %1197
        %1199 = vrot.lane.b32.xlu0 %v1092, 32
        %v1200 = vpop.permute.xlu0 %1199
        %1201 = vrot.lane.b32.xlu0 %v1093, 32
        %v1202 = vpop.permute.xlu0 %1201
        %1203 = vrot.lane.b32.xlu0 %v1094, 32
        %v1204 = vpop.permute.xlu0 %1203
        %1205 = vrot.lane.b32.xlu0 %v1095, 32
        %v1206 = vpop.permute.xlu0 %1205
        %1207 = vrot.lane.b32.xlu0 %v1096, 32
        %v1208 = vpop.permute.xlu0 %1207
        %1209 = vrot.lane.b32.xlu0 %v1097, 32
        %v1210 = vpop.permute.xlu0 %1209
        %vm1239 = vcmask 523520
        %1240 = vst.msk [vmem:[#allocation2 + $0x18] sm:$0xff] %vm1239, %v1156
        %1241 = vst.msk [vmem:[#allocation2 + $0x20] sm:$0xff] %vm1239, %v1158
        %1242 = vst.msk [vmem:[#allocation2 + $0x28] sm:$0xff] %vm1239, %v1160
        %1243 = vst.msk [vmem:[#allocation2 + $0x30] sm:$0xff] %vm1239, %v1162
        %1244 = vst.msk [vmem:[#allocation2 + $0x38] sm:$0xff] %vm1239, %v1164
        %1245 = vst.msk [vmem:[#allocation2 + $0x40] sm:$0xff] %vm1239, %v1166
        %1246 = vst.msk [vmem:[#allocation2 + $0x48] sm:$0xff] %vm1239, %v1168
        %1247 = vst.msk [vmem:[#allocation2 + $0x50] sm:$0xff] %vm1239, %v1170
        %1248 = vst.msk [vmem:[#allocation2 + $0x58] sm:$0xff] %vm1239, %v1172
        %1249 = vst.msk [vmem:[#allocation2 + $0x60] sm:$0xff] %vm1239, %v1174
        %1250 = vst.msk [vmem:[#allocation2 + $0x68] sm:$0xff] %vm1239, %v1176
        %1251 = vst.msk [vmem:[#allocation2 + $0x70] sm:$0xff] %vm1239, %v1178
        %1252 = vst.msk [vmem:[#allocation2 + $0x78] sm:$0xff] %vm1239, %v1180
        %1253 = vst.msk [vmem:[#allocation2 + $0x80] sm:$0xff] %vm1239, %v1182
        %1254 = vst.msk [vmem:[#allocation2 + $0x88] sm:$0xff] %vm1239, %v1184
        %1255 = vst.msk [vmem:[#allocation2 + $0x90] sm:$0xff] %vm1239, %v1186
        %1256 = vst.msk [vmem:[#allocation2 + $0x98] sm:$0xff] %vm1239, %v1188
        %1257 = vst.msk [vmem:[#allocation2 + $0xa0] sm:$0xff] %vm1239, %v1190
        %1258 = vst.msk [vmem:[#allocation2 + $0xa8] sm:$0xff] %vm1239, %v1192
        %1259 = vst.msk [vmem:[#allocation2 + $0xb0] sm:$0xff] %vm1239, %v1194
        %1260 = vst.msk [vmem:[#allocation2 + $0xb8] sm:$0xff] %vm1239, %v1196
        %1261 = vst.msk [vmem:[#allocation2 + $0xc0] sm:$0xff] %vm1239, %v1198
        %1262 = vst.msk [vmem:[#allocation2 + $0xc8] sm:$0xff] %vm1239, %v1200
        %1263 = vst.msk [vmem:[#allocation2 + $0xd0] sm:$0xff] %vm1239, %v1202
        %1264 = vst.msk [vmem:[#allocation2 + $0xd8] sm:$0xff] %vm1239, %v1204
        %1265 = vst.msk [vmem:[#allocation2 + $0xe0] sm:$0xff] %vm1239, %v1206
        %1266 = vst.msk [vmem:[#allocation2 + $0xe8] sm:$0xff] %vm1239, %v1208
        %1267 = vst.msk [vmem:[#allocation2 + $0xf0] sm:$0xff] %vm1239, %v1210
        %1268 = vrot.lane.b32.xlu0 %v1070, 64
        %v1269 = vpop.permute.xlu0 %1268
        %1270 = vrot.lane.b32.xlu0 %v1071, 64
        %v1271 = vpop.permute.xlu0 %1270
        %1272 = vrot.lane.b32.xlu0 %v1072, 64
        %v1273 = vpop.permute.xlu0 %1272
        %1274 = vrot.lane.b32.xlu0 %v1073, 64
        %v1275 = vpop.permute.xlu0 %1274
        %1276 = vrot.lane.b32.xlu0 %v1074, 64
        %v1277 = vpop.permute.xlu0 %1276
        %1278 = vrot.lane.b32.xlu0 %v1075, 64
        %v1279 = vpop.permute.xlu0 %1278
        %1280 = vrot.lane.b32.xlu0 %v1076, 64
        %v1281 = vpop.permute.xlu0 %1280
        %1282 = vrot.lane.b32.xlu0 %v1077, 64
        %v1283 = vpop.permute.xlu0 %1282
        %1284 = vrot.lane.b32.xlu0 %v1078, 64
        %v1285 = vpop.permute.xlu0 %1284
        %1286 = vrot.lane.b32.xlu0 %v1079, 64
        %v1287 = vpop.permute.xlu0 %1286
        %1288 = vrot.lane.b32.xlu0 %v1080, 64
        %v1289 = vpop.permute.xlu0 %1288
        %1290 = vrot.lane.b32.xlu0 %v1081, 64
        %v1291 = vpop.permute.xlu0 %1290
        %1292 = vrot.lane.b32.xlu0 %v1082, 64
        %v1293 = vpop.permute.xlu0 %1292
        %1294 = vrot.lane.b32.xlu0 %v1083, 64
        %v1295 = vpop.permute.xlu0 %1294
        %1296 = vrot.lane.b32.xlu0 %v1084, 64
        %v1297 = vpop.permute.xlu0 %1296
        %1298 = vrot.lane.b32.xlu0 %v1085, 64
        %v1299 = vpop.permute.xlu0 %1298
        %1300 = vrot.lane.b32.xlu0 %v1086, 64
        %v1301 = vpop.permute.xlu0 %1300
        %1302 = vrot.lane.b32.xlu0 %v1087, 64
        %v1303 = vpop.permute.xlu0 %1302
        %1304 = vrot.lane.b32.xlu0 %v1088, 64
        %v1305 = vpop.permute.xlu0 %1304
        %1306 = vrot.lane.b32.xlu0 %v1089, 64
        %v1307 = vpop.permute.xlu0 %1306
        %1308 = vrot.lane.b32.xlu0 %v1090, 64
        %v1309 = vpop.permute.xlu0 %1308
        %1310 = vrot.lane.b32.xlu0 %v1091, 64
        %v1311 = vpop.permute.xlu0 %1310
        %1312 = vrot.lane.b32.xlu0 %v1092, 64
        %v1313 = vpop.permute.xlu0 %1312
        %1314 = vrot.lane.b32.xlu0 %v1093, 64
        %v1315 = vpop.permute.xlu0 %1314
        %1316 = vrot.lane.b32.xlu0 %v1094, 64
        %v1317 = vpop.permute.xlu0 %1316
        %1318 = vrot.lane.b32.xlu0 %v1095, 64
        %v1319 = vpop.permute.xlu0 %1318
        %1320 = vrot.lane.b32.xlu0 %v1096, 64
        %v1321 = vpop.permute.xlu0 %1320
        %1322 = vrot.lane.b32.xlu0 %v1097, 64
        %v1323 = vpop.permute.xlu0 %1322
        %vm1352 = vcmask 785920
        %1353 = vst.msk [vmem:[#allocation2 + $0x17] sm:$0xff] %vm1352, %v1269
        %1354 = vst.msk [vmem:[#allocation2 + $0x1f] sm:$0xff] %vm1352, %v1271
        %1355 = vst.msk [vmem:[#allocation2 + $0x27] sm:$0xff] %vm1352, %v1273
        %1356 = vst.msk [vmem:[#allocation2 + $0x2f] sm:$0xff] %vm1352, %v1275
        %1357 = vst.msk [vmem:[#allocation2 + $0x37] sm:$0xff] %vm1352, %v1277
        %1358 = vst.msk [vmem:[#allocation2 + $0x3f] sm:$0xff] %vm1352, %v1279
        %1359 = vst.msk [vmem:[#allocation2 + $0x47] sm:$0xff] %vm1352, %v1281
        %1360 = vst.msk [vmem:[#allocation2 + $0x4f] sm:$0xff] %vm1352, %v1283
        %1361 = vst.msk [vmem:[#allocation2 + $0x57] sm:$0xff] %vm1352, %v1285
        %1362 = vst.msk [vmem:[#allocation2 + $0x5f] sm:$0xff] %vm1352, %v1287
        %1363 = vst.msk [vmem:[#allocation2 + $0x67] sm:$0xff] %vm1352, %v1289
        %1364 = vst.msk [vmem:[#allocation2 + $0x6f] sm:$0xff] %vm1352, %v1291
        %1365 = vst.msk [vmem:[#allocation2 + $0x77] sm:$0xff] %vm1352, %v1293
        %1366 = vst.msk [vmem:[#allocation2 + $0x7f] sm:$0xff] %vm1352, %v1295
        %1367 = vst.msk [vmem:[#allocation2 + $0x87] sm:$0xff] %vm1352, %v1297
        %1368 = vst.msk [vmem:[#allocation2 + $0x8f] sm:$0xff] %vm1352, %v1299
        %1369 = vst.msk [vmem:[#allocation2 + $0x97] sm:$0xff] %vm1352, %v1301
        %1370 = vst.msk [vmem:[#allocation2 + $0x9f] sm:$0xff] %vm1352, %v1303
        %1371 = vst.msk [vmem:[#allocation2 + $0xa7] sm:$0xff] %vm1352, %v1305
        %1372 = vst.msk [vmem:[#allocation2 + $0xaf] sm:$0xff] %vm1352, %v1307
        %1373 = vst.msk [vmem:[#allocation2 + $0xb7] sm:$0xff] %vm1352, %v1309
        %1374 = vst.msk [vmem:[#allocation2 + $0xbf] sm:$0xff] %vm1352, %v1311
        %1375 = vst.msk [vmem:[#allocation2 + $0xc7] sm:$0xff] %vm1352, %v1313
        %1376 = vst.msk [vmem:[#allocation2 + $0xcf] sm:$0xff] %vm1352, %v1315
        %1377 = vst.msk [vmem:[#allocation2 + $0xd7] sm:$0xff] %vm1352, %v1317
        %1378 = vst.msk [vmem:[#allocation2 + $0xdf] sm:$0xff] %vm1352, %v1319
        %1379 = vst.msk [vmem:[#allocation2 + $0xe7] sm:$0xff] %vm1352, %v1321
        %1380 = vst.msk [vmem:[#allocation2 + $0xef] sm:$0xff] %vm1352, %v1323
        %v1381 = vld [vmem:[#allocation2 + $0x8] sm:$0xff]
        %v1382 = vld [vmem:[#allocation2 + $0x10] sm:$0xff]
        %v1383 = vld [vmem:[#allocation2 + $0x18] sm:$0xff]
        %v1384 = vld [vmem:[#allocation2 + $0x20] sm:$0xff]
        %v1385 = vld [vmem:[#allocation2 + $0x28] sm:$0xff]
        %v1386 = vld [vmem:[#allocation2 + $0x30] sm:$0xff]
        %v1387 = vld [vmem:[#allocation2 + $0x38] sm:$0xff]
        %v1388 = vld [vmem:[#allocation2 + $0x40] sm:$0xff]
        %v1389 = vld [vmem:[#allocation2 + $0x48] sm:$0xff]
        %v1390 = vld [vmem:[#allocation2 + $0x50] sm:$0xff]
        %v1391 = vld [vmem:[#allocation2 + $0x58] sm:$0xff]
        %v1392 = vld [vmem:[#allocation2 + $0x60] sm:$0xff]
        %v1393 = vld [vmem:[#allocation2 + $0x68] sm:$0xff]
        %v1394 = vld [vmem:[#allocation2 + $0x70] sm:$0xff]
        %v1395 = vld [vmem:[#allocation2 + $0x78] sm:$0xff]
        %v1396 = vld [vmem:[#allocation2 + $0x80] sm:$0xff]
        %v1397 = vld [vmem:[#allocation2 + $0x88] sm:$0xff]
        %v1398 = vld [vmem:[#allocation2 + $0x90] sm:$0xff]
        %v1399 = vld [vmem:[#allocation2 + $0x98] sm:$0xff]
        %v1400 = vld [vmem:[#allocation2 + $0xa0] sm:$0xff]
        %v1401 = vld [vmem:[#allocation2 + $0xa8] sm:$0xff]
        %v1402 = vld [vmem:[#allocation2 + $0xb0] sm:$0xff]
        %v1403 = vld [vmem:[#allocation2 + $0xb8] sm:$0xff]
        %v1404 = vld [vmem:[#allocation2 + $0xc0] sm:$0xff]
        %v1405 = vld [vmem:[#allocation2 + $0xc8] sm:$0xff]
        %v1406 = vld [vmem:[#allocation2 + $0xd0] sm:$0xff]
        %v1407 = vld [vmem:[#allocation2 + $0xd8] sm:$0xff]
        %v1408 = vld [vmem:[#allocation2 + $0xe0] sm:$0xff]
        %v1409 = vld [vmem:[%s4] sm:$0xff]
        %v1410 = vld [vmem:[%s4 + $0x8] sm:$0xff]
        %v1411 = vld [vmem:[%s4 + $0x10] sm:$0xff]
        %v1412 = vld [vmem:[%s4 + $0x18] sm:$0xff]
        %v1413 = vld [vmem:[%s4 + $0x20] sm:$0xff]
        %v1414 = vld [vmem:[%s4 + $0x28] sm:$0xff]
        %v1415 = vld [vmem:[%s4 + $0x30] sm:$0xff]
        %v1416 = vld [vmem:[%s4 + $0x38] sm:$0xff]
        %v1417 = vld [vmem:[%s4 + $0x40] sm:$0xff]
        %v1418 = vld [vmem:[%s4 + $0x48] sm:$0xff]
        %v1419 = vld [vmem:[%s4 + $0x50] sm:$0xff]
        %v1420 = vld [vmem:[%s4 + $0x58] sm:$0xff]
        %v1421 = vld [vmem:[#allocation2 + $0xe8] sm:$0xff]
        %v1422 = vld [vmem:[#allocation2 + $0xf0] sm:$0xff]
        %s1423 = scalar_lea.vmem %s4, 96
        %v1424 = vld [vmem:[%s1423] sm:$0xff]
        %v1425 = vld [vmem:[%s1423 + $0x8] sm:$0xff]
        %v1426 = vld [vmem:[%s1423 + $0x10] sm:$0xff]
        %v1427 = vld [vmem:[%s1423 + $0x18] sm:$0xff]
        %v1428 = vld [vmem:[%s1423 + $0x20] sm:$0xff]
        %v1429 = vld [vmem:[%s1423 + $0x28] sm:$0xff]
        %v1430 = vld [vmem:[%s1423 + $0x30] sm:$0xff]
        %v1431 = vld [vmem:[%s1423 + $0x38] sm:$0xff]
        %v1432 = vld [vmem:[%s1423 + $0x40] sm:$0xff]
        %v1433 = vld [vmem:[%s1423 + $0x48] sm:$0xff]
        %v1434 = vld [vmem:[%s1423 + $0x50] sm:$0xff]
        %v1435 = vld [vmem:[%s1423 + $0x58] sm:$0xff]
        %v1437 = vsel %vm358, %v1383, 0
        %v1440 = vsel %vm358, %v1384, 0
        %v1443 = vsel %vm358, %v1385, 0
        %v1446 = vsel %vm358, %v1386, 0
        %v1449 = vsel %vm358, %v1387, 0
        %v1452 = vsel %vm358, %v1388, 0
        %v1455 = vsel %vm358, %v1389, 0
        %v1458 = vsel %vm358, %v1390, 0
        %v1461 = vsel %vm358, %v1391, 0
        %v1464 = vsel %vm358, %v1392, 0
        %v1467 = vsel %vm358, %v1393, 0
        %v1470 = vsel %vm358, %v1394, 0
        %v1473 = vsel %vm358, %v1395, 0
        %v1476 = vsel %vm358, %v1396, 0
        %v1479 = vsel %vm358, %v1397, 0
        %v1482 = vsel %vm358, %v1398, 0
        %v1485 = vsel %vm358, %v1399, 0
        %v1488 = vsel %vm358, %v1400, 0
        %v1491 = vsel %vm358, %v1401, 0
        %v1494 = vsel %vm358, %v1402, 0
        %v1497 = vsel %vm358, %v1403, 0
        %v1500 = vsel %vm358, %v1404, 0
        %v1503 = vsel %vm358, %v1405, 0
        %v1506 = vsel %vm358, %v1406, 0
        %v1509 = vsel %vm358, %v1407, 0
        %v1512 = vsel %vm358, %v1408, 0
        %v1515 = vsel %vm358, %v1421, 0
        %v1518 = vsel %vm358, %v1422, 0
        %1520 = vmatpush.msra.mxu0 0.0
        %1521 = vmatpush.msra.mxu0 0.0
        %1522 = vmatpush.msra.mxu0 0.0
        %1523 = vmatpush.msra.mxu0 0.0
        %1524 = vmatpush.msra.mxu0 %v1435
        %1525 = vmatpush.msra.mxu0 %v1434
        %1526 = vmatpush.msra.mxu0 %v1433
        %1527 = vmatpush.msra.mxu0 %v1432
        %1528 = vmatpush.msra.mxu0 %v1431
        %1529 = vmatpush.msra.mxu0 %v1430
        %1530 = vmatpush.msra.mxu0 %v1429
        %1531 = vmatpush.msra.mxu0 %v1428
        %1532 = vmatpush.msra.mxu0 %v1427
        %1533 = vmatpush.msra.mxu0 %v1426
        %1534 = vmatpush.msra.mxu0 %v1425
        %1535 = vmatpush.msra.mxu0 %v1424
        %1536 = vmatmul.f32.gmra.mxu0 %v1437
        %v1537 = vpop.f32.mrf.mxu0
        %v1538 = vadd.f32 0.0, %v1537
        %1539 = vmatmul.f32.gmra.mxu0 %v1440
        %v1540 = vpop.f32.mrf.mxu0
        %v1541 = vadd.f32 0.0, %v1540
        %1542 = vmatmul.f32.gmra.mxu0 %v1443
        %v1543 = vpop.f32.mrf.mxu0
        %v1544 = vadd.f32 0.0, %v1543
        %1545 = vmatmul.f32.gmra.mxu0 %v1446
        %v1546 = vpop.f32.mrf.mxu0
        %v1547 = vadd.f32 0.0, %v1546
        %1548 = vmatmul.f32.gmra.mxu0 %v1449
        %v1549 = vpop.f32.mrf.mxu0
        %v1550 = vadd.f32 0.0, %v1549
        %1551 = vmatmul.f32.gmra.mxu0 %v1452
        %v1552 = vpop.f32.mrf.mxu0
        %v1553 = vadd.f32 0.0, %v1552
        %1554 = vmatmul.f32.gmra.mxu0 %v1455
        %v1555 = vpop.f32.mrf.mxu0
        %v1556 = vadd.f32 0.0, %v1555
        %1557 = vmatmul.f32.gmra.mxu0 %v1458
        %v1558 = vpop.f32.mrf.mxu0
        %v1559 = vadd.f32 0.0, %v1558
        %1560 = vmatmul.f32.gmra.mxu0 %v1461
        %v1561 = vpop.f32.mrf.mxu0
        %v1562 = vadd.f32 0.0, %v1561
        %1563 = vmatmul.f32.gmra.mxu0 %v1464
        %v1564 = vpop.f32.mrf.mxu0
        %v1565 = vadd.f32 0.0, %v1564
        %1566 = vmatmul.f32.gmra.mxu0 %v1467
        %v1567 = vpop.f32.mrf.mxu0
        %v1568 = vadd.f32 0.0, %v1567
        %1569 = vmatmul.f32.gmra.mxu0 %v1470
        %v1570 = vpop.f32.mrf.mxu0
        %v1571 = vadd.f32 0.0, %v1570
        %1572 = vmatmul.f32.gmra.mxu0 %v1473
        %v1573 = vpop.f32.mrf.mxu0
        %v1574 = vadd.f32 0.0, %v1573
        %1575 = vmatmul.f32.gmra.mxu0 %v1476
        %v1576 = vpop.f32.mrf.mxu0
        %v1577 = vadd.f32 0.0, %v1576
        %1578 = vmatmul.f32.gmra.mxu0 %v1479
        %v1579 = vpop.f32.mrf.mxu0
        %v1580 = vadd.f32 0.0, %v1579
        %1581 = vmatmul.f32.gmra.mxu0 %v1482
        %v1582 = vpop.f32.mrf.mxu0
        %v1583 = vadd.f32 0.0, %v1582
        %1584 = vmatmul.f32.gmra.mxu0 %v1485
        %v1585 = vpop.f32.mrf.mxu0
        %v1586 = vadd.f32 0.0, %v1585
        %1587 = vmatmul.f32.gmra.mxu0 %v1488
        %v1588 = vpop.f32.mrf.mxu0
        %v1589 = vadd.f32 0.0, %v1588
        %1590 = vmatmul.f32.gmra.mxu0 %v1491
        %v1591 = vpop.f32.mrf.mxu0
        %v1592 = vadd.f32 0.0, %v1591
        %1593 = vmatmul.f32.gmra.mxu0 %v1494
        %v1594 = vpop.f32.mrf.mxu0
        %v1595 = vadd.f32 0.0, %v1594
        %1596 = vmatmul.f32.gmra.mxu0 %v1497
        %v1597 = vpop.f32.mrf.mxu0
        %v1598 = vadd.f32 0.0, %v1597
        %1599 = vmatmul.f32.gmra.mxu0 %v1500
        %v1600 = vpop.f32.mrf.mxu0
        %v1601 = vadd.f32 0.0, %v1600
        %1602 = vmatmul.f32.gmra.mxu0 %v1503
        %v1603 = vpop.f32.mrf.mxu0
        %v1604 = vadd.f32 0.0, %v1603
        %1605 = vmatmul.f32.gmra.mxu0 %v1506
        %v1606 = vpop.f32.mrf.mxu0
        %v1607 = vadd.f32 0.0, %v1606
        %1608 = vmatmul.f32.gmra.mxu0 %v1509
        %v1609 = vpop.f32.mrf.mxu0
        %v1610 = vadd.f32 0.0, %v1609
        %1611 = vmatmul.f32.gmra.mxu0 %v1512
        %v1612 = vpop.f32.mrf.mxu0
        %v1613 = vadd.f32 0.0, %v1612
        %1614 = vmatmul.f32.gmra.mxu0 %v1515
        %v1615 = vpop.f32.mrf.mxu0
        %v1616 = vadd.f32 0.0, %v1615
        %1617 = vmatmul.f32.gmra.mxu0 %v1518
        %v1618 = vpop.f32.mrf.mxu0
        %v1619 = vadd.f32 0.0, %v1618
        %1620 = vdwg.mxu0
        %v1622 = vsel %vm358, %v1381, 0
        %v1625 = vsel %vm358, %v1382, 0
        %1627 = vmatpush.msra.mxu0 0.0
        %1628 = vmatpush.msra.mxu0 0.0
        %1629 = vmatpush.msra.mxu0 0.0
        %1630 = vmatpush.msra.mxu0 0.0
        %1631 = vmatpush.msra.mxu0 %v1420
        %1632 = vmatpush.msra.mxu0 %v1419
        %1633 = vmatpush.msra.mxu0 %v1418
        %1634 = vmatpush.msra.mxu0 %v1417
        %1635 = vmatpush.msra.mxu0 %v1416
        %1636 = vmatpush.msra.mxu0 %v1415
        %1637 = vmatpush.msra.mxu0 %v1414
        %1638 = vmatpush.msra.mxu0 %v1413
        %1639 = vmatpush.msra.mxu0 %v1412
        %1640 = vmatpush.msra.mxu0 %v1411
        %1641 = vmatpush.msra.mxu0 %v1410
        %1642 = vmatpush.msra.mxu0 %v1409
        %1643 = vmatmul.f32.gmra.mxu0 %v1622
        %v1644 = vpop.f32.mrf.mxu0
        %v1645 = vadd.f32 %v1538, %v1644
        %1646 = vmatmul.f32.gmra.mxu0 %v1625
        %v1647 = vpop.f32.mrf.mxu0
        %v1648 = vadd.f32 %v1541, %v1647
        %1649 = vmatmul.f32.gmra.mxu0 %v1437
        %v1650 = vpop.f32.mrf.mxu0
        %v1651 = vadd.f32 %v1544, %v1650
        %1652 = vmatmul.f32.gmra.mxu0 %v1440
        %v1653 = vpop.f32.mrf.mxu0
        %v1654 = vadd.f32 %v1547, %v1653
        %1655 = vmatmul.f32.gmra.mxu0 %v1443
        %v1656 = vpop.f32.mrf.mxu0
        %v1657 = vadd.f32 %v1550, %v1656
        %1658 = vmatmul.f32.gmra.mxu0 %v1446
        %v1659 = vpop.f32.mrf.mxu0
        %v1660 = vadd.f32 %v1553, %v1659
        %1661 = vmatmul.f32.gmra.mxu0 %v1449
        %v1662 = vpop.f32.mrf.mxu0
        %v1663 = vadd.f32 %v1556, %v1662
        %1664 = vmatmul.f32.gmra.mxu0 %v1452
        %v1665 = vpop.f32.mrf.mxu0
        %v1666 = vadd.f32 %v1559, %v1665
        %1667 = vmatmul.f32.gmra.mxu0 %v1455
        %v1668 = vpop.f32.mrf.mxu0
        %v1669 = vadd.f32 %v1562, %v1668
        %1670 = vmatmul.f32.gmra.mxu0 %v1458
        %v1671 = vpop.f32.mrf.mxu0
        %v1672 = vadd.f32 %v1565, %v1671
        %1673 = vmatmul.f32.gmra.mxu0 %v1461
        %v1674 = vpop.f32.mrf.mxu0
        %v1675 = vadd.f32 %v1568, %v1674
        %1676 = vmatmul.f32.gmra.mxu0 %v1464
        %v1677 = vpop.f32.mrf.mxu0
        %v1678 = vadd.f32 %v1571, %v1677
        %1679 = vmatmul.f32.gmra.mxu0 %v1467
        %v1680 = vpop.f32.mrf.mxu0
        %v1681 = vadd.f32 %v1574, %v1680
        %1682 = vmatmul.f32.gmra.mxu0 %v1470
        %v1683 = vpop.f32.mrf.mxu0
        %v1684 = vadd.f32 %v1577, %v1683
        %1685 = vmatmul.f32.gmra.mxu0 %v1473
        %v1686 = vpop.f32.mrf.mxu0
        %v1687 = vadd.f32 %v1580, %v1686
        %1688 = vmatmul.f32.gmra.mxu0 %v1476
        %v1689 = vpop.f32.mrf.mxu0
        %v1690 = vadd.f32 %v1583, %v1689
        %1691 = vmatmul.f32.gmra.mxu0 %v1479
        %v1692 = vpop.f32.mrf.mxu0
        %v1693 = vadd.f32 %v1586, %v1692
        %1694 = vmatmul.f32.gmra.mxu0 %v1482
        %v1695 = vpop.f32.mrf.mxu0
        %v1696 = vadd.f32 %v1589, %v1695
        %1697 = vmatmul.f32.gmra.mxu0 %v1485
        %v1698 = vpop.f32.mrf.mxu0
        %v1699 = vadd.f32 %v1592, %v1698
        %1700 = vmatmul.f32.gmra.mxu0 %v1488
        %v1701 = vpop.f32.mrf.mxu0
        %v1702 = vadd.f32 %v1595, %v1701
        %1703 = vmatmul.f32.gmra.mxu0 %v1491
        %v1704 = vpop.f32.mrf.mxu0
        %v1705 = vadd.f32 %v1598, %v1704
        %1706 = vmatmul.f32.gmra.mxu0 %v1494
        %v1707 = vpop.f32.mrf.mxu0
        %v1708 = vadd.f32 %v1601, %v1707
        %1709 = vmatmul.f32.gmra.mxu0 %v1497
        %v1710 = vpop.f32.mrf.mxu0
        %v1711 = vadd.f32 %v1604, %v1710
        %1712 = vmatmul.f32.gmra.mxu0 %v1500
        %v1713 = vpop.f32.mrf.mxu0
        %v1714 = vadd.f32 %v1607, %v1713
        %1715 = vmatmul.f32.gmra.mxu0 %v1503
        %v1716 = vpop.f32.mrf.mxu0
        %v1717 = vadd.f32 %v1610, %v1716
        %1718 = vmatmul.f32.gmra.mxu0 %v1506
        %v1719 = vpop.f32.mrf.mxu0
        %v1720 = vadd.f32 %v1613, %v1719
        %1721 = vmatmul.f32.gmra.mxu0 %v1509
        %v1722 = vpop.f32.mrf.mxu0
        %v1723 = vadd.f32 %v1616, %v1722
        %1724 = vmatmul.f32.gmra.mxu0 %v1512
        %v1725 = vpop.f32.mrf.mxu0
        %v1726 = vadd.f32 %v1619, %v1725
        %1727 = vdwg.mxu0
        %v1728 = vld [vmem:[#allocation2 + $0x28] sm:$0xff]
        %v1729 = vld [vmem:[#allocation2 + $0x30] sm:$0xff]
        %v1730 = vld [vmem:[#allocation2 + $0x38] sm:$0xff]
        %v1731 = vld [vmem:[#allocation2 + $0x40] sm:$0xff]
        %v1732 = vld [vmem:[#allocation2 + $0x48] sm:$0xff]
        %v1733 = vld [vmem:[#allocation2 + $0x50] sm:$0xff]
        %v1734 = vld [vmem:[#allocation2 + $0x58] sm:$0xff]
        %v1735 = vld [vmem:[#allocation2 + $0x60] sm:$0xff]
        %v1736 = vld [vmem:[#allocation2 + $0x68] sm:$0xff]
        %v1737 = vld [vmem:[#allocation2 + $0x70] sm:$0xff]
        %v1738 = vld [vmem:[#allocation2 + $0x78] sm:$0xff]
        %v1739 = vld [vmem:[#allocation2 + $0x80] sm:$0xff]
        %v1740 = vld [vmem:[#allocation2 + $0x88] sm:$0xff]
        %v1741 = vld [vmem:[#allocation2 + $0x90] sm:$0xff]
        %v1742 = vld [vmem:[#allocation2 + $0x98] sm:$0xff]
        %v1743 = vld [vmem:[#allocation2 + $0xa0] sm:$0xff]
        %v1744 = vld [vmem:[#allocation2 + $0xa8] sm:$0xff]
        %v1745 = vld [vmem:[#allocation2 + $0xb0] sm:$0xff]
        %v1746 = vld [vmem:[#allocation2 + $0xb8] sm:$0xff]
        %v1747 = vld [vmem:[#allocation2 + $0xc0] sm:$0xff]
        %v1748 = vld [vmem:[#allocation2 + $0xc8] sm:$0xff]
        %v1749 = vld [vmem:[#allocation2 + $0xd0] sm:$0xff]
        %v1750 = vld [vmem:[#allocation2 + $0xd8] sm:$0xff]
        %v1751 = vld [vmem:[#allocation2 + $0xe0] sm:$0xff]
        %v1752 = vld [vmem:[#allocation2 + $0xe8] sm:$0xff]
        %v1753 = vld [vmem:[#allocation2 + $0xf0] sm:$0xff]
        %v1754 = vld [vmem:[#allocation2 + $0xf8] sm:$0xff]
        %v1755 = vld [vmem:[#allocation2 + $0x100] sm:$0xff]
        %s1756 = scalar_lea.vmem %s4, 192
        %v1757 = vld [vmem:[%s1756] sm:$0xff]
        %v1758 = vld [vmem:[%s1756 + $0x8] sm:$0xff]
        %v1759 = vld [vmem:[%s1756 + $0x10] sm:$0xff]
        %v1760 = vld [vmem:[%s1756 + $0x18] sm:$0xff]
        %v1761 = vld [vmem:[%s1756 + $0x20] sm:$0xff]
        %v1762 = vld [vmem:[%s1756 + $0x28] sm:$0xff]
        %v1763 = vld [vmem:[%s1756 + $0x30] sm:$0xff]
        %v1764 = vld [vmem:[%s1756 + $0x38] sm:$0xff]
        %v1765 = vld [vmem:[%s1756 + $0x40] sm:$0xff]
        %v1766 = vld [vmem:[%s1756 + $0x48] sm:$0xff]
        %v1767 = vld [vmem:[%s1756 + $0x50] sm:$0xff]
        %v1768 = vld [vmem:[%s1756 + $0x58] sm:$0xff]
        %v1770 = vsel %vm358, %v1728, 0
        %v1773 = vsel %vm358, %v1729, 0
        %v1776 = vsel %vm358, %v1730, 0
        %v1779 = vsel %vm358, %v1731, 0
        %v1782 = vsel %vm358, %v1732, 0
        %v1785 = vsel %vm358, %v1733, 0
        %v1788 = vsel %vm358, %v1734, 0
        %v1791 = vsel %vm358, %v1735, 0
        %v1794 = vsel %vm358, %v1736, 0
        %v1797 = vsel %vm358, %v1737, 0
        %v1800 = vsel %vm358, %v1738, 0
        %v1803 = vsel %vm358, %v1739, 0
        %v1806 = vsel %vm358, %v1740, 0
        %v1809 = vsel %vm358, %v1741, 0
        %v1812 = vsel %vm358, %v1742, 0
        %v1815 = vsel %vm358, %v1743, 0
        %v1818 = vsel %vm358, %v1744, 0
        %v1821 = vsel %vm358, %v1745, 0
        %v1824 = vsel %vm358, %v1746, 0
        %v1827 = vsel %vm358, %v1747, 0
        %v1830 = vsel %vm358, %v1748, 0
        %v1833 = vsel %vm358, %v1749, 0
        %v1836 = vsel %vm358, %v1750, 0
        %v1839 = vsel %vm358, %v1751, 0
        %v1842 = vsel %vm358, %v1752, 0
        %v1845 = vsel %vm358, %v1753, 0
        %v1848 = vsel %vm358, %v1754, 0
        %v1851 = vsel %vm358, %v1755, 0
        %1853 = vmatpush.msra.mxu0 0.0
        %1854 = vmatpush.msra.mxu0 0.0
        %1855 = vmatpush.msra.mxu0 0.0
        %1856 = vmatpush.msra.mxu0 0.0
        %1857 = vmatpush.msra.mxu0 %v1768
        %1858 = vmatpush.msra.mxu0 %v1767
        %1859 = vmatpush.msra.mxu0 %v1766
        %1860 = vmatpush.msra.mxu0 %v1765
        %1861 = vmatpush.msra.mxu0 %v1764
        %1862 = vmatpush.msra.mxu0 %v1763
        %1863 = vmatpush.msra.mxu0 %v1762
        %1864 = vmatpush.msra.mxu0 %v1761
        %1865 = vmatpush.msra.mxu0 %v1760
        %1866 = vmatpush.msra.mxu0 %v1759
        %1867 = vmatpush.msra.mxu0 %v1758
        %1868 = vmatpush.msra.mxu0 %v1757
        %1869 = vmatmul.f32.gmra.mxu0 %v1770
        %v1870 = vpop.f32.mrf.mxu0
        %v1871 = vadd.f32 0.0, %v1870
        %1872 = vmatmul.f32.gmra.mxu0 %v1773
        %v1873 = vpop.f32.mrf.mxu0
        %v1874 = vadd.f32 0.0, %v1873
        %1875 = vmatmul.f32.gmra.mxu0 %v1776
        %v1876 = vpop.f32.mrf.mxu0
        %v1877 = vadd.f32 0.0, %v1876
        %1878 = vmatmul.f32.gmra.mxu0 %v1779
        %v1879 = vpop.f32.mrf.mxu0
        %v1880 = vadd.f32 0.0, %v1879
        %1881 = vmatmul.f32.gmra.mxu0 %v1782
        %v1882 = vpop.f32.mrf.mxu0
        %v1883 = vadd.f32 0.0, %v1882
        %1884 = vmatmul.f32.gmra.mxu0 %v1785
        %v1885 = vpop.f32.mrf.mxu0
        %v1886 = vadd.f32 0.0, %v1885
        %1887 = vmatmul.f32.gmra.mxu0 %v1788
        %v1888 = vpop.f32.mrf.mxu0
        %v1889 = vadd.f32 0.0, %v1888
        %1890 = vmatmul.f32.gmra.mxu0 %v1791
        %v1891 = vpop.f32.mrf.mxu0
        %v1892 = vadd.f32 0.0, %v1891
        %1893 = vmatmul.f32.gmra.mxu0 %v1794
        %v1894 = vpop.f32.mrf.mxu0
        %v1895 = vadd.f32 0.0, %v1894
        %1896 = vmatmul.f32.gmra.mxu0 %v1797
        %v1897 = vpop.f32.mrf.mxu0
        %v1898 = vadd.f32 0.0, %v1897
        %1899 = vmatmul.f32.gmra.mxu0 %v1800
        %v1900 = vpop.f32.mrf.mxu0
        %v1901 = vadd.f32 0.0, %v1900
        %1902 = vmatmul.f32.gmra.mxu0 %v1803
        %v1903 = vpop.f32.mrf.mxu0
        %v1904 = vadd.f32 0.0, %v1903
        %1905 = vmatmul.f32.gmra.mxu0 %v1806
        %v1906 = vpop.f32.mrf.mxu0
        %v1907 = vadd.f32 0.0, %v1906
        %1908 = vmatmul.f32.gmra.mxu0 %v1809
        %v1909 = vpop.f32.mrf.mxu0
        %v1910 = vadd.f32 0.0, %v1909
        %1911 = vmatmul.f32.gmra.mxu0 %v1812
        %v1912 = vpop.f32.mrf.mxu0
        %v1913 = vadd.f32 0.0, %v1912
        %1914 = vmatmul.f32.gmra.mxu0 %v1815
        %v1915 = vpop.f32.mrf.mxu0
        %v1916 = vadd.f32 0.0, %v1915
        %1917 = vmatmul.f32.gmra.mxu0 %v1818
        %v1918 = vpop.f32.mrf.mxu0
        %v1919 = vadd.f32 0.0, %v1918
        %1920 = vmatmul.f32.gmra.mxu0 %v1821
        %v1921 = vpop.f32.mrf.mxu0
        %v1922 = vadd.f32 0.0, %v1921
        %1923 = vmatmul.f32.gmra.mxu0 %v1824
        %v1924 = vpop.f32.mrf.mxu0
        %v1925 = vadd.f32 0.0, %v1924
        %1926 = vmatmul.f32.gmra.mxu0 %v1827
        %v1927 = vpop.f32.mrf.mxu0
        %v1928 = vadd.f32 0.0, %v1927
        %1929 = vmatmul.f32.gmra.mxu0 %v1830
        %v1930 = vpop.f32.mrf.mxu0
        %v1931 = vadd.f32 0.0, %v1930
        %1932 = vmatmul.f32.gmra.mxu0 %v1833
        %v1933 = vpop.f32.mrf.mxu0
        %v1934 = vadd.f32 0.0, %v1933
        %1935 = vmatmul.f32.gmra.mxu0 %v1836
        %v1936 = vpop.f32.mrf.mxu0
        %v1937 = vadd.f32 0.0, %v1936
        %1938 = vmatmul.f32.gmra.mxu0 %v1839
        %v1939 = vpop.f32.mrf.mxu0
        %v1940 = vadd.f32 0.0, %v1939
        %1941 = vmatmul.f32.gmra.mxu0 %v1842
        %v1942 = vpop.f32.mrf.mxu0
        %v1943 = vadd.f32 0.0, %v1942
        %1944 = vmatmul.f32.gmra.mxu0 %v1845
        %v1945 = vpop.f32.mrf.mxu0
        %v1946 = vadd.f32 0.0, %v1945
        %1947 = vmatmul.f32.gmra.mxu0 %v1848
        %v1948 = vpop.f32.mrf.mxu0
        %v1949 = vadd.f32 0.0, %v1948
        %1950 = vmatmul.f32.gmra.mxu0 %v1851
        %v1951 = vpop.f32.mrf.mxu0
        %v1952 = vadd.f32 0.0, %v1951
        %1953 = vdwg.mxu0
        %v1954 = vadd.f32 %v1645, %v1871
        %v1955 = vadd.f32 %v1648, %v1874
        %v1956 = vadd.f32 %v1651, %v1877
        %v1957 = vadd.f32 %v1654, %v1880
        %v1958 = vadd.f32 %v1657, %v1883
        %v1959 = vadd.f32 %v1660, %v1886
        %v1960 = vadd.f32 %v1663, %v1889
        %v1961 = vadd.f32 %v1666, %v1892
        %v1962 = vadd.f32 %v1669, %v1895
        %v1963 = vadd.f32 %v1672, %v1898
        %v1964 = vadd.f32 %v1675, %v1901
        %v1965 = vadd.f32 %v1678, %v1904
        %v1966 = vadd.f32 %v1681, %v1907
        %v1967 = vadd.f32 %v1684, %v1910
        %v1968 = vadd.f32 %v1687, %v1913
        %v1969 = vadd.f32 %v1690, %v1916
        %v1970 = vadd.f32 %v1693, %v1919
        %v1971 = vadd.f32 %v1696, %v1922
        %v1972 = vadd.f32 %v1699, %v1925
        %v1973 = vadd.f32 %v1702, %v1928
        %v1974 = vadd.f32 %v1705, %v1931
        %v1975 = vadd.f32 %v1708, %v1934
        %v1976 = vadd.f32 %v1711, %v1937
        %v1977 = vadd.f32 %v1714, %v1940
        %v1978 = vadd.f32 %v1717, %v1943
        %v1979 = vadd.f32 %v1720, %v1946
        %v1980 = vadd.f32 %v1723, %v1949
        %v1981 = vadd.f32 %v1726, %v1952
        %v1982 = vld [vmem:[%s5] sm:$0x1]
        %v1984 = vperm.slane %v1982, 0
        %v1986 = vadd.f32 %v1954, %v1984
        %v1987 = vadd.f32 %v1955, %v1984
        %v1988 = vadd.f32 %v1956, %v1984
        %v1989 = vadd.f32 %v1957, %v1984
        %v1990 = vadd.f32 %v1958, %v1984
        %v1991 = vadd.f32 %v1959, %v1984
        %v1992 = vadd.f32 %v1960, %v1984
        %v1993 = vadd.f32 %v1961, %v1984
        %v1994 = vadd.f32 %v1962, %v1984
        %v1995 = vadd.f32 %v1963, %v1984
        %v1996 = vadd.f32 %v1964, %v1984
        %v1997 = vadd.f32 %v1965, %v1984
        %v1998 = vadd.f32 %v1966, %v1984
        %v1999 = vadd.f32 %v1967, %v1984
        %v2000 = vadd.f32 %v1968, %v1984
        %v2001 = vadd.f32 %v1969, %v1984
        %v2002 = vadd.f32 %v1970, %v1984
        %v2003 = vadd.f32 %v1971, %v1984
        %v2004 = vadd.f32 %v1972, %v1984
        %v2005 = vadd.f32 %v1973, %v1984
        %v2006 = vadd.f32 %v1974, %v1984
        %v2007 = vadd.f32 %v1975, %v1984
        %v2008 = vadd.f32 %v1976, %v1984
        %v2009 = vadd.f32 %v1977, %v1984
        %v2010 = vadd.f32 %v1978, %v1984
        %v2011 = vadd.f32 %v1979, %v1984
        %v2012 = vadd.f32 %v1980, %v1984
        %v2013 = vadd.f32 %v1981, %v1984
        %v2014 = vmax.f32 %v1986, 0.0
        %v2015 = vmax.f32 %v1987, 0.0
        %v2016 = vmax.f32 %v1988, 0.0
        %v2017 = vmax.f32 %v1989, 0.0
        %v2018 = vmax.f32 %v1990, 0.0
        %v2019 = vmax.f32 %v1991, 0.0
        %v2020 = vmax.f32 %v1992, 0.0
        %v2021 = vmax.f32 %v1993, 0.0
        %v2022 = vmax.f32 %v1994, 0.0
        %v2023 = vmax.f32 %v1995, 0.0
        %v2024 = vmax.f32 %v1996, 0.0
        %v2025 = vmax.f32 %v1997, 0.0
        %v2026 = vmax.f32 %v1998, 0.0
        %v2027 = vmax.f32 %v1999, 0.0
        %v2028 = vmax.f32 %v2000, 0.0
        %v2029 = vmax.f32 %v2001, 0.0
        %v2030 = vmax.f32 %v2002, 0.0
        %v2031 = vmax.f32 %v2003, 0.0
        %v2032 = vmax.f32 %v2004, 0.0
        %v2033 = vmax.f32 %v2005, 0.0
        %v2034 = vmax.f32 %v2006, 0.0
        %v2035 = vmax.f32 %v2007, 0.0
        %v2036 = vmax.f32 %v2008, 0.0
        %v2037 = vmax.f32 %v2009, 0.0
        %v2038 = vmax.f32 %v2010, 0.0
        %v2039 = vmax.f32 %v2011, 0.0
        %v2040 = vmax.f32 %v2012, 0.0
        %v2041 = vmax.f32 %v2013, 0.0
        %v2042 = vld [vmem:[%s1] sm:$0xff]
        %v2043 = vld [vmem:[%s1 + $0x8] sm:$0xff]
        %v2044 = vld [vmem:[%s1 + $0x10] sm:$0xff]
        %v2045 = vld [vmem:[%s1 + $0x18] sm:$0xff]
        %v2046 = vld [vmem:[%s1 + $0x20] sm:$0xff]
        %v2047 = vld [vmem:[%s1 + $0x28] sm:$0xff]
        %v2048 = vld [vmem:[%s1 + $0x30] sm:$0xff]
        %v2049 = vld [vmem:[%s1 + $0x38] sm:$0xff]
        %v2050 = vld [vmem:[%s1 + $0x40] sm:$0xff]
        %v2051 = vld [vmem:[%s1 + $0x48] sm:$0xff]
        %v2052 = vld [vmem:[%s1 + $0x50] sm:$0xff]
        %v2053 = vld [vmem:[%s1 + $0x58] sm:$0xff]
        %v2054 = vld [vmem:[%s1 + $0x60] sm:$0x1]
        %v2055 = vld [vmem:[%s1 + $0x68] sm:$0x1]
        %v2057 = vsel %vm358, %v2043, 0
        %v2060 = vsel %vm358, %v2045, 0
        %v2063 = vsel %vm358, %v2047, 0
        %v2066 = vsel %vm358, %v2049, 0
        %v2069 = vsel %vm358, %v2051, 0
        %v2072 = vsel %vm358, %v2053, 0
        %v2075 = vsel %vm358, %v2055, 0
        %2077 = vmatpush.msra.mxu0 %v2029
        %2078 = vmatpush.msra.mxu0 %v2028
        %2079 = vmatpush.msra.mxu0 %v2027
        %2080 = vmatpush.msra.mxu0 %v2026
        %2081 = vmatpush.msra.mxu0 %v2025
        %2082 = vmatpush.msra.mxu0 %v2024
        %2083 = vmatpush.msra.mxu0 %v2023
        %2084 = vmatpush.msra.mxu0 %v2022
        %2085 = vmatpush.msra.mxu0 %v2021
        %2086 = vmatpush.msra.mxu0 %v2020
        %2087 = vmatpush.msra.mxu0 %v2019
        %2088 = vmatpush.msra.mxu0 %v2018
        %2089 = vmatpush.msra.mxu0 %v2017
        %2090 = vmatpush.msra.mxu0 %v2016
        %2091 = vmatpush.msra.mxu0 %v2015
        %2092 = vmatpush.msra.mxu0 %v2014
        %2093 = vmatmul.f32.gmra.mxu0 %v2042
        %v2094 = vpop.f32.mrf.mxu0
        %v2095 = vadd.f32 0.0, %v2094
        %2096 = vmatmul.f32.gmra.mxu0 %v2044
        %v2097 = vpop.f32.mrf.mxu0
        %v2098 = vadd.f32 0.0, %v2097
        %2099 = vmatmul.f32.gmra.mxu0 %v2046
        %v2100 = vpop.f32.mrf.mxu0
        %v2101 = vadd.f32 0.0, %v2100
        %2102 = vmatmul.f32.gmra.mxu0 %v2048
        %v2103 = vpop.f32.mrf.mxu0
        %v2104 = vadd.f32 0.0, %v2103
        %2105 = vmatmul.f32.gmra.mxu0 %v2050
        %v2106 = vpop.f32.mrf.mxu0
        %v2107 = vadd.f32 0.0, %v2106
        %2108 = vmatmul.f32.gmra.mxu0 %v2052
        %v2109 = vpop.f32.mrf.mxu0
        %v2110 = vadd.f32 0.0, %v2109
        %2111 = vmatmul.f32.gmra.mxu0 %v2054
        %v2112 = vpop.f32.mrf.mxu0
        %v2113 = vadd.f32 0.0, %v2112
        %2114 = vdwg.mxu0
        %2115 = vmatpush.msra.mxu0 0.0
        %2116 = vmatpush.msra.mxu0 0.0
        %2117 = vmatpush.msra.mxu0 0.0
        %2118 = vmatpush.msra.mxu0 0.0
        %2119 = vmatpush.msra.mxu0 %v2041
        %2120 = vmatpush.msra.mxu0 %v2040
        %2121 = vmatpush.msra.mxu0 %v2039
        %2122 = vmatpush.msra.mxu0 %v2038
        %2123 = vmatpush.msra.mxu0 %v2037
        %2124 = vmatpush.msra.mxu0 %v2036
        %2125 = vmatpush.msra.mxu0 %v2035
        %2126 = vmatpush.msra.mxu0 %v2034
        %2127 = vmatpush.msra.mxu0 %v2033
        %2128 = vmatpush.msra.mxu0 %v2032
        %2129 = vmatpush.msra.mxu0 %v2031
        %2130 = vmatpush.msra.mxu0 %v2030
        %2131 = vmatmul.f32.gmra.mxu0 %v2057
        %v2132 = vpop.f32.mrf.mxu0
        %v2133 = vadd.f32 %v2095, %v2132
        %2134 = vmatmul.f32.gmra.mxu0 %v2060
        %v2135 = vpop.f32.mrf.mxu0
        %v2136 = vadd.f32 %v2098, %v2135
        %2137 = vmatmul.f32.gmra.mxu0 %v2063
        %v2138 = vpop.f32.mrf.mxu0
        %v2139 = vadd.f32 %v2101, %v2138
        %2140 = vmatmul.f32.gmra.mxu0 %v2066
        %v2141 = vpop.f32.mrf.mxu0
        %v2142 = vadd.f32 %v2104, %v2141
        %2143 = vmatmul.f32.gmra.mxu0 %v2069
        %v2144 = vpop.f32.mrf.mxu0
        %v2145 = vadd.f32 %v2107, %v2144
        %2146 = vmatmul.f32.gmra.mxu0 %v2072
        %v2147 = vpop.f32.mrf.mxu0
        %v2148 = vadd.f32 %v2110, %v2147
        %2149 = vmatmul.f32.gmra.mxu0 %v2075
        %v2150 = vpop.f32.mrf.mxu0
        %v2151 = vadd.f32 %v2113, %v2150
        %2152 = vdwg.mxu0
        %vm2153 = vcmask 523264
        %2154 = vst.msk [vmem:[#allocation3] sm:$0xff] %vm2153, %v2133
        %2155 = vst.msk [vmem:[#allocation3 + $0x8] sm:$0xff] %vm2153, %v2136
        %2156 = vst.msk [vmem:[#allocation3 + $0x10] sm:$0xff] %vm2153, %v2139
        %2157 = vst.msk [vmem:[#allocation3 + $0x18] sm:$0xff] %vm2153, %v2142
        %2158 = vst.msk [vmem:[#allocation3 + $0x20] sm:$0xff] %vm2153, %v2145
        %2159 = vst.msk [vmem:[#allocation3 + $0x28] sm:$0xff] %vm2153, %v2148
        %vm2160 = vcmask 516096
        %2161 = vst.msk [vmem:[#allocation3 + $0x30] sm:$0x1] %vm2160, %v2151
        %v2162 = vld [vmem:[#allocation3] sm:$0x1]
        %v2163 = vpack.c.bf16 %v2162, %v2162
        %v2164 = vld [vmem:[%s6] sm:$0xff]
        %v2165 = vld [vmem:[%s6 + $0x8] sm:$0xff]
        %v2166 = vld [vmem:[%s6 + $0x10] sm:$0xff]
        %v2167 = vld [vmem:[%s6 + $0x18] sm:$0xff]
        %v2168 = vld [vmem:[%s6 + $0x20] sm:$0xff]
        %v2169 = vld [vmem:[%s6 + $0x28] sm:$0xff]
        %v2170 = vld [vmem:[%s6 + $0x30] sm:$0xff]
        %v2171 = vld [vmem:[%s6 + $0x38] sm:$0xff]
        %v2172 = vld [vmem:[#allocation3 + $0x1] sm:$0x1]
        %v2173 = vpack.c.bf16 %v2172, %v2172
        %v2174 = vld [vmem:[%s6 + $0x40] sm:$0xff]
        %v2175 = vld [vmem:[%s6 + $0x48] sm:$0xff]
        %v2176 = vld [vmem:[%s6 + $0x50] sm:$0xff]
        %v2177 = vld [vmem:[%s6 + $0x58] sm:$0xff]
        %v2178 = vld [vmem:[%s6 + $0x60] sm:$0xff]
        %v2179 = vld [vmem:[%s6 + $0x68] sm:$0xff]
        %v2180 = vld [vmem:[%s6 + $0x70] sm:$0xff]
        %v2181 = vld [vmem:[%s6 + $0x78] sm:$0xff]
        %v2190 = vunpack.c.l.b16 %v2174
        %v2191 = vunpack.c.h.b16 %v2174
        %v2192 = vunpack.c.l.b16 %v2175
        %v2193 = vunpack.c.h.b16 %v2175
        %v2194 = vunpack.c.l.b16 %v2176
        %v2195 = vunpack.c.h.b16 %v2176
        %v2196 = vunpack.c.l.b16 %v2177
        %v2197 = vunpack.c.h.b16 %v2177
        %v2198 = vunpack.c.l.b16 %v2178
        %v2199 = vunpack.c.h.b16 %v2178
        %v2200 = vunpack.c.l.b16 %v2179
        %v2201 = vunpack.c.h.b16 %v2179
        %v2202 = vunpack.c.l.b16 %v2180
        %v2203 = vunpack.c.h.b16 %v2180
        %v2204 = vunpack.c.l.b16 %v2181
        %v2205 = vunpack.c.h.b16 %v2181
        %v2206 = vpack.c.b16 %v2192, %v2190
        %v2207 = vpack.c.b16 %v2193, %v2191
        %v2208 = vpack.c.b16 %v2196, %v2194
        %v2209 = vpack.c.b16 %v2197, %v2195
        %v2210 = vpack.c.b16 %v2200, %v2198
        %v2211 = vpack.c.b16 %v2201, %v2199
        %v2212 = vpack.c.b16 %v2204, %v2202
        %v2213 = vpack.c.b16 %v2205, %v2203
        %v2223 = vsel %vm2153, %v2173, 0
        %2225 = vmatpush.bf16.msra.mxu0 0
        %2226 = vmatpush.bf16.msra.mxu0 0
        %2227 = vmatpush.bf16.msra.mxu0 0
        %2228 = vmatpush.bf16.msra.mxu0 0
        %2229 = vmatpush.bf16.msra.mxu0 %v2212
        %2230 = vmatpush.bf16.msra.mxu0 %v2210
        %2231 = vmatpush.bf16.msra.mxu0 %v2208
        %2232 = vmatpush.bf16.msra.mxu0 %v2206
        %2233 = vmatmul.bf16.gmra.mxu0 %v2223
        %v2234 = vpop.f32.mrf.mxu0
        %v2235 = vadd.f32 0.0, %v2234
        %v2236 = vpop.f32.mrf.mxu0
        %2237 = vdwg.mxu0
        %2238 = vmatpush.bf16.msra.mxu0 0
        %2239 = vmatpush.bf16.msra.mxu0 0
        %2240 = vmatpush.bf16.msra.mxu0 0
        %2241 = vmatpush.bf16.msra.mxu0 0
        %2242 = vmatpush.bf16.msra.mxu0 %v2213
        %2243 = vmatpush.bf16.msra.mxu0 %v2211
        %2244 = vmatpush.bf16.msra.mxu0 %v2209
        %2245 = vmatpush.bf16.msra.mxu0 %v2207
        %2246 = vmatmul.bf16.gmra.mxu0 %v2223
        %v2247 = vpop.f32.mrf.mxu0
        %v2248 = vadd.f32 0.0, %v2247
        %v2249 = vpop.f32.mrf.mxu0
        %2250 = vdwg.mxu0
        %v2259 = vunpack.c.l.b16 %v2164
        %v2260 = vunpack.c.h.b16 %v2164
        %v2261 = vunpack.c.l.b16 %v2165
        %v2262 = vunpack.c.h.b16 %v2165
        %v2263 = vunpack.c.l.b16 %v2166
        %v2264 = vunpack.c.h.b16 %v2166
        %v2265 = vunpack.c.l.b16 %v2167
        %v2266 = vunpack.c.h.b16 %v2167
        %v2267 = vunpack.c.l.b16 %v2168
        %v2268 = vunpack.c.h.b16 %v2168
        %v2269 = vunpack.c.l.b16 %v2169
        %v2270 = vunpack.c.h.b16 %v2169
        %v2271 = vunpack.c.l.b16 %v2170
        %v2272 = vunpack.c.h.b16 %v2170
        %v2273 = vunpack.c.l.b16 %v2171
        %v2274 = vunpack.c.h.b16 %v2171
        %v2275 = vpack.c.b16 %v2261, %v2259
        %v2276 = vpack.c.b16 %v2262, %v2260
        %v2277 = vpack.c.b16 %v2265, %v2263
        %v2278 = vpack.c.b16 %v2266, %v2264
        %v2279 = vpack.c.b16 %v2269, %v2267
        %v2280 = vpack.c.b16 %v2270, %v2268
        %v2281 = vpack.c.b16 %v2273, %v2271
        %v2282 = vpack.c.b16 %v2274, %v2272
        %v2292 = vsel %vm2153, %v2163, 0
        %2294 = vmatpush.bf16.msra.mxu0 0
        %2295 = vmatpush.bf16.msra.mxu0 0
        %2296 = vmatpush.bf16.msra.mxu0 0
        %2297 = vmatpush.bf16.msra.mxu0 0
        %2298 = vmatpush.bf16.msra.mxu0 %v2281
        %2299 = vmatpush.bf16.msra.mxu0 %v2279
        %2300 = vmatpush.bf16.msra.mxu0 %v2277
        %2301 = vmatpush.bf16.msra.mxu0 %v2275
        %2302 = vmatmul.bf16.gmra.mxu0 %v2292
        %v2303 = vpop.f32.mrf.mxu0
        %v2304 = vadd.f32 %v2235, %v2303
        %v2305 = vpop.f32.mrf.mxu0
        %2306 = vdwg.mxu0
        %2307 = vmatpush.bf16.msra.mxu0 0
        %2308 = vmatpush.bf16.msra.mxu0 0
        %2309 = vmatpush.bf16.msra.mxu0 0
        %2310 = vmatpush.bf16.msra.mxu0 0
        %2311 = vmatpush.bf16.msra.mxu0 %v2282
        %2312 = vmatpush.bf16.msra.mxu0 %v2280
        %2313 = vmatpush.bf16.msra.mxu0 %v2278
        %2314 = vmatpush.bf16.msra.mxu0 %v2276
        %2315 = vmatmul.bf16.gmra.mxu0 %v2292
        %v2316 = vpop.f32.mrf.mxu0
        %v2317 = vadd.f32 %v2248, %v2316
        %v2318 = vpop.f32.mrf.mxu0
        %2319 = vdwg.mxu0
        %v2320 = vld [vmem:[#allocation3 + $0x2] sm:$0x1]
        %v2321 = vpack.c.bf16 %v2320, %v2320
        %v2322 = vld [vmem:[%s6 + $0x80] sm:$0xff]
        %v2323 = vld [vmem:[%s6 + $0x88] sm:$0xff]
        %v2324 = vld [vmem:[%s6 + $0x90] sm:$0xff]
        %v2325 = vld [vmem:[%s6 + $0x98] sm:$0xff]
        %v2326 = vld [vmem:[%s6 + $0xa0] sm:$0xff]
        %v2327 = vld [vmem:[%s6 + $0xa8] sm:$0xff]
        %v2328 = vld [vmem:[%s6 + $0xb0] sm:$0xff]
        %v2329 = vld [vmem:[%s6 + $0xb8] sm:$0xff]
        %v2338 = vunpack.c.l.b16 %v2322
        %v2339 = vunpack.c.h.b16 %v2322
        %v2340 = vunpack.c.l.b16 %v2323
        %v2341 = vunpack.c.h.b16 %v2323
        %v2342 = vunpack.c.l.b16 %v2324
        %v2343 = vunpack.c.h.b16 %v2324
        %v2344 = vunpack.c.l.b16 %v2325
        %v2345 = vunpack.c.h.b16 %v2325
        %v2346 = vunpack.c.l.b16 %v2326
        %v2347 = vunpack.c.h.b16 %v2326
        %v2348 = vunpack.c.l.b16 %v2327
        %v2349 = vunpack.c.h.b16 %v2327
        %v2350 = vunpack.c.l.b16 %v2328
        %v2351 = vunpack.c.h.b16 %v2328
        %v2352 = vunpack.c.l.b16 %v2329
        %v2353 = vunpack.c.h.b16 %v2329
        %v2354 = vpack.c.b16 %v2340, %v2338
        %v2355 = vpack.c.b16 %v2341, %v2339
        %v2356 = vpack.c.b16 %v2344, %v2342
        %v2357 = vpack.c.b16 %v2345, %v2343
        %v2358 = vpack.c.b16 %v2348, %v2346
        %v2359 = vpack.c.b16 %v2349, %v2347
        %v2360 = vpack.c.b16 %v2352, %v2350
        %v2361 = vpack.c.b16 %v2353, %v2351
        %v2371 = vsel %vm2153, %v2321, 0
        %2373 = vmatpush.bf16.msra.mxu0 0
        %2374 = vmatpush.bf16.msra.mxu0 0
        %2375 = vmatpush.bf16.msra.mxu0 0
        %2376 = vmatpush.bf16.msra.mxu0 0
        %2377 = vmatpush.bf16.msra.mxu0 %v2360
        %2378 = vmatpush.bf16.msra.mxu0 %v2358
        %2379 = vmatpush.bf16.msra.mxu0 %v2356
        %2380 = vmatpush.bf16.msra.mxu0 %v2354
        %2381 = vmatmul.bf16.gmra.mxu0 %v2371
        %v2382 = vpop.f32.mrf.mxu0
        %v2383 = vadd.f32 0.0, %v2382
        %v2384 = vpop.f32.mrf.mxu0
        %2385 = vdwg.mxu0
        %2386 = vmatpush.bf16.msra.mxu0 0
        %2387 = vmatpush.bf16.msra.mxu0 0
        %2388 = vmatpush.bf16.msra.mxu0 0
        %2389 = vmatpush.bf16.msra.mxu0 0
        %2390 = vmatpush.bf16.msra.mxu0 %v2361
        %2391 = vmatpush.bf16.msra.mxu0 %v2359
        %2392 = vmatpush.bf16.msra.mxu0 %v2357
        %2393 = vmatpush.bf16.msra.mxu0 %v2355
        %2394 = vmatmul.bf16.gmra.mxu0 %v2371
        %v2395 = vpop.f32.mrf.mxu0
        %v2396 = vadd.f32 0.0, %v2395
        %v2397 = vpop.f32.mrf.mxu0
        %2398 = vdwg.mxu0
        %v2399 = vadd.f32 %v2304, %v2383
        %v2400 = vadd.f32 %v2317, %v2396
        %v2401 = vld [vmem:[#allocation3 + $0x3] sm:$0x1]
        %v2402 = vpack.c.bf16 %v2401, %v2401
        %v2403 = vld [vmem:[%s6 + $0xc0] sm:$0xff]
        %v2404 = vld [vmem:[%s6 + $0xc8] sm:$0xff]
        %v2405 = vld [vmem:[%s6 + $0xd0] sm:$0xff]
        %v2406 = vld [vmem:[%s6 + $0xd8] sm:$0xff]
        %v2407 = vld [vmem:[%s6 + $0xe0] sm:$0xff]
        %v2408 = vld [vmem:[%s6 + $0xe8] sm:$0xff]
        %v2409 = vld [vmem:[%s6 + $0xf0] sm:$0xff]
        %v2410 = vld [vmem:[%s6 + $0xf8] sm:$0xff]
        %v2419 = vunpack.c.l.b16 %v2403
        %v2420 = vunpack.c.h.b16 %v2403
        %v2421 = vunpack.c.l.b16 %v2404
        %v2422 = vunpack.c.h.b16 %v2404
        %v2423 = vunpack.c.l.b16 %v2405
        %v2424 = vunpack.c.h.b16 %v2405
        %v2425 = vunpack.c.l.b16 %v2406
        %v2426 = vunpack.c.h.b16 %v2406
        %v2427 = vunpack.c.l.b16 %v2407
        %v2428 = vunpack.c.h.b16 %v2407
        %v2429 = vunpack.c.l.b16 %v2408
        %v2430 = vunpack.c.h.b16 %v2408
        %v2431 = vunpack.c.l.b16 %v2409
        %v2432 = vunpack.c.h.b16 %v2409
        %v2433 = vunpack.c.l.b16 %v2410
        %v2434 = vunpack.c.h.b16 %v2410
        %v2435 = vpack.c.b16 %v2421, %v2419
        %v2436 = vpack.c.b16 %v2422, %v2420
        %v2437 = vpack.c.b16 %v2425, %v2423
        %v2438 = vpack.c.b16 %v2426, %v2424
        %v2439 = vpack.c.b16 %v2429, %v2427
        %v2440 = vpack.c.b16 %v2430, %v2428
        %v2441 = vpack.c.b16 %v2433, %v2431
        %v2442 = vpack.c.b16 %v2434, %v2432
        %v2452 = vsel %vm2153, %v2402, 0
        %2454 = vmatpush.bf16.msra.mxu0 0
        %2455 = vmatpush.bf16.msra.mxu0 0
        %2456 = vmatpush.bf16.msra.mxu0 0
        %2457 = vmatpush.bf16.msra.mxu0 0
        %2458 = vmatpush.bf16.msra.mxu0 %v2441
        %2459 = vmatpush.bf16.msra.mxu0 %v2439
        %2460 = vmatpush.bf16.msra.mxu0 %v2437
        %2461 = vmatpush.bf16.msra.mxu0 %v2435
        %2462 = vmatmul.bf16.gmra.mxu0 %v2452
        %v2463 = vpop.f32.mrf.mxu0
        %v2464 = vadd.f32 0.0, %v2463
        %v2465 = vpop.f32.mrf.mxu0
        %2466 = vdwg.mxu0
        %2467 = vmatpush.bf16.msra.mxu0 0
        %2468 = vmatpush.bf16.msra.mxu0 0
        %2469 = vmatpush.bf16.msra.mxu0 0
        %2470 = vmatpush.bf16.msra.mxu0 0
        %2471 = vmatpush.bf16.msra.mxu0 %v2442
        %2472 = vmatpush.bf16.msra.mxu0 %v2440
        %2473 = vmatpush.bf16.msra.mxu0 %v2438
        %2474 = vmatpush.bf16.msra.mxu0 %v2436
        %2475 = vmatmul.bf16.gmra.mxu0 %v2452
        %v2476 = vpop.f32.mrf.mxu0
        %v2477 = vadd.f32 0.0, %v2476
        %v2478 = vpop.f32.mrf.mxu0
        %2479 = vdwg.mxu0
        %v2480 = vadd.f32 %v2399, %v2464
        %v2481 = vadd.f32 %v2400, %v2477
        %v2482 = vld [vmem:[#allocation3 + $0x4] sm:$0x1]
        %v2483 = vpack.c.bf16 %v2482, %v2482
        %v2484 = vld [vmem:[%s6 + $0x100] sm:$0xff]
        %v2485 = vld [vmem:[%s6 + $0x108] sm:$0xff]
        %v2486 = vld [vmem:[%s6 + $0x110] sm:$0xff]
        %v2487 = vld [vmem:[%s6 + $0x118] sm:$0xff]
        %v2488 = vld [vmem:[%s6 + $0x120] sm:$0xff]
        %v2489 = vld [vmem:[%s6 + $0x128] sm:$0xff]
        %v2490 = vld [vmem:[%s6 + $0x130] sm:$0xff]
        %v2491 = vld [vmem:[%s6 + $0x138] sm:$0xff]
        %v2500 = vunpack.c.l.b16 %v2484
        %v2501 = vunpack.c.h.b16 %v2484
        %v2502 = vunpack.c.l.b16 %v2485
        %v2503 = vunpack.c.h.b16 %v2485
        %v2504 = vunpack.c.l.b16 %v2486
        %v2505 = vunpack.c.h.b16 %v2486
        %v2506 = vunpack.c.l.b16 %v2487
        %v2507 = vunpack.c.h.b16 %v2487
        %v2508 = vunpack.c.l.b16 %v2488
        %v2509 = vunpack.c.h.b16 %v2488
        %v2510 = vunpack.c.l.b16 %v2489
        %v2511 = vunpack.c.h.b16 %v2489
        %v2512 = vunpack.c.l.b16 %v2490
        %v2513 = vunpack.c.h.b16 %v2490
        %v2514 = vunpack.c.l.b16 %v2491
        %v2515 = vunpack.c.h.b16 %v2491
        %v2516 = vpack.c.b16 %v2502, %v2500
        %v2517 = vpack.c.b16 %v2503, %v2501
        %v2518 = vpack.c.b16 %v2506, %v2504
        %v2519 = vpack.c.b16 %v2507, %v2505
        %v2520 = vpack.c.b16 %v2510, %v2508
        %v2521 = vpack.c.b16 %v2511, %v2509
        %v2522 = vpack.c.b16 %v2514, %v2512
        %v2523 = vpack.c.b16 %v2515, %v2513
        %v2533 = vsel %vm2153, %v2483, 0
        %2535 = vmatpush.bf16.msra.mxu0 0
        %2536 = vmatpush.bf16.msra.mxu0 0
        %2537 = vmatpush.bf16.msra.mxu0 0
        %2538 = vmatpush.bf16.msra.mxu0 0
        %2539 = vmatpush.bf16.msra.mxu0 %v2522
        %2540 = vmatpush.bf16.msra.mxu0 %v2520
        %2541 = vmatpush.bf16.msra.mxu0 %v2518
        %2542 = vmatpush.bf16.msra.mxu0 %v2516
        %2543 = vmatmul.bf16.gmra.mxu0 %v2533
        %v2544 = vpop.f32.mrf.mxu0
        %v2545 = vadd.f32 0.0, %v2544
        %v2546 = vpop.f32.mrf.mxu0
        %2547 = vdwg.mxu0
        %2548 = vmatpush.bf16.msra.mxu0 0
        %2549 = vmatpush.bf16.msra.mxu0 0
        %2550 = vmatpush.bf16.msra.mxu0 0
        %2551 = vmatpush.bf16.msra.mxu0 0
        %2552 = vmatpush.bf16.msra.mxu0 %v2523
        %2553 = vmatpush.bf16.msra.mxu0 %v2521
        %2554 = vmatpush.bf16.msra.mxu0 %v2519
        %2555 = vmatpush.bf16.msra.mxu0 %v2517
        %2556 = vmatmul.bf16.gmra.mxu0 %v2533
        %v2557 = vpop.f32.mrf.mxu0
        %v2558 = vadd.f32 0.0, %v2557
        %v2559 = vpop.f32.mrf.mxu0
        %2560 = vdwg.mxu0
        %v2561 = vadd.f32 %v2480, %v2545
        %v2562 = vadd.f32 %v2481, %v2558
        %v2563 = vld [vmem:[#allocation3 + $0x5] sm:$0x1]
        %v2564 = vpack.c.bf16 %v2563, %v2563
        %v2565 = vld [vmem:[%s6 + $0x140] sm:$0xff]
        %v2566 = vld [vmem:[%s6 + $0x148] sm:$0xff]
        %v2567 = vld [vmem:[%s6 + $0x150] sm:$0xff]
        %v2568 = vld [vmem:[%s6 + $0x158] sm:$0xff]
        %v2569 = vld [vmem:[%s6 + $0x160] sm:$0xff]
        %v2570 = vld [vmem:[%s6 + $0x168] sm:$0xff]
        %v2571 = vld [vmem:[%s6 + $0x170] sm:$0xff]
        %v2572 = vld [vmem:[%s6 + $0x178] sm:$0xff]
        %v2581 = vunpack.c.l.b16 %v2565
        %v2582 = vunpack.c.h.b16 %v2565
        %v2583 = vunpack.c.l.b16 %v2566
        %v2584 = vunpack.c.h.b16 %v2566
        %v2585 = vunpack.c.l.b16 %v2567
        %v2586 = vunpack.c.h.b16 %v2567
        %v2587 = vunpack.c.l.b16 %v2568
        %v2588 = vunpack.c.h.b16 %v2568
        %v2589 = vunpack.c.l.b16 %v2569
        %v2590 = vunpack.c.h.b16 %v2569
        %v2591 = vunpack.c.l.b16 %v2570
        %v2592 = vunpack.c.h.b16 %v2570
        %v2593 = vunpack.c.l.b16 %v2571
        %v2594 = vunpack.c.h.b16 %v2571
        %v2595 = vunpack.c.l.b16 %v2572
        %v2596 = vunpack.c.h.b16 %v2572
        %v2597 = vpack.c.b16 %v2583, %v2581
        %v2598 = vpack.c.b16 %v2584, %v2582
        %v2599 = vpack.c.b16 %v2587, %v2585
        %v2600 = vpack.c.b16 %v2588, %v2586
        %v2601 = vpack.c.b16 %v2591, %v2589
        %v2602 = vpack.c.b16 %v2592, %v2590
        %v2603 = vpack.c.b16 %v2595, %v2593
        %v2604 = vpack.c.b16 %v2596, %v2594
        %v2614 = vsel %vm2153, %v2564, 0
        %2616 = vmatpush.bf16.msra.mxu0 0
        %2617 = vmatpush.bf16.msra.mxu0 0
        %2618 = vmatpush.bf16.msra.mxu0 0
        %2619 = vmatpush.bf16.msra.mxu0 0
        %2620 = vmatpush.bf16.msra.mxu0 %v2603
        %2621 = vmatpush.bf16.msra.mxu0 %v2601
        %2622 = vmatpush.bf16.msra.mxu0 %v2599
        %2623 = vmatpush.bf16.msra.mxu0 %v2597
        %2624 = vmatmul.bf16.gmra.mxu0 %v2614
        %v2625 = vpop.f32.mrf.mxu0
        %v2626 = vadd.f32 0.0, %v2625
        %v2627 = vpop.f32.mrf.mxu0
        %2628 = vdwg.mxu0
        %2629 = vmatpush.bf16.msra.mxu0 0
        %2630 = vmatpush.bf16.msra.mxu0 0
        %2631 = vmatpush.bf16.msra.mxu0 0
        %2632 = vmatpush.bf16.msra.mxu0 0
        %2633 = vmatpush.bf16.msra.mxu0 %v2604
        %2634 = vmatpush.bf16.msra.mxu0 %v2602
        %2635 = vmatpush.bf16.msra.mxu0 %v2600
        %2636 = vmatpush.bf16.msra.mxu0 %v2598
        %2637 = vmatmul.bf16.gmra.mxu0 %v2614
        %v2638 = vpop.f32.mrf.mxu0
        %v2639 = vadd.f32 0.0, %v2638
        %v2640 = vpop.f32.mrf.mxu0
        %2641 = vdwg.mxu0
        %v2642 = vadd.f32 %v2561, %v2626
        %v2643 = vadd.f32 %v2562, %v2639
        %v2644 = vld [vmem:[#allocation3 + $0x6] sm:$0x1]
        %v2645 = vpack.c.bf16 %v2644, %v2644
        %v2646 = vld [vmem:[%s6 + $0x180] sm:$0xff]
        %v2647 = vld [vmem:[%s6 + $0x188] sm:$0xff]
        %v2648 = vld [vmem:[%s6 + $0x190] sm:$0xff]
        %v2649 = vld [vmem:[%s6 + $0x198] sm:$0xff]
        %v2650 = vld [vmem:[%s6 + $0x1a0] sm:$0xff]
        %v2651 = vld [vmem:[%s6 + $0x1a8] sm:$0xff]
        %v2652 = vld [vmem:[%s6 + $0x1b0] sm:$0xff]
        %v2653 = vld [vmem:[%s6 + $0x1b8] sm:$0xff]
        %v2662 = vunpack.c.l.b16 %v2646
        %v2663 = vunpack.c.h.b16 %v2646
        %v2664 = vunpack.c.l.b16 %v2647
        %v2665 = vunpack.c.h.b16 %v2647
        %v2666 = vunpack.c.l.b16 %v2648
        %v2667 = vunpack.c.h.b16 %v2648
        %v2668 = vunpack.c.l.b16 %v2649
        %v2669 = vunpack.c.h.b16 %v2649
        %v2670 = vunpack.c.l.b16 %v2650
        %v2671 = vunpack.c.h.b16 %v2650
        %v2672 = vunpack.c.l.b16 %v2651
        %v2673 = vunpack.c.h.b16 %v2651
        %v2674 = vunpack.c.l.b16 %v2652
        %v2675 = vunpack.c.h.b16 %v2652
        %v2676 = vunpack.c.l.b16 %v2653
        %v2677 = vunpack.c.h.b16 %v2653
        %v2678 = vpack.c.b16 %v2664, %v2662
        %v2679 = vpack.c.b16 %v2665, %v2663
        %v2680 = vpack.c.b16 %v2668, %v2666
        %v2681 = vpack.c.b16 %v2669, %v2667
        %v2682 = vpack.c.b16 %v2672, %v2670
        %v2683 = vpack.c.b16 %v2673, %v2671
        %v2684 = vpack.c.b16 %v2676, %v2674
        %v2685 = vpack.c.b16 %v2677, %v2675
        %v2695 = vsel %vm2153, %v2645, 0
        %2697 = vmatpush.bf16.msra.mxu0 0
        %2698 = vmatpush.bf16.msra.mxu0 0
        %2699 = vmatpush.bf16.msra.mxu0 0
        %2700 = vmatpush.bf16.msra.mxu0 0
        %2701 = vmatpush.bf16.msra.mxu0 %v2684
        %2702 = vmatpush.bf16.msra.mxu0 %v2682
        %2703 = vmatpush.bf16.msra.mxu0 %v2680
        %2704 = vmatpush.bf16.msra.mxu0 %v2678
        %2705 = vmatmul.bf16.gmra.mxu0 %v2695
        %v2706 = vpop.f32.mrf.mxu0
        %v2707 = vadd.f32 0.0, %v2706
        %v2708 = vpop.f32.mrf.mxu0
        %2709 = vdwg.mxu0
        %2710 = vmatpush.bf16.msra.mxu0 0
        %2711 = vmatpush.bf16.msra.mxu0 0
        %2712 = vmatpush.bf16.msra.mxu0 0
        %2713 = vmatpush.bf16.msra.mxu0 0
        %2714 = vmatpush.bf16.msra.mxu0 %v2685
        %2715 = vmatpush.bf16.msra.mxu0 %v2683
        %2716 = vmatpush.bf16.msra.mxu0 %v2681
        %2717 = vmatpush.bf16.msra.mxu0 %v2679
        %2718 = vmatmul.bf16.gmra.mxu0 %v2695
        %v2719 = vpop.f32.mrf.mxu0
        %v2720 = vadd.f32 0.0, %v2719
        %v2721 = vpop.f32.mrf.mxu0
        %2722 = vdwg.mxu0
        %v2723 = vadd.f32 %v2642, %v2707
        %v2724 = vadd.f32 %v2643, %v2720
        %v2725 = vld [vmem:[#allocation3 + $0x7] sm:$0x1]
        %v2726 = vpack.c.bf16 %v2725, %v2725
        %v2727 = vld [vmem:[%s6 + $0x1c0] sm:$0xff]
        %v2728 = vld [vmem:[%s6 + $0x1c8] sm:$0xff]
        %v2729 = vld [vmem:[%s6 + $0x1d0] sm:$0xff]
        %v2730 = vld [vmem:[%s6 + $0x1d8] sm:$0xff]
        %v2731 = vld [vmem:[%s6 + $0x1e0] sm:$0xff]
        %v2732 = vld [vmem:[%s6 + $0x1e8] sm:$0xff]
        %v2733 = vld [vmem:[%s6 + $0x1f0] sm:$0xff]
        %v2734 = vld [vmem:[%s6 + $0x1f8] sm:$0xff]
        %v2743 = vunpack.c.l.b16 %v2727
        %v2744 = vunpack.c.h.b16 %v2727
        %v2745 = vunpack.c.l.b16 %v2728
        %v2746 = vunpack.c.h.b16 %v2728
        %v2747 = vunpack.c.l.b16 %v2729
        %v2748 = vunpack.c.h.b16 %v2729
        %v2749 = vunpack.c.l.b16 %v2730
        %v2750 = vunpack.c.h.b16 %v2730
        %v2751 = vunpack.c.l.b16 %v2731
        %v2752 = vunpack.c.h.b16 %v2731
        %v2753 = vunpack.c.l.b16 %v2732
        %v2754 = vunpack.c.h.b16 %v2732
        %v2755 = vunpack.c.l.b16 %v2733
        %v2756 = vunpack.c.h.b16 %v2733
        %v2757 = vunpack.c.l.b16 %v2734
        %v2758 = vunpack.c.h.b16 %v2734
        %v2759 = vpack.c.b16 %v2745, %v2743
        %v2760 = vpack.c.b16 %v2746, %v2744
        %v2761 = vpack.c.b16 %v2749, %v2747
        %v2762 = vpack.c.b16 %v2750, %v2748
        %v2763 = vpack.c.b16 %v2753, %v2751
        %v2764 = vpack.c.b16 %v2754, %v2752
        %v2765 = vpack.c.b16 %v2757, %v2755
        %v2766 = vpack.c.b16 %v2758, %v2756
        %v2776 = vsel %vm2153, %v2726, 0
        %2778 = vmatpush.bf16.msra.mxu0 0
        %2779 = vmatpush.bf16.msra.mxu0 0
        %2780 = vmatpush.bf16.msra.mxu0 0
        %2781 = vmatpush.bf16.msra.mxu0 0
        %2782 = vmatpush.bf16.msra.mxu0 %v2765
        %2783 = vmatpush.bf16.msra.mxu0 %v2763
        %2784 = vmatpush.bf16.msra.mxu0 %v2761
        %2785 = vmatpush.bf16.msra.mxu0 %v2759
        %2786 = vmatmul.bf16.gmra.mxu0 %v2776
        %v2787 = vpop.f32.mrf.mxu0
        %v2788 = vadd.f32 0.0, %v2787
        %v2789 = vpop.f32.mrf.mxu0
        %2790 = vdwg.mxu0
        %2791 = vmatpush.bf16.msra.mxu0 0
        %2792 = vmatpush.bf16.msra.mxu0 0
        %2793 = vmatpush.bf16.msra.mxu0 0
        %2794 = vmatpush.bf16.msra.mxu0 0
        %2795 = vmatpush.bf16.msra.mxu0 %v2766
        %2796 = vmatpush.bf16.msra.mxu0 %v2764
        %2797 = vmatpush.bf16.msra.mxu0 %v2762
        %2798 = vmatpush.bf16.msra.mxu0 %v2760
        %2799 = vmatmul.bf16.gmra.mxu0 %v2776
        %v2800 = vpop.f32.mrf.mxu0
        %v2801 = vadd.f32 0.0, %v2800
        %v2802 = vpop.f32.mrf.mxu0
        %2803 = vdwg.mxu0
        %v2804 = vadd.f32 %v2723, %v2788
        %v2805 = vadd.f32 %v2724, %v2801
        %v2806 = vld [vmem:[#allocation3 + $0x8] sm:$0x1]
        %v2807 = vpack.c.bf16 %v2806, %v2806
        %v2808 = vld [vmem:[%s6 + $0x200] sm:$0xff]
        %v2809 = vld [vmem:[%s6 + $0x208] sm:$0xff]
        %v2810 = vld [vmem:[%s6 + $0x210] sm:$0xff]
        %v2811 = vld [vmem:[%s6 + $0x218] sm:$0xff]
        %v2812 = vld [vmem:[%s6 + $0x220] sm:$0xff]
        %v2813 = vld [vmem:[%s6 + $0x228] sm:$0xff]
        %v2814 = vld [vmem:[%s6 + $0x230] sm:$0xff]
        %v2815 = vld [vmem:[%s6 + $0x238] sm:$0xff]
        %v2824 = vunpack.c.l.b16 %v2808
        %v2825 = vunpack.c.h.b16 %v2808
        %v2826 = vunpack.c.l.b16 %v2809
        %v2827 = vunpack.c.h.b16 %v2809
        %v2828 = vunpack.c.l.b16 %v2810
        %v2829 = vunpack.c.h.b16 %v2810
        %v2830 = vunpack.c.l.b16 %v2811
        %v2831 = vunpack.c.h.b16 %v2811
        %v2832 = vunpack.c.l.b16 %v2812
        %v2833 = vunpack.c.h.b16 %v2812
        %v2834 = vunpack.c.l.b16 %v2813
        %v2835 = vunpack.c.h.b16 %v2813
        %v2836 = vunpack.c.l.b16 %v2814
        %v2837 = vunpack.c.h.b16 %v2814
        %v2838 = vunpack.c.l.b16 %v2815
        %v2839 = vunpack.c.h.b16 %v2815
        %v2840 = vpack.c.b16 %v2826, %v2824
        %v2841 = vpack.c.b16 %v2827, %v2825
        %v2842 = vpack.c.b16 %v2830, %v2828
        %v2843 = vpack.c.b16 %v2831, %v2829
        %v2844 = vpack.c.b16 %v2834, %v2832
        %v2845 = vpack.c.b16 %v2835, %v2833
        %v2846 = vpack.c.b16 %v2838, %v2836
        %v2847 = vpack.c.b16 %v2839, %v2837
        %v2857 = vsel %vm2153, %v2807, 0
        %2859 = vmatpush.bf16.msra.mxu0 0
        %2860 = vmatpush.bf16.msra.mxu0 0
        %2861 = vmatpush.bf16.msra.mxu0 0
        %2862 = vmatpush.bf16.msra.mxu0 0
        %2863 = vmatpush.bf16.msra.mxu0 %v2846
        %2864 = vmatpush.bf16.msra.mxu0 %v2844
        %2865 = vmatpush.bf16.msra.mxu0 %v2842
        %2866 = vmatpush.bf16.msra.mxu0 %v2840
        %2867 = vmatmul.bf16.gmra.mxu0 %v2857
        %v2868 = vpop.f32.mrf.mxu0
        %v2869 = vadd.f32 0.0, %v2868
        %v2870 = vpop.f32.mrf.mxu0
        %2871 = vdwg.mxu0
        %2872 = vmatpush.bf16.msra.mxu0 0
        %2873 = vmatpush.bf16.msra.mxu0 0
        %2874 = vmatpush.bf16.msra.mxu0 0
        %2875 = vmatpush.bf16.msra.mxu0 0
        %2876 = vmatpush.bf16.msra.mxu0 %v2847
        %2877 = vmatpush.bf16.msra.mxu0 %v2845
        %2878 = vmatpush.bf16.msra.mxu0 %v2843
        %2879 = vmatpush.bf16.msra.mxu0 %v2841
        %2880 = vmatmul.bf16.gmra.mxu0 %v2857
        %v2881 = vpop.f32.mrf.mxu0
        %v2882 = vadd.f32 0.0, %v2881
        %v2883 = vpop.f32.mrf.mxu0
        %2884 = vdwg.mxu0
        %v2885 = vadd.f32 %v2804, %v2869
        %v2886 = vadd.f32 %v2805, %v2882
        %v2887 = vld [vmem:[#allocation3 + $0x9] sm:$0x1]
        %v2888 = vpack.c.bf16 %v2887, %v2887
        %v2889 = vld [vmem:[%s6 + $0x240] sm:$0xff]
        %v2890 = vld [vmem:[%s6 + $0x248] sm:$0xff]
        %v2891 = vld [vmem:[%s6 + $0x250] sm:$0xff]
        %v2892 = vld [vmem:[%s6 + $0x258] sm:$0xff]
        %v2893 = vld [vmem:[%s6 + $0x260] sm:$0xff]
        %v2894 = vld [vmem:[%s6 + $0x268] sm:$0xff]
        %v2895 = vld [vmem:[%s6 + $0x270] sm:$0xff]
        %v2896 = vld [vmem:[%s6 + $0x278] sm:$0xff]
        %v2905 = vunpack.c.l.b16 %v2889
        %v2906 = vunpack.c.h.b16 %v2889
        %v2907 = vunpack.c.l.b16 %v2890
        %v2908 = vunpack.c.h.b16 %v2890
        %v2909 = vunpack.c.l.b16 %v2891
        %v2910 = vunpack.c.h.b16 %v2891
        %v2911 = vunpack.c.l.b16 %v2892
        %v2912 = vunpack.c.h.b16 %v2892
        %v2913 = vunpack.c.l.b16 %v2893
        %v2914 = vunpack.c.h.b16 %v2893
        %v2915 = vunpack.c.l.b16 %v2894
        %v2916 = vunpack.c.h.b16 %v2894
        %v2917 = vunpack.c.l.b16 %v2895
        %v2918 = vunpack.c.h.b16 %v2895
        %v2919 = vunpack.c.l.b16 %v2896
        %v2920 = vunpack.c.h.b16 %v2896
        %v2921 = vpack.c.b16 %v2907, %v2905
        %v2922 = vpack.c.b16 %v2908, %v2906
        %v2923 = vpack.c.b16 %v2911, %v2909
        %v2924 = vpack.c.b16 %v2912, %v2910
        %v2925 = vpack.c.b16 %v2915, %v2913
        %v2926 = vpack.c.b16 %v2916, %v2914
        %v2927 = vpack.c.b16 %v2919, %v2917
        %v2928 = vpack.c.b16 %v2920, %v2918
        %v2938 = vsel %vm2153, %v2888, 0
        %2940 = vmatpush.bf16.msra.mxu0 0
        %2941 = vmatpush.bf16.msra.mxu0 0
        %2942 = vmatpush.bf16.msra.mxu0 0
        %2943 = vmatpush.bf16.msra.mxu0 0
        %2944 = vmatpush.bf16.msra.mxu0 %v2927
        %2945 = vmatpush.bf16.msra.mxu0 %v2925
        %2946 = vmatpush.bf16.msra.mxu0 %v2923
        %2947 = vmatpush.bf16.msra.mxu0 %v2921
        %2948 = vmatmul.bf16.gmra.mxu0 %v2938
        %v2949 = vpop.f32.mrf.mxu0
        %v2950 = vadd.f32 0.0, %v2949
        %v2951 = vpop.f32.mrf.mxu0
        %2952 = vdwg.mxu0
        %2953 = vmatpush.bf16.msra.mxu0 0
        %2954 = vmatpush.bf16.msra.mxu0 0
        %2955 = vmatpush.bf16.msra.mxu0 0
        %2956 = vmatpush.bf16.msra.mxu0 0
        %2957 = vmatpush.bf16.msra.mxu0 %v2928
        %2958 = vmatpush.bf16.msra.mxu0 %v2926
        %2959 = vmatpush.bf16.msra.mxu0 %v2924
        %2960 = vmatpush.bf16.msra.mxu0 %v2922
        %2961 = vmatmul.bf16.gmra.mxu0 %v2938
        %v2962 = vpop.f32.mrf.mxu0
        %v2963 = vadd.f32 0.0, %v2962
        %v2964 = vpop.f32.mrf.mxu0
        %2965 = vdwg.mxu0
        %v2966 = vadd.f32 %v2885, %v2950
        %v2967 = vadd.f32 %v2886, %v2963
        %v2968 = vld [vmem:[#allocation3 + $0xa] sm:$0x1]
        %v2969 = vpack.c.bf16 %v2968, %v2968
        %v2970 = vld [vmem:[%s6 + $0x280] sm:$0xff]
        %v2971 = vld [vmem:[%s6 + $0x288] sm:$0xff]
        %v2972 = vld [vmem:[%s6 + $0x290] sm:$0xff]
        %v2973 = vld [vmem:[%s6 + $0x298] sm:$0xff]
        %v2974 = vld [vmem:[%s6 + $0x2a0] sm:$0xff]
        %v2975 = vld [vmem:[%s6 + $0x2a8] sm:$0xff]
        %v2976 = vld [vmem:[%s6 + $0x2b0] sm:$0xff]
        %v2977 = vld [vmem:[%s6 + $0x2b8] sm:$0xff]
        %v2986 = vunpack.c.l.b16 %v2970
        %v2987 = vunpack.c.h.b16 %v2970
        %v2988 = vunpack.c.l.b16 %v2971
        %v2989 = vunpack.c.h.b16 %v2971
        %v2990 = vunpack.c.l.b16 %v2972
        %v2991 = vunpack.c.h.b16 %v2972
        %v2992 = vunpack.c.l.b16 %v2973
        %v2993 = vunpack.c.h.b16 %v2973
        %v2994 = vunpack.c.l.b16 %v2974
        %v2995 = vunpack.c.h.b16 %v2974
        %v2996 = vunpack.c.l.b16 %v2975
        %v2997 = vunpack.c.h.b16 %v2975
        %v2998 = vunpack.c.l.b16 %v2976
        %v2999 = vunpack.c.h.b16 %v2976
        %v3000 = vunpack.c.l.b16 %v2977
        %v3001 = vunpack.c.h.b16 %v2977
        %v3002 = vpack.c.b16 %v2988, %v2986
        %v3003 = vpack.c.b16 %v2989, %v2987
        %v3004 = vpack.c.b16 %v2992, %v2990
        %v3005 = vpack.c.b16 %v2993, %v2991
        %v3006 = vpack.c.b16 %v2996, %v2994
        %v3007 = vpack.c.b16 %v2997, %v2995
        %v3008 = vpack.c.b16 %v3000, %v2998
        %v3009 = vpack.c.b16 %v3001, %v2999
        %v3019 = vsel %vm2153, %v2969, 0
        %3021 = vmatpush.bf16.msra.mxu0 0
        %3022 = vmatpush.bf16.msra.mxu0 0
        %3023 = vmatpush.bf16.msra.mxu0 0
        %3024 = vmatpush.bf16.msra.mxu0 0
        %3025 = vmatpush.bf16.msra.mxu0 %v3008
        %3026 = vmatpush.bf16.msra.mxu0 %v3006
        %3027 = vmatpush.bf16.msra.mxu0 %v3004
        %3028 = vmatpush.bf16.msra.mxu0 %v3002
        %3029 = vmatmul.bf16.gmra.mxu0 %v3019
        %v3030 = vpop.f32.mrf.mxu0
        %v3031 = vadd.f32 0.0, %v3030
        %v3032 = vpop.f32.mrf.mxu0
        %3033 = vdwg.mxu0
        %3034 = vmatpush.bf16.msra.mxu0 0
        %3035 = vmatpush.bf16.msra.mxu0 0
        %3036 = vmatpush.bf16.msra.mxu0 0
        %3037 = vmatpush.bf16.msra.mxu0 0
        %3038 = vmatpush.bf16.msra.mxu0 %v3009
        %3039 = vmatpush.bf16.msra.mxu0 %v3007
        %3040 = vmatpush.bf16.msra.mxu0 %v3005
        %3041 = vmatpush.bf16.msra.mxu0 %v3003
        %3042 = vmatmul.bf16.gmra.mxu0 %v3019
        %v3043 = vpop.f32.mrf.mxu0
        %v3044 = vadd.f32 0.0, %v3043
        %v3045 = vpop.f32.mrf.mxu0
        %3046 = vdwg.mxu0
        %v3047 = vadd.f32 %v2966, %v3031
        %v3048 = vadd.f32 %v2967, %v3044
        %v3049 = vld [vmem:[#allocation3 + $0xb] sm:$0x1]
        %v3050 = vpack.c.bf16 %v3049, %v3049
        %v3051 = vld [vmem:[%s6 + $0x2c0] sm:$0xff]
        %v3052 = vld [vmem:[%s6 + $0x2c8] sm:$0xff]
        %v3053 = vld [vmem:[%s6 + $0x2d0] sm:$0xff]
        %v3054 = vld [vmem:[%s6 + $0x2d8] sm:$0xff]
        %v3055 = vld [vmem:[%s6 + $0x2e0] sm:$0xff]
        %v3056 = vld [vmem:[%s6 + $0x2e8] sm:$0xff]
        %v3057 = vld [vmem:[%s6 + $0x2f0] sm:$0xff]
        %v3058 = vld [vmem:[%s6 + $0x2f8] sm:$0xff]
        %v3067 = vunpack.c.l.b16 %v3051
        %v3068 = vunpack.c.h.b16 %v3051
        %v3069 = vunpack.c.l.b16 %v3052
        %v3070 = vunpack.c.h.b16 %v3052
        %v3071 = vunpack.c.l.b16 %v3053
        %v3072 = vunpack.c.h.b16 %v3053
        %v3073 = vunpack.c.l.b16 %v3054
        %v3074 = vunpack.c.h.b16 %v3054
        %v3075 = vunpack.c.l.b16 %v3055
        %v3076 = vunpack.c.h.b16 %v3055
        %v3077 = vunpack.c.l.b16 %v3056
        %v3078 = vunpack.c.h.b16 %v3056
        %v3079 = vunpack.c.l.b16 %v3057
        %v3080 = vunpack.c.h.b16 %v3057
        %v3081 = vunpack.c.l.b16 %v3058
        %v3082 = vunpack.c.h.b16 %v3058
        %v3083 = vpack.c.b16 %v3069, %v3067
        %v3084 = vpack.c.b16 %v3070, %v3068
        %v3085 = vpack.c.b16 %v3073, %v3071
        %v3086 = vpack.c.b16 %v3074, %v3072
        %v3087 = vpack.c.b16 %v3077, %v3075
        %v3088 = vpack.c.b16 %v3078, %v3076
        %v3089 = vpack.c.b16 %v3081, %v3079
        %v3090 = vpack.c.b16 %v3082, %v3080
        %v3100 = vsel %vm2153, %v3050, 0
        %3102 = vmatpush.bf16.msra.mxu0 0
        %3103 = vmatpush.bf16.msra.mxu0 0
        %3104 = vmatpush.bf16.msra.mxu0 0
        %3105 = vmatpush.bf16.msra.mxu0 0
        %3106 = vmatpush.bf16.msra.mxu0 %v3089
        %3107 = vmatpush.bf16.msra.mxu0 %v3087
        %3108 = vmatpush.bf16.msra.mxu0 %v3085
        %3109 = vmatpush.bf16.msra.mxu0 %v3083
        %3110 = vmatmul.bf16.gmra.mxu0 %v3100
        %v3111 = vpop.f32.mrf.mxu0
        %v3112 = vadd.f32 0.0, %v3111
        %v3113 = vpop.f32.mrf.mxu0
        %3114 = vdwg.mxu0
        %3115 = vmatpush.bf16.msra.mxu0 0
        %3116 = vmatpush.bf16.msra.mxu0 0
        %3117 = vmatpush.bf16.msra.mxu0 0
        %3118 = vmatpush.bf16.msra.mxu0 0
        %3119 = vmatpush.bf16.msra.mxu0 %v3090
        %3120 = vmatpush.bf16.msra.mxu0 %v3088
        %3121 = vmatpush.bf16.msra.mxu0 %v3086
        %3122 = vmatpush.bf16.msra.mxu0 %v3084
        %3123 = vmatmul.bf16.gmra.mxu0 %v3100
        %v3124 = vpop.f32.mrf.mxu0
        %v3125 = vadd.f32 0.0, %v3124
        %v3126 = vpop.f32.mrf.mxu0
        %3127 = vdwg.mxu0
        %v3128 = vadd.f32 %v3047, %v3112
        %v3129 = vadd.f32 %v3048, %v3125
        %v3130 = vld [vmem:[#allocation3 + $0xc] sm:$0x1]
        %v3131 = vpack.c.bf16 %v3130, %v3130
        %v3132 = vld [vmem:[%s6 + $0x300] sm:$0xff]
        %v3133 = vld [vmem:[%s6 + $0x308] sm:$0xff]
        %v3134 = vld [vmem:[%s6 + $0x310] sm:$0xff]
        %v3135 = vld [vmem:[%s6 + $0x318] sm:$0xff]
        %v3136 = vld [vmem:[%s6 + $0x320] sm:$0xff]
        %v3137 = vld [vmem:[%s6 + $0x328] sm:$0xff]
        %v3138 = vld [vmem:[%s6 + $0x330] sm:$0xff]
        %v3139 = vld [vmem:[%s6 + $0x338] sm:$0xff]
        %v3148 = vunpack.c.l.b16 %v3132
        %v3149 = vunpack.c.h.b16 %v3132
        %v3150 = vunpack.c.l.b16 %v3133
        %v3151 = vunpack.c.h.b16 %v3133
        %v3152 = vunpack.c.l.b16 %v3134
        %v3153 = vunpack.c.h.b16 %v3134
        %v3154 = vunpack.c.l.b16 %v3135
        %v3155 = vunpack.c.h.b16 %v3135
        %v3156 = vunpack.c.l.b16 %v3136
        %v3157 = vunpack.c.h.b16 %v3136
        %v3158 = vunpack.c.l.b16 %v3137
        %v3159 = vunpack.c.h.b16 %v3137
        %v3160 = vunpack.c.l.b16 %v3138
        %v3161 = vunpack.c.h.b16 %v3138
        %v3162 = vunpack.c.l.b16 %v3139
        %v3163 = vunpack.c.h.b16 %v3139
        %v3164 = vpack.c.b16 %v3150, %v3148
        %v3165 = vpack.c.b16 %v3151, %v3149
        %v3166 = vpack.c.b16 %v3154, %v3152
        %v3167 = vpack.c.b16 %v3155, %v3153
        %v3168 = vpack.c.b16 %v3158, %v3156
        %v3169 = vpack.c.b16 %v3159, %v3157
        %v3170 = vpack.c.b16 %v3162, %v3160
        %v3171 = vpack.c.b16 %v3163, %v3161
        %v3181 = vsel %vm2153, %v3131, 0
        %3183 = vmatpush.bf16.msra.mxu0 0
        %3184 = vmatpush.bf16.msra.mxu0 0
        %3185 = vmatpush.bf16.msra.mxu0 0
        %3186 = vmatpush.bf16.msra.mxu0 0
        %3187 = vmatpush.bf16.msra.mxu0 %v3170
        %3188 = vmatpush.bf16.msra.mxu0 %v3168
        %3189 = vmatpush.bf16.msra.mxu0 %v3166
        %3190 = vmatpush.bf16.msra.mxu0 %v3164
        %3191 = vmatmul.bf16.gmra.mxu0 %v3181
        %v3192 = vpop.f32.mrf.mxu0
        %v3193 = vadd.f32 0.0, %v3192
        %v3194 = vpop.f32.mrf.mxu0
        %3195 = vdwg.mxu0
        %3196 = vmatpush.bf16.msra.mxu0 0
        %3197 = vmatpush.bf16.msra.mxu0 0
        %3198 = vmatpush.bf16.msra.mxu0 0
        %3199 = vmatpush.bf16.msra.mxu0 0
        %3200 = vmatpush.bf16.msra.mxu0 %v3171
        %3201 = vmatpush.bf16.msra.mxu0 %v3169
        %3202 = vmatpush.bf16.msra.mxu0 %v3167
        %3203 = vmatpush.bf16.msra.mxu0 %v3165
        %3204 = vmatmul.bf16.gmra.mxu0 %v3181
        %v3205 = vpop.f32.mrf.mxu0
        %v3206 = vadd.f32 0.0, %v3205
        %v3207 = vpop.f32.mrf.mxu0
        %3208 = vdwg.mxu0
        %v3209 = vadd.f32 %v3128, %v3193
        %v3210 = vadd.f32 %v3129, %v3206
        %v3211 = vld [vmem:[#allocation3 + $0xd] sm:$0x1]
        %v3212 = vpack.c.bf16 %v3211, %v3211
        %v3213 = vld [vmem:[%s6 + $0x340] sm:$0xff]
        %v3214 = vld [vmem:[%s6 + $0x348] sm:$0xff]
        %v3215 = vld [vmem:[%s6 + $0x350] sm:$0xff]
        %v3216 = vld [vmem:[%s6 + $0x358] sm:$0xff]
        %v3217 = vld [vmem:[%s6 + $0x360] sm:$0xff]
        %v3218 = vld [vmem:[%s6 + $0x368] sm:$0xff]
        %v3219 = vld [vmem:[%s6 + $0x370] sm:$0xff]
        %v3220 = vld [vmem:[%s6 + $0x378] sm:$0xff]
        %v3229 = vunpack.c.l.b16 %v3213
        %v3230 = vunpack.c.h.b16 %v3213
        %v3231 = vunpack.c.l.b16 %v3214
        %v3232 = vunpack.c.h.b16 %v3214
        %v3233 = vunpack.c.l.b16 %v3215
        %v3234 = vunpack.c.h.b16 %v3215
        %v3235 = vunpack.c.l.b16 %v3216
        %v3236 = vunpack.c.h.b16 %v3216
        %v3237 = vunpack.c.l.b16 %v3217
        %v3238 = vunpack.c.h.b16 %v3217
        %v3239 = vunpack.c.l.b16 %v3218
        %v3240 = vunpack.c.h.b16 %v3218
        %v3241 = vunpack.c.l.b16 %v3219
        %v3242 = vunpack.c.h.b16 %v3219
        %v3243 = vunpack.c.l.b16 %v3220
        %v3244 = vunpack.c.h.b16 %v3220
        %v3245 = vpack.c.b16 %v3231, %v3229
        %v3246 = vpack.c.b16 %v3232, %v3230
        %v3247 = vpack.c.b16 %v3235, %v3233
        %v3248 = vpack.c.b16 %v3236, %v3234
        %v3249 = vpack.c.b16 %v3239, %v3237
        %v3250 = vpack.c.b16 %v3240, %v3238
        %v3251 = vpack.c.b16 %v3243, %v3241
        %v3252 = vpack.c.b16 %v3244, %v3242
        %v3262 = vsel %vm2153, %v3212, 0
        %3264 = vmatpush.bf16.msra.mxu0 0
        %3265 = vmatpush.bf16.msra.mxu0 0
        %3266 = vmatpush.bf16.msra.mxu0 0
        %3267 = vmatpush.bf16.msra.mxu0 0
        %3268 = vmatpush.bf16.msra.mxu0 %v3251
        %3269 = vmatpush.bf16.msra.mxu0 %v3249
        %3270 = vmatpush.bf16.msra.mxu0 %v3247
        %3271 = vmatpush.bf16.msra.mxu0 %v3245
        %3272 = vmatmul.bf16.gmra.mxu0 %v3262
        %v3273 = vpop.f32.mrf.mxu0
        %v3274 = vadd.f32 0.0, %v3273
        %v3275 = vpop.f32.mrf.mxu0
        %3276 = vdwg.mxu0
        %3277 = vmatpush.bf16.msra.mxu0 0
        %3278 = vmatpush.bf16.msra.mxu0 0
        %3279 = vmatpush.bf16.msra.mxu0 0
        %3280 = vmatpush.bf16.msra.mxu0 0
        %3281 = vmatpush.bf16.msra.mxu0 %v3252
        %3282 = vmatpush.bf16.msra.mxu0 %v3250
        %3283 = vmatpush.bf16.msra.mxu0 %v3248
        %3284 = vmatpush.bf16.msra.mxu0 %v3246
        %3285 = vmatmul.bf16.gmra.mxu0 %v3262
        %v3286 = vpop.f32.mrf.mxu0
        %v3287 = vadd.f32 0.0, %v3286
        %v3288 = vpop.f32.mrf.mxu0
        %3289 = vdwg.mxu0
        %v3290 = vadd.f32 %v3209, %v3274
        %v3291 = vadd.f32 %v3210, %v3287
        %v3292 = vld [vmem:[#allocation3 + $0xe] sm:$0x1]
        %v3293 = vpack.c.bf16 %v3292, %v3292
        %v3294 = vld [vmem:[%s6 + $0x380] sm:$0xff]
        %v3295 = vld [vmem:[%s6 + $0x388] sm:$0xff]
        %v3296 = vld [vmem:[%s6 + $0x390] sm:$0xff]
        %v3297 = vld [vmem:[%s6 + $0x398] sm:$0xff]
        %v3298 = vld [vmem:[%s6 + $0x3a0] sm:$0xff]
        %v3299 = vld [vmem:[%s6 + $0x3a8] sm:$0xff]
        %v3300 = vld [vmem:[%s6 + $0x3b0] sm:$0xff]
        %v3301 = vld [vmem:[%s6 + $0x3b8] sm:$0xff]
        %v3310 = vunpack.c.l.b16 %v3294
        %v3311 = vunpack.c.h.b16 %v3294
        %v3312 = vunpack.c.l.b16 %v3295
        %v3313 = vunpack.c.h.b16 %v3295
        %v3314 = vunpack.c.l.b16 %v3296
        %v3315 = vunpack.c.h.b16 %v3296
        %v3316 = vunpack.c.l.b16 %v3297
        %v3317 = vunpack.c.h.b16 %v3297
        %v3318 = vunpack.c.l.b16 %v3298
        %v3319 = vunpack.c.h.b16 %v3298
        %v3320 = vunpack.c.l.b16 %v3299
        %v3321 = vunpack.c.h.b16 %v3299
        %v3322 = vunpack.c.l.b16 %v3300
        %v3323 = vunpack.c.h.b16 %v3300
        %v3324 = vunpack.c.l.b16 %v3301
        %v3325 = vunpack.c.h.b16 %v3301
        %v3326 = vpack.c.b16 %v3312, %v3310
        %v3327 = vpack.c.b16 %v3313, %v3311
        %v3328 = vpack.c.b16 %v3316, %v3314
        %v3329 = vpack.c.b16 %v3317, %v3315
        %v3330 = vpack.c.b16 %v3320, %v3318
        %v3331 = vpack.c.b16 %v3321, %v3319
        %v3332 = vpack.c.b16 %v3324, %v3322
        %v3333 = vpack.c.b16 %v3325, %v3323
        %v3343 = vsel %vm2153, %v3293, 0
        %3345 = vmatpush.bf16.msra.mxu0 0
        %3346 = vmatpush.bf16.msra.mxu0 0
        %3347 = vmatpush.bf16.msra.mxu0 0
        %3348 = vmatpush.bf16.msra.mxu0 0
        %3349 = vmatpush.bf16.msra.mxu0 %v3332
        %3350 = vmatpush.bf16.msra.mxu0 %v3330
        %3351 = vmatpush.bf16.msra.mxu0 %v3328
        %3352 = vmatpush.bf16.msra.mxu0 %v3326
        %3353 = vmatmul.bf16.gmra.mxu0 %v3343
        %v3354 = vpop.f32.mrf.mxu0
        %v3355 = vadd.f32 0.0, %v3354
        %v3356 = vpop.f32.mrf.mxu0
        %3357 = vdwg.mxu0
        %3358 = vmatpush.bf16.msra.mxu0 0
        %3359 = vmatpush.bf16.msra.mxu0 0
        %3360 = vmatpush.bf16.msra.mxu0 0
        %3361 = vmatpush.bf16.msra.mxu0 0
        %3362 = vmatpush.bf16.msra.mxu0 %v3333
        %3363 = vmatpush.bf16.msra.mxu0 %v3331
        %3364 = vmatpush.bf16.msra.mxu0 %v3329
        %3365 = vmatpush.bf16.msra.mxu0 %v3327
        %3366 = vmatmul.bf16.gmra.mxu0 %v3343
        %v3367 = vpop.f32.mrf.mxu0
        %v3368 = vadd.f32 0.0, %v3367
        %v3369 = vpop.f32.mrf.mxu0
        %3370 = vdwg.mxu0
        %v3371 = vadd.f32 %v3290, %v3355
        %v3372 = vadd.f32 %v3291, %v3368
        %v3373 = vld [vmem:[#allocation3 + $0xf] sm:$0x1]
        %v3374 = vpack.c.bf16 %v3373, %v3373
        %v3375 = vld [vmem:[%s6 + $0x3c0] sm:$0xff]
        %v3376 = vld [vmem:[%s6 + $0x3c8] sm:$0xff]
        %v3377 = vld [vmem:[%s6 + $0x3d0] sm:$0xff]
        %v3378 = vld [vmem:[%s6 + $0x3d8] sm:$0xff]
        %v3379 = vld [vmem:[%s6 + $0x3e0] sm:$0xff]
        %v3380 = vld [vmem:[%s6 + $0x3e8] sm:$0xff]
        %v3381 = vld [vmem:[%s6 + $0x3f0] sm:$0xff]
        %v3382 = vld [vmem:[%s6 + $0x3f8] sm:$0xff]
        %v3391 = vunpack.c.l.b16 %v3375
        %v3392 = vunpack.c.h.b16 %v3375
        %v3393 = vunpack.c.l.b16 %v3376
        %v3394 = vunpack.c.h.b16 %v3376
        %v3395 = vunpack.c.l.b16 %v3377
        %v3396 = vunpack.c.h.b16 %v3377
        %v3397 = vunpack.c.l.b16 %v3378
        %v3398 = vunpack.c.h.b16 %v3378
        %v3399 = vunpack.c.l.b16 %v3379
        %v3400 = vunpack.c.h.b16 %v3379
        %v3401 = vunpack.c.l.b16 %v3380
        %v3402 = vunpack.c.h.b16 %v3380
        %v3403 = vunpack.c.l.b16 %v3381
        %v3404 = vunpack.c.h.b16 %v3381
        %v3405 = vunpack.c.l.b16 %v3382
        %v3406 = vunpack.c.h.b16 %v3382
        %v3407 = vpack.c.b16 %v3393, %v3391
        %v3408 = vpack.c.b16 %v3394, %v3392
        %v3409 = vpack.c.b16 %v3397, %v3395
        %v3410 = vpack.c.b16 %v3398, %v3396
        %v3411 = vpack.c.b16 %v3401, %v3399
        %v3412 = vpack.c.b16 %v3402, %v3400
        %v3413 = vpack.c.b16 %v3405, %v3403
        %v3414 = vpack.c.b16 %v3406, %v3404
        %v3424 = vsel %vm2153, %v3374, 0
        %3426 = vmatpush.bf16.msra.mxu0 0
        %3427 = vmatpush.bf16.msra.mxu0 0
        %3428 = vmatpush.bf16.msra.mxu0 0
        %3429 = vmatpush.bf16.msra.mxu0 0
        %3430 = vmatpush.bf16.msra.mxu0 %v3413
        %3431 = vmatpush.bf16.msra.mxu0 %v3411
        %3432 = vmatpush.bf16.msra.mxu0 %v3409
        %3433 = vmatpush.bf16.msra.mxu0 %v3407
        %3434 = vmatmul.bf16.gmra.mxu0 %v3424
        %v3435 = vpop.f32.mrf.mxu0
        %v3436 = vadd.f32 0.0, %v3435
        %v3437 = vpop.f32.mrf.mxu0
        %3438 = vdwg.mxu0
        %3439 = vmatpush.bf16.msra.mxu0 0
        %3440 = vmatpush.bf16.msra.mxu0 0
        %3441 = vmatpush.bf16.msra.mxu0 0
        %3442 = vmatpush.bf16.msra.mxu0 0
        %3443 = vmatpush.bf16.msra.mxu0 %v3414
        %3444 = vmatpush.bf16.msra.mxu0 %v3412
        %3445 = vmatpush.bf16.msra.mxu0 %v3410
        %3446 = vmatpush.bf16.msra.mxu0 %v3408
        %3447 = vmatmul.bf16.gmra.mxu0 %v3424
        %v3448 = vpop.f32.mrf.mxu0
        %v3449 = vadd.f32 0.0, %v3448
        %v3450 = vpop.f32.mrf.mxu0
        %3451 = vdwg.mxu0
        %v3452 = vadd.f32 %v3371, %v3436
        %v3453 = vadd.f32 %v3372, %v3449
        %v3454 = vld [vmem:[#allocation3 + $0x10] sm:$0x1]
        %v3455 = vpack.c.bf16 %v3454, %v3454
        %v3456 = vld [vmem:[%s6 + $0x400] sm:$0xff]
        %v3457 = vld [vmem:[%s6 + $0x408] sm:$0xff]
        %v3458 = vld [vmem:[%s6 + $0x410] sm:$0xff]
        %v3459 = vld [vmem:[%s6 + $0x418] sm:$0xff]
        %v3460 = vld [vmem:[%s6 + $0x420] sm:$0xff]
        %v3461 = vld [vmem:[%s6 + $0x428] sm:$0xff]
        %v3462 = vld [vmem:[%s6 + $0x430] sm:$0xff]
        %v3463 = vld [vmem:[%s6 + $0x438] sm:$0xff]
        %v3472 = vunpack.c.l.b16 %v3456
        %v3473 = vunpack.c.h.b16 %v3456
        %v3474 = vunpack.c.l.b16 %v3457
        %v3475 = vunpack.c.h.b16 %v3457
        %v3476 = vunpack.c.l.b16 %v3458
        %v3477 = vunpack.c.h.b16 %v3458
        %v3478 = vunpack.c.l.b16 %v3459
        %v3479 = vunpack.c.h.b16 %v3459
        %v3480 = vunpack.c.l.b16 %v3460
        %v3481 = vunpack.c.h.b16 %v3460
        %v3482 = vunpack.c.l.b16 %v3461
        %v3483 = vunpack.c.h.b16 %v3461
        %v3484 = vunpack.c.l.b16 %v3462
        %v3485 = vunpack.c.h.b16 %v3462
        %v3486 = vunpack.c.l.b16 %v3463
        %v3487 = vunpack.c.h.b16 %v3463
        %v3488 = vpack.c.b16 %v3474, %v3472
        %v3489 = vpack.c.b16 %v3475, %v3473
        %v3490 = vpack.c.b16 %v3478, %v3476
        %v3491 = vpack.c.b16 %v3479, %v3477
        %v3492 = vpack.c.b16 %v3482, %v3480
        %v3493 = vpack.c.b16 %v3483, %v3481
        %v3494 = vpack.c.b16 %v3486, %v3484
        %v3495 = vpack.c.b16 %v3487, %v3485
        %v3505 = vsel %vm2153, %v3455, 0
        %3507 = vmatpush.bf16.msra.mxu0 0
        %3508 = vmatpush.bf16.msra.mxu0 0
        %3509 = vmatpush.bf16.msra.mxu0 0
        %3510 = vmatpush.bf16.msra.mxu0 0
        %3511 = vmatpush.bf16.msra.mxu0 %v3494
        %3512 = vmatpush.bf16.msra.mxu0 %v3492
        %3513 = vmatpush.bf16.msra.mxu0 %v3490
        %3514 = vmatpush.bf16.msra.mxu0 %v3488
        %3515 = vmatmul.bf16.gmra.mxu0 %v3505
        %v3516 = vpop.f32.mrf.mxu0
        %v3517 = vadd.f32 0.0, %v3516
        %v3518 = vpop.f32.mrf.mxu0
        %3519 = vdwg.mxu0
        %3520 = vmatpush.bf16.msra.mxu0 0
        %3521 = vmatpush.bf16.msra.mxu0 0
        %3522 = vmatpush.bf16.msra.mxu0 0
        %3523 = vmatpush.bf16.msra.mxu0 0
        %3524 = vmatpush.bf16.msra.mxu0 %v3495
        %3525 = vmatpush.bf16.msra.mxu0 %v3493
        %3526 = vmatpush.bf16.msra.mxu0 %v3491
        %3527 = vmatpush.bf16.msra.mxu0 %v3489
        %3528 = vmatmul.bf16.gmra.mxu0 %v3505
        %v3529 = vpop.f32.mrf.mxu0
        %v3530 = vadd.f32 0.0, %v3529
        %v3531 = vpop.f32.mrf.mxu0
        %3532 = vdwg.mxu0
        %v3533 = vadd.f32 %v3452, %v3517
        %v3534 = vadd.f32 %v3453, %v3530
        %v3535 = vld [vmem:[#allocation3 + $0x11] sm:$0x1]
        %v3536 = vpack.c.bf16 %v3535, %v3535
        %v3537 = vld [vmem:[%s6 + $0x440] sm:$0xff]
        %v3538 = vld [vmem:[%s6 + $0x448] sm:$0xff]
        %v3539 = vld [vmem:[%s6 + $0x450] sm:$0xff]
        %v3540 = vld [vmem:[%s6 + $0x458] sm:$0xff]
        %v3541 = vld [vmem:[%s6 + $0x460] sm:$0xff]
        %v3542 = vld [vmem:[%s6 + $0x468] sm:$0xff]
        %v3543 = vld [vmem:[%s6 + $0x470] sm:$0xff]
        %v3544 = vld [vmem:[%s6 + $0x478] sm:$0xff]
        %v3553 = vunpack.c.l.b16 %v3537
        %v3554 = vunpack.c.h.b16 %v3537
        %v3555 = vunpack.c.l.b16 %v3538
        %v3556 = vunpack.c.h.b16 %v3538
        %v3557 = vunpack.c.l.b16 %v3539
        %v3558 = vunpack.c.h.b16 %v3539
        %v3559 = vunpack.c.l.b16 %v3540
        %v3560 = vunpack.c.h.b16 %v3540
        %v3561 = vunpack.c.l.b16 %v3541
        %v3562 = vunpack.c.h.b16 %v3541
        %v3563 = vunpack.c.l.b16 %v3542
        %v3564 = vunpack.c.h.b16 %v3542
        %v3565 = vunpack.c.l.b16 %v3543
        %v3566 = vunpack.c.h.b16 %v3543
        %v3567 = vunpack.c.l.b16 %v3544
        %v3568 = vunpack.c.h.b16 %v3544
        %v3569 = vpack.c.b16 %v3555, %v3553
        %v3570 = vpack.c.b16 %v3556, %v3554
        %v3571 = vpack.c.b16 %v3559, %v3557
        %v3572 = vpack.c.b16 %v3560, %v3558
        %v3573 = vpack.c.b16 %v3563, %v3561
        %v3574 = vpack.c.b16 %v3564, %v3562
        %v3575 = vpack.c.b16 %v3567, %v3565
        %v3576 = vpack.c.b16 %v3568, %v3566
        %v3586 = vsel %vm2153, %v3536, 0
        %3588 = vmatpush.bf16.msra.mxu0 0
        %3589 = vmatpush.bf16.msra.mxu0 0
        %3590 = vmatpush.bf16.msra.mxu0 0
        %3591 = vmatpush.bf16.msra.mxu0 0
        %3592 = vmatpush.bf16.msra.mxu0 %v3575
        %3593 = vmatpush.bf16.msra.mxu0 %v3573
        %3594 = vmatpush.bf16.msra.mxu0 %v3571
        %3595 = vmatpush.bf16.msra.mxu0 %v3569
        %3596 = vmatmul.bf16.gmra.mxu0 %v3586
        %v3597 = vpop.f32.mrf.mxu0
        %v3598 = vadd.f32 0.0, %v3597
        %v3599 = vpop.f32.mrf.mxu0
        %3600 = vdwg.mxu0
        %3601 = vmatpush.bf16.msra.mxu0 0
        %3602 = vmatpush.bf16.msra.mxu0 0
        %3603 = vmatpush.bf16.msra.mxu0 0
        %3604 = vmatpush.bf16.msra.mxu0 0
        %3605 = vmatpush.bf16.msra.mxu0 %v3576
        %3606 = vmatpush.bf16.msra.mxu0 %v3574
        %3607 = vmatpush.bf16.msra.mxu0 %v3572
        %3608 = vmatpush.bf16.msra.mxu0 %v3570
        %3609 = vmatmul.bf16.gmra.mxu0 %v3586
        %v3610 = vpop.f32.mrf.mxu0
        %v3611 = vadd.f32 0.0, %v3610
        %v3612 = vpop.f32.mrf.mxu0
        %3613 = vdwg.mxu0
        %v3614 = vadd.f32 %v3533, %v3598
        %v3615 = vadd.f32 %v3534, %v3611
        %v3616 = vld [vmem:[#allocation3 + $0x12] sm:$0x1]
        %v3617 = vpack.c.bf16 %v3616, %v3616
        %v3618 = vld [vmem:[%s6 + $0x480] sm:$0xff]
        %v3619 = vld [vmem:[%s6 + $0x488] sm:$0xff]
        %v3620 = vld [vmem:[%s6 + $0x490] sm:$0xff]
        %v3621 = vld [vmem:[%s6 + $0x498] sm:$0xff]
        %v3622 = vld [vmem:[%s6 + $0x4a0] sm:$0xff]
        %v3623 = vld [vmem:[%s6 + $0x4a8] sm:$0xff]
        %v3624 = vld [vmem:[%s6 + $0x4b0] sm:$0xff]
        %v3625 = vld [vmem:[%s6 + $0x4b8] sm:$0xff]
        %v3634 = vunpack.c.l.b16 %v3618
        %v3635 = vunpack.c.h.b16 %v3618
        %v3636 = vunpack.c.l.b16 %v3619
        %v3637 = vunpack.c.h.b16 %v3619
        %v3638 = vunpack.c.l.b16 %v3620
        %v3639 = vunpack.c.h.b16 %v3620
        %v3640 = vunpack.c.l.b16 %v3621
        %v3641 = vunpack.c.h.b16 %v3621
        %v3642 = vunpack.c.l.b16 %v3622
        %v3643 = vunpack.c.h.b16 %v3622
        %v3644 = vunpack.c.l.b16 %v3623
        %v3645 = vunpack.c.h.b16 %v3623
        %v3646 = vunpack.c.l.b16 %v3624
        %v3647 = vunpack.c.h.b16 %v3624
        %v3648 = vunpack.c.l.b16 %v3625
        %v3649 = vunpack.c.h.b16 %v3625
        %v3650 = vpack.c.b16 %v3636, %v3634
        %v3651 = vpack.c.b16 %v3637, %v3635
        %v3652 = vpack.c.b16 %v3640, %v3638
        %v3653 = vpack.c.b16 %v3641, %v3639
        %v3654 = vpack.c.b16 %v3644, %v3642
        %v3655 = vpack.c.b16 %v3645, %v3643
        %v3656 = vpack.c.b16 %v3648, %v3646
        %v3657 = vpack.c.b16 %v3649, %v3647
        %v3667 = vsel %vm2153, %v3617, 0
        %3669 = vmatpush.bf16.msra.mxu0 0
        %3670 = vmatpush.bf16.msra.mxu0 0
        %3671 = vmatpush.bf16.msra.mxu0 0
        %3672 = vmatpush.bf16.msra.mxu0 0
        %3673 = vmatpush.bf16.msra.mxu0 %v3656
        %3674 = vmatpush.bf16.msra.mxu0 %v3654
        %3675 = vmatpush.bf16.msra.mxu0 %v3652
        %3676 = vmatpush.bf16.msra.mxu0 %v3650
        %3677 = vmatmul.bf16.gmra.mxu0 %v3667
        %v3678 = vpop.f32.mrf.mxu0
        %v3679 = vadd.f32 0.0, %v3678
        %v3680 = vpop.f32.mrf.mxu0
        %3681 = vdwg.mxu0
        %3682 = vmatpush.bf16.msra.mxu0 0
        %3683 = vmatpush.bf16.msra.mxu0 0
        %3684 = vmatpush.bf16.msra.mxu0 0
        %3685 = vmatpush.bf16.msra.mxu0 0
        %3686 = vmatpush.bf16.msra.mxu0 %v3657
        %3687 = vmatpush.bf16.msra.mxu0 %v3655
        %3688 = vmatpush.bf16.msra.mxu0 %v3653
        %3689 = vmatpush.bf16.msra.mxu0 %v3651
        %3690 = vmatmul.bf16.gmra.mxu0 %v3667
        %v3691 = vpop.f32.mrf.mxu0
        %v3692 = vadd.f32 0.0, %v3691
        %v3693 = vpop.f32.mrf.mxu0
        %3694 = vdwg.mxu0
        %v3695 = vadd.f32 %v3614, %v3679
        %v3696 = vadd.f32 %v3615, %v3692
        %v3697 = vld [vmem:[#allocation3 + $0x13] sm:$0x1]
        %v3698 = vpack.c.bf16 %v3697, %v3697
        %v3699 = vld [vmem:[%s6 + $0x4c0] sm:$0xff]
        %v3700 = vld [vmem:[%s6 + $0x4c8] sm:$0xff]
        %v3701 = vld [vmem:[%s6 + $0x4d0] sm:$0xff]
        %v3702 = vld [vmem:[%s6 + $0x4d8] sm:$0xff]
        %v3703 = vld [vmem:[%s6 + $0x4e0] sm:$0xff]
        %v3704 = vld [vmem:[%s6 + $0x4e8] sm:$0xff]
        %v3705 = vld [vmem:[%s6 + $0x4f0] sm:$0xff]
        %v3706 = vld [vmem:[%s6 + $0x4f8] sm:$0xff]
        %v3715 = vunpack.c.l.b16 %v3699
        %v3716 = vunpack.c.h.b16 %v3699
        %v3717 = vunpack.c.l.b16 %v3700
        %v3718 = vunpack.c.h.b16 %v3700
        %v3719 = vunpack.c.l.b16 %v3701
        %v3720 = vunpack.c.h.b16 %v3701
        %v3721 = vunpack.c.l.b16 %v3702
        %v3722 = vunpack.c.h.b16 %v3702
        %v3723 = vunpack.c.l.b16 %v3703
        %v3724 = vunpack.c.h.b16 %v3703
        %v3725 = vunpack.c.l.b16 %v3704
        %v3726 = vunpack.c.h.b16 %v3704
        %v3727 = vunpack.c.l.b16 %v3705
        %v3728 = vunpack.c.h.b16 %v3705
        %v3729 = vunpack.c.l.b16 %v3706
        %v3730 = vunpack.c.h.b16 %v3706
        %v3731 = vpack.c.b16 %v3717, %v3715
        %v3732 = vpack.c.b16 %v3718, %v3716
        %v3733 = vpack.c.b16 %v3721, %v3719
        %v3734 = vpack.c.b16 %v3722, %v3720
        %v3735 = vpack.c.b16 %v3725, %v3723
        %v3736 = vpack.c.b16 %v3726, %v3724
        %v3737 = vpack.c.b16 %v3729, %v3727
        %v3738 = vpack.c.b16 %v3730, %v3728
        %v3748 = vsel %vm2153, %v3698, 0
        %3750 = vmatpush.bf16.msra.mxu0 0
        %3751 = vmatpush.bf16.msra.mxu0 0
        %3752 = vmatpush.bf16.msra.mxu0 0
        %3753 = vmatpush.bf16.msra.mxu0 0
        %3754 = vmatpush.bf16.msra.mxu0 %v3737
        %3755 = vmatpush.bf16.msra.mxu0 %v3735
        %3756 = vmatpush.bf16.msra.mxu0 %v3733
        %3757 = vmatpush.bf16.msra.mxu0 %v3731
        %3758 = vmatmul.bf16.gmra.mxu0 %v3748
        %v3759 = vpop.f32.mrf.mxu0
        %v3760 = vadd.f32 0.0, %v3759
        %v3761 = vpop.f32.mrf.mxu0
        %3762 = vdwg.mxu0
        %3763 = vmatpush.bf16.msra.mxu0 0
        %3764 = vmatpush.bf16.msra.mxu0 0
        %3765 = vmatpush.bf16.msra.mxu0 0
        %3766 = vmatpush.bf16.msra.mxu0 0
        %3767 = vmatpush.bf16.msra.mxu0 %v3738
        %3768 = vmatpush.bf16.msra.mxu0 %v3736
        %3769 = vmatpush.bf16.msra.mxu0 %v3734
        %3770 = vmatpush.bf16.msra.mxu0 %v3732
        %3771 = vmatmul.bf16.gmra.mxu0 %v3748
        %v3772 = vpop.f32.mrf.mxu0
        %v3773 = vadd.f32 0.0, %v3772
        %v3774 = vpop.f32.mrf.mxu0
        %3775 = vdwg.mxu0
        %v3776 = vadd.f32 %v3695, %v3760
        %v3777 = vadd.f32 %v3696, %v3773
        %v3778 = vld [vmem:[#allocation3 + $0x14] sm:$0x1]
        %v3779 = vpack.c.bf16 %v3778, %v3778
        %v3780 = vld [vmem:[%s6 + $0x500] sm:$0xff]
        %v3781 = vld [vmem:[%s6 + $0x508] sm:$0xff]
        %v3782 = vld [vmem:[%s6 + $0x510] sm:$0xff]
        %v3783 = vld [vmem:[%s6 + $0x518] sm:$0xff]
        %v3784 = vld [vmem:[%s6 + $0x520] sm:$0xff]
        %v3785 = vld [vmem:[%s6 + $0x528] sm:$0xff]
        %v3786 = vld [vmem:[%s6 + $0x530] sm:$0xff]
        %v3787 = vld [vmem:[%s6 + $0x538] sm:$0xff]
        %v3796 = vunpack.c.l.b16 %v3780
        %v3797 = vunpack.c.h.b16 %v3780
        %v3798 = vunpack.c.l.b16 %v3781
        %v3799 = vunpack.c.h.b16 %v3781
        %v3800 = vunpack.c.l.b16 %v3782
        %v3801 = vunpack.c.h.b16 %v3782
        %v3802 = vunpack.c.l.b16 %v3783
        %v3803 = vunpack.c.h.b16 %v3783
        %v3804 = vunpack.c.l.b16 %v3784
        %v3805 = vunpack.c.h.b16 %v3784
        %v3806 = vunpack.c.l.b16 %v3785
        %v3807 = vunpack.c.h.b16 %v3785
        %v3808 = vunpack.c.l.b16 %v3786
        %v3809 = vunpack.c.h.b16 %v3786
        %v3810 = vunpack.c.l.b16 %v3787
        %v3811 = vunpack.c.h.b16 %v3787
        %v3812 = vpack.c.b16 %v3798, %v3796
        %v3813 = vpack.c.b16 %v3799, %v3797
        %v3814 = vpack.c.b16 %v3802, %v3800
        %v3815 = vpack.c.b16 %v3803, %v3801
        %v3816 = vpack.c.b16 %v3806, %v3804
        %v3817 = vpack.c.b16 %v3807, %v3805
        %v3818 = vpack.c.b16 %v3810, %v3808
        %v3819 = vpack.c.b16 %v3811, %v3809
        %v3829 = vsel %vm2153, %v3779, 0
        %3831 = vmatpush.bf16.msra.mxu0 0
        %3832 = vmatpush.bf16.msra.mxu0 0
        %3833 = vmatpush.bf16.msra.mxu0 0
        %3834 = vmatpush.bf16.msra.mxu0 0
        %3835 = vmatpush.bf16.msra.mxu0 %v3818
        %3836 = vmatpush.bf16.msra.mxu0 %v3816
        %3837 = vmatpush.bf16.msra.mxu0 %v3814
        %3838 = vmatpush.bf16.msra.mxu0 %v3812
        %3839 = vmatmul.bf16.gmra.mxu0 %v3829
        %v3840 = vpop.f32.mrf.mxu0
        %v3841 = vadd.f32 0.0, %v3840
        %v3842 = vpop.f32.mrf.mxu0
        %3843 = vdwg.mxu0
        %3844 = vmatpush.bf16.msra.mxu0 0
        %3845 = vmatpush.bf16.msra.mxu0 0
        %3846 = vmatpush.bf16.msra.mxu0 0
        %3847 = vmatpush.bf16.msra.mxu0 0
        %3848 = vmatpush.bf16.msra.mxu0 %v3819
        %3849 = vmatpush.bf16.msra.mxu0 %v3817
        %3850 = vmatpush.bf16.msra.mxu0 %v3815
        %3851 = vmatpush.bf16.msra.mxu0 %v3813
        %3852 = vmatmul.bf16.gmra.mxu0 %v3829
        %v3853 = vpop.f32.mrf.mxu0
        %v3854 = vadd.f32 0.0, %v3853
        %v3855 = vpop.f32.mrf.mxu0
        %3856 = vdwg.mxu0
        %v3857 = vadd.f32 %v3776, %v3841
        %v3858 = vadd.f32 %v3777, %v3854
        %v3859 = vld [vmem:[#allocation3 + $0x15] sm:$0x1]
        %v3860 = vpack.c.bf16 %v3859, %v3859
        %v3861 = vld [vmem:[%s6 + $0x540] sm:$0xff]
        %v3862 = vld [vmem:[%s6 + $0x548] sm:$0xff]
        %v3863 = vld [vmem:[%s6 + $0x550] sm:$0xff]
        %v3864 = vld [vmem:[%s6 + $0x558] sm:$0xff]
        %v3865 = vld [vmem:[%s6 + $0x560] sm:$0xff]
        %v3866 = vld [vmem:[%s6 + $0x568] sm:$0xff]
        %v3867 = vld [vmem:[%s6 + $0x570] sm:$0xff]
        %v3868 = vld [vmem:[%s6 + $0x578] sm:$0xff]
        %v3877 = vunpack.c.l.b16 %v3861
        %v3878 = vunpack.c.h.b16 %v3861
        %v3879 = vunpack.c.l.b16 %v3862
        %v3880 = vunpack.c.h.b16 %v3862
        %v3881 = vunpack.c.l.b16 %v3863
        %v3882 = vunpack.c.h.b16 %v3863
        %v3883 = vunpack.c.l.b16 %v3864
        %v3884 = vunpack.c.h.b16 %v3864
        %v3885 = vunpack.c.l.b16 %v3865
        %v3886 = vunpack.c.h.b16 %v3865
        %v3887 = vunpack.c.l.b16 %v3866
        %v3888 = vunpack.c.h.b16 %v3866
        %v3889 = vunpack.c.l.b16 %v3867
        %v3890 = vunpack.c.h.b16 %v3867
        %v3891 = vunpack.c.l.b16 %v3868
        %v3892 = vunpack.c.h.b16 %v3868
        %v3893 = vpack.c.b16 %v3879, %v3877
        %v3894 = vpack.c.b16 %v3880, %v3878
        %v3895 = vpack.c.b16 %v3883, %v3881
        %v3896 = vpack.c.b16 %v3884, %v3882
        %v3897 = vpack.c.b16 %v3887, %v3885
        %v3898 = vpack.c.b16 %v3888, %v3886
        %v3899 = vpack.c.b16 %v3891, %v3889
        %v3900 = vpack.c.b16 %v3892, %v3890
        %v3910 = vsel %vm2153, %v3860, 0
        %3912 = vmatpush.bf16.msra.mxu0 0
        %3913 = vmatpush.bf16.msra.mxu0 0
        %3914 = vmatpush.bf16.msra.mxu0 0
        %3915 = vmatpush.bf16.msra.mxu0 0
        %3916 = vmatpush.bf16.msra.mxu0 %v3899
        %3917 = vmatpush.bf16.msra.mxu0 %v3897
        %3918 = vmatpush.bf16.msra.mxu0 %v3895
        %3919 = vmatpush.bf16.msra.mxu0 %v3893
        %3920 = vmatmul.bf16.gmra.mxu0 %v3910
        %v3921 = vpop.f32.mrf.mxu0
        %v3922 = vadd.f32 0.0, %v3921
        %v3923 = vpop.f32.mrf.mxu0
        %3924 = vdwg.mxu0
        %3925 = vmatpush.bf16.msra.mxu0 0
        %3926 = vmatpush.bf16.msra.mxu0 0
        %3927 = vmatpush.bf16.msra.mxu0 0
        %3928 = vmatpush.bf16.msra.mxu0 0
        %3929 = vmatpush.bf16.msra.mxu0 %v3900
        %3930 = vmatpush.bf16.msra.mxu0 %v3898
        %3931 = vmatpush.bf16.msra.mxu0 %v3896
        %3932 = vmatpush.bf16.msra.mxu0 %v3894
        %3933 = vmatmul.bf16.gmra.mxu0 %v3910
        %v3934 = vpop.f32.mrf.mxu0
        %v3935 = vadd.f32 0.0, %v3934
        %v3936 = vpop.f32.mrf.mxu0
        %3937 = vdwg.mxu0
        %v3938 = vadd.f32 %v3857, %v3922
        %v3939 = vadd.f32 %v3858, %v3935
        %v3940 = vld [vmem:[#allocation3 + $0x16] sm:$0x1]
        %v3941 = vpack.c.bf16 %v3940, %v3940
        %v3942 = vld [vmem:[%s6 + $0x580] sm:$0xff]
        %v3943 = vld [vmem:[%s6 + $0x588] sm:$0xff]
        %v3944 = vld [vmem:[%s6 + $0x590] sm:$0xff]
        %v3945 = vld [vmem:[%s6 + $0x598] sm:$0xff]
        %v3946 = vld [vmem:[%s6 + $0x5a0] sm:$0xff]
        %v3947 = vld [vmem:[%s6 + $0x5a8] sm:$0xff]
        %v3948 = vld [vmem:[%s6 + $0x5b0] sm:$0xff]
        %v3949 = vld [vmem:[%s6 + $0x5b8] sm:$0xff]
        %v3958 = vunpack.c.l.b16 %v3942
        %v3959 = vunpack.c.h.b16 %v3942
        %v3960 = vunpack.c.l.b16 %v3943
        %v3961 = vunpack.c.h.b16 %v3943
        %v3962 = vunpack.c.l.b16 %v3944
        %v3963 = vunpack.c.h.b16 %v3944
        %v3964 = vunpack.c.l.b16 %v3945
        %v3965 = vunpack.c.h.b16 %v3945
        %v3966 = vunpack.c.l.b16 %v3946
        %v3967 = vunpack.c.h.b16 %v3946
        %v3968 = vunpack.c.l.b16 %v3947
        %v3969 = vunpack.c.h.b16 %v3947
        %v3970 = vunpack.c.l.b16 %v3948
        %v3971 = vunpack.c.h.b16 %v3948
        %v3972 = vunpack.c.l.b16 %v3949
        %v3973 = vunpack.c.h.b16 %v3949
        %v3974 = vpack.c.b16 %v3960, %v3958
        %v3975 = vpack.c.b16 %v3961, %v3959
        %v3976 = vpack.c.b16 %v3964, %v3962
        %v3977 = vpack.c.b16 %v3965, %v3963
        %v3978 = vpack.c.b16 %v3968, %v3966
        %v3979 = vpack.c.b16 %v3969, %v3967
        %v3980 = vpack.c.b16 %v3972, %v3970
        %v3981 = vpack.c.b16 %v3973, %v3971
        %v3991 = vsel %vm2153, %v3941, 0
        %3993 = vmatpush.bf16.msra.mxu0 0
        %3994 = vmatpush.bf16.msra.mxu0 0
        %3995 = vmatpush.bf16.msra.mxu0 0
        %3996 = vmatpush.bf16.msra.mxu0 0
        %3997 = vmatpush.bf16.msra.mxu0 %v3980
        %3998 = vmatpush.bf16.msra.mxu0 %v3978
        %3999 = vmatpush.bf16.msra.mxu0 %v3976
        %4000 = vmatpush.bf16.msra.mxu0 %v3974
        %4001 = vmatmul.bf16.gmra.mxu0 %v3991
        %v4002 = vpop.f32.mrf.mxu0
        %v4003 = vadd.f32 0.0, %v4002
        %v4004 = vpop.f32.mrf.mxu0
        %4005 = vdwg.mxu0
        %4006 = vmatpush.bf16.msra.mxu0 0
        %4007 = vmatpush.bf16.msra.mxu0 0
        %4008 = vmatpush.bf16.msra.mxu0 0
        %4009 = vmatpush.bf16.msra.mxu0 0
        %4010 = vmatpush.bf16.msra.mxu0 %v3981
        %4011 = vmatpush.bf16.msra.mxu0 %v3979
        %4012 = vmatpush.bf16.msra.mxu0 %v3977
        %4013 = vmatpush.bf16.msra.mxu0 %v3975
        %4014 = vmatmul.bf16.gmra.mxu0 %v3991
        %v4015 = vpop.f32.mrf.mxu0
        %v4016 = vadd.f32 0.0, %v4015
        %v4017 = vpop.f32.mrf.mxu0
        %4018 = vdwg.mxu0
        %v4019 = vadd.f32 %v3938, %v4003
        %v4020 = vadd.f32 %v3939, %v4016
        %v4021 = vld [vmem:[#allocation3 + $0x17] sm:$0x1]
        %v4022 = vpack.c.bf16 %v4021, %v4021
        %v4023 = vld [vmem:[%s6 + $0x5c0] sm:$0xff]
        %v4024 = vld [vmem:[%s6 + $0x5c8] sm:$0xff]
        %v4025 = vld [vmem:[%s6 + $0x5d0] sm:$0xff]
        %v4026 = vld [vmem:[%s6 + $0x5d8] sm:$0xff]
        %v4027 = vld [vmem:[%s6 + $0x5e0] sm:$0xff]
        %v4028 = vld [vmem:[%s6 + $0x5e8] sm:$0xff]
        %v4029 = vld [vmem:[%s6 + $0x5f0] sm:$0xff]
        %v4030 = vld [vmem:[%s6 + $0x5f8] sm:$0xff]
        %v4039 = vunpack.c.l.b16 %v4023
        %v4040 = vunpack.c.h.b16 %v4023
        %v4041 = vunpack.c.l.b16 %v4024
        %v4042 = vunpack.c.h.b16 %v4024
        %v4043 = vunpack.c.l.b16 %v4025
        %v4044 = vunpack.c.h.b16 %v4025
        %v4045 = vunpack.c.l.b16 %v4026
        %v4046 = vunpack.c.h.b16 %v4026
        %v4047 = vunpack.c.l.b16 %v4027
        %v4048 = vunpack.c.h.b16 %v4027
        %v4049 = vunpack.c.l.b16 %v4028
        %v4050 = vunpack.c.h.b16 %v4028
        %v4051 = vunpack.c.l.b16 %v4029
        %v4052 = vunpack.c.h.b16 %v4029
        %v4053 = vunpack.c.l.b16 %v4030
        %v4054 = vunpack.c.h.b16 %v4030
        %v4055 = vpack.c.b16 %v4041, %v4039
        %v4056 = vpack.c.b16 %v4042, %v4040
        %v4057 = vpack.c.b16 %v4045, %v4043
        %v4058 = vpack.c.b16 %v4046, %v4044
        %v4059 = vpack.c.b16 %v4049, %v4047
        %v4060 = vpack.c.b16 %v4050, %v4048
        %v4061 = vpack.c.b16 %v4053, %v4051
        %v4062 = vpack.c.b16 %v4054, %v4052
        %v4072 = vsel %vm2153, %v4022, 0
        %4074 = vmatpush.bf16.msra.mxu0 0
        %4075 = vmatpush.bf16.msra.mxu0 0
        %4076 = vmatpush.bf16.msra.mxu0 0
        %4077 = vmatpush.bf16.msra.mxu0 0
        %4078 = vmatpush.bf16.msra.mxu0 %v4061
        %4079 = vmatpush.bf16.msra.mxu0 %v4059
        %4080 = vmatpush.bf16.msra.mxu0 %v4057
        %4081 = vmatpush.bf16.msra.mxu0 %v4055
        %4082 = vmatmul.bf16.gmra.mxu0 %v4072
        %v4083 = vpop.f32.mrf.mxu0
        %v4084 = vadd.f32 0.0, %v4083
        %v4085 = vpop.f32.mrf.mxu0
        %4086 = vdwg.mxu0
        %4087 = vmatpush.bf16.msra.mxu0 0
        %4088 = vmatpush.bf16.msra.mxu0 0
        %4089 = vmatpush.bf16.msra.mxu0 0
        %4090 = vmatpush.bf16.msra.mxu0 0
        %4091 = vmatpush.bf16.msra.mxu0 %v4062
        %4092 = vmatpush.bf16.msra.mxu0 %v4060
        %4093 = vmatpush.bf16.msra.mxu0 %v4058
        %4094 = vmatpush.bf16.msra.mxu0 %v4056
        %4095 = vmatmul.bf16.gmra.mxu0 %v4072
        %v4096 = vpop.f32.mrf.mxu0
        %v4097 = vadd.f32 0.0, %v4096
        %v4098 = vpop.f32.mrf.mxu0
        %4099 = vdwg.mxu0
        %v4100 = vadd.f32 %v4019, %v4084
        %v4101 = vadd.f32 %v4020, %v4097
        %v4102 = vld [vmem:[#allocation3 + $0x18] sm:$0x1]
        %v4103 = vpack.c.bf16 %v4102, %v4102
        %v4104 = vld [vmem:[%s6 + $0x600] sm:$0xff]
        %v4105 = vld [vmem:[%s6 + $0x608] sm:$0xff]
        %v4106 = vld [vmem:[%s6 + $0x610] sm:$0xff]
        %v4107 = vld [vmem:[%s6 + $0x618] sm:$0xff]
        %v4108 = vld [vmem:[%s6 + $0x620] sm:$0xff]
        %v4109 = vld [vmem:[%s6 + $0x628] sm:$0xff]
        %v4110 = vld [vmem:[%s6 + $0x630] sm:$0xff]
        %v4111 = vld [vmem:[%s6 + $0x638] sm:$0xff]
        %v4120 = vunpack.c.l.b16 %v4104
        %v4121 = vunpack.c.h.b16 %v4104
        %v4122 = vunpack.c.l.b16 %v4105
        %v4123 = vunpack.c.h.b16 %v4105
        %v4124 = vunpack.c.l.b16 %v4106
        %v4125 = vunpack.c.h.b16 %v4106
        %v4126 = vunpack.c.l.b16 %v4107
        %v4127 = vunpack.c.h.b16 %v4107
        %v4128 = vunpack.c.l.b16 %v4108
        %v4129 = vunpack.c.h.b16 %v4108
        %v4130 = vunpack.c.l.b16 %v4109
        %v4131 = vunpack.c.h.b16 %v4109
        %v4132 = vunpack.c.l.b16 %v4110
        %v4133 = vunpack.c.h.b16 %v4110
        %v4134 = vunpack.c.l.b16 %v4111
        %v4135 = vunpack.c.h.b16 %v4111
        %v4136 = vpack.c.b16 %v4122, %v4120
        %v4137 = vpack.c.b16 %v4123, %v4121
        %v4138 = vpack.c.b16 %v4126, %v4124
        %v4139 = vpack.c.b16 %v4127, %v4125
        %v4140 = vpack.c.b16 %v4130, %v4128
        %v4141 = vpack.c.b16 %v4131, %v4129
        %v4142 = vpack.c.b16 %v4134, %v4132
        %v4143 = vpack.c.b16 %v4135, %v4133
        %v4153 = vsel %vm2153, %v4103, 0
        %4155 = vmatpush.bf16.msra.mxu0 0
        %4156 = vmatpush.bf16.msra.mxu0 0
        %4157 = vmatpush.bf16.msra.mxu0 0
        %4158 = vmatpush.bf16.msra.mxu0 0
        %4159 = vmatpush.bf16.msra.mxu0 %v4142
        %4160 = vmatpush.bf16.msra.mxu0 %v4140
        %4161 = vmatpush.bf16.msra.mxu0 %v4138
        %4162 = vmatpush.bf16.msra.mxu0 %v4136
        %4163 = vmatmul.bf16.gmra.mxu0 %v4153
        %v4164 = vpop.f32.mrf.mxu0
        %v4165 = vadd.f32 0.0, %v4164
        %v4166 = vpop.f32.mrf.mxu0
        %4167 = vdwg.mxu0
        %4168 = vmatpush.bf16.msra.mxu0 0
        %4169 = vmatpush.bf16.msra.mxu0 0
        %4170 = vmatpush.bf16.msra.mxu0 0
        %4171 = vmatpush.bf16.msra.mxu0 0
        %4172 = vmatpush.bf16.msra.mxu0 %v4143
        %4173 = vmatpush.bf16.msra.mxu0 %v4141
        %4174 = vmatpush.bf16.msra.mxu0 %v4139
        %4175 = vmatpush.bf16.msra.mxu0 %v4137
        %4176 = vmatmul.bf16.gmra.mxu0 %v4153
        %v4177 = vpop.f32.mrf.mxu0
        %v4178 = vadd.f32 0.0, %v4177
        %v4179 = vpop.f32.mrf.mxu0
        %4180 = vdwg.mxu0
        %v4181 = vadd.f32 %v4100, %v4165
        %v4182 = vadd.f32 %v4101, %v4178
        %v4183 = vld [vmem:[#allocation3 + $0x19] sm:$0x1]
        %v4184 = vpack.c.bf16 %v4183, %v4183
        %v4185 = vld [vmem:[%s6 + $0x640] sm:$0xff]
        %v4186 = vld [vmem:[%s6 + $0x648] sm:$0xff]
        %v4187 = vld [vmem:[%s6 + $0x650] sm:$0xff]
        %v4188 = vld [vmem:[%s6 + $0x658] sm:$0xff]
        %v4189 = vld [vmem:[%s6 + $0x660] sm:$0xff]
        %v4190 = vld [vmem:[%s6 + $0x668] sm:$0xff]
        %v4191 = vld [vmem:[%s6 + $0x670] sm:$0xff]
        %v4192 = vld [vmem:[%s6 + $0x678] sm:$0xff]
        %v4201 = vunpack.c.l.b16 %v4185
        %v4202 = vunpack.c.h.b16 %v4185
        %v4203 = vunpack.c.l.b16 %v4186
        %v4204 = vunpack.c.h.b16 %v4186
        %v4205 = vunpack.c.l.b16 %v4187
        %v4206 = vunpack.c.h.b16 %v4187
        %v4207 = vunpack.c.l.b16 %v4188
        %v4208 = vunpack.c.h.b16 %v4188
        %v4209 = vunpack.c.l.b16 %v4189
        %v4210 = vunpack.c.h.b16 %v4189
        %v4211 = vunpack.c.l.b16 %v4190
        %v4212 = vunpack.c.h.b16 %v4190
        %v4213 = vunpack.c.l.b16 %v4191
        %v4214 = vunpack.c.h.b16 %v4191
        %v4215 = vunpack.c.l.b16 %v4192
        %v4216 = vunpack.c.h.b16 %v4192
        %v4217 = vpack.c.b16 %v4203, %v4201
        %v4218 = vpack.c.b16 %v4204, %v4202
        %v4219 = vpack.c.b16 %v4207, %v4205
        %v4220 = vpack.c.b16 %v4208, %v4206
        %v4221 = vpack.c.b16 %v4211, %v4209
        %v4222 = vpack.c.b16 %v4212, %v4210
        %v4223 = vpack.c.b16 %v4215, %v4213
        %v4224 = vpack.c.b16 %v4216, %v4214
        %v4234 = vsel %vm2153, %v4184, 0
        %4236 = vmatpush.bf16.msra.mxu0 0
        %4237 = vmatpush.bf16.msra.mxu0 0
        %4238 = vmatpush.bf16.msra.mxu0 0
        %4239 = vmatpush.bf16.msra.mxu0 0
        %4240 = vmatpush.bf16.msra.mxu0 %v4223
        %4241 = vmatpush.bf16.msra.mxu0 %v4221
        %4242 = vmatpush.bf16.msra.mxu0 %v4219
        %4243 = vmatpush.bf16.msra.mxu0 %v4217
        %4244 = vmatmul.bf16.gmra.mxu0 %v4234
        %v4245 = vpop.f32.mrf.mxu0
        %v4246 = vadd.f32 0.0, %v4245
        %v4247 = vpop.f32.mrf.mxu0
        %4248 = vdwg.mxu0
        %4249 = vmatpush.bf16.msra.mxu0 0
        %4250 = vmatpush.bf16.msra.mxu0 0
        %4251 = vmatpush.bf16.msra.mxu0 0
        %4252 = vmatpush.bf16.msra.mxu0 0
        %4253 = vmatpush.bf16.msra.mxu0 %v4224
        %4254 = vmatpush.bf16.msra.mxu0 %v4222
        %4255 = vmatpush.bf16.msra.mxu0 %v4220
        %4256 = vmatpush.bf16.msra.mxu0 %v4218
        %4257 = vmatmul.bf16.gmra.mxu0 %v4234
        %v4258 = vpop.f32.mrf.mxu0
        %v4259 = vadd.f32 0.0, %v4258
        %v4260 = vpop.f32.mrf.mxu0
        %4261 = vdwg.mxu0
        %v4262 = vadd.f32 %v4181, %v4246
        %v4263 = vadd.f32 %v4182, %v4259
        %v4264 = vld [vmem:[#allocation3 + $0x1a] sm:$0x1]
        %v4265 = vpack.c.bf16 %v4264, %v4264
        %v4266 = vld [vmem:[%s6 + $0x680] sm:$0xff]
        %v4267 = vld [vmem:[%s6 + $0x688] sm:$0xff]
        %v4268 = vld [vmem:[%s6 + $0x690] sm:$0xff]
        %v4269 = vld [vmem:[%s6 + $0x698] sm:$0xff]
        %v4270 = vld [vmem:[%s6 + $0x6a0] sm:$0xff]
        %v4271 = vld [vmem:[%s6 + $0x6a8] sm:$0xff]
        %v4272 = vld [vmem:[%s6 + $0x6b0] sm:$0xff]
        %v4273 = vld [vmem:[%s6 + $0x6b8] sm:$0xff]
        %v4282 = vunpack.c.l.b16 %v4266
        %v4283 = vunpack.c.h.b16 %v4266
        %v4284 = vunpack.c.l.b16 %v4267
        %v4285 = vunpack.c.h.b16 %v4267
        %v4286 = vunpack.c.l.b16 %v4268
        %v4287 = vunpack.c.h.b16 %v4268
        %v4288 = vunpack.c.l.b16 %v4269
        %v4289 = vunpack.c.h.b16 %v4269
        %v4290 = vunpack.c.l.b16 %v4270
        %v4291 = vunpack.c.h.b16 %v4270
        %v4292 = vunpack.c.l.b16 %v4271
        %v4293 = vunpack.c.h.b16 %v4271
        %v4294 = vunpack.c.l.b16 %v4272
        %v4295 = vunpack.c.h.b16 %v4272
        %v4296 = vunpack.c.l.b16 %v4273
        %v4297 = vunpack.c.h.b16 %v4273
        %v4298 = vpack.c.b16 %v4284, %v4282
        %v4299 = vpack.c.b16 %v4285, %v4283
        %v4300 = vpack.c.b16 %v4288, %v4286
        %v4301 = vpack.c.b16 %v4289, %v4287
        %v4302 = vpack.c.b16 %v4292, %v4290
        %v4303 = vpack.c.b16 %v4293, %v4291
        %v4304 = vpack.c.b16 %v4296, %v4294
        %v4305 = vpack.c.b16 %v4297, %v4295
        %v4315 = vsel %vm2153, %v4265, 0
        %4317 = vmatpush.bf16.msra.mxu0 0
        %4318 = vmatpush.bf16.msra.mxu0 0
        %4319 = vmatpush.bf16.msra.mxu0 0
        %4320 = vmatpush.bf16.msra.mxu0 0
        %4321 = vmatpush.bf16.msra.mxu0 %v4304
        %4322 = vmatpush.bf16.msra.mxu0 %v4302
        %4323 = vmatpush.bf16.msra.mxu0 %v4300
        %4324 = vmatpush.bf16.msra.mxu0 %v4298
        %4325 = vmatmul.bf16.gmra.mxu0 %v4315
        %v4326 = vpop.f32.mrf.mxu0
        %v4327 = vadd.f32 0.0, %v4326
        %v4328 = vpop.f32.mrf.mxu0
        %4329 = vdwg.mxu0
        %4330 = vmatpush.bf16.msra.mxu0 0
        %4331 = vmatpush.bf16.msra.mxu0 0
        %4332 = vmatpush.bf16.msra.mxu0 0
        %4333 = vmatpush.bf16.msra.mxu0 0
        %4334 = vmatpush.bf16.msra.mxu0 %v4305
        %4335 = vmatpush.bf16.msra.mxu0 %v4303
        %4336 = vmatpush.bf16.msra.mxu0 %v4301
        %4337 = vmatpush.bf16.msra.mxu0 %v4299
        %4338 = vmatmul.bf16.gmra.mxu0 %v4315
        %v4339 = vpop.f32.mrf.mxu0
        %v4340 = vadd.f32 0.0, %v4339
        %v4341 = vpop.f32.mrf.mxu0
        %4342 = vdwg.mxu0
        %v4343 = vadd.f32 %v4262, %v4327
        %v4344 = vadd.f32 %v4263, %v4340
        %v4345 = vld [vmem:[#allocation3 + $0x1b] sm:$0x1]
        %v4346 = vpack.c.bf16 %v4345, %v4345
        %v4347 = vld [vmem:[%s6 + $0x6c0] sm:$0xff]
        %v4348 = vld [vmem:[%s6 + $0x6c8] sm:$0xff]
        %v4349 = vld [vmem:[%s6 + $0x6d0] sm:$0xff]
        %v4350 = vld [vmem:[%s6 + $0x6d8] sm:$0xff]
        %v4351 = vld [vmem:[%s6 + $0x6e0] sm:$0xff]
        %v4352 = vld [vmem:[%s6 + $0x6e8] sm:$0xff]
        %v4353 = vld [vmem:[%s6 + $0x6f0] sm:$0xff]
        %v4354 = vld [vmem:[%s6 + $0x6f8] sm:$0xff]
        %v4363 = vunpack.c.l.b16 %v4347
        %v4364 = vunpack.c.h.b16 %v4347
        %v4365 = vunpack.c.l.b16 %v4348
        %v4366 = vunpack.c.h.b16 %v4348
        %v4367 = vunpack.c.l.b16 %v4349
        %v4368 = vunpack.c.h.b16 %v4349
        %v4369 = vunpack.c.l.b16 %v4350
        %v4370 = vunpack.c.h.b16 %v4350
        %v4371 = vunpack.c.l.b16 %v4351
        %v4372 = vunpack.c.h.b16 %v4351
        %v4373 = vunpack.c.l.b16 %v4352
        %v4374 = vunpack.c.h.b16 %v4352
        %v4375 = vunpack.c.l.b16 %v4353
        %v4376 = vunpack.c.h.b16 %v4353
        %v4377 = vunpack.c.l.b16 %v4354
        %v4378 = vunpack.c.h.b16 %v4354
        %v4379 = vpack.c.b16 %v4365, %v4363
        %v4380 = vpack.c.b16 %v4366, %v4364
        %v4381 = vpack.c.b16 %v4369, %v4367
        %v4382 = vpack.c.b16 %v4370, %v4368
        %v4383 = vpack.c.b16 %v4373, %v4371
        %v4384 = vpack.c.b16 %v4374, %v4372
        %v4385 = vpack.c.b16 %v4377, %v4375
        %v4386 = vpack.c.b16 %v4378, %v4376
        %v4396 = vsel %vm2153, %v4346, 0
        %4398 = vmatpush.bf16.msra.mxu0 0
        %4399 = vmatpush.bf16.msra.mxu0 0
        %4400 = vmatpush.bf16.msra.mxu0 0
        %4401 = vmatpush.bf16.msra.mxu0 0
        %4402 = vmatpush.bf16.msra.mxu0 %v4385
        %4403 = vmatpush.bf16.msra.mxu0 %v4383
        %4404 = vmatpush.bf16.msra.mxu0 %v4381
        %4405 = vmatpush.bf16.msra.mxu0 %v4379
        %4406 = vmatmul.bf16.gmra.mxu0 %v4396
        %v4407 = vpop.f32.mrf.mxu0
        %v4408 = vadd.f32 0.0, %v4407
        %v4409 = vpop.f32.mrf.mxu0
        %4410 = vdwg.mxu0
        %4411 = vmatpush.bf16.msra.mxu0 0
        %4412 = vmatpush.bf16.msra.mxu0 0
        %4413 = vmatpush.bf16.msra.mxu0 0
        %4414 = vmatpush.bf16.msra.mxu0 0
        %4415 = vmatpush.bf16.msra.mxu0 %v4386
        %4416 = vmatpush.bf16.msra.mxu0 %v4384
        %4417 = vmatpush.bf16.msra.mxu0 %v4382
        %4418 = vmatpush.bf16.msra.mxu0 %v4380
        %4419 = vmatmul.bf16.gmra.mxu0 %v4396
        %v4420 = vpop.f32.mrf.mxu0
        %v4421 = vadd.f32 0.0, %v4420
        %v4422 = vpop.f32.mrf.mxu0
        %4423 = vdwg.mxu0
        %v4424 = vadd.f32 %v4343, %v4408
        %v4425 = vadd.f32 %v4344, %v4421
        %v4426 = vld [vmem:[#allocation3 + $0x1c] sm:$0x1]
        %v4427 = vpack.c.bf16 %v4426, %v4426
        %v4428 = vld [vmem:[%s6 + $0x700] sm:$0xff]
        %v4429 = vld [vmem:[%s6 + $0x708] sm:$0xff]
        %v4430 = vld [vmem:[%s6 + $0x710] sm:$0xff]
        %v4431 = vld [vmem:[%s6 + $0x718] sm:$0xff]
        %v4432 = vld [vmem:[%s6 + $0x720] sm:$0xff]
        %v4433 = vld [vmem:[%s6 + $0x728] sm:$0xff]
        %v4434 = vld [vmem:[%s6 + $0x730] sm:$0xff]
        %v4435 = vld [vmem:[%s6 + $0x738] sm:$0xff]
        %v4444 = vunpack.c.l.b16 %v4428
        %v4445 = vunpack.c.h.b16 %v4428
        %v4446 = vunpack.c.l.b16 %v4429
        %v4447 = vunpack.c.h.b16 %v4429
        %v4448 = vunpack.c.l.b16 %v4430
        %v4449 = vunpack.c.h.b16 %v4430
        %v4450 = vunpack.c.l.b16 %v4431
        %v4451 = vunpack.c.h.b16 %v4431
        %v4452 = vunpack.c.l.b16 %v4432
        %v4453 = vunpack.c.h.b16 %v4432
        %v4454 = vunpack.c.l.b16 %v4433
        %v4455 = vunpack.c.h.b16 %v4433
        %v4456 = vunpack.c.l.b16 %v4434
        %v4457 = vunpack.c.h.b16 %v4434
        %v4458 = vunpack.c.l.b16 %v4435
        %v4459 = vunpack.c.h.b16 %v4435
        %v4460 = vpack.c.b16 %v4446, %v4444
        %v4461 = vpack.c.b16 %v4447, %v4445
        %v4462 = vpack.c.b16 %v4450, %v4448
        %v4463 = vpack.c.b16 %v4451, %v4449
        %v4464 = vpack.c.b16 %v4454, %v4452
        %v4465 = vpack.c.b16 %v4455, %v4453
        %v4466 = vpack.c.b16 %v4458, %v4456
        %v4467 = vpack.c.b16 %v4459, %v4457
        %v4477 = vsel %vm2153, %v4427, 0
        %4479 = vmatpush.bf16.msra.mxu0 0
        %4480 = vmatpush.bf16.msra.mxu0 0
        %4481 = vmatpush.bf16.msra.mxu0 0
        %4482 = vmatpush.bf16.msra.mxu0 0
        %4483 = vmatpush.bf16.msra.mxu0 %v4466
        %4484 = vmatpush.bf16.msra.mxu0 %v4464
        %4485 = vmatpush.bf16.msra.mxu0 %v4462
        %4486 = vmatpush.bf16.msra.mxu0 %v4460
        %4487 = vmatmul.bf16.gmra.mxu0 %v4477
        %v4488 = vpop.f32.mrf.mxu0
        %v4489 = vadd.f32 0.0, %v4488
        %v4490 = vpop.f32.mrf.mxu0
        %4491 = vdwg.mxu0
        %4492 = vmatpush.bf16.msra.mxu0 0
        %4493 = vmatpush.bf16.msra.mxu0 0
        %4494 = vmatpush.bf16.msra.mxu0 0
        %4495 = vmatpush.bf16.msra.mxu0 0
        %4496 = vmatpush.bf16.msra.mxu0 %v4467
        %4497 = vmatpush.bf16.msra.mxu0 %v4465
        %4498 = vmatpush.bf16.msra.mxu0 %v4463
        %4499 = vmatpush.bf16.msra.mxu0 %v4461
        %4500 = vmatmul.bf16.gmra.mxu0 %v4477
        %v4501 = vpop.f32.mrf.mxu0
        %v4502 = vadd.f32 0.0, %v4501
        %v4503 = vpop.f32.mrf.mxu0
        %4504 = vdwg.mxu0
        %v4505 = vadd.f32 %v4424, %v4489
        %v4506 = vadd.f32 %v4425, %v4502
        %v4507 = vld [vmem:[#allocation3 + $0x1d] sm:$0x1]
        %v4508 = vpack.c.bf16 %v4507, %v4507
        %v4509 = vld [vmem:[%s6 + $0x740] sm:$0xff]
        %v4510 = vld [vmem:[%s6 + $0x748] sm:$0xff]
        %v4511 = vld [vmem:[%s6 + $0x750] sm:$0xff]
        %v4512 = vld [vmem:[%s6 + $0x758] sm:$0xff]
        %v4513 = vld [vmem:[%s6 + $0x760] sm:$0xff]
        %v4514 = vld [vmem:[%s6 + $0x768] sm:$0xff]
        %v4515 = vld [vmem:[%s6 + $0x770] sm:$0xff]
        %v4516 = vld [vmem:[%s6 + $0x778] sm:$0xff]
        %v4525 = vunpack.c.l.b16 %v4509
        %v4526 = vunpack.c.h.b16 %v4509
        %v4527 = vunpack.c.l.b16 %v4510
        %v4528 = vunpack.c.h.b16 %v4510
        %v4529 = vunpack.c.l.b16 %v4511
        %v4530 = vunpack.c.h.b16 %v4511
        %v4531 = vunpack.c.l.b16 %v4512
        %v4532 = vunpack.c.h.b16 %v4512
        %v4533 = vunpack.c.l.b16 %v4513
        %v4534 = vunpack.c.h.b16 %v4513
        %v4535 = vunpack.c.l.b16 %v4514
        %v4536 = vunpack.c.h.b16 %v4514
        %v4537 = vunpack.c.l.b16 %v4515
        %v4538 = vunpack.c.h.b16 %v4515
        %v4539 = vunpack.c.l.b16 %v4516
        %v4540 = vunpack.c.h.b16 %v4516
        %v4541 = vpack.c.b16 %v4527, %v4525
        %v4542 = vpack.c.b16 %v4528, %v4526
        %v4543 = vpack.c.b16 %v4531, %v4529
        %v4544 = vpack.c.b16 %v4532, %v4530
        %v4545 = vpack.c.b16 %v4535, %v4533
        %v4546 = vpack.c.b16 %v4536, %v4534
        %v4547 = vpack.c.b16 %v4539, %v4537
        %v4548 = vpack.c.b16 %v4540, %v4538
        %v4558 = vsel %vm2153, %v4508, 0
        %4560 = vmatpush.bf16.msra.mxu0 0
        %4561 = vmatpush.bf16.msra.mxu0 0
        %4562 = vmatpush.bf16.msra.mxu0 0
        %4563 = vmatpush.bf16.msra.mxu0 0
        %4564 = vmatpush.bf16.msra.mxu0 %v4547
        %4565 = vmatpush.bf16.msra.mxu0 %v4545
        %4566 = vmatpush.bf16.msra.mxu0 %v4543
        %4567 = vmatpush.bf16.msra.mxu0 %v4541
        %4568 = vmatmul.bf16.gmra.mxu0 %v4558
        %v4569 = vpop.f32.mrf.mxu0
        %v4570 = vadd.f32 0.0, %v4569
        %v4571 = vpop.f32.mrf.mxu0
        %4572 = vdwg.mxu0
        %4573 = vmatpush.bf16.msra.mxu0 0
        %4574 = vmatpush.bf16.msra.mxu0 0
        %4575 = vmatpush.bf16.msra.mxu0 0
        %4576 = vmatpush.bf16.msra.mxu0 0
        %4577 = vmatpush.bf16.msra.mxu0 %v4548
        %4578 = vmatpush.bf16.msra.mxu0 %v4546
        %4579 = vmatpush.bf16.msra.mxu0 %v4544
        %4580 = vmatpush.bf16.msra.mxu0 %v4542
        %4581 = vmatmul.bf16.gmra.mxu0 %v4558
        %v4582 = vpop.f32.mrf.mxu0
        %v4583 = vadd.f32 0.0, %v4582
        %v4584 = vpop.f32.mrf.mxu0
        %4585 = vdwg.mxu0
        %v4586 = vadd.f32 %v4505, %v4570
        %v4587 = vadd.f32 %v4506, %v4583
        %v4588 = vld [vmem:[#allocation3 + $0x1e] sm:$0x1]
        %v4589 = vpack.c.bf16 %v4588, %v4588
        %v4590 = vld [vmem:[%s6 + $0x780] sm:$0xff]
        %v4591 = vld [vmem:[%s6 + $0x788] sm:$0xff]
        %v4592 = vld [vmem:[%s6 + $0x790] sm:$0xff]
        %v4593 = vld [vmem:[%s6 + $0x798] sm:$0xff]
        %v4594 = vld [vmem:[%s6 + $0x7a0] sm:$0xff]
        %v4595 = vld [vmem:[%s6 + $0x7a8] sm:$0xff]
        %v4596 = vld [vmem:[%s6 + $0x7b0] sm:$0xff]
        %v4597 = vld [vmem:[%s6 + $0x7b8] sm:$0xff]
        %v4606 = vunpack.c.l.b16 %v4590
        %v4607 = vunpack.c.h.b16 %v4590
        %v4608 = vunpack.c.l.b16 %v4591
        %v4609 = vunpack.c.h.b16 %v4591
        %v4610 = vunpack.c.l.b16 %v4592
        %v4611 = vunpack.c.h.b16 %v4592
        %v4612 = vunpack.c.l.b16 %v4593
        %v4613 = vunpack.c.h.b16 %v4593
        %v4614 = vunpack.c.l.b16 %v4594
        %v4615 = vunpack.c.h.b16 %v4594
        %v4616 = vunpack.c.l.b16 %v4595
        %v4617 = vunpack.c.h.b16 %v4595
        %v4618 = vunpack.c.l.b16 %v4596
        %v4619 = vunpack.c.h.b16 %v4596
        %v4620 = vunpack.c.l.b16 %v4597
        %v4621 = vunpack.c.h.b16 %v4597
        %v4622 = vpack.c.b16 %v4608, %v4606
        %v4623 = vpack.c.b16 %v4609, %v4607
        %v4624 = vpack.c.b16 %v4612, %v4610
        %v4625 = vpack.c.b16 %v4613, %v4611
        %v4626 = vpack.c.b16 %v4616, %v4614
        %v4627 = vpack.c.b16 %v4617, %v4615
        %v4628 = vpack.c.b16 %v4620, %v4618
        %v4629 = vpack.c.b16 %v4621, %v4619
        %v4639 = vsel %vm2153, %v4589, 0
        %4641 = vmatpush.bf16.msra.mxu0 0
        %4642 = vmatpush.bf16.msra.mxu0 0
        %4643 = vmatpush.bf16.msra.mxu0 0
        %4644 = vmatpush.bf16.msra.mxu0 0
        %4645 = vmatpush.bf16.msra.mxu0 %v4628
        %4646 = vmatpush.bf16.msra.mxu0 %v4626
        %4647 = vmatpush.bf16.msra.mxu0 %v4624
        %4648 = vmatpush.bf16.msra.mxu0 %v4622
        %4649 = vmatmul.bf16.gmra.mxu0 %v4639
        %v4650 = vpop.f32.mrf.mxu0
        %v4651 = vadd.f32 0.0, %v4650
        %v4652 = vpop.f32.mrf.mxu0
        %4653 = vdwg.mxu0
        %4654 = vmatpush.bf16.msra.mxu0 0
        %4655 = vmatpush.bf16.msra.mxu0 0
        %4656 = vmatpush.bf16.msra.mxu0 0
        %4657 = vmatpush.bf16.msra.mxu0 0
        %4658 = vmatpush.bf16.msra.mxu0 %v4629
        %4659 = vmatpush.bf16.msra.mxu0 %v4627
        %4660 = vmatpush.bf16.msra.mxu0 %v4625
        %4661 = vmatpush.bf16.msra.mxu0 %v4623
        %4662 = vmatmul.bf16.gmra.mxu0 %v4639
        %v4663 = vpop.f32.mrf.mxu0
        %v4664 = vadd.f32 0.0, %v4663
        %v4665 = vpop.f32.mrf.mxu0
        %4666 = vdwg.mxu0
        %v4667 = vadd.f32 %v4586, %v4651
        %v4668 = vadd.f32 %v4587, %v4664
        %v4669 = vld [vmem:[#allocation3 + $0x1f] sm:$0x1]
        %v4670 = vpack.c.bf16 %v4669, %v4669
        %v4671 = vld [vmem:[%s6 + $0x7c0] sm:$0xff]
        %v4672 = vld [vmem:[%s6 + $0x7c8] sm:$0xff]
        %v4673 = vld [vmem:[%s6 + $0x7d0] sm:$0xff]
        %v4674 = vld [vmem:[%s6 + $0x7d8] sm:$0xff]
        %v4675 = vld [vmem:[%s6 + $0x7e0] sm:$0xff]
        %v4676 = vld [vmem:[%s6 + $0x7e8] sm:$0xff]
        %v4677 = vld [vmem:[%s6 + $0x7f0] sm:$0xff]
        %v4678 = vld [vmem:[%s6 + $0x7f8] sm:$0xff]
        %v4687 = vunpack.c.l.b16 %v4671
        %v4688 = vunpack.c.h.b16 %v4671
        %v4689 = vunpack.c.l.b16 %v4672
        %v4690 = vunpack.c.h.b16 %v4672
        %v4691 = vunpack.c.l.b16 %v4673
        %v4692 = vunpack.c.h.b16 %v4673
        %v4693 = vunpack.c.l.b16 %v4674
        %v4694 = vunpack.c.h.b16 %v4674
        %v4695 = vunpack.c.l.b16 %v4675
        %v4696 = vunpack.c.h.b16 %v4675
        %v4697 = vunpack.c.l.b16 %v4676
        %v4698 = vunpack.c.h.b16 %v4676
        %v4699 = vunpack.c.l.b16 %v4677
        %v4700 = vunpack.c.h.b16 %v4677
        %v4701 = vunpack.c.l.b16 %v4678
        %v4702 = vunpack.c.h.b16 %v4678
        %v4703 = vpack.c.b16 %v4689, %v4687
        %v4704 = vpack.c.b16 %v4690, %v4688
        %v4705 = vpack.c.b16 %v4693, %v4691
        %v4706 = vpack.c.b16 %v4694, %v4692
        %v4707 = vpack.c.b16 %v4697, %v4695
        %v4708 = vpack.c.b16 %v4698, %v4696
        %v4709 = vpack.c.b16 %v4701, %v4699
        %v4710 = vpack.c.b16 %v4702, %v4700
        %v4720 = vsel %vm2153, %v4670, 0
        %4722 = vmatpush.bf16.msra.mxu0 0
        %4723 = vmatpush.bf16.msra.mxu0 0
        %4724 = vmatpush.bf16.msra.mxu0 0
        %4725 = vmatpush.bf16.msra.mxu0 0
        %4726 = vmatpush.bf16.msra.mxu0 %v4709
        %4727 = vmatpush.bf16.msra.mxu0 %v4707
        %4728 = vmatpush.bf16.msra.mxu0 %v4705
        %4729 = vmatpush.bf16.msra.mxu0 %v4703
        %4730 = vmatmul.bf16.gmra.mxu0 %v4720
        %v4731 = vpop.f32.mrf.mxu0
        %v4732 = vadd.f32 0.0, %v4731
        %v4733 = vpop.f32.mrf.mxu0
        %4734 = vdwg.mxu0
        %4735 = vmatpush.bf16.msra.mxu0 0
        %4736 = vmatpush.bf16.msra.mxu0 0
        %4737 = vmatpush.bf16.msra.mxu0 0
        %4738 = vmatpush.bf16.msra.mxu0 0
        %4739 = vmatpush.bf16.msra.mxu0 %v4710
        %4740 = vmatpush.bf16.msra.mxu0 %v4708
        %4741 = vmatpush.bf16.msra.mxu0 %v4706
        %4742 = vmatpush.bf16.msra.mxu0 %v4704
        %4743 = vmatmul.bf16.gmra.mxu0 %v4720
        %v4744 = vpop.f32.mrf.mxu0
        %v4745 = vadd.f32 0.0, %v4744
        %v4746 = vpop.f32.mrf.mxu0
        %4747 = vdwg.mxu0
        %v4748 = vadd.f32 %v4667, %v4732
        %v4749 = vadd.f32 %v4668, %v4745
        %v4750 = vld [vmem:[#allocation3 + $0x20] sm:$0x1]
        %v4751 = vpack.c.bf16 %v4750, %v4750
        %v4752 = vld [vmem:[%s6 + $0x800] sm:$0xff]
        %v4753 = vld [vmem:[%s6 + $0x808] sm:$0xff]
        %v4754 = vld [vmem:[%s6 + $0x810] sm:$0xff]
        %v4755 = vld [vmem:[%s6 + $0x818] sm:$0xff]
        %v4756 = vld [vmem:[%s6 + $0x820] sm:$0xff]
        %v4757 = vld [vmem:[%s6 + $0x828] sm:$0xff]
        %v4758 = vld [vmem:[%s6 + $0x830] sm:$0xff]
        %v4759 = vld [vmem:[%s6 + $0x838] sm:$0xff]
        %v4768 = vunpack.c.l.b16 %v4752
        %v4769 = vunpack.c.h.b16 %v4752
        %v4770 = vunpack.c.l.b16 %v4753
        %v4771 = vunpack.c.h.b16 %v4753
        %v4772 = vunpack.c.l.b16 %v4754
        %v4773 = vunpack.c.h.b16 %v4754
        %v4774 = vunpack.c.l.b16 %v4755
        %v4775 = vunpack.c.h.b16 %v4755
        %v4776 = vunpack.c.l.b16 %v4756
        %v4777 = vunpack.c.h.b16 %v4756
        %v4778 = vunpack.c.l.b16 %v4757
        %v4779 = vunpack.c.h.b16 %v4757
        %v4780 = vunpack.c.l.b16 %v4758
        %v4781 = vunpack.c.h.b16 %v4758
        %v4782 = vunpack.c.l.b16 %v4759
        %v4783 = vunpack.c.h.b16 %v4759
        %v4784 = vpack.c.b16 %v4770, %v4768
        %v4785 = vpack.c.b16 %v4771, %v4769
        %v4786 = vpack.c.b16 %v4774, %v4772
        %v4787 = vpack.c.b16 %v4775, %v4773
        %v4788 = vpack.c.b16 %v4778, %v4776
        %v4789 = vpack.c.b16 %v4779, %v4777
        %v4790 = vpack.c.b16 %v4782, %v4780
        %v4791 = vpack.c.b16 %v4783, %v4781
        %v4801 = vsel %vm2153, %v4751, 0
        %4803 = vmatpush.bf16.msra.mxu0 0
        %4804 = vmatpush.bf16.msra.mxu0 0
        %4805 = vmatpush.bf16.msra.mxu0 0
        %4806 = vmatpush.bf16.msra.mxu0 0
        %4807 = vmatpush.bf16.msra.mxu0 %v4790
        %4808 = vmatpush.bf16.msra.mxu0 %v4788
        %4809 = vmatpush.bf16.msra.mxu0 %v4786
        %4810 = vmatpush.bf16.msra.mxu0 %v4784
        %4811 = vmatmul.bf16.gmra.mxu0 %v4801
        %v4812 = vpop.f32.mrf.mxu0
        %v4813 = vadd.f32 0.0, %v4812
        %v4814 = vpop.f32.mrf.mxu0
        %4815 = vdwg.mxu0
        %4816 = vmatpush.bf16.msra.mxu0 0
        %4817 = vmatpush.bf16.msra.mxu0 0
        %4818 = vmatpush.bf16.msra.mxu0 0
        %4819 = vmatpush.bf16.msra.mxu0 0
        %4820 = vmatpush.bf16.msra.mxu0 %v4791
        %4821 = vmatpush.bf16.msra.mxu0 %v4789
        %4822 = vmatpush.bf16.msra.mxu0 %v4787
        %4823 = vmatpush.bf16.msra.mxu0 %v4785
        %4824 = vmatmul.bf16.gmra.mxu0 %v4801
        %v4825 = vpop.f32.mrf.mxu0
        %v4826 = vadd.f32 0.0, %v4825
        %v4827 = vpop.f32.mrf.mxu0
        %4828 = vdwg.mxu0
        %v4829 = vadd.f32 %v4748, %v4813
        %v4830 = vadd.f32 %v4749, %v4826
        %v4831 = vld [vmem:[#allocation3 + $0x21] sm:$0x1]
        %v4832 = vpack.c.bf16 %v4831, %v4831
        %v4833 = vld [vmem:[%s6 + $0x840] sm:$0xff]
        %v4834 = vld [vmem:[%s6 + $0x848] sm:$0xff]
        %v4835 = vld [vmem:[%s6 + $0x850] sm:$0xff]
        %v4836 = vld [vmem:[%s6 + $0x858] sm:$0xff]
        %v4837 = vld [vmem:[%s6 + $0x860] sm:$0xff]
        %v4838 = vld [vmem:[%s6 + $0x868] sm:$0xff]
        %v4839 = vld [vmem:[%s6 + $0x870] sm:$0xff]
        %v4840 = vld [vmem:[%s6 + $0x878] sm:$0xff]
        %v4849 = vunpack.c.l.b16 %v4833
        %v4850 = vunpack.c.h.b16 %v4833
        %v4851 = vunpack.c.l.b16 %v4834
        %v4852 = vunpack.c.h.b16 %v4834
        %v4853 = vunpack.c.l.b16 %v4835
        %v4854 = vunpack.c.h.b16 %v4835
        %v4855 = vunpack.c.l.b16 %v4836
        %v4856 = vunpack.c.h.b16 %v4836
        %v4857 = vunpack.c.l.b16 %v4837
        %v4858 = vunpack.c.h.b16 %v4837
        %v4859 = vunpack.c.l.b16 %v4838
        %v4860 = vunpack.c.h.b16 %v4838
        %v4861 = vunpack.c.l.b16 %v4839
        %v4862 = vunpack.c.h.b16 %v4839
        %v4863 = vunpack.c.l.b16 %v4840
        %v4864 = vunpack.c.h.b16 %v4840
        %v4865 = vpack.c.b16 %v4851, %v4849
        %v4866 = vpack.c.b16 %v4852, %v4850
        %v4867 = vpack.c.b16 %v4855, %v4853
        %v4868 = vpack.c.b16 %v4856, %v4854
        %v4869 = vpack.c.b16 %v4859, %v4857
        %v4870 = vpack.c.b16 %v4860, %v4858
        %v4871 = vpack.c.b16 %v4863, %v4861
        %v4872 = vpack.c.b16 %v4864, %v4862
        %v4882 = vsel %vm2153, %v4832, 0
        %4884 = vmatpush.bf16.msra.mxu0 0
        %4885 = vmatpush.bf16.msra.mxu0 0
        %4886 = vmatpush.bf16.msra.mxu0 0
        %4887 = vmatpush.bf16.msra.mxu0 0
        %4888 = vmatpush.bf16.msra.mxu0 %v4871
        %4889 = vmatpush.bf16.msra.mxu0 %v4869
        %4890 = vmatpush.bf16.msra.mxu0 %v4867
        %4891 = vmatpush.bf16.msra.mxu0 %v4865
        %4892 = vmatmul.bf16.gmra.mxu0 %v4882
        %v4893 = vpop.f32.mrf.mxu0
        %v4894 = vadd.f32 0.0, %v4893
        %v4895 = vpop.f32.mrf.mxu0
        %4896 = vdwg.mxu0
        %4897 = vmatpush.bf16.msra.mxu0 0
        %4898 = vmatpush.bf16.msra.mxu0 0
        %4899 = vmatpush.bf16.msra.mxu0 0
        %4900 = vmatpush.bf16.msra.mxu0 0
        %4901 = vmatpush.bf16.msra.mxu0 %v4872
        %4902 = vmatpush.bf16.msra.mxu0 %v4870
        %4903 = vmatpush.bf16.msra.mxu0 %v4868
        %4904 = vmatpush.bf16.msra.mxu0 %v4866
        %4905 = vmatmul.bf16.gmra.mxu0 %v4882
        %v4906 = vpop.f32.mrf.mxu0
        %v4907 = vadd.f32 0.0, %v4906
        %v4908 = vpop.f32.mrf.mxu0
        %4909 = vdwg.mxu0
        %v4910 = vadd.f32 %v4829, %v4894
        %v4911 = vadd.f32 %v4830, %v4907
        %v4912 = vld [vmem:[#allocation3 + $0x22] sm:$0x1]
        %v4913 = vpack.c.bf16 %v4912, %v4912
        %v4914 = vld [vmem:[%s6 + $0x880] sm:$0xff]
        %v4915 = vld [vmem:[%s6 + $0x888] sm:$0xff]
        %v4916 = vld [vmem:[%s6 + $0x890] sm:$0xff]
        %v4917 = vld [vmem:[%s6 + $0x898] sm:$0xff]
        %v4918 = vld [vmem:[%s6 + $0x8a0] sm:$0xff]
        %v4919 = vld [vmem:[%s6 + $0x8a8] sm:$0xff]
        %v4920 = vld [vmem:[%s6 + $0x8b0] sm:$0xff]
        %v4921 = vld [vmem:[%s6 + $0x8b8] sm:$0xff]
        %v4930 = vunpack.c.l.b16 %v4914
        %v4931 = vunpack.c.h.b16 %v4914
        %v4932 = vunpack.c.l.b16 %v4915
        %v4933 = vunpack.c.h.b16 %v4915
        %v4934 = vunpack.c.l.b16 %v4916
        %v4935 = vunpack.c.h.b16 %v4916
        %v4936 = vunpack.c.l.b16 %v4917
        %v4937 = vunpack.c.h.b16 %v4917
        %v4938 = vunpack.c.l.b16 %v4918
        %v4939 = vunpack.c.h.b16 %v4918
        %v4940 = vunpack.c.l.b16 %v4919
        %v4941 = vunpack.c.h.b16 %v4919
        %v4942 = vunpack.c.l.b16 %v4920
        %v4943 = vunpack.c.h.b16 %v4920
        %v4944 = vunpack.c.l.b16 %v4921
        %v4945 = vunpack.c.h.b16 %v4921
        %v4946 = vpack.c.b16 %v4932, %v4930
        %v4947 = vpack.c.b16 %v4933, %v4931
        %v4948 = vpack.c.b16 %v4936, %v4934
        %v4949 = vpack.c.b16 %v4937, %v4935
        %v4950 = vpack.c.b16 %v4940, %v4938
        %v4951 = vpack.c.b16 %v4941, %v4939
        %v4952 = vpack.c.b16 %v4944, %v4942
        %v4953 = vpack.c.b16 %v4945, %v4943
        %v4963 = vsel %vm2153, %v4913, 0
        %4965 = vmatpush.bf16.msra.mxu0 0
        %4966 = vmatpush.bf16.msra.mxu0 0
        %4967 = vmatpush.bf16.msra.mxu0 0
        %4968 = vmatpush.bf16.msra.mxu0 0
        %4969 = vmatpush.bf16.msra.mxu0 %v4952
        %4970 = vmatpush.bf16.msra.mxu0 %v4950
        %4971 = vmatpush.bf16.msra.mxu0 %v4948
        %4972 = vmatpush.bf16.msra.mxu0 %v4946
        %4973 = vmatmul.bf16.gmra.mxu0 %v4963
        %v4974 = vpop.f32.mrf.mxu0
        %v4975 = vadd.f32 0.0, %v4974
        %v4976 = vpop.f32.mrf.mxu0
        %4977 = vdwg.mxu0
        %4978 = vmatpush.bf16.msra.mxu0 0
        %4979 = vmatpush.bf16.msra.mxu0 0
        %4980 = vmatpush.bf16.msra.mxu0 0
        %4981 = vmatpush.bf16.msra.mxu0 0
        %4982 = vmatpush.bf16.msra.mxu0 %v4953
        %4983 = vmatpush.bf16.msra.mxu0 %v4951
        %4984 = vmatpush.bf16.msra.mxu0 %v4949
        %4985 = vmatpush.bf16.msra.mxu0 %v4947
        %4986 = vmatmul.bf16.gmra.mxu0 %v4963
        %v4987 = vpop.f32.mrf.mxu0
        %v4988 = vadd.f32 0.0, %v4987
        %v4989 = vpop.f32.mrf.mxu0
        %4990 = vdwg.mxu0
        %v4991 = vadd.f32 %v4910, %v4975
        %v4992 = vadd.f32 %v4911, %v4988
        %v4993 = vld [vmem:[#allocation3 + $0x23] sm:$0x1]
        %v4994 = vpack.c.bf16 %v4993, %v4993
        %v4995 = vld [vmem:[%s6 + $0x8c0] sm:$0xff]
        %v4996 = vld [vmem:[%s6 + $0x8c8] sm:$0xff]
        %v4997 = vld [vmem:[%s6 + $0x8d0] sm:$0xff]
        %v4998 = vld [vmem:[%s6 + $0x8d8] sm:$0xff]
        %v4999 = vld [vmem:[%s6 + $0x8e0] sm:$0xff]
        %v5000 = vld [vmem:[%s6 + $0x8e8] sm:$0xff]
        %v5001 = vld [vmem:[%s6 + $0x8f0] sm:$0xff]
        %v5002 = vld [vmem:[%s6 + $0x8f8] sm:$0xff]
        %v5011 = vunpack.c.l.b16 %v4995
        %v5012 = vunpack.c.h.b16 %v4995
        %v5013 = vunpack.c.l.b16 %v4996
        %v5014 = vunpack.c.h.b16 %v4996
        %v5015 = vunpack.c.l.b16 %v4997
        %v5016 = vunpack.c.h.b16 %v4997
        %v5017 = vunpack.c.l.b16 %v4998
        %v5018 = vunpack.c.h.b16 %v4998
        %v5019 = vunpack.c.l.b16 %v4999
        %v5020 = vunpack.c.h.b16 %v4999
        %v5021 = vunpack.c.l.b16 %v5000
        %v5022 = vunpack.c.h.b16 %v5000
        %v5023 = vunpack.c.l.b16 %v5001
        %v5024 = vunpack.c.h.b16 %v5001
        %v5025 = vunpack.c.l.b16 %v5002
        %v5026 = vunpack.c.h.b16 %v5002
        %v5027 = vpack.c.b16 %v5013, %v5011
        %v5028 = vpack.c.b16 %v5014, %v5012
        %v5029 = vpack.c.b16 %v5017, %v5015
        %v5030 = vpack.c.b16 %v5018, %v5016
        %v5031 = vpack.c.b16 %v5021, %v5019
        %v5032 = vpack.c.b16 %v5022, %v5020
        %v5033 = vpack.c.b16 %v5025, %v5023
        %v5034 = vpack.c.b16 %v5026, %v5024
        %v5044 = vsel %vm2153, %v4994, 0
        %5046 = vmatpush.bf16.msra.mxu0 0
        %5047 = vmatpush.bf16.msra.mxu0 0
        %5048 = vmatpush.bf16.msra.mxu0 0
        %5049 = vmatpush.bf16.msra.mxu0 0
        %5050 = vmatpush.bf16.msra.mxu0 %v5033
        %5051 = vmatpush.bf16.msra.mxu0 %v5031
        %5052 = vmatpush.bf16.msra.mxu0 %v5029
        %5053 = vmatpush.bf16.msra.mxu0 %v5027
        %5054 = vmatmul.bf16.gmra.mxu0 %v5044
        %v5055 = vpop.f32.mrf.mxu0
        %v5056 = vadd.f32 0.0, %v5055
        %v5057 = vpop.f32.mrf.mxu0
        %5058 = vdwg.mxu0
        %5059 = vmatpush.bf16.msra.mxu0 0
        %5060 = vmatpush.bf16.msra.mxu0 0
        %5061 = vmatpush.bf16.msra.mxu0 0
        %5062 = vmatpush.bf16.msra.mxu0 0
        %5063 = vmatpush.bf16.msra.mxu0 %v5034
        %5064 = vmatpush.bf16.msra.mxu0 %v5032
        %5065 = vmatpush.bf16.msra.mxu0 %v5030
        %5066 = vmatpush.bf16.msra.mxu0 %v5028
        %5067 = vmatmul.bf16.gmra.mxu0 %v5044
        %v5068 = vpop.f32.mrf.mxu0
        %v5069 = vadd.f32 0.0, %v5068
        %v5070 = vpop.f32.mrf.mxu0
        %5071 = vdwg.mxu0
        %v5072 = vadd.f32 %v4991, %v5056
        %v5073 = vadd.f32 %v4992, %v5069
        %v5074 = vld [vmem:[#allocation3 + $0x24] sm:$0x1]
        %v5075 = vpack.c.bf16 %v5074, %v5074
        %v5076 = vld [vmem:[%s6 + $0x900] sm:$0xff]
        %v5077 = vld [vmem:[%s6 + $0x908] sm:$0xff]
        %v5078 = vld [vmem:[%s6 + $0x910] sm:$0xff]
        %v5079 = vld [vmem:[%s6 + $0x918] sm:$0xff]
        %v5080 = vld [vmem:[%s6 + $0x920] sm:$0xff]
        %v5081 = vld [vmem:[%s6 + $0x928] sm:$0xff]
        %v5082 = vld [vmem:[%s6 + $0x930] sm:$0xff]
        %v5083 = vld [vmem:[%s6 + $0x938] sm:$0xff]
        %v5092 = vunpack.c.l.b16 %v5076
        %v5093 = vunpack.c.h.b16 %v5076
        %v5094 = vunpack.c.l.b16 %v5077
        %v5095 = vunpack.c.h.b16 %v5077
        %v5096 = vunpack.c.l.b16 %v5078
        %v5097 = vunpack.c.h.b16 %v5078
        %v5098 = vunpack.c.l.b16 %v5079
        %v5099 = vunpack.c.h.b16 %v5079
        %v5100 = vunpack.c.l.b16 %v5080
        %v5101 = vunpack.c.h.b16 %v5080
        %v5102 = vunpack.c.l.b16 %v5081
        %v5103 = vunpack.c.h.b16 %v5081
        %v5104 = vunpack.c.l.b16 %v5082
        %v5105 = vunpack.c.h.b16 %v5082
        %v5106 = vunpack.c.l.b16 %v5083
        %v5107 = vunpack.c.h.b16 %v5083
        %v5108 = vpack.c.b16 %v5094, %v5092
        %v5109 = vpack.c.b16 %v5095, %v5093
        %v5110 = vpack.c.b16 %v5098, %v5096
        %v5111 = vpack.c.b16 %v5099, %v5097
        %v5112 = vpack.c.b16 %v5102, %v5100
        %v5113 = vpack.c.b16 %v5103, %v5101
        %v5114 = vpack.c.b16 %v5106, %v5104
        %v5115 = vpack.c.b16 %v5107, %v5105
        %v5125 = vsel %vm2153, %v5075, 0
        %5127 = vmatpush.bf16.msra.mxu0 0
        %5128 = vmatpush.bf16.msra.mxu0 0
        %5129 = vmatpush.bf16.msra.mxu0 0
        %5130 = vmatpush.bf16.msra.mxu0 0
        %5131 = vmatpush.bf16.msra.mxu0 %v5114
        %5132 = vmatpush.bf16.msra.mxu0 %v5112
        %5133 = vmatpush.bf16.msra.mxu0 %v5110
        %5134 = vmatpush.bf16.msra.mxu0 %v5108
        %5135 = vmatmul.bf16.gmra.mxu0 %v5125
        %v5136 = vpop.f32.mrf.mxu0
        %v5137 = vadd.f32 0.0, %v5136
        %v5138 = vpop.f32.mrf.mxu0
        %5139 = vdwg.mxu0
        %5140 = vmatpush.bf16.msra.mxu0 0
        %5141 = vmatpush.bf16.msra.mxu0 0
        %5142 = vmatpush.bf16.msra.mxu0 0
        %5143 = vmatpush.bf16.msra.mxu0 0
        %5144 = vmatpush.bf16.msra.mxu0 %v5115
        %5145 = vmatpush.bf16.msra.mxu0 %v5113
        %5146 = vmatpush.bf16.msra.mxu0 %v5111
        %5147 = vmatpush.bf16.msra.mxu0 %v5109
        %5148 = vmatmul.bf16.gmra.mxu0 %v5125
        %v5149 = vpop.f32.mrf.mxu0
        %v5150 = vadd.f32 0.0, %v5149
        %v5151 = vpop.f32.mrf.mxu0
        %5152 = vdwg.mxu0
        %v5153 = vadd.f32 %v5072, %v5137
        %v5154 = vadd.f32 %v5073, %v5150
        %v5155 = vld [vmem:[#allocation3 + $0x25] sm:$0x1]
        %v5156 = vpack.c.bf16 %v5155, %v5155
        %v5157 = vld [vmem:[%s6 + $0x940] sm:$0xff]
        %v5158 = vld [vmem:[%s6 + $0x948] sm:$0xff]
        %v5159 = vld [vmem:[%s6 + $0x950] sm:$0xff]
        %v5160 = vld [vmem:[%s6 + $0x958] sm:$0xff]
        %v5161 = vld [vmem:[%s6 + $0x960] sm:$0xff]
        %v5162 = vld [vmem:[%s6 + $0x968] sm:$0xff]
        %v5163 = vld [vmem:[%s6 + $0x970] sm:$0xff]
        %v5164 = vld [vmem:[%s6 + $0x978] sm:$0xff]
        %v5173 = vunpack.c.l.b16 %v5157
        %v5174 = vunpack.c.h.b16 %v5157
        %v5175 = vunpack.c.l.b16 %v5158
        %v5176 = vunpack.c.h.b16 %v5158
        %v5177 = vunpack.c.l.b16 %v5159
        %v5178 = vunpack.c.h.b16 %v5159
        %v5179 = vunpack.c.l.b16 %v5160
        %v5180 = vunpack.c.h.b16 %v5160
        %v5181 = vunpack.c.l.b16 %v5161
        %v5182 = vunpack.c.h.b16 %v5161
        %v5183 = vunpack.c.l.b16 %v5162
        %v5184 = vunpack.c.h.b16 %v5162
        %v5185 = vunpack.c.l.b16 %v5163
        %v5186 = vunpack.c.h.b16 %v5163
        %v5187 = vunpack.c.l.b16 %v5164
        %v5188 = vunpack.c.h.b16 %v5164
        %v5189 = vpack.c.b16 %v5175, %v5173
        %v5190 = vpack.c.b16 %v5176, %v5174
        %v5191 = vpack.c.b16 %v5179, %v5177
        %v5192 = vpack.c.b16 %v5180, %v5178
        %v5193 = vpack.c.b16 %v5183, %v5181
        %v5194 = vpack.c.b16 %v5184, %v5182
        %v5195 = vpack.c.b16 %v5187, %v5185
        %v5196 = vpack.c.b16 %v5188, %v5186
        %v5206 = vsel %vm2153, %v5156, 0
        %5208 = vmatpush.bf16.msra.mxu0 0
        %5209 = vmatpush.bf16.msra.mxu0 0
        %5210 = vmatpush.bf16.msra.mxu0 0
        %5211 = vmatpush.bf16.msra.mxu0 0
        %5212 = vmatpush.bf16.msra.mxu0 %v5195
        %5213 = vmatpush.bf16.msra.mxu0 %v5193
        %5214 = vmatpush.bf16.msra.mxu0 %v5191
        %5215 = vmatpush.bf16.msra.mxu0 %v5189
        %5216 = vmatmul.bf16.gmra.mxu0 %v5206
        %v5217 = vpop.f32.mrf.mxu0
        %v5218 = vadd.f32 0.0, %v5217
        %v5219 = vpop.f32.mrf.mxu0
        %5220 = vdwg.mxu0
        %5221 = vmatpush.bf16.msra.mxu0 0
        %5222 = vmatpush.bf16.msra.mxu0 0
        %5223 = vmatpush.bf16.msra.mxu0 0
        %5224 = vmatpush.bf16.msra.mxu0 0
        %5225 = vmatpush.bf16.msra.mxu0 %v5196
        %5226 = vmatpush.bf16.msra.mxu0 %v5194
        %5227 = vmatpush.bf16.msra.mxu0 %v5192
        %5228 = vmatpush.bf16.msra.mxu0 %v5190
        %5229 = vmatmul.bf16.gmra.mxu0 %v5206
        %v5230 = vpop.f32.mrf.mxu0
        %v5231 = vadd.f32 0.0, %v5230
        %v5232 = vpop.f32.mrf.mxu0
        %5233 = vdwg.mxu0
        %v5234 = vadd.f32 %v5153, %v5218
        %v5235 = vadd.f32 %v5154, %v5231
        %v5236 = vld [vmem:[#allocation3 + $0x26] sm:$0x1]
        %v5237 = vpack.c.bf16 %v5236, %v5236
        %v5238 = vld [vmem:[%s6 + $0x980] sm:$0xff]
        %v5239 = vld [vmem:[%s6 + $0x988] sm:$0xff]
        %v5240 = vld [vmem:[%s6 + $0x990] sm:$0xff]
        %v5241 = vld [vmem:[%s6 + $0x998] sm:$0xff]
        %v5242 = vld [vmem:[%s6 + $0x9a0] sm:$0xff]
        %v5243 = vld [vmem:[%s6 + $0x9a8] sm:$0xff]
        %v5244 = vld [vmem:[%s6 + $0x9b0] sm:$0xff]
        %v5245 = vld [vmem:[%s6 + $0x9b8] sm:$0xff]
        %v5254 = vunpack.c.l.b16 %v5238
        %v5255 = vunpack.c.h.b16 %v5238
        %v5256 = vunpack.c.l.b16 %v5239
        %v5257 = vunpack.c.h.b16 %v5239
        %v5258 = vunpack.c.l.b16 %v5240
        %v5259 = vunpack.c.h.b16 %v5240
        %v5260 = vunpack.c.l.b16 %v5241
        %v5261 = vunpack.c.h.b16 %v5241
        %v5262 = vunpack.c.l.b16 %v5242
        %v5263 = vunpack.c.h.b16 %v5242
        %v5264 = vunpack.c.l.b16 %v5243
        %v5265 = vunpack.c.h.b16 %v5243
        %v5266 = vunpack.c.l.b16 %v5244
        %v5267 = vunpack.c.h.b16 %v5244
        %v5268 = vunpack.c.l.b16 %v5245
        %v5269 = vunpack.c.h.b16 %v5245
        %v5270 = vpack.c.b16 %v5256, %v5254
        %v5271 = vpack.c.b16 %v5257, %v5255
        %v5272 = vpack.c.b16 %v5260, %v5258
        %v5273 = vpack.c.b16 %v5261, %v5259
        %v5274 = vpack.c.b16 %v5264, %v5262
        %v5275 = vpack.c.b16 %v5265, %v5263
        %v5276 = vpack.c.b16 %v5268, %v5266
        %v5277 = vpack.c.b16 %v5269, %v5267
        %v5287 = vsel %vm2153, %v5237, 0
        %5289 = vmatpush.bf16.msra.mxu0 0
        %5290 = vmatpush.bf16.msra.mxu0 0
        %5291 = vmatpush.bf16.msra.mxu0 0
        %5292 = vmatpush.bf16.msra.mxu0 0
        %5293 = vmatpush.bf16.msra.mxu0 %v5276
        %5294 = vmatpush.bf16.msra.mxu0 %v5274
        %5295 = vmatpush.bf16.msra.mxu0 %v5272
        %5296 = vmatpush.bf16.msra.mxu0 %v5270
        %5297 = vmatmul.bf16.gmra.mxu0 %v5287
        %v5298 = vpop.f32.mrf.mxu0
        %v5299 = vadd.f32 0.0, %v5298
        %v5300 = vpop.f32.mrf.mxu0
        %5301 = vdwg.mxu0
        %5302 = vmatpush.bf16.msra.mxu0 0
        %5303 = vmatpush.bf16.msra.mxu0 0
        %5304 = vmatpush.bf16.msra.mxu0 0
        %5305 = vmatpush.bf16.msra.mxu0 0
        %5306 = vmatpush.bf16.msra.mxu0 %v5277
        %5307 = vmatpush.bf16.msra.mxu0 %v5275
        %5308 = vmatpush.bf16.msra.mxu0 %v5273
        %5309 = vmatpush.bf16.msra.mxu0 %v5271
        %5310 = vmatmul.bf16.gmra.mxu0 %v5287
        %v5311 = vpop.f32.mrf.mxu0
        %v5312 = vadd.f32 0.0, %v5311
        %v5313 = vpop.f32.mrf.mxu0
        %5314 = vdwg.mxu0
        %v5315 = vadd.f32 %v5234, %v5299
        %v5316 = vadd.f32 %v5235, %v5312
        %v5317 = vld [vmem:[#allocation3 + $0x27] sm:$0x1]
        %v5318 = vpack.c.bf16 %v5317, %v5317
        %v5319 = vld [vmem:[%s6 + $0x9c0] sm:$0xff]
        %v5320 = vld [vmem:[%s6 + $0x9c8] sm:$0xff]
        %v5321 = vld [vmem:[%s6 + $0x9d0] sm:$0xff]
        %v5322 = vld [vmem:[%s6 + $0x9d8] sm:$0xff]
        %v5323 = vld [vmem:[%s6 + $0x9e0] sm:$0xff]
        %v5324 = vld [vmem:[%s6 + $0x9e8] sm:$0xff]
        %v5325 = vld [vmem:[%s6 + $0x9f0] sm:$0xff]
        %v5326 = vld [vmem:[%s6 + $0x9f8] sm:$0xff]
        %v5335 = vunpack.c.l.b16 %v5319
        %v5336 = vunpack.c.h.b16 %v5319
        %v5337 = vunpack.c.l.b16 %v5320
        %v5338 = vunpack.c.h.b16 %v5320
        %v5339 = vunpack.c.l.b16 %v5321
        %v5340 = vunpack.c.h.b16 %v5321
        %v5341 = vunpack.c.l.b16 %v5322
        %v5342 = vunpack.c.h.b16 %v5322
        %v5343 = vunpack.c.l.b16 %v5323
        %v5344 = vunpack.c.h.b16 %v5323
        %v5345 = vunpack.c.l.b16 %v5324
        %v5346 = vunpack.c.h.b16 %v5324
        %v5347 = vunpack.c.l.b16 %v5325
        %v5348 = vunpack.c.h.b16 %v5325
        %v5349 = vunpack.c.l.b16 %v5326
        %v5350 = vunpack.c.h.b16 %v5326
        %v5351 = vpack.c.b16 %v5337, %v5335
        %v5352 = vpack.c.b16 %v5338, %v5336
        %v5353 = vpack.c.b16 %v5341, %v5339
        %v5354 = vpack.c.b16 %v5342, %v5340
        %v5355 = vpack.c.b16 %v5345, %v5343
        %v5356 = vpack.c.b16 %v5346, %v5344
        %v5357 = vpack.c.b16 %v5349, %v5347
        %v5358 = vpack.c.b16 %v5350, %v5348
        %v5368 = vsel %vm2153, %v5318, 0
        %5370 = vmatpush.bf16.msra.mxu0 0
        %5371 = vmatpush.bf16.msra.mxu0 0
        %5372 = vmatpush.bf16.msra.mxu0 0
        %5373 = vmatpush.bf16.msra.mxu0 0
        %5374 = vmatpush.bf16.msra.mxu0 %v5357
        %5375 = vmatpush.bf16.msra.mxu0 %v5355
        %5376 = vmatpush.bf16.msra.mxu0 %v5353
        %5377 = vmatpush.bf16.msra.mxu0 %v5351
        %5378 = vmatmul.bf16.gmra.mxu0 %v5368
        %v5379 = vpop.f32.mrf.mxu0
        %v5380 = vadd.f32 0.0, %v5379
        %v5381 = vpop.f32.mrf.mxu0
        %5382 = vdwg.mxu0
        %5383 = vmatpush.bf16.msra.mxu0 0
        %5384 = vmatpush.bf16.msra.mxu0 0
        %5385 = vmatpush.bf16.msra.mxu0 0
        %5386 = vmatpush.bf16.msra.mxu0 0
        %5387 = vmatpush.bf16.msra.mxu0 %v5358
        %5388 = vmatpush.bf16.msra.mxu0 %v5356
        %5389 = vmatpush.bf16.msra.mxu0 %v5354
        %5390 = vmatpush.bf16.msra.mxu0 %v5352
        %5391 = vmatmul.bf16.gmra.mxu0 %v5368
        %v5392 = vpop.f32.mrf.mxu0
        %v5393 = vadd.f32 0.0, %v5392
        %v5394 = vpop.f32.mrf.mxu0
        %5395 = vdwg.mxu0
        %v5396 = vadd.f32 %v5315, %v5380
        %v5397 = vadd.f32 %v5316, %v5393
        %v5398 = vld [vmem:[#allocation3 + $0x28] sm:$0x1]
        %v5399 = vpack.c.bf16 %v5398, %v5398
        %v5400 = vld [vmem:[%s6 + $0xa00] sm:$0xff]
        %v5401 = vld [vmem:[%s6 + $0xa08] sm:$0xff]
        %v5402 = vld [vmem:[%s6 + $0xa10] sm:$0xff]
        %v5403 = vld [vmem:[%s6 + $0xa18] sm:$0xff]
        %v5404 = vld [vmem:[%s6 + $0xa20] sm:$0xff]
        %v5405 = vld [vmem:[%s6 + $0xa28] sm:$0xff]
        %v5406 = vld [vmem:[%s6 + $0xa30] sm:$0xff]
        %v5407 = vld [vmem:[%s6 + $0xa38] sm:$0xff]
        %v5416 = vunpack.c.l.b16 %v5400
        %v5417 = vunpack.c.h.b16 %v5400
        %v5418 = vunpack.c.l.b16 %v5401
        %v5419 = vunpack.c.h.b16 %v5401
        %v5420 = vunpack.c.l.b16 %v5402
        %v5421 = vunpack.c.h.b16 %v5402
        %v5422 = vunpack.c.l.b16 %v5403
        %v5423 = vunpack.c.h.b16 %v5403
        %v5424 = vunpack.c.l.b16 %v5404
        %v5425 = vunpack.c.h.b16 %v5404
        %v5426 = vunpack.c.l.b16 %v5405
        %v5427 = vunpack.c.h.b16 %v5405
        %v5428 = vunpack.c.l.b16 %v5406
        %v5429 = vunpack.c.h.b16 %v5406
        %v5430 = vunpack.c.l.b16 %v5407
        %v5431 = vunpack.c.h.b16 %v5407
        %v5432 = vpack.c.b16 %v5418, %v5416
        %v5433 = vpack.c.b16 %v5419, %v5417
        %v5434 = vpack.c.b16 %v5422, %v5420
        %v5435 = vpack.c.b16 %v5423, %v5421
        %v5436 = vpack.c.b16 %v5426, %v5424
        %v5437 = vpack.c.b16 %v5427, %v5425
        %v5438 = vpack.c.b16 %v5430, %v5428
        %v5439 = vpack.c.b16 %v5431, %v5429
        %v5449 = vsel %vm2153, %v5399, 0
        %5451 = vmatpush.bf16.msra.mxu0 0
        %5452 = vmatpush.bf16.msra.mxu0 0
        %5453 = vmatpush.bf16.msra.mxu0 0
        %5454 = vmatpush.bf16.msra.mxu0 0
        %5455 = vmatpush.bf16.msra.mxu0 %v5438
        %5456 = vmatpush.bf16.msra.mxu0 %v5436
        %5457 = vmatpush.bf16.msra.mxu0 %v5434
        %5458 = vmatpush.bf16.msra.mxu0 %v5432
        %5459 = vmatmul.bf16.gmra.mxu0 %v5449
        %v5460 = vpop.f32.mrf.mxu0
        %v5461 = vadd.f32 0.0, %v5460
        %v5462 = vpop.f32.mrf.mxu0
        %5463 = vdwg.mxu0
        %5464 = vmatpush.bf16.msra.mxu0 0
        %5465 = vmatpush.bf16.msra.mxu0 0
        %5466 = vmatpush.bf16.msra.mxu0 0
        %5467 = vmatpush.bf16.msra.mxu0 0
        %5468 = vmatpush.bf16.msra.mxu0 %v5439
        %5469 = vmatpush.bf16.msra.mxu0 %v5437
        %5470 = vmatpush.bf16.msra.mxu0 %v5435
        %5471 = vmatpush.bf16.msra.mxu0 %v5433
        %5472 = vmatmul.bf16.gmra.mxu0 %v5449
        %v5473 = vpop.f32.mrf.mxu0
        %v5474 = vadd.f32 0.0, %v5473
        %v5475 = vpop.f32.mrf.mxu0
        %5476 = vdwg.mxu0
        %v5477 = vadd.f32 %v5396, %v5461
        %v5478 = vadd.f32 %v5397, %v5474
        %v5479 = vld [vmem:[#allocation3 + $0x29] sm:$0x1]
        %v5480 = vpack.c.bf16 %v5479, %v5479
        %v5481 = vld [vmem:[%s6 + $0xa40] sm:$0xff]
        %v5482 = vld [vmem:[%s6 + $0xa48] sm:$0xff]
        %v5483 = vld [vmem:[%s6 + $0xa50] sm:$0xff]
        %v5484 = vld [vmem:[%s6 + $0xa58] sm:$0xff]
        %v5485 = vld [vmem:[%s6 + $0xa60] sm:$0xff]
        %v5486 = vld [vmem:[%s6 + $0xa68] sm:$0xff]
        %v5487 = vld [vmem:[%s6 + $0xa70] sm:$0xff]
        %v5488 = vld [vmem:[%s6 + $0xa78] sm:$0xff]
        %v5497 = vunpack.c.l.b16 %v5481
        %v5498 = vunpack.c.h.b16 %v5481
        %v5499 = vunpack.c.l.b16 %v5482
        %v5500 = vunpack.c.h.b16 %v5482
        %v5501 = vunpack.c.l.b16 %v5483
        %v5502 = vunpack.c.h.b16 %v5483
        %v5503 = vunpack.c.l.b16 %v5484
        %v5504 = vunpack.c.h.b16 %v5484
        %v5505 = vunpack.c.l.b16 %v5485
        %v5506 = vunpack.c.h.b16 %v5485
        %v5507 = vunpack.c.l.b16 %v5486
        %v5508 = vunpack.c.h.b16 %v5486
        %v5509 = vunpack.c.l.b16 %v5487
        %v5510 = vunpack.c.h.b16 %v5487
        %v5511 = vunpack.c.l.b16 %v5488
        %v5512 = vunpack.c.h.b16 %v5488
        %v5513 = vpack.c.b16 %v5499, %v5497
        %v5514 = vpack.c.b16 %v5500, %v5498
        %v5515 = vpack.c.b16 %v5503, %v5501
        %v5516 = vpack.c.b16 %v5504, %v5502
        %v5517 = vpack.c.b16 %v5507, %v5505
        %v5518 = vpack.c.b16 %v5508, %v5506
        %v5519 = vpack.c.b16 %v5511, %v5509
        %v5520 = vpack.c.b16 %v5512, %v5510
        %v5530 = vsel %vm2153, %v5480, 0
        %5532 = vmatpush.bf16.msra.mxu0 0
        %5533 = vmatpush.bf16.msra.mxu0 0
        %5534 = vmatpush.bf16.msra.mxu0 0
        %5535 = vmatpush.bf16.msra.mxu0 0
        %5536 = vmatpush.bf16.msra.mxu0 %v5519
        %5537 = vmatpush.bf16.msra.mxu0 %v5517
        %5538 = vmatpush.bf16.msra.mxu0 %v5515
        %5539 = vmatpush.bf16.msra.mxu0 %v5513
        %5540 = vmatmul.bf16.gmra.mxu0 %v5530
        %v5541 = vpop.f32.mrf.mxu0
        %v5542 = vadd.f32 0.0, %v5541
        %v5543 = vpop.f32.mrf.mxu0
        %5544 = vdwg.mxu0
        %5545 = vmatpush.bf16.msra.mxu0 0
        %5546 = vmatpush.bf16.msra.mxu0 0
        %5547 = vmatpush.bf16.msra.mxu0 0
        %5548 = vmatpush.bf16.msra.mxu0 0
        %5549 = vmatpush.bf16.msra.mxu0 %v5520
        %5550 = vmatpush.bf16.msra.mxu0 %v5518
        %5551 = vmatpush.bf16.msra.mxu0 %v5516
        %5552 = vmatpush.bf16.msra.mxu0 %v5514
        %5553 = vmatmul.bf16.gmra.mxu0 %v5530
        %v5554 = vpop.f32.mrf.mxu0
        %v5555 = vadd.f32 0.0, %v5554
        %v5556 = vpop.f32.mrf.mxu0
        %5557 = vdwg.mxu0
        %v5558 = vadd.f32 %v5477, %v5542
        %v5559 = vadd.f32 %v5478, %v5555
        %v5560 = vld [vmem:[#allocation3 + $0x2a] sm:$0x1]
        %v5561 = vpack.c.bf16 %v5560, %v5560
        %v5562 = vld [vmem:[%s6 + $0xa80] sm:$0xff]
        %v5563 = vld [vmem:[%s6 + $0xa88] sm:$0xff]
        %v5564 = vld [vmem:[%s6 + $0xa90] sm:$0xff]
        %v5565 = vld [vmem:[%s6 + $0xa98] sm:$0xff]
        %v5566 = vld [vmem:[%s6 + $0xaa0] sm:$0xff]
        %v5567 = vld [vmem:[%s6 + $0xaa8] sm:$0xff]
        %v5568 = vld [vmem:[%s6 + $0xab0] sm:$0xff]
        %v5569 = vld [vmem:[%s6 + $0xab8] sm:$0xff]
        %v5578 = vunpack.c.l.b16 %v5562
        %v5579 = vunpack.c.h.b16 %v5562
        %v5580 = vunpack.c.l.b16 %v5563
        %v5581 = vunpack.c.h.b16 %v5563
        %v5582 = vunpack.c.l.b16 %v5564
        %v5583 = vunpack.c.h.b16 %v5564
        %v5584 = vunpack.c.l.b16 %v5565
        %v5585 = vunpack.c.h.b16 %v5565
        %v5586 = vunpack.c.l.b16 %v5566
        %v5587 = vunpack.c.h.b16 %v5566
        %v5588 = vunpack.c.l.b16 %v5567
        %v5589 = vunpack.c.h.b16 %v5567
        %v5590 = vunpack.c.l.b16 %v5568
        %v5591 = vunpack.c.h.b16 %v5568
        %v5592 = vunpack.c.l.b16 %v5569
        %v5593 = vunpack.c.h.b16 %v5569
        %v5594 = vpack.c.b16 %v5580, %v5578
        %v5595 = vpack.c.b16 %v5581, %v5579
        %v5596 = vpack.c.b16 %v5584, %v5582
        %v5597 = vpack.c.b16 %v5585, %v5583
        %v5598 = vpack.c.b16 %v5588, %v5586
        %v5599 = vpack.c.b16 %v5589, %v5587
        %v5600 = vpack.c.b16 %v5592, %v5590
        %v5601 = vpack.c.b16 %v5593, %v5591
        %v5611 = vsel %vm2153, %v5561, 0
        %5613 = vmatpush.bf16.msra.mxu0 0
        %5614 = vmatpush.bf16.msra.mxu0 0
        %5615 = vmatpush.bf16.msra.mxu0 0
        %5616 = vmatpush.bf16.msra.mxu0 0
        %5617 = vmatpush.bf16.msra.mxu0 %v5600
        %5618 = vmatpush.bf16.msra.mxu0 %v5598
        %5619 = vmatpush.bf16.msra.mxu0 %v5596
        %5620 = vmatpush.bf16.msra.mxu0 %v5594
        %5621 = vmatmul.bf16.gmra.mxu0 %v5611
        %v5622 = vpop.f32.mrf.mxu0
        %v5623 = vadd.f32 0.0, %v5622
        %v5624 = vpop.f32.mrf.mxu0
        %5625 = vdwg.mxu0
        %5626 = vmatpush.bf16.msra.mxu0 0
        %5627 = vmatpush.bf16.msra.mxu0 0
        %5628 = vmatpush.bf16.msra.mxu0 0
        %5629 = vmatpush.bf16.msra.mxu0 0
        %5630 = vmatpush.bf16.msra.mxu0 %v5601
        %5631 = vmatpush.bf16.msra.mxu0 %v5599
        %5632 = vmatpush.bf16.msra.mxu0 %v5597
        %5633 = vmatpush.bf16.msra.mxu0 %v5595
        %5634 = vmatmul.bf16.gmra.mxu0 %v5611
        %v5635 = vpop.f32.mrf.mxu0
        %v5636 = vadd.f32 0.0, %v5635
        %v5637 = vpop.f32.mrf.mxu0
        %5638 = vdwg.mxu0
        %v5639 = vadd.f32 %v5558, %v5623
        %v5640 = vadd.f32 %v5559, %v5636
        %v5641 = vld [vmem:[#allocation3 + $0x2b] sm:$0x1]
        %v5642 = vpack.c.bf16 %v5641, %v5641
        %v5643 = vld [vmem:[%s6 + $0xac0] sm:$0xff]
        %v5644 = vld [vmem:[%s6 + $0xac8] sm:$0xff]
        %v5645 = vld [vmem:[%s6 + $0xad0] sm:$0xff]
        %v5646 = vld [vmem:[%s6 + $0xad8] sm:$0xff]
        %v5647 = vld [vmem:[%s6 + $0xae0] sm:$0xff]
        %v5648 = vld [vmem:[%s6 + $0xae8] sm:$0xff]
        %v5649 = vld [vmem:[%s6 + $0xaf0] sm:$0xff]
        %v5650 = vld [vmem:[%s6 + $0xaf8] sm:$0xff]
        %v5659 = vunpack.c.l.b16 %v5643
        %v5660 = vunpack.c.h.b16 %v5643
        %v5661 = vunpack.c.l.b16 %v5644
        %v5662 = vunpack.c.h.b16 %v5644
        %v5663 = vunpack.c.l.b16 %v5645
        %v5664 = vunpack.c.h.b16 %v5645
        %v5665 = vunpack.c.l.b16 %v5646
        %v5666 = vunpack.c.h.b16 %v5646
        %v5667 = vunpack.c.l.b16 %v5647
        %v5668 = vunpack.c.h.b16 %v5647
        %v5669 = vunpack.c.l.b16 %v5648
        %v5670 = vunpack.c.h.b16 %v5648
        %v5671 = vunpack.c.l.b16 %v5649
        %v5672 = vunpack.c.h.b16 %v5649
        %v5673 = vunpack.c.l.b16 %v5650
        %v5674 = vunpack.c.h.b16 %v5650
        %v5675 = vpack.c.b16 %v5661, %v5659
        %v5676 = vpack.c.b16 %v5662, %v5660
        %v5677 = vpack.c.b16 %v5665, %v5663
        %v5678 = vpack.c.b16 %v5666, %v5664
        %v5679 = vpack.c.b16 %v5669, %v5667
        %v5680 = vpack.c.b16 %v5670, %v5668
        %v5681 = vpack.c.b16 %v5673, %v5671
        %v5682 = vpack.c.b16 %v5674, %v5672
        %v5692 = vsel %vm2153, %v5642, 0
        %5694 = vmatpush.bf16.msra.mxu0 0
        %5695 = vmatpush.bf16.msra.mxu0 0
        %5696 = vmatpush.bf16.msra.mxu0 0
        %5697 = vmatpush.bf16.msra.mxu0 0
        %5698 = vmatpush.bf16.msra.mxu0 %v5681
        %5699 = vmatpush.bf16.msra.mxu0 %v5679
        %5700 = vmatpush.bf16.msra.mxu0 %v5677
        %5701 = vmatpush.bf16.msra.mxu0 %v5675
        %5702 = vmatmul.bf16.gmra.mxu0 %v5692
        %v5703 = vpop.f32.mrf.mxu0
        %v5704 = vadd.f32 0.0, %v5703
        %v5705 = vpop.f32.mrf.mxu0
        %5706 = vdwg.mxu0
        %5707 = vmatpush.bf16.msra.mxu0 0
        %5708 = vmatpush.bf16.msra.mxu0 0
        %5709 = vmatpush.bf16.msra.mxu0 0
        %5710 = vmatpush.bf16.msra.mxu0 0
        %5711 = vmatpush.bf16.msra.mxu0 %v5682
        %5712 = vmatpush.bf16.msra.mxu0 %v5680
        %5713 = vmatpush.bf16.msra.mxu0 %v5678
        %5714 = vmatpush.bf16.msra.mxu0 %v5676
        %5715 = vmatmul.bf16.gmra.mxu0 %v5692
        %v5716 = vpop.f32.mrf.mxu0
        %v5717 = vadd.f32 0.0, %v5716
        %v5718 = vpop.f32.mrf.mxu0
        %5719 = vdwg.mxu0
        %v5720 = vadd.f32 %v5639, %v5704
        %v5721 = vadd.f32 %v5640, %v5717
        %v5722 = vld [vmem:[#allocation3 + $0x2c] sm:$0x1]
        %v5723 = vpack.c.bf16 %v5722, %v5722
        %v5724 = vld [vmem:[%s6 + $0xb00] sm:$0xff]
        %v5725 = vld [vmem:[%s6 + $0xb08] sm:$0xff]
        %v5726 = vld [vmem:[%s6 + $0xb10] sm:$0xff]
        %v5727 = vld [vmem:[%s6 + $0xb18] sm:$0xff]
        %v5728 = vld [vmem:[%s6 + $0xb20] sm:$0xff]
        %v5729 = vld [vmem:[%s6 + $0xb28] sm:$0xff]
        %v5730 = vld [vmem:[%s6 + $0xb30] sm:$0xff]
        %v5731 = vld [vmem:[%s6 + $0xb38] sm:$0xff]
        %v5740 = vunpack.c.l.b16 %v5724
        %v5741 = vunpack.c.h.b16 %v5724
        %v5742 = vunpack.c.l.b16 %v5725
        %v5743 = vunpack.c.h.b16 %v5725
        %v5744 = vunpack.c.l.b16 %v5726
        %v5745 = vunpack.c.h.b16 %v5726
        %v5746 = vunpack.c.l.b16 %v5727
        %v5747 = vunpack.c.h.b16 %v5727
        %v5748 = vunpack.c.l.b16 %v5728
        %v5749 = vunpack.c.h.b16 %v5728
        %v5750 = vunpack.c.l.b16 %v5729
        %v5751 = vunpack.c.h.b16 %v5729
        %v5752 = vunpack.c.l.b16 %v5730
        %v5753 = vunpack.c.h.b16 %v5730
        %v5754 = vunpack.c.l.b16 %v5731
        %v5755 = vunpack.c.h.b16 %v5731
        %v5756 = vpack.c.b16 %v5742, %v5740
        %v5757 = vpack.c.b16 %v5743, %v5741
        %v5758 = vpack.c.b16 %v5746, %v5744
        %v5759 = vpack.c.b16 %v5747, %v5745
        %v5760 = vpack.c.b16 %v5750, %v5748
        %v5761 = vpack.c.b16 %v5751, %v5749
        %v5762 = vpack.c.b16 %v5754, %v5752
        %v5763 = vpack.c.b16 %v5755, %v5753
        %v5773 = vsel %vm2153, %v5723, 0
        %5775 = vmatpush.bf16.msra.mxu0 0
        %5776 = vmatpush.bf16.msra.mxu0 0
        %5777 = vmatpush.bf16.msra.mxu0 0
        %5778 = vmatpush.bf16.msra.mxu0 0
        %5779 = vmatpush.bf16.msra.mxu0 %v5762
        %5780 = vmatpush.bf16.msra.mxu0 %v5760
        %5781 = vmatpush.bf16.msra.mxu0 %v5758
        %5782 = vmatpush.bf16.msra.mxu0 %v5756
        %5783 = vmatmul.bf16.gmra.mxu0 %v5773
        %v5784 = vpop.f32.mrf.mxu0
        %v5785 = vadd.f32 0.0, %v5784
        %v5786 = vpop.f32.mrf.mxu0
        %5787 = vdwg.mxu0
        %5788 = vmatpush.bf16.msra.mxu0 0
        %5789 = vmatpush.bf16.msra.mxu0 0
        %5790 = vmatpush.bf16.msra.mxu0 0
        %5791 = vmatpush.bf16.msra.mxu0 0
        %5792 = vmatpush.bf16.msra.mxu0 %v5763
        %5793 = vmatpush.bf16.msra.mxu0 %v5761
        %5794 = vmatpush.bf16.msra.mxu0 %v5759
        %5795 = vmatpush.bf16.msra.mxu0 %v5757
        %5796 = vmatmul.bf16.gmra.mxu0 %v5773
        %v5797 = vpop.f32.mrf.mxu0
        %v5798 = vadd.f32 0.0, %v5797
        %v5799 = vpop.f32.mrf.mxu0
        %5800 = vdwg.mxu0
        %v5801 = vadd.f32 %v5720, %v5785
        %v5802 = vadd.f32 %v5721, %v5798
        %v5803 = vld [vmem:[#allocation3 + $0x2d] sm:$0x1]
        %v5804 = vpack.c.bf16 %v5803, %v5803
        %v5805 = vld [vmem:[%s6 + $0xb40] sm:$0xff]
        %v5806 = vld [vmem:[%s6 + $0xb48] sm:$0xff]
        %v5807 = vld [vmem:[%s6 + $0xb50] sm:$0xff]
        %v5808 = vld [vmem:[%s6 + $0xb58] sm:$0xff]
        %v5809 = vld [vmem:[%s6 + $0xb60] sm:$0xff]
        %v5810 = vld [vmem:[%s6 + $0xb68] sm:$0xff]
        %v5811 = vld [vmem:[%s6 + $0xb70] sm:$0xff]
        %v5812 = vld [vmem:[%s6 + $0xb78] sm:$0xff]
        %v5821 = vunpack.c.l.b16 %v5805
        %v5822 = vunpack.c.h.b16 %v5805
        %v5823 = vunpack.c.l.b16 %v5806
        %v5824 = vunpack.c.h.b16 %v5806
        %v5825 = vunpack.c.l.b16 %v5807
        %v5826 = vunpack.c.h.b16 %v5807
        %v5827 = vunpack.c.l.b16 %v5808
        %v5828 = vunpack.c.h.b16 %v5808
        %v5829 = vunpack.c.l.b16 %v5809
        %v5830 = vunpack.c.h.b16 %v5809
        %v5831 = vunpack.c.l.b16 %v5810
        %v5832 = vunpack.c.h.b16 %v5810
        %v5833 = vunpack.c.l.b16 %v5811
        %v5834 = vunpack.c.h.b16 %v5811
        %v5835 = vunpack.c.l.b16 %v5812
        %v5836 = vunpack.c.h.b16 %v5812
        %v5837 = vpack.c.b16 %v5823, %v5821
        %v5838 = vpack.c.b16 %v5824, %v5822
        %v5839 = vpack.c.b16 %v5827, %v5825
        %v5840 = vpack.c.b16 %v5828, %v5826
        %v5841 = vpack.c.b16 %v5831, %v5829
        %v5842 = vpack.c.b16 %v5832, %v5830
        %v5843 = vpack.c.b16 %v5835, %v5833
        %v5844 = vpack.c.b16 %v5836, %v5834
        %v5854 = vsel %vm2153, %v5804, 0
        %5856 = vmatpush.bf16.msra.mxu0 0
        %5857 = vmatpush.bf16.msra.mxu0 0
        %5858 = vmatpush.bf16.msra.mxu0 0
        %5859 = vmatpush.bf16.msra.mxu0 0
        %5860 = vmatpush.bf16.msra.mxu0 %v5843
        %5861 = vmatpush.bf16.msra.mxu0 %v5841
        %5862 = vmatpush.bf16.msra.mxu0 %v5839
        %5863 = vmatpush.bf16.msra.mxu0 %v5837
        %5864 = vmatmul.bf16.gmra.mxu0 %v5854
        %v5865 = vpop.f32.mrf.mxu0
        %v5866 = vadd.f32 0.0, %v5865
        %v5867 = vpop.f32.mrf.mxu0
        %5868 = vdwg.mxu0
        %5869 = vmatpush.bf16.msra.mxu0 0
        %5870 = vmatpush.bf16.msra.mxu0 0
        %5871 = vmatpush.bf16.msra.mxu0 0
        %5872 = vmatpush.bf16.msra.mxu0 0
        %5873 = vmatpush.bf16.msra.mxu0 %v5844
        %5874 = vmatpush.bf16.msra.mxu0 %v5842
        %5875 = vmatpush.bf16.msra.mxu0 %v5840
        %5876 = vmatpush.bf16.msra.mxu0 %v5838
        %5877 = vmatmul.bf16.gmra.mxu0 %v5854
        %v5878 = vpop.f32.mrf.mxu0
        %v5879 = vadd.f32 0.0, %v5878
        %v5880 = vpop.f32.mrf.mxu0
        %5881 = vdwg.mxu0
        %v5882 = vadd.f32 %v5801, %v5866
        %v5883 = vadd.f32 %v5802, %v5879
        %v5884 = vld [vmem:[#allocation3 + $0x2e] sm:$0x1]
        %v5885 = vpack.c.bf16 %v5884, %v5884
        %v5886 = vld [vmem:[%s6 + $0xb80] sm:$0xff]
        %v5887 = vld [vmem:[%s6 + $0xb88] sm:$0xff]
        %v5888 = vld [vmem:[%s6 + $0xb90] sm:$0xff]
        %v5889 = vld [vmem:[%s6 + $0xb98] sm:$0xff]
        %v5890 = vld [vmem:[%s6 + $0xba0] sm:$0xff]
        %v5891 = vld [vmem:[%s6 + $0xba8] sm:$0xff]
        %v5892 = vld [vmem:[%s6 + $0xbb0] sm:$0xff]
        %v5893 = vld [vmem:[%s6 + $0xbb8] sm:$0xff]
        %v5902 = vunpack.c.l.b16 %v5886
        %v5903 = vunpack.c.h.b16 %v5886
        %v5904 = vunpack.c.l.b16 %v5887
        %v5905 = vunpack.c.h.b16 %v5887
        %v5906 = vunpack.c.l.b16 %v5888
        %v5907 = vunpack.c.h.b16 %v5888
        %v5908 = vunpack.c.l.b16 %v5889
        %v5909 = vunpack.c.h.b16 %v5889
        %v5910 = vunpack.c.l.b16 %v5890
        %v5911 = vunpack.c.h.b16 %v5890
        %v5912 = vunpack.c.l.b16 %v5891
        %v5913 = vunpack.c.h.b16 %v5891
        %v5914 = vunpack.c.l.b16 %v5892
        %v5915 = vunpack.c.h.b16 %v5892
        %v5916 = vunpack.c.l.b16 %v5893
        %v5917 = vunpack.c.h.b16 %v5893
        %v5918 = vpack.c.b16 %v5904, %v5902
        %v5919 = vpack.c.b16 %v5905, %v5903
        %v5920 = vpack.c.b16 %v5908, %v5906
        %v5921 = vpack.c.b16 %v5909, %v5907
        %v5922 = vpack.c.b16 %v5912, %v5910
        %v5923 = vpack.c.b16 %v5913, %v5911
        %v5924 = vpack.c.b16 %v5916, %v5914
        %v5925 = vpack.c.b16 %v5917, %v5915
        %v5935 = vsel %vm2153, %v5885, 0
        %5937 = vmatpush.bf16.msra.mxu0 0
        %5938 = vmatpush.bf16.msra.mxu0 0
        %5939 = vmatpush.bf16.msra.mxu0 0
        %5940 = vmatpush.bf16.msra.mxu0 0
        %5941 = vmatpush.bf16.msra.mxu0 %v5924
        %5942 = vmatpush.bf16.msra.mxu0 %v5922
        %5943 = vmatpush.bf16.msra.mxu0 %v5920
        %5944 = vmatpush.bf16.msra.mxu0 %v5918
        %5945 = vmatmul.bf16.gmra.mxu0 %v5935
        %v5946 = vpop.f32.mrf.mxu0
        %v5947 = vadd.f32 0.0, %v5946
        %v5948 = vpop.f32.mrf.mxu0
        %5949 = vdwg.mxu0
        %5950 = vmatpush.bf16.msra.mxu0 0
        %5951 = vmatpush.bf16.msra.mxu0 0
        %5952 = vmatpush.bf16.msra.mxu0 0
        %5953 = vmatpush.bf16.msra.mxu0 0
        %5954 = vmatpush.bf16.msra.mxu0 %v5925
        %5955 = vmatpush.bf16.msra.mxu0 %v5923
        %5956 = vmatpush.bf16.msra.mxu0 %v5921
        %5957 = vmatpush.bf16.msra.mxu0 %v5919
        %5958 = vmatmul.bf16.gmra.mxu0 %v5935
        %v5959 = vpop.f32.mrf.mxu0
        %v5960 = vadd.f32 0.0, %v5959
        %v5961 = vpop.f32.mrf.mxu0
        %5962 = vdwg.mxu0
        %v5963 = vadd.f32 %v5882, %v5947
        %v5964 = vadd.f32 %v5883, %v5960
        %v5965 = vld [vmem:[#allocation3 + $0x2f] sm:$0x1]
        %v5966 = vpack.c.bf16 %v5965, %v5965
        %v5967 = vld [vmem:[%s6 + $0xbc0] sm:$0xff]
        %v5968 = vld [vmem:[%s6 + $0xbc8] sm:$0xff]
        %v5969 = vld [vmem:[%s6 + $0xbd0] sm:$0xff]
        %v5970 = vld [vmem:[%s6 + $0xbd8] sm:$0xff]
        %v5971 = vld [vmem:[%s6 + $0xbe0] sm:$0xff]
        %v5972 = vld [vmem:[%s6 + $0xbe8] sm:$0xff]
        %v5973 = vld [vmem:[%s6 + $0xbf0] sm:$0xff]
        %v5974 = vld [vmem:[%s6 + $0xbf8] sm:$0xff]
        %v5983 = vunpack.c.l.b16 %v5967
        %v5984 = vunpack.c.h.b16 %v5967
        %v5985 = vunpack.c.l.b16 %v5968
        %v5986 = vunpack.c.h.b16 %v5968
        %v5987 = vunpack.c.l.b16 %v5969
        %v5988 = vunpack.c.h.b16 %v5969
        %v5989 = vunpack.c.l.b16 %v5970
        %v5990 = vunpack.c.h.b16 %v5970
        %v5991 = vunpack.c.l.b16 %v5971
        %v5992 = vunpack.c.h.b16 %v5971
        %v5993 = vunpack.c.l.b16 %v5972
        %v5994 = vunpack.c.h.b16 %v5972
        %v5995 = vunpack.c.l.b16 %v5973
        %v5996 = vunpack.c.h.b16 %v5973
        %v5997 = vunpack.c.l.b16 %v5974
        %v5998 = vunpack.c.h.b16 %v5974
        %v5999 = vpack.c.b16 %v5985, %v5983
        %v6000 = vpack.c.b16 %v5986, %v5984
        %v6001 = vpack.c.b16 %v5989, %v5987
        %v6002 = vpack.c.b16 %v5990, %v5988
        %v6003 = vpack.c.b16 %v5993, %v5991
        %v6004 = vpack.c.b16 %v5994, %v5992
        %v6005 = vpack.c.b16 %v5997, %v5995
        %v6006 = vpack.c.b16 %v5998, %v5996
        %v6016 = vsel %vm2153, %v5966, 0
        %6018 = vmatpush.bf16.msra.mxu0 0
        %6019 = vmatpush.bf16.msra.mxu0 0
        %6020 = vmatpush.bf16.msra.mxu0 0
        %6021 = vmatpush.bf16.msra.mxu0 0
        %6022 = vmatpush.bf16.msra.mxu0 %v6005
        %6023 = vmatpush.bf16.msra.mxu0 %v6003
        %6024 = vmatpush.bf16.msra.mxu0 %v6001
        %6025 = vmatpush.bf16.msra.mxu0 %v5999
        %6026 = vmatmul.bf16.gmra.mxu0 %v6016
        %v6027 = vpop.f32.mrf.mxu0
        %v6028 = vadd.f32 0.0, %v6027
        %v6029 = vpop.f32.mrf.mxu0
        %6030 = vdwg.mxu0
        %6031 = vmatpush.bf16.msra.mxu0 0
        %6032 = vmatpush.bf16.msra.mxu0 0
        %6033 = vmatpush.bf16.msra.mxu0 0
        %6034 = vmatpush.bf16.msra.mxu0 0
        %6035 = vmatpush.bf16.msra.mxu0 %v6006
        %6036 = vmatpush.bf16.msra.mxu0 %v6004
        %6037 = vmatpush.bf16.msra.mxu0 %v6002
        %6038 = vmatpush.bf16.msra.mxu0 %v6000
        %6039 = vmatmul.bf16.gmra.mxu0 %v6016
        %v6040 = vpop.f32.mrf.mxu0
        %v6041 = vadd.f32 0.0, %v6040
        %v6042 = vpop.f32.mrf.mxu0
        %6043 = vdwg.mxu0
        %v6044 = vadd.f32 %v5963, %v6028
        %v6045 = vadd.f32 %v5964, %v6041
        %v6046 = vld [vmem:[#allocation3 + $0x30] sm:$0x1]
        %v6047 = vpack.c.bf16 %v6046, %v6046
        %v6048 = vld [vmem:[%s6 + $0xc00] sm:$0xff]
        %v6049 = vld [vmem:[%s6 + $0xc08] sm:$0xff]
        %v6050 = vld [vmem:[%s6 + $0xc10] sm:$0xff]
        %v6051 = vld [vmem:[%s6 + $0xc18] sm:$0xff]
        %v6052 = vld [vmem:[%s6 + $0xc20] sm:$0xff]
        %v6053 = vld [vmem:[%s6 + $0xc28] sm:$0xff]
        %v6054 = vld [vmem:[%s6 + $0xc30] sm:$0xff]
        %v6055 = vld [vmem:[%s6 + $0xc38] sm:$0xff]
        %v6064 = vunpack.c.l.b16 %v6048
        %v6065 = vunpack.c.h.b16 %v6048
        %v6066 = vunpack.c.l.b16 %v6049
        %v6067 = vunpack.c.h.b16 %v6049
        %v6068 = vunpack.c.l.b16 %v6050
        %v6069 = vunpack.c.h.b16 %v6050
        %v6070 = vunpack.c.l.b16 %v6051
        %v6071 = vunpack.c.h.b16 %v6051
        %v6072 = vunpack.c.l.b16 %v6052
        %v6073 = vunpack.c.h.b16 %v6052
        %v6074 = vunpack.c.l.b16 %v6053
        %v6075 = vunpack.c.h.b16 %v6053
        %v6076 = vunpack.c.l.b16 %v6054
        %v6077 = vunpack.c.h.b16 %v6054
        %v6078 = vunpack.c.l.b16 %v6055
        %v6079 = vunpack.c.h.b16 %v6055
        %v6080 = vpack.c.b16 %v6066, %v6064
        %v6081 = vpack.c.b16 %v6067, %v6065
        %v6082 = vpack.c.b16 %v6070, %v6068
        %v6083 = vpack.c.b16 %v6071, %v6069
        %v6084 = vpack.c.b16 %v6074, %v6072
        %v6085 = vpack.c.b16 %v6075, %v6073
        %v6086 = vpack.c.b16 %v6078, %v6076
        %v6087 = vpack.c.b16 %v6079, %v6077
        %v6097 = vsel %vm2153, %v6047, 0
        %6099 = vmatpush.bf16.msra.mxu0 0
        %6100 = vmatpush.bf16.msra.mxu0 0
        %6101 = vmatpush.bf16.msra.mxu0 0
        %6102 = vmatpush.bf16.msra.mxu0 0
        %6103 = vmatpush.bf16.msra.mxu0 %v6086
        %6104 = vmatpush.bf16.msra.mxu0 %v6084
        %6105 = vmatpush.bf16.msra.mxu0 %v6082
        %6106 = vmatpush.bf16.msra.mxu0 %v6080
        %6107 = vmatmul.bf16.gmra.mxu0 %v6097
        %v6108 = vpop.f32.mrf.mxu0
        %v6109 = vadd.f32 0.0, %v6108
        %v6110 = vpop.f32.mrf.mxu0
        %6111 = vdwg.mxu0
        %6112 = vmatpush.bf16.msra.mxu0 0
        %6113 = vmatpush.bf16.msra.mxu0 0
        %6114 = vmatpush.bf16.msra.mxu0 0
        %6115 = vmatpush.bf16.msra.mxu0 0
        %6116 = vmatpush.bf16.msra.mxu0 %v6087
        %6117 = vmatpush.bf16.msra.mxu0 %v6085
        %6118 = vmatpush.bf16.msra.mxu0 %v6083
        %6119 = vmatpush.bf16.msra.mxu0 %v6081
        %6120 = vmatmul.bf16.gmra.mxu0 %v6097
        %v6121 = vpop.f32.mrf.mxu0
        %v6122 = vadd.f32 0.0, %v6121
        %v6123 = vpop.f32.mrf.mxu0
        %6124 = vdwg.mxu0
        %v6125 = vadd.f32 %v6044, %v6109
        %v6126 = vadd.f32 %v6045, %v6122
        %v6127 = vld [vmem:[%s7] sm:$0x3]
        %v6129 = vperm.slane %v6127, 0
        %v6130 = vperm.slane %v6127, 1
        %v6133 = vadd.f32 %v6125, %v6129
        %v6134 = vadd.f32 %v6126, %v6130
        %v6135 = vmax.f32 %v6133, 0.0
        %v6136 = vmax.f32 %v6134, 0.0
        %v6137 = vld [vmem:[%s8] sm:$0xff]
        %v6138 = vld [vmem:[%s8 + $0x8] sm:$0xff]
        %v6139 = vld [vmem:[%s8 + $0x10] sm:$0xff]
        %v6140 = vld [vmem:[%s8 + $0x18] sm:$0xff]
        %v6141 = vld [vmem:[%s8 + $0x20] sm:$0xff]
        %v6142 = vld [vmem:[%s8 + $0x28] sm:$0xff]
        %v6143 = vld [vmem:[%s8 + $0x30] sm:$0xff]
        %v6144 = vld [vmem:[%s8 + $0x38] sm:$0xff]
        %v6145 = vld [vmem:[%s8 + $0x40] sm:$0xff]
        %v6146 = vld [vmem:[%s8 + $0x48] sm:$0xff]
        %v6147 = vld [vmem:[%s8 + $0x50] sm:$0xff]
        %v6148 = vld [vmem:[%s8 + $0x58] sm:$0xff]
        %v6149 = vld [vmem:[%s8 + $0x60] sm:$0xff]
        %v6150 = vld [vmem:[%s8 + $0x68] sm:$0xff]
        %v6151 = vld [vmem:[%s8 + $0x70] sm:$0xff]
        %v6152 = vld [vmem:[%s8 + $0x78] sm:$0xff]
        %v6153 = vld [vmem:[%s8 + $0x80] sm:$0xff]
        %v6154 = vld [vmem:[%s8 + $0x88] sm:$0xff]
        %v6155 = vld [vmem:[%s8 + $0x90] sm:$0xff]
        %v6156 = vld [vmem:[%s8 + $0x98] sm:$0xff]
        %v6157 = vld [vmem:[%s8 + $0xa0] sm:$0xff]
        %v6158 = vld [vmem:[%s8 + $0xa8] sm:$0xff]
        %v6159 = vld [vmem:[%s8 + $0xb0] sm:$0xff]
        %v6160 = vld [vmem:[%s8 + $0xb8] sm:$0xff]
        %v6161 = vld [vmem:[%s8 + $0xc0] sm:$0xff]
        %v6162 = vld [vmem:[%s8 + $0xc8] sm:$0xff]
        %v6163 = vld [vmem:[%s8 + $0xd0] sm:$0xff]
        %v6164 = vld [vmem:[%s8 + $0xd8] sm:$0xff]
        %v6165 = vld [vmem:[%s8 + $0xe0] sm:$0xff]
        %v6166 = vld [vmem:[%s8 + $0xe8] sm:$0xff]
        %v6167 = vld [vmem:[%s8 + $0xf0] sm:$0xff]
        %v6168 = vld [vmem:[%s8 + $0xf8] sm:$0xff]
        %v6169 = vld [vmem:[%s9] sm:$0x1]
        %6170 = vmatpush.msra.mxu0 %v6152
        %6171 = vmatpush.msra.mxu0 %v6151
        %6172 = vmatpush.msra.mxu0 %v6150
        %6173 = vmatpush.msra.mxu0 %v6149
        %6174 = vmatpush.msra.mxu0 %v6148
        %6175 = vmatpush.msra.mxu0 %v6147
        %6176 = vmatpush.msra.mxu0 %v6146
        %6177 = vmatpush.msra.mxu0 %v6145
        %6178 = vmatpush.msra.mxu0 %v6144
        %6179 = vmatpush.msra.mxu0 %v6143
        %6180 = vmatpush.msra.mxu0 %v6142
        %6181 = vmatpush.msra.mxu0 %v6141
        %6182 = vmatpush.msra.mxu0 %v6140
        %6183 = vmatpush.msra.mxu0 %v6139
        %6184 = vmatpush.msra.mxu0 %v6138
        %6185 = vmatpush.msra.mxu0 %v6137
        %6186 = vmatmul.f32.gmra.mxu0 %v6135
        %v6187 = vpop.f32.mrf.mxu0
        %v6188 = vadd.f32 %v6169, %v6187
        %6189 = vdwg.mxu0
        %6190 = vmatpush.msra.mxu0 %v6168
        %6191 = vmatpush.msra.mxu0 %v6167
        %6192 = vmatpush.msra.mxu0 %v6166
        %6193 = vmatpush.msra.mxu0 %v6165
        %6194 = vmatpush.msra.mxu0 %v6164
        %6195 = vmatpush.msra.mxu0 %v6163
        %6196 = vmatpush.msra.mxu0 %v6162
        %6197 = vmatpush.msra.mxu0 %v6161
        %6198 = vmatpush.msra.mxu0 %v6160
        %6199 = vmatpush.msra.mxu0 %v6159
        %6200 = vmatpush.msra.mxu0 %v6158
        %6201 = vmatpush.msra.mxu0 %v6157
        %6202 = vmatpush.msra.mxu0 %v6156
        %6203 = vmatpush.msra.mxu0 %v6155
        %6204 = vmatpush.msra.mxu0 %v6154
        %6205 = vmatpush.msra.mxu0 %v6153
        %6206 = vmatmul.f32.gmra.mxu0 %v6136
        %v6207 = vpop.f32.mrf.mxu0
        %v6208 = vadd.f32 %v6188, %v6207
        %6209 = vdwg.mxu0
        %6210 = vst [vmem:[%s351] sm:$0x1] %v6208
        %s6211 = sand.u32 %s247, 1
        %s6212 = scalar_lea.sflag [#allocation5], %s6211
        %s6213 = sand.u32 %s247, 1
        %s6214 = scalar_lea.vmem [#allocation4], %s6213
        // Predicated region
        $region61: #{simple_model2_forward.1} parent=59 // pred_check
          %p6215 = pneg %p257
        $region62: #{simple_model2_forward.1} parent=59 // pred_check_branch
          %6217 = sbr.rel (%p6215) target = $region64
        $region63: #{simple_model2_forward.1} parent=59 // pred_region
          %6219 = vsyncadd %s6212, 0
          %s6220 = scalar_lea.hbm %s10, %s24
          %s6222 = sshll.u32 %s6214, 4
          %s6223 = int_to_ptr.vmem [resolvable:$true] %s6222
          %s6224 = sshll.u32 %s6220, 4
          %s6225 = int_to_ptr.hbm [resolvable:$true] %s6224
          %6227 = dma.vmem_to_hbm [thread:$0]  %s6223, 16, %s6225, %s6212
        $region64: #{simple_model2_forward.1} parent=59 // pred_fallthru
          _
      $region60: #{simple_model2_forward.1} parent=5 // pred_fallthru
        _
      %p6228 = scmp.le.s32.totalorder 2, %s19
      // Predicated region
      $region65: #{simple_model2_forward.1} parent=5 // pred_check
        %p6229 = pneg %p6228
      $region66: #{simple_model2_forward.1} parent=5 // pred_check_branch
        %6231 = sbr.rel (%p6229) target = $region68
      $region67: #{simple_model2_forward.1} parent=5 // pred_region
        %s6232 = ssub.s32 %s19, 2
        // Predicated region
        $region69: #{simple_model2_forward.1} parent=67 // pred_check
          %p6233 = pneg %p263
        $region70: #{simple_model2_forward.1} parent=67 // pred_check_branch
          %6235 = sbr.rel (%p6233) target = $region72
        $region71: #{simple_model2_forward.1} parent=67 // pred_region
          %s6236 = sand.u32 %s248, 1
          %s6237 = scalar_lea.sflag [#allocation5], %s6236
          %s6238 = sand.u32 %s248, 1
          %s6239 = scalar_lea.vmem [#allocation4], %s6238
          %6241 = dma.done %s6237, 16
        $region72: #{simple_model2_forward.1} parent=67 // pred_fallthru
          _
      $region68: #{simple_model2_forward.1} parent=5 // pred_fallthru
        _
    $region6: #{simple_model2_forward.1} parent=1 // loop_footer
      %s23 = sadd.s32 1, %s19
    $region7: #{simple_model2_forward.1} parent=1 // loop_footer_branch
      %18 = sbr.rel target = $region3
    $region8: #{simple_model2_forward.1} parent=1 // loop_exit
      _
    %6242 = vsyncpa [#allocation5], 1
    %s6243 = scalar_lea.sflag [#allocation5], 1
    %6244 = vsyncpa %s6243, 1

</llo_original>
